<compile_context>
chip_gen: v6e
topology: v6e:2x2x1
jax: 0.10.0
libtpu: 0.0.40
codegen_flags: <defaults>
</compile_context>

<pallas_src>
import jax
import jax.numpy as jnp
from jax import lax
from jax.experimental import pallas as pl
from jax.experimental.pallas import tpu as pltpu
import numpy as np


# ------------------------- fused Pallas kernel -------------------------

def unet_up_block_kernel(x_ref, br_ref, wt_ref, bt_ref, bm_ref,
                         w1_ref, b1_ref, s1_ref, t1_ref,
                         w2_ref, b2_ref, s2_ref, t2_ref,
                         out_ref, pad1_ref, pad2_ref):
    # x_ref:   (1, H, W, Cin)     up-conv input (NHWC)
    # br_ref:  (1, Hh, Ww, Cb)    center-cropped bridge (NHWC), Hh=2H, Ww=2W
    # wt_ref:  (Cin, 4*Cout)      ConvTranspose2d weight, columns ordered (kh, kw, co)
    # bt_ref:  (1, 4*Cout)        ConvTranspose2d bias tiled over the 4 taps
    # bm_ref:  (Hh, Ww, 4*Cout)   one-hot parity masks selecting the owning (kh, kw) tap
    # w1_ref:  (9*Ccat, Cout)     conv1 weight (rows ordered dh, dw, cin); w2_ref: (9*Cout, Cout)
    # b*/s*/t*:(1, Cout)          conv bias / folded BN scale / folded BN shift
    # out_ref: (1, Cout, Hh*Ww)   channel-major, lane-dense output
    _, H, W, Cin = x_ref.shape
    _, Hh, Ww, Cb = br_ref.shape
    Cout = out_ref.shape[1]
    Cup = Cout
    Ccat = Cup + Cb
    C4 = 4 * Cup

    # Zero only the 1-pixel halo border of the scratch pads (interior is fully overwritten
    # every grid step, so this stays correct even if the batch axis is split across cores).
    for ref, c in ((pad1_ref, Ccat), (pad2_ref, Cout)):
        zrow = jnp.zeros((1, Ww + 2, c), jnp.float32)
        zcol = jnp.zeros((Hh + 2, 1, c), jnp.float32)
        ref[0:1, :, :] = zrow
        ref[Hh + 1:Hh + 2, :, :] = zrow
        ref[:, 0:1, :] = zcol
        ref[:, Ww + 1:Ww + 2, :] = zcol

    # ---- ConvTranspose2d(k=2, s=2): ONE fused MXU matmul over all 4 sub-pixel taps ----
    xf = x_ref[0].reshape(H * W, Cin)
    p = jnp.dot(xf, wt_ref[...], preferred_element_type=jnp.float32) + bt_ref[...]
    # nearest-neighbour 2x repeat along W then H (broadcast + leading-dim reshapes only)
    p = jnp.broadcast_to(p[:, None, :], (H * W, 2, C4)).reshape(H, Ww, C4)
    p = jnp.broadcast_to(p[:, None, :, :], (H, 2, Ww, C4)).reshape(Hh, Ww, C4)
    # select the (kh, kw) tap that owns each output pixel via precomputed parity masks
    pm = p * bm_ref[...]
    up = (pm[:, :, 0:Cup] + pm[:, :, Cup:2 * Cup]
          + pm[:, :, 2 * Cup:3 * Cup] + pm[:, :, 3 * Cup:4 * Cup])

    # channel concat == writing up and the cropped bridge into one halo-padded buffer
    pad1_ref[1:Hh + 1, 1:Ww + 1, 0:Cup] = up
    pad1_ref[1:Hh + 1, 1:Ww + 1, Cup:Ccat] = br_ref[0]

    # ---- Conv1 3x3 (pad=1) as a single im2col matmul + bias/ReLU/BN epilogue ----
    cols1 = jnp.concatenate(
        [pad1_ref[dh:dh + Hh, dw:dw + Ww, :] for dh in range(3) for dw in range(3)],
        axis=-1)                                                  # (Hh, Ww, 9*Ccat)
    h1 = jnp.dot(cols1.reshape(Hh * Ww, 9 * Ccat), w1_ref[...],
                 preferred_element_type=jnp.float32)              # (Hh*Ww, Cout)
    h1 = jnp.maximum(h1 + b1_ref[...], 0.0) * s1_ref[...] + t1_ref[...]
    pad2_ref[1:Hh + 1, 1:Ww + 1, :] = h1.reshape(Hh, Ww, Cout)

    # ---- Conv2 3x3 (pad=1), same structure ----
    cols2 = jnp.concatenate(
        [pad2_ref[dh:dh + Hh, dw:dw + Ww, :] for dh in range(3) for dw in range(3)],
        axis=-1)                                                  # (Hh, Ww, 9*Cout)
    h2 = jnp.dot(cols2.reshape(Hh * Ww, 9 * Cout), w2_ref[...],
                 preferred_element_type=jnp.float32)              # (Hh*Ww, Cout)
    h2 = jnp.maximum(h2 + b2_ref[...], 0.0) * s2_ref[...] + t2_ref[...]

    # channel-major, lane-dense (last dim = Hh*Ww) store
    out_ref[0] = jnp.transpose(h2)


# ------------------------- wrapper (JAX glue) -------------------------

def unet_up_block(x_nchw, bridge_nchw, p):
    N, Cin, H, W = x_nchw.shape
    Cout = p["wt"].shape[3]
    Hh, Ww = 2 * H, 2 * W
    Cb = bridge_nchw.shape[1]
    Ccat = Cout + Cb

    # inputs to NHWC; center-crop the bridge to the up-sampled size
    x = jnp.transpose(x_nchw, (0, 2, 3, 1)).astype(jnp.float32)
    dy = (bridge_nchw.shape[2] - Hh) // 2
    dx = (bridge_nchw.shape[3] - Ww) // 2
    br = jnp.transpose(bridge_nchw[:, :, dy:dy + Hh, dx:dx + Ww],
                       (0, 2, 3, 1)).astype(jnp.float32)

    # ConvTranspose weight fused over the 4 (kh, kw) taps: (Cin, 4*Cout), cols (kh, kw, co)
    wt2d = jnp.transpose(p["wt"], (2, 0, 1, 3)).reshape(Cin, 4 * Cout).astype(jnp.float32)
    bt4 = jnp.tile(p["bt"], 4).reshape(1, 4 * Cout).astype(jnp.float32)

    # parity masks: bigmask[y, x, k*Cout + co] = 1 iff k == (y % 2) * 2 + (x % 2)
    sel = (jnp.arange(Hh) % 2)[:, None] * 2 + (jnp.arange(Ww) % 2)[None, :]
    onehot = (sel[:, :, None] == jnp.arange(4)[None, None, :]).astype(jnp.float32)
    bigmask = jnp.repeat(onehot, Cout, axis=-1)                    # (Hh, Ww, 4*Cout)

    # conv weights reshaped for the im2col matmuls: rows ordered (dh, dw, cin)
    w1r = p["w1"].reshape(9 * Ccat, Cout)
    w2r = p["w2"].reshape(9 * Cout, Cout)

    # BatchNorm running stats folded to per-channel scale/shift (inference mode)
    scale1 = p["gamma1"] / jnp.sqrt(p["var1"] + 1e-5)
    shift1 = p["beta1"] - p["mean1"] * scale1
    scale2 = p["gamma2"] / jnp.sqrt(p["var2"] + 1e-5)
    shift2 = p["beta2"] - p["mean2"] * scale2

    out = pl.pallas_call(
        unet_up_block_kernel,
        out_shape=jax.ShapeDtypeStruct((N, Cout, Hh * Ww), jnp.float32),
        grid=(N,),
        in_specs=[
            pl.BlockSpec((1, H, W, Cin), lambda n: (n, 0, 0, 0)),
            pl.BlockSpec((1, Hh, Ww, Cb), lambda n: (n, 0, 0, 0)),
            pl.BlockSpec((Cin, 4 * Cout), lambda n: (0, 0)),
            pl.BlockSpec((1, 4 * Cout), lambda n: (0, 0)),
            pl.BlockSpec((Hh, Ww, 4 * Cout), lambda n: (0, 0, 0)),
            pl.BlockSpec((9 * Ccat, Cout), lambda n: (0, 0)),
            pl.BlockSpec((1, Cout), lambda n: (0, 0)),
            pl.BlockSpec((1, Cout), lambda n: (0, 0)),
            pl.BlockSpec((1, Cout), lambda n: (0, 0)),
            pl.BlockSpec((9 * Cout, Cout), lambda n: (0, 0)),
            pl.BlockSpec((1, Cout), lambda n: (0, 0)),
            pl.BlockSpec((1, Cout), lambda n: (0, 0)),
            pl.BlockSpec((1, Cout), lambda n: (0, 0)),
        ],
        out_specs=pl.BlockSpec((1, Cout, Hh * Ww), lambda n: (n, 0, 0)),
        scratch_shapes=[
            pltpu.VMEM((Hh + 2, Ww + 2, Ccat), jnp.float32),
            pltpu.VMEM((Hh + 2, Ww + 2, Cout), jnp.float32),
        ],
        compiler_params=pltpu.CompilerParams(dimension_semantics=("parallel",)),
    )(x, br, wt2d, bt4, bigmask,
      w1r, p["b1"].reshape(1, Cout), scale1.reshape(1, Cout), shift1.reshape(1, Cout),
      w2r, p["b2"].reshape(1, Cout), scale2.reshape(1, Cout), shift2.reshape(1, Cout))

    # (N, Cout, Hh*Ww) -> NCHW is a free, contiguous reshape (no transpose pass)
    return out.reshape(N, Cout, Hh, Ww)


# ------------------------- pure-JAX reference -------------------------

def reference(x_nchw, bridge_nchw, p):
    x = jnp.transpose(x_nchw, (0, 2, 3, 1)).astype(jnp.float32)
    bridge = jnp.transpose(bridge_nchw, (0, 2, 3, 1)).astype(jnp.float32)
    N, H, W, _ = x.shape
    Cout = p["wt"].shape[3]
    up = jnp.einsum("nhwc,klcd->nhkwld", x, p["wt"]).reshape(N, 2 * H, 2 * W, Cout) + p["bt"]
    Hh, Ww = 2 * H, 2 * W
    dy = (bridge.shape[1] - Hh) // 2
    dx = (bridge.shape[2] - Ww) // 2
    cat = jnp.concatenate([up, bridge[:, dy:dy + Hh, dx:dx + Ww, :]], axis=-1)
    dn = ("NHWC", "HWIO", "NHWC")
    scale1 = p["gamma1"] / jnp.sqrt(p["var1"] + 1e-5)
    shift1 = p["beta1"] - p["mean1"] * scale1
    scale2 = p["gamma2"] / jnp.sqrt(p["var2"] + 1e-5)
    shift2 = p["beta2"] - p["mean2"] * scale2
    h1 = lax.conv_general_dilated(cat, p["w1"], (1, 1), "SAME", dimension_numbers=dn) + p["b1"]
    h1 = jnp.maximum(h1, 0.0) * scale1 + shift1
    h2 = lax.conv_general_dilated(h1, p["w2"], (1, 1), "SAME", dimension_numbers=dn) + p["b2"]
    h2 = jnp.maximum(h2, 0.0) * scale2 + shift2
    return jnp.transpose(h2, (0, 3, 1, 2))


# ------------------------- main -------------------------

if __name__ == "__main__":
    in_size, out_size = 8, 4          # UNetUpBlock(in_size=8, out_size=4, 'upconv', True, True)
    N, H, W = 2, 8, 8                 # x spatial; up output is 16x16
    BH, BW = 20, 20                   # bridge is larger -> exercises center_crop

    key = jax.random.PRNGKey(0)
    ks = jax.random.split(key, 16)
    p = {
        "wt":     jax.random.normal(ks[0], (2, 2, in_size, out_size), jnp.float32) * 0.1,
        "bt":     jax.random.normal(ks[1], (out_size,), jnp.float32) * 0.1,
        "w1":     jax.random.normal(ks[2], (3, 3, in_size, out_size), jnp.float32) * 0.1,
        "b1":     jax.random.normal(ks[3], (out_size,), jnp.float32) * 0.1,
        "gamma1": 1.0 + 0.1 * jax.random.normal(ks[4], (out_size,), jnp.float32),
        "beta1":  0.1 * jax.random.normal(ks[5], (out_size,), jnp.float32),
        "mean1":  0.1 * jax.random.normal(ks[6], (out_size,), jnp.float32),
        "var1":   jax.random.uniform(ks[7], (out_size,), jnp.float32, 0.5, 1.5),
        "w2":     jax.random.normal(ks[8], (3, 3, out_size, out_size), jnp.float32) * 0.1,
        "b2":     jax.random.normal(ks[9], (out_size,), jnp.float32) * 0.1,
        "gamma2": 1.0 + 0.1 * jax.random.normal(ks[10], (out_size,), jnp.float32),
        "beta2":  0.1 * jax.random.normal(ks[11], (out_size,), jnp.float32),
        "mean2":  0.1 * jax.random.normal(ks[12], (out_size,), jnp.float32),
        "var2":   jax.random.uniform(ks[13], (out_size,), jnp.float32, 0.5, 1.5),
    }
    x = jax.random.normal(ks[14], (N, in_size, H, W), jnp.float32)           # NCHW
    bridge = jax.random.normal(ks[15], (N, out_size, BH, BW), jnp.float32)   # NCHW

    out = jax.block_until_ready(unet_up_block(x, bridge, p))
    ref = jax.block_until_ready(reference(x, bridge, p))
    np.testing.assert_allclose(np.asarray(out), np.asarray(ref), rtol=5e-3, atol=5e-3)
    print("KERNEL_OK")
</pallas_src>

<mosaic_0001>
module attributes {stable_mosaic.version = 11 : i64} {
  func.func @unet_up_block_kernel(%arg0: i32, %arg1: memref<1x8x8x8xf32, #tpu.memory_space<vmem>>, %arg2: memref<1x16x16x4xf32, #tpu.memory_space<vmem>>, %arg3: memref<8x16xf32, #tpu.memory_space<vmem>>, %arg4: memref<1x16xf32, #tpu.memory_space<vmem>>, %arg5: memref<16x16x16xf32, #tpu.memory_space<vmem>>, %arg6: memref<72x4xf32, #tpu.memory_space<vmem>>, %arg7: memref<1x4xf32, #tpu.memory_space<vmem>>, %arg8: memref<1x4xf32, #tpu.memory_space<vmem>>, %arg9: memref<1x4xf32, #tpu.memory_space<vmem>>, %arg10: memref<36x4xf32, #tpu.memory_space<vmem>>, %arg11: memref<1x4xf32, #tpu.memory_space<vmem>>, %arg12: memref<1x4xf32, #tpu.memory_space<vmem>>, %arg13: memref<1x4xf32, #tpu.memory_space<vmem>>, %arg14: memref<1x4x256xf32, #tpu.memory_space<vmem>>, %arg15: memref<18x18x8xf32, #tpu.memory_space<vmem>>, %arg16: memref<18x18x4xf32, #tpu.memory_space<vmem>>) attributes {dimension_semantics = [#tpu.dimension_semantics<parallel>], iteration_bounds = array<i64: 2>, scalar_prefetch = 0 : i64, scratch_operands = 2 : i64, tpu.core_type = #tpu.core_type<tc>, window_params = [{transform_indices = @transform_0, window_bounds = array<i64: 1, 8, 8, 8>}, {transform_indices = @transform_1, window_bounds = array<i64: 1, 16, 16, 4>}, {pipeline_mode = #tpu.pipeline_mode<synchronous>, transform_indices = @transform_2, window_bounds = array<i64: 8, 16>}, {pipeline_mode = #tpu.pipeline_mode<synchronous>, transform_indices = @transform_3, window_bounds = array<i64: 1, 16>}, {pipeline_mode = #tpu.pipeline_mode<synchronous>, transform_indices = @transform_4, window_bounds = array<i64: 16, 16, 16>}, {pipeline_mode = #tpu.pipeline_mode<synchronous>, transform_indices = @transform_5, window_bounds = array<i64: 72, 4>}, {pipeline_mode = #tpu.pipeline_mode<synchronous>, transform_indices = @transform_6, window_bounds = array<i64: 1, 4>}, {pipeline_mode = #tpu.pipeline_mode<synchronous>, transform_indices = @transform_7, window_bounds = array<i64: 1, 4>}, {pipeline_mode = #tpu.pipeline_mode<synchronous>, transform_indices = @transform_8, window_bounds = array<i64: 1, 4>}, {pipeline_mode = #tpu.pipeline_mode<synchronous>, transform_indices = @transform_9, window_bounds = array<i64: 36, 4>}, {pipeline_mode = #tpu.pipeline_mode<synchronous>, transform_indices = @transform_10, window_bounds = array<i64: 1, 4>}, {pipeline_mode = #tpu.pipeline_mode<synchronous>, transform_indices = @transform_11, window_bounds = array<i64: 1, 4>}, {pipeline_mode = #tpu.pipeline_mode<synchronous>, transform_indices = @transform_12, window_bounds = array<i64: 1, 4>}, {transform_indices = @transform_13, window_bounds = array<i64: 1, 4, 256>}]} {
    %cst = arith.constant 0.000000e+00 : f32
    %0 = vector.broadcast %cst : f32 to vector<1x18x8xf32>
    %cst_0 = arith.constant 0.000000e+00 : f32
    %1 = vector.broadcast %cst_0 : f32 to vector<18x1x8xf32>
    %c0 = arith.constant 0 : index
    %c0_1 = arith.constant 0 : index
    %c0_2 = arith.constant 0 : index
    %2 = vector.load %arg15[%c0, %c0_1, %c0_2] : memref<18x18x8xf32, #tpu.memory_space<vmem>>, vector<1x18x8xf32>
    tpu.vector_store %arg15[%c0, %c0_1, %c0_2], %0 {strides = array<i32>} : memref<18x18x8xf32, #tpu.memory_space<vmem>>, vector<1x18x8xf32>,
    %c17 = arith.constant 17 : index
    %c0_3 = arith.constant 0 : index
    %c0_4 = arith.constant 0 : index
    %3 = vector.load %arg15[%c17, %c0_3, %c0_4] : memref<18x18x8xf32, #tpu.memory_space<vmem>>, vector<1x18x8xf32>
    tpu.vector_store %arg15[%c17, %c0_3, %c0_4], %0 {strides = array<i32>} : memref<18x18x8xf32, #tpu.memory_space<vmem>>, vector<1x18x8xf32>,
    %c0_5 = arith.constant 0 : index
    %c0_6 = arith.constant 0 : index
    %c0_7 = arith.constant 0 : index
    %4 = vector.load %arg15[%c0_5, %c0_6, %c0_7] : memref<18x18x8xf32, #tpu.memory_space<vmem>>, vector<18x1x8xf32>
    tpu.vector_store %arg15[%c0_5, %c0_6, %c0_7], %1 {strides = array<i32>} : memref<18x18x8xf32, #tpu.memory_space<vmem>>, vector<18x1x8xf32>,
    %c0_8 = arith.constant 0 : index
    %c17_9 = arith.constant 17 : index
    %c0_10 = arith.constant 0 : index
    %5 = vector.load %arg15[%c0_8, %c17_9, %c0_10] : memref<18x18x8xf32, #tpu.memory_space<vmem>>, vector<18x1x8xf32>
    tpu.vector_store %arg15[%c0_8, %c17_9, %c0_10], %1 {strides = array<i32>} : memref<18x18x8xf32, #tpu.memory_space<vmem>>, vector<18x1x8xf32>,
    %cst_11 = arith.constant 0.000000e+00 : f32
    %6 = vector.broadcast %cst_11 : f32 to vector<1x18x4xf32>
    %cst_12 = arith.constant 0.000000e+00 : f32
    %7 = vector.broadcast %cst_12 : f32 to vector<18x1x4xf32>
    %c0_13 = arith.constant 0 : index
    %c0_14 = arith.constant 0 : index
    %c0_15 = arith.constant 0 : index
    %8 = vector.load %arg16[%c0_13, %c0_14, %c0_15] : memref<18x18x4xf32, #tpu.memory_space<vmem>>, vector<1x18x4xf32>
    tpu.vector_store %arg16[%c0_13, %c0_14, %c0_15], %6 {strides = array<i32>} : memref<18x18x4xf32, #tpu.memory_space<vmem>>, vector<1x18x4xf32>,
    %c17_16 = arith.constant 17 : index
    %c0_17 = arith.constant 0 : index
    %c0_18 = arith.constant 0 : index
    %9 = vector.load %arg16[%c17_16, %c0_17, %c0_18] : memref<18x18x4xf32, #tpu.memory_space<vmem>>, vector<1x18x4xf32>
    tpu.vector_store %arg16[%c17_16, %c0_17, %c0_18], %6 {strides = array<i32>} : memref<18x18x4xf32, #tpu.memory_space<vmem>>, vector<1x18x4xf32>,
    %c0_19 = arith.constant 0 : index
    %c0_20 = arith.constant 0 : index
    %c0_21 = arith.constant 0 : index
    %10 = vector.load %arg16[%c0_19, %c0_20, %c0_21] : memref<18x18x4xf32, #tpu.memory_space<vmem>>, vector<18x1x4xf32>
    tpu.vector_store %arg16[%c0_19, %c0_20, %c0_21], %7 {strides = array<i32>} : memref<18x18x4xf32, #tpu.memory_space<vmem>>, vector<18x1x4xf32>,
    %c0_22 = arith.constant 0 : index
    %c17_23 = arith.constant 17 : index
    %c0_24 = arith.constant 0 : index
    %11 = vector.load %arg16[%c0_22, %c17_23, %c0_24] : memref<18x18x4xf32, #tpu.memory_space<vmem>>, vector<18x1x4xf32>
    tpu.vector_store %arg16[%c0_22, %c17_23, %c0_24], %7 {strides = array<i32>} : memref<18x18x4xf32, #tpu.memory_space<vmem>>, vector<18x1x4xf32>,
    %c0_25 = arith.constant 0 : index
    %c0_26 = arith.constant 0 : index
    %c0_27 = arith.constant 0 : index
    %c0_28 = arith.constant 0 : index
    %12 = vector.load %arg1[%c0_25, %c0_26, %c0_27, %c0_28] : memref<1x8x8x8xf32, #tpu.memory_space<vmem>>, vector<1x8x8x8xf32>
    %13 = vector.shape_cast %12 : vector<1x8x8x8xf32> to vector<8x8x8xf32>
    %14 = vector.shape_cast %13 : vector<8x8x8xf32> to vector<64x8xf32>
    %c0_29 = arith.constant 0 : index
    %c0_30 = arith.constant 0 : index
    %15 = vector.load %arg3[%c0_29, %c0_30] : memref<8x16xf32, #tpu.memory_space<vmem>>, vector<8x16xf32>
    %cst_31 = arith.constant dense<0.000000e+00> : vector<64x16xf32>
    %16 = tpu.matmul %14, %15, %cst_31 {dimension_numbers = #tpu.dot_dimension_numbers<[1], [0], [0], [1], [0, 0, 1, 1], [], []>} : vector<64x8xf32>, vector<8x16xf32>, vector<64x16xf32> -> vector<64x16xf32>
    %c0_32 = arith.constant 0 : index
    %c0_33 = arith.constant 0 : index
    %17 = vector.load %arg4[%c0_32, %c0_33] : memref<1x16xf32, #tpu.memory_space<vmem>>, vector<1x16xf32>
    %18 = vector.broadcast %17 : vector<1x16xf32> to vector<64x16xf32>
    %19 = arith.addf %16, %18 : vector<64x16xf32>
    %20 = vector.shape_cast %19 : vector<64x16xf32> to vector<64x1x16xf32>
    %21 = vector.shape_cast %20 : vector<64x1x16xf32> to vector<64x1x16xf32>
    %22 = vector.broadcast %21 : vector<64x1x16xf32> to vector<64x2x16xf32>
    %23 = vector.shape_cast %22 : vector<64x2x16xf32> to vector<8x16x16xf32>
    %24 = vector.shape_cast %23 : vector<8x16x16xf32> to vector<8x1x16x16xf32>
    %25 = vector.shape_cast %24 : vector<8x1x16x16xf32> to vector<8x1x16x16xf32>
    %26 = vector.broadcast %25 : vector<8x1x16x16xf32> to vector<8x2x16x16xf32>
    %27 = vector.shape_cast %26 : vector<8x2x16x16xf32> to vector<16x16x16xf32>
    %c0_34 = arith.constant 0 : index
    %c0_35 = arith.constant 0 : index
    %c0_36 = arith.constant 0 : index
    %28 = vector.load %arg5[%c0_34, %c0_35, %c0_36] : memref<16x16x16xf32, #tpu.memory_space<vmem>>, vector<16x16x16xf32>
    %29 = arith.mulf %27, %28 : vector<16x16x16xf32>
    %30 = vector.extract_strided_slice %29 {offsets = [0, 0, 0], sizes = [16, 16, 4], strides = [1, 1, 1]} : vector<16x16x16xf32> to vector<16x16x4xf32>
    %31 = vector.extract_strided_slice %29 {offsets = [0, 0, 4], sizes = [16, 16, 4], strides = [1, 1, 1]} : vector<16x16x16xf32> to vector<16x16x4xf32>
    %32 = arith.addf %30, %31 : vector<16x16x4xf32>
    %33 = vector.extract_strided_slice %29 {offsets = [0, 0, 8], sizes = [16, 16, 4], strides = [1, 1, 1]} : vector<16x16x16xf32> to vector<16x16x4xf32>
    %34 = arith.addf %32, %33 : vector<16x16x4xf32>
    %35 = vector.extract_strided_slice %29 {offsets = [0, 0, 12], sizes = [16, 16, 4], strides = [1, 1, 1]} : vector<16x16x16xf32> to vector<16x16x4xf32>
    %36 = arith.addf %34, %35 : vector<16x16x4xf32>
    %c1 = arith.constant 1 : index
    %c1_37 = arith.constant 1 : index
    %c0_38 = arith.constant 0 : index
    %37 = vector.load %arg15[%c1, %c1_37, %c0_38] : memref<18x18x8xf32, #tpu.memory_space<vmem>>, vector<16x16x4xf32>
    tpu.vector_store %arg15[%c1, %c1_37, %c0_38], %36 {strides = array<i32>} : memref<18x18x8xf32, #tpu.memory_space<vmem>>, vector<16x16x4xf32>,
    %c0_39 = arith.constant 0 : index
    %c0_40 = arith.constant 0 : index
    %c0_41 = arith.constant 0 : index
    %c0_42 = arith.constant 0 : index
    %38 = vector.load %arg2[%c0_39, %c0_40, %c0_41, %c0_42] : memref<1x16x16x4xf32, #tpu.memory_space<vmem>>, vector<1x16x16x4xf32>
    %39 = vector.shape_cast %38 : vector<1x16x16x4xf32> to vector<16x16x4xf32>
    %c1_43 = arith.constant 1 : index
    %c1_44 = arith.constant 1 : index
    %c4 = arith.constant 4 : index
    %40 = vector.load %arg15[%c1_43, %c1_44, %c4] : memref<18x18x8xf32, #tpu.memory_space<vmem>>, vector<16x16x4xf32>
    tpu.vector_store %arg15[%c1_43, %c1_44, %c4], %39 {strides = array<i32>} : memref<18x18x8xf32, #tpu.memory_space<vmem>>, vector<16x16x4xf32>,
    %c0_45 = arith.constant 0 : index
    %c0_46 = arith.constant 0 : index
    %c0_47 = arith.constant 0 : index
    %41 = vector.load %arg15[%c0_45, %c0_46, %c0_47] : memref<18x18x8xf32, #tpu.memory_space<vmem>>, vector<16x16x8xf32>
    %c0_48 = arith.constant 0 : index
    %c1_49 = arith.constant 1 : index
    %c0_50 = arith.constant 0 : index
    %42 = vector.load %arg15[%c0_48, %c1_49, %c0_50] : memref<18x18x8xf32, #tpu.memory_space<vmem>>, vector<16x16x8xf32>
    %c0_51 = arith.constant 0 : index
    %c2 = arith.constant 2 : index
    %c0_52 = arith.constant 0 : index
    %43 = vector.load %arg15[%c0_51, %c2, %c0_52] : memref<18x18x8xf32, #tpu.memory_space<vmem>>, vector<16x16x8xf32>
    %c1_53 = arith.constant 1 : index
    %c0_54 = arith.constant 0 : index
    %c0_55 = arith.constant 0 : index
    %44 = vector.load %arg15[%c1_53, %c0_54, %c0_55] : memref<18x18x8xf32, #tpu.memory_space<vmem>>, vector<16x16x8xf32>
    %c1_56 = arith.constant 1 : index
    %c1_57 = arith.constant 1 : index
    %c0_58 = arith.constant 0 : index
    %45 = vector.load %arg15[%c1_56, %c1_57, %c0_58] : memref<18x18x8xf32, #tpu.memory_space<vmem>>, vector<16x16x8xf32>
    %c1_59 = arith.constant 1 : index
    %c2_60 = arith.constant 2 : index
    %c0_61 = arith.constant 0 : index
    %46 = vector.load %arg15[%c1_59, %c2_60, %c0_61] : memref<18x18x8xf32, #tpu.memory_space<vmem>>, vector<16x16x8xf32>
    %c2_62 = arith.constant 2 : index
    %c0_63 = arith.constant 0 : index
    %c0_64 = arith.constant 0 : index
    %47 = vector.load %arg15[%c2_62, %c0_63, %c0_64] : memref<18x18x8xf32, #tpu.memory_space<vmem>>, vector<16x16x8xf32>
    %c2_65 = arith.constant 2 : index
    %c1_66 = arith.constant 1 : index
    %c0_67 = arith.constant 0 : index
    %48 = vector.load %arg15[%c2_65, %c1_66, %c0_67] : memref<18x18x8xf32, #tpu.memory_space<vmem>>, vector<16x16x8xf32>
    %c2_68 = arith.constant 2 : index
    %c2_69 = arith.constant 2 : index
    %c0_70 = arith.constant 0 : index
    %49 = vector.load %arg15[%c2_68, %c2_69, %c0_70] : memref<18x18x8xf32, #tpu.memory_space<vmem>>, vector<16x16x8xf32>
    %50 = tpu.concatenate %41, %42, %43, %44, %45, %46, %47, %48, %49 in 2 : vector<16x16x8xf32>, vector<16x16x8xf32>, vector<16x16x8xf32>, vector<16x16x8xf32>, vector<16x16x8xf32>, vector<16x16x8xf32>, vector<16x16x8xf32>, vector<16x16x8xf32>, vector<16x16x8xf32> -> vector<16x16x72xf32>
    %51 = vector.shape_cast %50 : vector<16x16x72xf32> to vector<256x72xf32>
    %c0_71 = arith.constant 0 : index
    %c0_72 = arith.constant 0 : index
    %52 = vector.load %arg6[%c0_71, %c0_72] : memref<72x4xf32, #tpu.memory_space<vmem>>, vector<72x4xf32>
    %cst_73 = arith.constant dense<0.000000e+00> : vector<256x4xf32>
    %53 = tpu.matmul %51, %52, %cst_73 {dimension_numbers = #tpu.dot_dimension_numbers<[1], [0], [0], [1], [0, 0, 1, 1], [], []>} : vector<256x72xf32>, vector<72x4xf32>, vector<256x4xf32> -> vector<256x4xf32>
    %c0_74 = arith.constant 0 : index
    %c0_75 = arith.constant 0 : index
    %54 = vector.load %arg7[%c0_74, %c0_75] : memref<1x4xf32, #tpu.memory_space<vmem>>, vector<1x4xf32>
    %55 = vector.broadcast %54 : vector<1x4xf32> to vector<256x4xf32>
    %56 = arith.addf %53, %55 : vector<256x4xf32>
    %cst_76 = arith.constant 0.000000e+00 : f32
    %57 = vector.broadcast %cst_76 : f32 to vector<256x4xf32>
    %58 = arith.maximumf %56, %57 : vector<256x4xf32>
    %c0_77 = arith.constant 0 : index
    %c0_78 = arith.constant 0 : index
    %59 = vector.load %arg8[%c0_77, %c0_78] : memref<1x4xf32, #tpu.memory_space<vmem>>, vector<1x4xf32>
    %60 = vector.broadcast %59 : vector<1x4xf32> to vector<256x4xf32>
    %61 = arith.mulf %58, %60 : vector<256x4xf32>
    %c0_79 = arith.constant 0 : index
    %c0_80 = arith.constant 0 : index
    %62 = vector.load %arg9[%c0_79, %c0_80] : memref<1x4xf32, #tpu.memory_space<vmem>>, vector<1x4xf32>
    %63 = vector.broadcast %62 : vector<1x4xf32> to vector<256x4xf32>
    %64 = arith.addf %61, %63 : vector<256x4xf32>
    %65 = vector.shape_cast %64 : vector<256x4xf32> to vector<16x16x4xf32>
    %c1_81 = arith.constant 1 : index
    %c1_82 = arith.constant 1 : index
    %c0_83 = arith.constant 0 : index
    %66 = vector.load %arg16[%c1_81, %c1_82, %c0_83] : memref<18x18x4xf32, #tpu.memory_space<vmem>>, vector<16x16x4xf32>
    tpu.vector_store %arg16[%c1_81, %c1_82, %c0_83], %65 {strides = array<i32>} : memref<18x18x4xf32, #tpu.memory_space<vmem>>, vector<16x16x4xf32>,
    %c0_84 = arith.constant 0 : index
    %c0_85 = arith.constant 0 : index
    %c0_86 = arith.constant 0 : index
    %67 = vector.load %arg16[%c0_84, %c0_85, %c0_86] : memref<18x18x4xf32, #tpu.memory_space<vmem>>, vector<16x16x4xf32>
    %c0_87 = arith.constant 0 : index
    %c1_88 = arith.constant 1 : index
    %c0_89 = arith.constant 0 : index
    %68 = vector.load %arg16[%c0_87, %c1_88, %c0_89] : memref<18x18x4xf32, #tpu.memory_space<vmem>>, vector<16x16x4xf32>
    %c0_90 = arith.constant 0 : index
    %c2_91 = arith.constant 2 : index
    %c0_92 = arith.constant 0 : index
    %69 = vector.load %arg16[%c0_90, %c2_91, %c0_92] : memref<18x18x4xf32, #tpu.memory_space<vmem>>, vector<16x16x4xf32>
    %c1_93 = arith.constant 1 : index
    %c0_94 = arith.constant 0 : index
    %c0_95 = arith.constant 0 : index
    %70 = vector.load %arg16[%c1_93, %c0_94, %c0_95] : memref<18x18x4xf32, #tpu.memory_space<vmem>>, vector<16x16x4xf32>
    %c1_96 = arith.constant 1 : index
    %c1_97 = arith.constant 1 : index
    %c0_98 = arith.constant 0 : index
    %71 = vector.load %arg16[%c1_96, %c1_97, %c0_98] : memref<18x18x4xf32, #tpu.memory_space<vmem>>, vector<16x16x4xf32>
    %c1_99 = arith.constant 1 : index
    %c2_100 = arith.constant 2 : index
    %c0_101 = arith.constant 0 : index
    %72 = vector.load %arg16[%c1_99, %c2_100, %c0_101] : memref<18x18x4xf32, #tpu.memory_space<vmem>>, vector<16x16x4xf32>
    %c2_102 = arith.constant 2 : index
    %c0_103 = arith.constant 0 : index
    %c0_104 = arith.constant 0 : index
    %73 = vector.load %arg16[%c2_102, %c0_103, %c0_104] : memref<18x18x4xf32, #tpu.memory_space<vmem>>, vector<16x16x4xf32>
    %c2_105 = arith.constant 2 : index
    %c1_106 = arith.constant 1 : index
    %c0_107 = arith.constant 0 : index
    %74 = vector.load %arg16[%c2_105, %c1_106, %c0_107] : memref<18x18x4xf32, #tpu.memory_space<vmem>>, vector<16x16x4xf32>
    %c2_108 = arith.constant 2 : index
    %c2_109 = arith.constant 2 : index
    %c0_110 = arith.constant 0 : index
    %75 = vector.load %arg16[%c2_108, %c2_109, %c0_110] : memref<18x18x4xf32, #tpu.memory_space<vmem>>, vector<16x16x4xf32>
    %76 = tpu.concatenate %67, %68, %69, %70, %71, %72, %73, %74, %75 in 2 : vector<16x16x4xf32>, vector<16x16x4xf32>, vector<16x16x4xf32>, vector<16x16x4xf32>, vector<16x16x4xf32>, vector<16x16x4xf32>, vector<16x16x4xf32>, vector<16x16x4xf32>, vector<16x16x4xf32> -> vector<16x16x36xf32>
    %77 = vector.shape_cast %76 : vector<16x16x36xf32> to vector<256x36xf32>
    %c0_111 = arith.constant 0 : index
    %c0_112 = arith.constant 0 : index
    %78 = vector.load %arg10[%c0_111, %c0_112] : memref<36x4xf32, #tpu.memory_space<vmem>>, vector<36x4xf32>
    %cst_113 = arith.constant dense<0.000000e+00> : vector<256x4xf32>
    %79 = tpu.matmul %77, %78, %cst_113 {dimension_numbers = #tpu.dot_dimension_numbers<[1], [0], [0], [1], [0, 0, 1, 1], [], []>} : vector<256x36xf32>, vector<36x4xf32>, vector<256x4xf32> -> vector<256x4xf32>
    %c0_114 = arith.constant 0 : index
    %c0_115 = arith.constant 0 : index
    %80 = vector.load %arg11[%c0_114, %c0_115] : memref<1x4xf32, #tpu.memory_space<vmem>>, vector<1x4xf32>
    %81 = vector.broadcast %80 : vector<1x4xf32> to vector<256x4xf32>
    %82 = arith.addf %79, %81 : vector<256x4xf32>
    %cst_116 = arith.constant 0.000000e+00 : f32
    %83 = vector.broadcast %cst_116 : f32 to vector<256x4xf32>
    %84 = arith.maximumf %82, %83 : vector<256x4xf32>
    %c0_117 = arith.constant 0 : index
    %c0_118 = arith.constant 0 : index
    %85 = vector.load %arg12[%c0_117, %c0_118] : memref<1x4xf32, #tpu.memory_space<vmem>>, vector<1x4xf32>
    %86 = vector.broadcast %85 : vector<1x4xf32> to vector<256x4xf32>
    %87 = arith.mulf %84, %86 : vector<256x4xf32>
    %c0_119 = arith.constant 0 : index
    %c0_120 = arith.constant 0 : index
    %88 = vector.load %arg13[%c0_119, %c0_120] : memref<1x4xf32, #tpu.memory_space<vmem>>, vector<1x4xf32>
    %89 = vector.broadcast %88 : vector<1x4xf32> to vector<256x4xf32>
    %90 = arith.addf %87, %89 : vector<256x4xf32>
    %91 = tpu.transpose %90, [1, 0] : vector<256x4xf32> -> vector<4x256xf32>
    %c0_121 = arith.constant 0 : index
    %c0_122 = arith.constant 0 : index
    %c0_123 = arith.constant 0 : index
    %92 = vector.load %arg14[%c0_121, %c0_122, %c0_123] : memref<1x4x256xf32, #tpu.memory_space<vmem>>, vector<1x4x256xf32>
    %93 = vector.shape_cast %92 : vector<1x4x256xf32> to vector<4x256xf32>
    %94 = vector.shape_cast %91 : vector<4x256xf32> to vector<1x4x256xf32>
    tpu.vector_store %arg14[%c0_121, %c0_122, %c0_123], %94 {strides = array<i32>} : memref<1x4x256xf32, #tpu.memory_space<vmem>>, vector<1x4x256xf32>,
    return
  }
  func.func @transform_0(%arg0: i32) -> (i32, i32, i32, i32) {
    %c0_i32 = arith.constant 0 : i32
    %c0_i32_0 = arith.constant 0 : i32
    %c0_i32_1 = arith.constant 0 : i32
    %c0_i32_2 = arith.constant 0 : i32
    return %arg0, %c0_i32, %c0_i32_0, %c0_i32_1 : i32, i32, i32, i32
  }
  func.func @transform_1(%arg0: i32) -> (i32, i32, i32, i32) {
    %c0_i32 = arith.constant 0 : i32
    %c0_i32_0 = arith.constant 0 : i32
    %c0_i32_1 = arith.constant 0 : i32
    %c0_i32_2 = arith.constant 0 : i32
    return %arg0, %c0_i32, %c0_i32_0, %c0_i32_1 : i32, i32, i32, i32
  }
  func.func @transform_2(%arg0: i32) -> (i32, i32) {
    %c0_i32 = arith.constant 0 : i32
    %c0_i32_0 = arith.constant 0 : i32
    %c0_i32_1 = arith.constant 0 : i32
    return %c0_i32, %c0_i32_0 : i32, i32
  }
  func.func @transform_3(%arg0: i32) -> (i32, i32) {
    %c0_i32 = arith.constant 0 : i32
    %c0_i32_0 = arith.constant 0 : i32
    %c0_i32_1 = arith.constant 0 : i32
    return %c0_i32, %c0_i32_0 : i32, i32
  }
  func.func @transform_4(%arg0: i32) -> (i32, i32, i32) {
    %c0_i32 = arith.constant 0 : i32
    %c0_i32_0 = arith.constant 0 : i32
    %c0_i32_1 = arith.constant 0 : i32
    %c0_i32_2 = arith.constant 0 : i32
    return %c0_i32, %c0_i32_0, %c0_i32_1 : i32, i32, i32
  }
  func.func @transform_5(%arg0: i32) -> (i32, i32) {
    %c0_i32 = arith.constant 0 : i32
    %c0_i32_0 = arith.constant 0 : i32
    %c0_i32_1 = arith.constant 0 : i32
    return %c0_i32, %c0_i32_0 : i32, i32
  }
  func.func @transform_6(%arg0: i32) -> (i32, i32) {
    %c0_i32 = arith.constant 0 : i32
    %c0_i32_0 = arith.constant 0 : i32
    %c0_i32_1 = arith.constant 0 : i32
    return %c0_i32, %c0_i32_0 : i32, i32
  }
  func.func @transform_7(%arg0: i32) -> (i32, i32) {
    %c0_i32 = arith.constant 0 : i32
    %c0_i32_0 = arith.constant 0 : i32
    %c0_i32_1 = arith.constant 0 : i32
    return %c0_i32, %c0_i32_0 : i32, i32
  }
  func.func @transform_8(%arg0: i32) -> (i32, i32) {
    %c0_i32 = arith.constant 0 : i32
    %c0_i32_0 = arith.constant 0 : i32
    %c0_i32_1 = arith.constant 0 : i32
    return %c0_i32, %c0_i32_0 : i32, i32
  }
  func.func @transform_9(%arg0: i32) -> (i32, i32) {
    %c0_i32 = arith.constant 0 : i32
    %c0_i32_0 = arith.constant 0 : i32
    %c0_i32_1 = arith.constant 0 : i32
    return %c0_i32, %c0_i32_0 : i32, i32
  }
  func.func @transform_10(%arg0: i32) -> (i32, i32) {
    %c0_i32 = arith.constant 0 : i32
    %c0_i32_0 = arith.constant 0 : i32
    %c0_i32_1 = arith.constant 0 : i32
    return %c0_i32, %c0_i32_0 : i32, i32
  }
  func.func @transform_11(%arg0: i32) -> (i32, i32) {
    %c0_i32 = arith.constant 0 : i32
    %c0_i32_0 = arith.constant 0 : i32
    %c0_i32_1 = arith.constant 0 : i32
    return %c0_i32, %c0_i32_0 : i32, i32
  }
  func.func @transform_12(%arg0: i32) -> (i32, i32) {
    %c0_i32 = arith.constant 0 : i32
    %c0_i32_0 = arith.constant 0 : i32
    %c0_i32_1 = arith.constant 0 : i32
    return %c0_i32, %c0_i32_0 : i32, i32
  }
  func.func @transform_13(%arg0: i32) -> (i32, i32, i32) {
    %c0_i32 = arith.constant 0 : i32
    %c0_i32_0 = arith.constant 0 : i32
    %c0_i32_1 = arith.constant 0 : i32
    return %arg0, %c0_i32, %c0_i32_0 : i32, i32, i32
  }
}

</mosaic_0001>

<llo_original>
// kernel: tpu_custom_call.1
$region0: #{tpu_custom_call.1}
  #allocation0 [shape = 'u32[]', space=smem, size = 0x4, offset = 0x4, fixed_abs, tag = 'smem constant byte address 0x4 - core index']
  #allocation1 [shape = 'u32[144,128]{1,0:T(1,128)}', space=vmem, size = 0x12000, scoped, tag = 'internal scratch']
  #allocation2 [shape = 'f32[18,18,8]{2,1,0:T(8,128)}', space=vmem, size = 0x36000, scoped, tag = 'scratch operand']
  #allocation3 [shape = 'f32[18,18,4]{2,1,0:T(8,128)}', space=vmem, size = 0x36000, scoped, tag = 'scratch operand']
  %s0 = inlined_call_operand.vmem [shape: f32[2,8,8,8], index: 0, kind: input, shape index: {}]
  %s1 = inlined_call_operand.vmem [shape: f32[2,16,16,4], index: 1, kind: input, shape index: {}]
  %s2 = inlined_call_operand.vmem [shape: f32[8,16], index: 2, kind: input, shape index: {}]
  %s3 = inlined_call_operand.vmem [shape: f32[1,16], index: 3, kind: input, shape index: {}]
  %s4 = inlined_call_operand.vmem [shape: f32[16,16,16], index: 4, kind: input, shape index: {}]
  %s5 = inlined_call_operand.vmem [shape: f32[72,4], index: 5, kind: input, shape index: {}]
  %s6 = inlined_call_operand.vmem [shape: f32[1,4], index: 6, kind: input, shape index: {}]
  %s7 = inlined_call_operand.vmem [shape: f32[1,4], index: 7, kind: input, shape index: {}]
  %s8 = inlined_call_operand.vmem [shape: f32[1,4], index: 8, kind: input, shape index: {}]
  %s9 = inlined_call_operand.vmem [shape: f32[36,4], index: 9, kind: input, shape index: {}]
  %s10 = inlined_call_operand.vmem [shape: f32[1,4], index: 10, kind: input, shape index: {}]
  %s11 = inlined_call_operand.vmem [shape: f32[1,4], index: 11, kind: input, shape index: {}]
  %s12 = inlined_call_operand.vmem [shape: f32[1,4], index: 12, kind: input, shape index: {}]
  %s13 = inlined_call_operand.hbm [shape: f32[2,4,256], index: 13, kind: output, shape index: {}]
  %s14 = sld [smem:[#allocation0]]
  $region85: #{tpu_custom_call.1} parent=0
    _
  %s16 = ssub.s32 1, %s14
  %s17 = scalar_select 0, %s16, %s14
  $region1: #{tpu_custom_call.1} parent=0
    #allocation4 [shape = 'u8[8192]{0}', space=vmem, size = 0x2000, scoped, tag = 'output window, operand 0']
    #allocation5 [shape = 's32[2]{0}', space=sflag, size = 0x8, scoped, tag = 'scoped memory for tpu_custom_call.1']
    %18 = vsyncpa [#allocation5], 0
    %s19 = scalar_lea.sflag [#allocation5], 1
    %20 = vsyncpa %s19, 0
    loop: start=0, step=1, limit=4
    $region2: #{tpu_custom_call.1} parent=1 // loop_pre_header
      _
    $region3: #{tpu_custom_call.1} parent=1 // loop_header
      %s22 = sphi 0, %s26
      %p23 = scmp.ge.s32.totalorder %s22, 4
      %s32 = sphi 0, %s34
      %s35 = sphi 0, %s32
      %s36 = sphi 0, %s35
      %s52 = sphi 0, %s36
      %s58 = sphi 0, %s60
      %s61 = sphi 0, %s58
      %s62 = sphi 0, %s61
      %s78 = sphi 0, %s62
      %s82 = sphi 0, %s82
      %s84 = sphi 0, %s82
      %s85 = sphi 0, %s84
      %s99 = sphi 0, %s85
      %s103 = sphi 0, %s103
      %s105 = sphi 0, %s103
      %s106 = sphi 0, %s105
      %s120 = sphi 0, %s106
      %s124 = sphi 0, %s124
      %s126 = sphi 0, %s124
      %s127 = sphi 0, %s126
      %s141 = sphi 0, %s127
      %s145 = sphi 0, %s145
      %s147 = sphi 0, %s145
      %s148 = sphi 0, %s147
      %s162 = sphi 0, %s148
      %s166 = sphi 0, %s166
      %s168 = sphi 0, %s166
      %s169 = sphi 0, %s168
      %s183 = sphi 0, %s169
      %s187 = sphi 0, %s187
      %s189 = sphi 0, %s187
      %s190 = sphi 0, %s189
      %s204 = sphi 0, %s190
      %s208 = sphi 0, %s208
      %s210 = sphi 0, %s208
      %s211 = sphi 0, %s210
      %s225 = sphi 0, %s211
      %s229 = sphi 0, %s229
      %s231 = sphi 0, %s229
      %s232 = sphi 0, %s231
      %s246 = sphi 0, %s232
      %s250 = sphi 0, %s250
      %s252 = sphi 0, %s250
      %s253 = sphi 0, %s252
      %s267 = sphi 0, %s253
      %s271 = sphi 0, %s271
      %s273 = sphi 0, %s271
      %s274 = sphi 0, %s273
      %s288 = sphi 0, %s274
      %s292 = sphi 0, %s292
      %s294 = sphi 0, %s292
      %s295 = sphi 0, %s294
      %s309 = sphi 0, %s295
      %s315 = sphi 0, %s317
      %s318 = sphi 0, %s315
      %s319 = sphi 0, %s318
      %s335 = sphi 0, %s319
    $region4: #{tpu_custom_call.1} parent=1 // loop_header_branch
      %25 = sbr.rel (%p23) target = $region8
    $region5: #{tpu_custom_call.1} parent=1 // loop_body
      %s27 = ssub.s32 %s22, 1
      %s28 = ssub.s32 %s22, 2
      %s29 = sadd.s32 %s22, 1
      %s30 = ssub.s32 %s22, %s29
      %p31 = scmp.eq.s32.totalorder %s30, 0
      %s33 = sadd.s32 %s32, 1
      %s34 = scalar_select %p31, %s32, %s33
      %p37 = pneg %p31
      %p38 = scmp.eq.s32.totalorder %s22, 1
      %p39 = por %p37, %p38
      %p40 = scmp.ne.s32.totalorder %s32, %s35
      %p41 = scmp.eq.s32.totalorder %s22, 0
      %p42 = por %p40, %p41
      %p43 = scmp.ne.s32.totalorder %s32, %s35
      %p44 = scmp.eq.s32.totalorder %s27, 1
      %p45 = por %p43, %p44
      %p46 = scmp.ne.s32.totalorder %s35, %s36
      %p47 = scmp.eq.s32.totalorder %s27, 0
      %p48 = por %p46, %p47
      %p49 = scmp.ne.s32.totalorder %s35, %s36
      %p50 = scmp.eq.s32.totalorder %s28, 1
      %p51 = por %p49, %p50
      %p53 = scmp.ne.s32.totalorder %s36, %s52
      %p54 = scmp.eq.s32.totalorder %s28, 0
      %p55 = por %p53, %p54
      %s56 = ssub.s32 %s22, %s29
      %p57 = scmp.eq.s32.totalorder %s56, 0
      %s59 = sadd.s32 %s58, 1
      %s60 = scalar_select %p57, %s58, %s59
      %p63 = pneg %p57
      %p64 = scmp.eq.s32.totalorder %s22, 1
      %p65 = por %p63, %p64
      %p66 = scmp.ne.s32.totalorder %s58, %s61
      %p67 = scmp.eq.s32.totalorder %s22, 0
      %p68 = por %p66, %p67
      %p69 = scmp.ne.s32.totalorder %s58, %s61
      %p70 = scmp.eq.s32.totalorder %s27, 1
      %p71 = por %p69, %p70
      %p72 = scmp.ne.s32.totalorder %s61, %s62
      %p73 = scmp.eq.s32.totalorder %s27, 0
      %p74 = por %p72, %p73
      %p75 = scmp.ne.s32.totalorder %s61, %s62
      %p76 = scmp.eq.s32.totalorder %s28, 1
      %p77 = por %p75, %p76
      %p79 = scmp.ne.s32.totalorder %s62, %s78
      %p80 = scmp.eq.s32.totalorder %s28, 0
      %p81 = por %p79, %p80
      %s83 = sadd.s32 %s82, 1
      %p86 = scmp.eq.s32.totalorder %s22, 1
      %p87 = scmp.ne.s32.totalorder %s82, %s84
      %p88 = scmp.eq.s32.totalorder %s22, 0
      %p89 = por %p87, %p88
      %p90 = scmp.ne.s32.totalorder %s82, %s84
      %p91 = scmp.eq.s32.totalorder %s27, 1
      %p92 = por %p90, %p91
      %p93 = scmp.ne.s32.totalorder %s84, %s85
      %p94 = scmp.eq.s32.totalorder %s27, 0
      %p95 = por %p93, %p94
      %p96 = scmp.ne.s32.totalorder %s84, %s85
      %p97 = scmp.eq.s32.totalorder %s28, 1
      %p98 = por %p96, %p97
      %p100 = scmp.ne.s32.totalorder %s85, %s99
      %p101 = scmp.eq.s32.totalorder %s28, 0
      %p102 = por %p100, %p101
      %s104 = sadd.s32 %s103, 1
      %p107 = scmp.eq.s32.totalorder %s22, 1
      %p108 = scmp.ne.s32.totalorder %s103, %s105
      %p109 = scmp.eq.s32.totalorder %s22, 0
      %p110 = por %p108, %p109
      %p111 = scmp.ne.s32.totalorder %s103, %s105
      %p112 = scmp.eq.s32.totalorder %s27, 1
      %p113 = por %p111, %p112
      %p114 = scmp.ne.s32.totalorder %s105, %s106
      %p115 = scmp.eq.s32.totalorder %s27, 0
      %p116 = por %p114, %p115
      %p117 = scmp.ne.s32.totalorder %s105, %s106
      %p118 = scmp.eq.s32.totalorder %s28, 1
      %p119 = por %p117, %p118
      %p121 = scmp.ne.s32.totalorder %s106, %s120
      %p122 = scmp.eq.s32.totalorder %s28, 0
      %p123 = por %p121, %p122
      %s125 = sadd.s32 %s124, 1
      %p128 = scmp.eq.s32.totalorder %s22, 1
      %p129 = scmp.ne.s32.totalorder %s124, %s126
      %p130 = scmp.eq.s32.totalorder %s22, 0
      %p131 = por %p129, %p130
      %p132 = scmp.ne.s32.totalorder %s124, %s126
      %p133 = scmp.eq.s32.totalorder %s27, 1
      %p134 = por %p132, %p133
      %p135 = scmp.ne.s32.totalorder %s126, %s127
      %p136 = scmp.eq.s32.totalorder %s27, 0
      %p137 = por %p135, %p136
      %p138 = scmp.ne.s32.totalorder %s126, %s127
      %p139 = scmp.eq.s32.totalorder %s28, 1
      %p140 = por %p138, %p139
      %p142 = scmp.ne.s32.totalorder %s127, %s141
      %p143 = scmp.eq.s32.totalorder %s28, 0
      %p144 = por %p142, %p143
      %s146 = sadd.s32 %s145, 1
      %p149 = scmp.eq.s32.totalorder %s22, 1
      %p150 = scmp.ne.s32.totalorder %s145, %s147
      %p151 = scmp.eq.s32.totalorder %s22, 0
      %p152 = por %p150, %p151
      %p153 = scmp.ne.s32.totalorder %s145, %s147
      %p154 = scmp.eq.s32.totalorder %s27, 1
      %p155 = por %p153, %p154
      %p156 = scmp.ne.s32.totalorder %s147, %s148
      %p157 = scmp.eq.s32.totalorder %s27, 0
      %p158 = por %p156, %p157
      %p159 = scmp.ne.s32.totalorder %s147, %s148
      %p160 = scmp.eq.s32.totalorder %s28, 1
      %p161 = por %p159, %p160
      %p163 = scmp.ne.s32.totalorder %s148, %s162
      %p164 = scmp.eq.s32.totalorder %s28, 0
      %p165 = por %p163, %p164
      %s167 = sadd.s32 %s166, 1
      %p170 = scmp.eq.s32.totalorder %s22, 1
      %p171 = scmp.ne.s32.totalorder %s166, %s168
      %p172 = scmp.eq.s32.totalorder %s22, 0
      %p173 = por %p171, %p172
      %p174 = scmp.ne.s32.totalorder %s166, %s168
      %p175 = scmp.eq.s32.totalorder %s27, 1
      %p176 = por %p174, %p175
      %p177 = scmp.ne.s32.totalorder %s168, %s169
      %p178 = scmp.eq.s32.totalorder %s27, 0
      %p179 = por %p177, %p178
      %p180 = scmp.ne.s32.totalorder %s168, %s169
      %p181 = scmp.eq.s32.totalorder %s28, 1
      %p182 = por %p180, %p181
      %p184 = scmp.ne.s32.totalorder %s169, %s183
      %p185 = scmp.eq.s32.totalorder %s28, 0
      %p186 = por %p184, %p185
      %s188 = sadd.s32 %s187, 1
      %p191 = scmp.eq.s32.totalorder %s22, 1
      %p192 = scmp.ne.s32.totalorder %s187, %s189
      %p193 = scmp.eq.s32.totalorder %s22, 0
      %p194 = por %p192, %p193
      %p195 = scmp.ne.s32.totalorder %s187, %s189
      %p196 = scmp.eq.s32.totalorder %s27, 1
      %p197 = por %p195, %p196
      %p198 = scmp.ne.s32.totalorder %s189, %s190
      %p199 = scmp.eq.s32.totalorder %s27, 0
      %p200 = por %p198, %p199
      %p201 = scmp.ne.s32.totalorder %s189, %s190
      %p202 = scmp.eq.s32.totalorder %s28, 1
      %p203 = por %p201, %p202
      %p205 = scmp.ne.s32.totalorder %s190, %s204
      %p206 = scmp.eq.s32.totalorder %s28, 0
      %p207 = por %p205, %p206
      %s209 = sadd.s32 %s208, 1
      %p212 = scmp.eq.s32.totalorder %s22, 1
      %p213 = scmp.ne.s32.totalorder %s208, %s210
      %p214 = scmp.eq.s32.totalorder %s22, 0
      %p215 = por %p213, %p214
      %p216 = scmp.ne.s32.totalorder %s208, %s210
      %p217 = scmp.eq.s32.totalorder %s27, 1
      %p218 = por %p216, %p217
      %p219 = scmp.ne.s32.totalorder %s210, %s211
      %p220 = scmp.eq.s32.totalorder %s27, 0
      %p221 = por %p219, %p220
      %p222 = scmp.ne.s32.totalorder %s210, %s211
      %p223 = scmp.eq.s32.totalorder %s28, 1
      %p224 = por %p222, %p223
      %p226 = scmp.ne.s32.totalorder %s211, %s225
      %p227 = scmp.eq.s32.totalorder %s28, 0
      %p228 = por %p226, %p227
      %s230 = sadd.s32 %s229, 1
      %p233 = scmp.eq.s32.totalorder %s22, 1
      %p234 = scmp.ne.s32.totalorder %s229, %s231
      %p235 = scmp.eq.s32.totalorder %s22, 0
      %p236 = por %p234, %p235
      %p237 = scmp.ne.s32.totalorder %s229, %s231
      %p238 = scmp.eq.s32.totalorder %s27, 1
      %p239 = por %p237, %p238
      %p240 = scmp.ne.s32.totalorder %s231, %s232
      %p241 = scmp.eq.s32.totalorder %s27, 0
      %p242 = por %p240, %p241
      %p243 = scmp.ne.s32.totalorder %s231, %s232
      %p244 = scmp.eq.s32.totalorder %s28, 1
      %p245 = por %p243, %p244
      %p247 = scmp.ne.s32.totalorder %s232, %s246
      %p248 = scmp.eq.s32.totalorder %s28, 0
      %p249 = por %p247, %p248
      %s251 = sadd.s32 %s250, 1
      %p254 = scmp.eq.s32.totalorder %s22, 1
      %p255 = scmp.ne.s32.totalorder %s250, %s252
      %p256 = scmp.eq.s32.totalorder %s22, 0
      %p257 = por %p255, %p256
      %p258 = scmp.ne.s32.totalorder %s250, %s252
      %p259 = scmp.eq.s32.totalorder %s27, 1
      %p260 = por %p258, %p259
      %p261 = scmp.ne.s32.totalorder %s252, %s253
      %p262 = scmp.eq.s32.totalorder %s27, 0
      %p263 = por %p261, %p262
      %p264 = scmp.ne.s32.totalorder %s252, %s253
      %p265 = scmp.eq.s32.totalorder %s28, 1
      %p266 = por %p264, %p265
      %p268 = scmp.ne.s32.totalorder %s253, %s267
      %p269 = scmp.eq.s32.totalorder %s28, 0
      %p270 = por %p268, %p269
      %s272 = sadd.s32 %s271, 1
      %p275 = scmp.eq.s32.totalorder %s22, 1
      %p276 = scmp.ne.s32.totalorder %s271, %s273
      %p277 = scmp.eq.s32.totalorder %s22, 0
      %p278 = por %p276, %p277
      %p279 = scmp.ne.s32.totalorder %s271, %s273
      %p280 = scmp.eq.s32.totalorder %s27, 1
      %p281 = por %p279, %p280
      %p282 = scmp.ne.s32.totalorder %s273, %s274
      %p283 = scmp.eq.s32.totalorder %s27, 0
      %p284 = por %p282, %p283
      %p285 = scmp.ne.s32.totalorder %s273, %s274
      %p286 = scmp.eq.s32.totalorder %s28, 1
      %p287 = por %p285, %p286
      %p289 = scmp.ne.s32.totalorder %s274, %s288
      %p290 = scmp.eq.s32.totalorder %s28, 0
      %p291 = por %p289, %p290
      %s293 = sadd.s32 %s292, 1
      %p296 = scmp.eq.s32.totalorder %s22, 1
      %p297 = scmp.ne.s32.totalorder %s292, %s294
      %p298 = scmp.eq.s32.totalorder %s22, 0
      %p299 = por %p297, %p298
      %p300 = scmp.ne.s32.totalorder %s292, %s294
      %p301 = scmp.eq.s32.totalorder %s27, 1
      %p302 = por %p300, %p301
      %p303 = scmp.ne.s32.totalorder %s294, %s295
      %p304 = scmp.eq.s32.totalorder %s27, 0
      %p305 = por %p303, %p304
      %p306 = scmp.ne.s32.totalorder %s294, %s295
      %p307 = scmp.eq.s32.totalorder %s28, 1
      %p308 = por %p306, %p307
      %p310 = scmp.ne.s32.totalorder %s295, %s309
      %p311 = scmp.eq.s32.totalorder %s28, 0
      %p312 = por %p310, %p311
      %s313 = ssub.s32 %s22, %s29
      %p314 = scmp.eq.s32.totalorder %s313, 0
      %s316 = sadd.s32 %s315, 1
      %s317 = scalar_select %p314, %s315, %s316
      %p320 = pneg %p314
      %p321 = scmp.eq.s32.totalorder %s22, 1
      %p322 = por %p320, %p321
      %p323 = scmp.ne.s32.totalorder %s315, %s318
      %p324 = scmp.eq.s32.totalorder %s22, 0
      %p325 = por %p323, %p324
      %p326 = scmp.ne.s32.totalorder %s315, %s318
      %p327 = scmp.eq.s32.totalorder %s27, 1
      %p328 = por %p326, %p327
      %p329 = scmp.ne.s32.totalorder %s318, %s319
      %p330 = scmp.eq.s32.totalorder %s27, 0
      %p331 = por %p329, %p330
      %p332 = scmp.ne.s32.totalorder %s318, %s319
      %p333 = scmp.eq.s32.totalorder %s28, 1
      %p334 = por %p332, %p333
      %p336 = scmp.ne.s32.totalorder %s319, %s335
      %p337 = scmp.eq.s32.totalorder %s28, 0
      %p338 = por %p336, %p337
      %p339 = scmp.le.s32.totalorder 1, %s22
      %p340 = scmp.lt.s32.totalorder %s22, 3
      %p341 = pnand %p339, %p340
      %p342 = pneg %p341
      // Predicated region
      $region9: #{tpu_custom_call.1} parent=5 // pred_check
        _
      $region10: #{tpu_custom_call.1} parent=5 // pred_check_branch
        %344 = sbr.rel (%p341) target = $region12
      $region11: #{tpu_custom_call.1} parent=5 // pred_region
        %s345 = ssub.s32 %s22, 1
        // Predicated region
        $region13: #{tpu_custom_call.1} parent=11 // pred_check
          %p346 = pneg %p95
        $region14: #{tpu_custom_call.1} parent=11 // pred_check_branch
          %348 = sbr.rel (%p346) target = $region16
        $region15: #{tpu_custom_call.1} parent=11 // pred_region
          _
        $region16: #{tpu_custom_call.1} parent=11 // pred_fallthru
          _
        // Predicated region
        $region17: #{tpu_custom_call.1} parent=11 // pred_check
          %p349 = pneg %p116
        $region18: #{tpu_custom_call.1} parent=11 // pred_check_branch
          %351 = sbr.rel (%p349) target = $region20
        $region19: #{tpu_custom_call.1} parent=11 // pred_region
          _
        $region20: #{tpu_custom_call.1} parent=11 // pred_fallthru
          _
        // Predicated region
        $region21: #{tpu_custom_call.1} parent=11 // pred_check
          %p352 = pneg %p137
        $region22: #{tpu_custom_call.1} parent=11 // pred_check_branch
          %354 = sbr.rel (%p352) target = $region24
        $region23: #{tpu_custom_call.1} parent=11 // pred_region
          _
        $region24: #{tpu_custom_call.1} parent=11 // pred_fallthru
          _
        // Predicated region
        $region25: #{tpu_custom_call.1} parent=11 // pred_check
          %p355 = pneg %p158
        $region26: #{tpu_custom_call.1} parent=11 // pred_check_branch
          %357 = sbr.rel (%p355) target = $region28
        $region27: #{tpu_custom_call.1} parent=11 // pred_region
          _
        $region28: #{tpu_custom_call.1} parent=11 // pred_fallthru
          _
        // Predicated region
        $region29: #{tpu_custom_call.1} parent=11 // pred_check
          %p358 = pneg %p179
        $region30: #{tpu_custom_call.1} parent=11 // pred_check_branch
          %360 = sbr.rel (%p358) target = $region32
        $region31: #{tpu_custom_call.1} parent=11 // pred_region
          _
        $region32: #{tpu_custom_call.1} parent=11 // pred_fallthru
          _
        // Predicated region
        $region33: #{tpu_custom_call.1} parent=11 // pred_check
          %p361 = pneg %p200
        $region34: #{tpu_custom_call.1} parent=11 // pred_check_branch
          %363 = sbr.rel (%p361) target = $region36
        $region35: #{tpu_custom_call.1} parent=11 // pred_region
          _
        $region36: #{tpu_custom_call.1} parent=11 // pred_fallthru
          _
        // Predicated region
        $region37: #{tpu_custom_call.1} parent=11 // pred_check
          %p364 = pneg %p221
        $region38: #{tpu_custom_call.1} parent=11 // pred_check_branch
          %366 = sbr.rel (%p364) target = $region40
        $region39: #{tpu_custom_call.1} parent=11 // pred_region
          _
        $region40: #{tpu_custom_call.1} parent=11 // pred_fallthru
          _
        // Predicated region
        $region41: #{tpu_custom_call.1} parent=11 // pred_check
          %p367 = pneg %p242
        $region42: #{tpu_custom_call.1} parent=11 // pred_check_branch
          %369 = sbr.rel (%p367) target = $region44
        $region43: #{tpu_custom_call.1} parent=11 // pred_region
          _
        $region44: #{tpu_custom_call.1} parent=11 // pred_fallthru
          _
        // Predicated region
        $region45: #{tpu_custom_call.1} parent=11 // pred_check
          %p370 = pneg %p263
        $region46: #{tpu_custom_call.1} parent=11 // pred_check_branch
          %372 = sbr.rel (%p370) target = $region48
        $region47: #{tpu_custom_call.1} parent=11 // pred_region
          _
        $region48: #{tpu_custom_call.1} parent=11 // pred_fallthru
          _
        // Predicated region
        $region49: #{tpu_custom_call.1} parent=11 // pred_check
          %p373 = pneg %p284
        $region50: #{tpu_custom_call.1} parent=11 // pred_check_branch
          %375 = sbr.rel (%p373) target = $region52
        $region51: #{tpu_custom_call.1} parent=11 // pred_region
          _
        $region52: #{tpu_custom_call.1} parent=11 // pred_fallthru
          _
        // Predicated region
        $region53: #{tpu_custom_call.1} parent=11 // pred_check
          %p376 = pneg %p305
        $region54: #{tpu_custom_call.1} parent=11 // pred_check_branch
          %378 = sbr.rel (%p376) target = $region56
        $region55: #{tpu_custom_call.1} parent=11 // pred_region
          _
        $region56: #{tpu_custom_call.1} parent=11 // pred_fallthru
          _
      $region12: #{tpu_custom_call.1} parent=5 // pred_fallthru
        _
      %p379 = scmp.lt.s32.totalorder %s22, 2
      // Predicated region
      $region57: #{tpu_custom_call.1} parent=5 // pred_check
        %p380 = pneg %p379
      $region58: #{tpu_custom_call.1} parent=5 // pred_check_branch
        %382 = sbr.rel (%p380) target = $region60
      $region59: #{tpu_custom_call.1} parent=5 // pred_region
        // Predicated region
        $region61: #{tpu_custom_call.1} parent=59 // pred_check
          %p383 = pneg %p42
        $region62: #{tpu_custom_call.1} parent=59 // pred_check_branch
          %385 = sbr.rel (%p383) target = $region64
        $region63: #{tpu_custom_call.1} parent=59 // pred_region
          %p386 = scmp.lt.s32.totalorder %s22, 1
          %s387 = scalar_select %p386, %s22, 1
          %s388 = smul.addr %s387, 8
          %s389 = smul.addr %s388, 8
          %s390 = scalar_lea.vmem %s0, %s389
        $region64: #{tpu_custom_call.1} parent=59 // pred_fallthru
          _
        // Predicated region
        $region65: #{tpu_custom_call.1} parent=59 // pred_check
          %p391 = pneg %p68
        $region66: #{tpu_custom_call.1} parent=59 // pred_check_branch
          %393 = sbr.rel (%p391) target = $region68
        $region67: #{tpu_custom_call.1} parent=59 // pred_region
          %p394 = scmp.lt.s32.totalorder %s22, 1
          %s395 = scalar_select %p394, %s22, 1
          %s396 = smul.addr %s395, 32
          %s397 = smul.addr %s396, 8
          %s398 = scalar_lea.vmem %s1, %s397
        $region68: #{tpu_custom_call.1} parent=59 // pred_fallthru
          _
      $region60: #{tpu_custom_call.1} parent=5 // pred_fallthru
        _
      %p399 = scmp.le.s32.totalorder 1, %s22
      %p400 = scmp.lt.s32.totalorder %s22, 3
      %p401 = pnand %p399, %p400
      %p402 = pneg %p401
      // Predicated region
      $region69: #{tpu_custom_call.1} parent=5 // pred_check
        _
      $region70: #{tpu_custom_call.1} parent=5 // pred_check_branch
        %404 = sbr.rel (%p401) target = $region72
      $region71: #{tpu_custom_call.1} parent=5 // pred_region
        %s405 = ssub.s32 %s22, 1
        %p406 = scmp.lt.s32.totalorder %s27, 1
        %s407 = scalar_select %p406, %s27, 1
        %s408 = smul.addr %s407, 8
        %s409 = smul.addr %s408, 8
        %s410 = scalar_lea.vmem %s0, %s409
        %p411 = pneg %p48
        %p412 = pneg %p45
        %p413 = scmp.lt.s32.totalorder %s27, 1
        %s414 = scalar_select %p413, %s27, 1
        %s415 = smul.addr %s414, 32
        %s416 = smul.addr %s415, 8
        %s417 = scalar_lea.vmem %s1, %s416
        %p418 = pneg %p74
        %p419 = pneg %p71
        %p420 = pneg %p95
        %p421 = pneg %p92
        %p422 = pneg %p116
        %p423 = pneg %p113
        %p424 = pneg %p137
        %p425 = pneg %p134
        %p426 = pneg %p158
        %p427 = pneg %p155
        %p428 = pneg %p179
        %p429 = pneg %p176
        %p430 = pneg %p200
        %p431 = pneg %p197
        %p432 = pneg %p221
        %p433 = pneg %p218
        %p434 = pneg %p242
        %p435 = pneg %p239
        %p436 = pneg %p263
        %p437 = pneg %p260
        %p438 = pneg %p284
        %p439 = pneg %p281
        %p440 = pneg %p305
        %p441 = pneg %p302
        %p442 = pneg %p331
        %p443 = pneg %p328
        %s444 = sand.u32 %s318, 1
        %s445 = scalar_lea.sflag [#allocation5], %s444
        %s446 = sand.u32 %s318, 1
        %s447 = smul.addr %s446, 8
        %s448 = scalar_lea.vmem [#allocation4], %s447
        %p449 = scmp.lt.s32.totalorder %s27, 1
        %s450 = scalar_select %p449, %s27, 1
        %s451 = smul.addr %s450, 8
        %s452 = smul.addr %s451, 8
        %s453 = scalar_lea.vmem %s0, %s452
        %p454 = scmp.lt.s32.totalorder %s27, 1
        %s455 = scalar_select %p454, %s27, 1
        %s456 = smul.addr %s455, 32
        %s457 = smul.addr %s456, 8
        %s458 = scalar_lea.vmem %s1, %s457
        %vm459 = vcmask 64512
        %460 = vst.msk [vmem:[#allocation2] sm:$0xff] %vm459, 0.0
        %461 = vst.msk [vmem:[#allocation2 + $0x8] sm:$0xff] %vm459, 0.0
        %vm462 = vcmask 58368
        %463 = vst.msk [vmem:[#allocation2 + $0x10] sm:$0x3] %vm462, 0.0
        %s464 = scalar_lea.vmem [#allocation2], 408
        %465 = vst.msk [vmem:[%s464] sm:$0xff] %vm459, 0.0
        %466 = vst.msk [vmem:[%s464 + $0x8] sm:$0xff] %vm459, 0.0
        %467 = vst.msk [vmem:[%s464 + $0x10] sm:$0x3] %vm462, 0.0
        %vm468 = vcmask 57344
        %469 = vst.msk [vmem:[#allocation2] sm:$0x1] %vm468, 0.0
        %470 = vst.msk [vmem:[#allocation2 + $0x18] sm:$0x1] %vm468, 0.0
        %471 = vst.msk [vmem:[#allocation2 + $0x30] sm:$0x1] %vm468, 0.0
        %472 = vst.msk [vmem:[#allocation2 + $0x48] sm:$0x1] %vm468, 0.0
        %473 = vst.msk [vmem:[#allocation2 + $0x60] sm:$0x1] %vm468, 0.0
        %474 = vst.msk [vmem:[#allocation2 + $0x78] sm:$0x1] %vm468, 0.0
        %475 = vst.msk [vmem:[#allocation2 + $0x90] sm:$0x1] %vm468, 0.0
        %476 = vst.msk [vmem:[#allocation2 + $0xa8] sm:$0x1] %vm468, 0.0
        %477 = vst.msk [vmem:[#allocation2 + $0xc0] sm:$0x1] %vm468, 0.0
        %478 = vst.msk [vmem:[#allocation2 + $0xd8] sm:$0x1] %vm468, 0.0
        %479 = vst.msk [vmem:[#allocation2 + $0xf0] sm:$0x1] %vm468, 0.0
        %480 = vst.msk [vmem:[#allocation2 + $0x108] sm:$0x1] %vm468, 0.0
        %481 = vst.msk [vmem:[#allocation2 + $0x120] sm:$0x1] %vm468, 0.0
        %482 = vst.msk [vmem:[#allocation2 + $0x138] sm:$0x1] %vm468, 0.0
        %483 = vst.msk [vmem:[#allocation2 + $0x150] sm:$0x1] %vm468, 0.0
        %484 = vst.msk [vmem:[#allocation2 + $0x168] sm:$0x1] %vm468, 0.0
        %485 = vst.msk [vmem:[#allocation2 + $0x180] sm:$0x1] %vm468, 0.0
        %486 = vst.msk [vmem:[#allocation2 + $0x198] sm:$0x1] %vm468, 0.0
        %487 = vst.msk [vmem:[#allocation2 + $0x11] sm:$0x1] %vm468, 0.0
        %488 = vst.msk [vmem:[#allocation2 + $0x29] sm:$0x1] %vm468, 0.0
        %489 = vst.msk [vmem:[#allocation2 + $0x41] sm:$0x1] %vm468, 0.0
        %490 = vst.msk [vmem:[#allocation2 + $0x59] sm:$0x1] %vm468, 0.0
        %491 = vst.msk [vmem:[#allocation2 + $0x71] sm:$0x1] %vm468, 0.0
        %492 = vst.msk [vmem:[#allocation2 + $0x89] sm:$0x1] %vm468, 0.0
        %493 = vst.msk [vmem:[#allocation2 + $0xa1] sm:$0x1] %vm468, 0.0
        %494 = vst.msk [vmem:[#allocation2 + $0xb9] sm:$0x1] %vm468, 0.0
        %495 = vst.msk [vmem:[#allocation2 + $0xd1] sm:$0x1] %vm468, 0.0
        %496 = vst.msk [vmem:[#allocation2 + $0xe9] sm:$0x1] %vm468, 0.0
        %497 = vst.msk [vmem:[#allocation2 + $0x101] sm:$0x1] %vm468, 0.0
        %498 = vst.msk [vmem:[#allocation2 + $0x119] sm:$0x1] %vm468, 0.0
        %499 = vst.msk [vmem:[#allocation2 + $0x131] sm:$0x1] %vm468, 0.0
        %500 = vst.msk [vmem:[#allocation2 + $0x149] sm:$0x1] %vm468, 0.0
        %501 = vst.msk [vmem:[#allocation2 + $0x161] sm:$0x1] %vm468, 0.0
        %502 = vst.msk [vmem:[#allocation2 + $0x179] sm:$0x1] %vm468, 0.0
        %503 = vst.msk [vmem:[#allocation2 + $0x191] sm:$0x1] %vm468, 0.0
        %504 = vst.msk [vmem:[#allocation2 + $0x1a9] sm:$0x1] %vm468, 0.0
        %vm505 = vcmask 31744
        %506 = vst.msk [vmem:[#allocation3] sm:$0xff] %vm505, 0.0
        %507 = vst.msk [vmem:[#allocation3 + $0x8] sm:$0xff] %vm505, 0.0
        %vm508 = vcmask 25600
        %509 = vst.msk [vmem:[#allocation3 + $0x10] sm:$0x3] %vm508, 0.0
        %s510 = scalar_lea.vmem [#allocation3], 408
        %511 = vst.msk [vmem:[%s510] sm:$0xff] %vm505, 0.0
        %512 = vst.msk [vmem:[%s510 + $0x8] sm:$0xff] %vm505, 0.0
        %513 = vst.msk [vmem:[%s510 + $0x10] sm:$0x3] %vm508, 0.0
        %vm514 = vcmask 24576
        %515 = vst.msk [vmem:[#allocation3] sm:$0x1] %vm514, 0.0
        %516 = vst.msk [vmem:[#allocation3 + $0x18] sm:$0x1] %vm514, 0.0
        %517 = vst.msk [vmem:[#allocation3 + $0x30] sm:$0x1] %vm514, 0.0
        %518 = vst.msk [vmem:[#allocation3 + $0x48] sm:$0x1] %vm514, 0.0
        %519 = vst.msk [vmem:[#allocation3 + $0x60] sm:$0x1] %vm514, 0.0
        %520 = vst.msk [vmem:[#allocation3 + $0x78] sm:$0x1] %vm514, 0.0
        %521 = vst.msk [vmem:[#allocation3 + $0x90] sm:$0x1] %vm514, 0.0
        %522 = vst.msk [vmem:[#allocation3 + $0xa8] sm:$0x1] %vm514, 0.0
        %523 = vst.msk [vmem:[#allocation3 + $0xc0] sm:$0x1] %vm514, 0.0
        %524 = vst.msk [vmem:[#allocation3 + $0xd8] sm:$0x1] %vm514, 0.0
        %525 = vst.msk [vmem:[#allocation3 + $0xf0] sm:$0x1] %vm514, 0.0
        %526 = vst.msk [vmem:[#allocation3 + $0x108] sm:$0x1] %vm514, 0.0
        %527 = vst.msk [vmem:[#allocation3 + $0x120] sm:$0x1] %vm514, 0.0
        %528 = vst.msk [vmem:[#allocation3 + $0x138] sm:$0x1] %vm514, 0.0
        %529 = vst.msk [vmem:[#allocation3 + $0x150] sm:$0x1] %vm514, 0.0
        %530 = vst.msk [vmem:[#allocation3 + $0x168] sm:$0x1] %vm514, 0.0
        %531 = vst.msk [vmem:[#allocation3 + $0x180] sm:$0x1] %vm514, 0.0
        %532 = vst.msk [vmem:[#allocation3 + $0x198] sm:$0x1] %vm514, 0.0
        %533 = vst.msk [vmem:[#allocation3 + $0x11] sm:$0x1] %vm514, 0.0
        %534 = vst.msk [vmem:[#allocation3 + $0x29] sm:$0x1] %vm514, 0.0
        %535 = vst.msk [vmem:[#allocation3 + $0x41] sm:$0x1] %vm514, 0.0
        %536 = vst.msk [vmem:[#allocation3 + $0x59] sm:$0x1] %vm514, 0.0
        %537 = vst.msk [vmem:[#allocation3 + $0x71] sm:$0x1] %vm514, 0.0
        %538 = vst.msk [vmem:[#allocation3 + $0x89] sm:$0x1] %vm514, 0.0
        %539 = vst.msk [vmem:[#allocation3 + $0xa1] sm:$0x1] %vm514, 0.0
        %540 = vst.msk [vmem:[#allocation3 + $0xb9] sm:$0x1] %vm514, 0.0
        %541 = vst.msk [vmem:[#allocation3 + $0xd1] sm:$0x1] %vm514, 0.0
        %542 = vst.msk [vmem:[#allocation3 + $0xe9] sm:$0x1] %vm514, 0.0
        %543 = vst.msk [vmem:[#allocation3 + $0x101] sm:$0x1] %vm514, 0.0
        %544 = vst.msk [vmem:[#allocation3 + $0x119] sm:$0x1] %vm514, 0.0
        %545 = vst.msk [vmem:[#allocation3 + $0x131] sm:$0x1] %vm514, 0.0
        %546 = vst.msk [vmem:[#allocation3 + $0x149] sm:$0x1] %vm514, 0.0
        %547 = vst.msk [vmem:[#allocation3 + $0x161] sm:$0x1] %vm514, 0.0
        %548 = vst.msk [vmem:[#allocation3 + $0x179] sm:$0x1] %vm514, 0.0
        %549 = vst.msk [vmem:[#allocation3 + $0x191] sm:$0x1] %vm514, 0.0
        %550 = vst.msk [vmem:[#allocation3 + $0x1a9] sm:$0x1] %vm514, 0.0
        %v551 = vld [vmem:[%s453] sm:$0xff]
        %v552 = vld [vmem:[%s453 + $0x8] sm:$0xff]
        %v553 = vld [vmem:[%s453 + $0x10] sm:$0xff]
        %v554 = vld [vmem:[%s453 + $0x18] sm:$0xff]
        %v555 = vld [vmem:[%s453 + $0x20] sm:$0xff]
        %v556 = vld [vmem:[%s453 + $0x28] sm:$0xff]
        %v557 = vld [vmem:[%s453 + $0x30] sm:$0xff]
        %v558 = vld [vmem:[%s453 + $0x38] sm:$0xff]
        %v559 = vld [vmem:[%s2] sm:$0xff]
        %v560 = vld [vmem:[%s3] sm:$0x1]
        %v562 = vlaneseq
        %v563 = vshrl.u32 %v562, 7
        %v564 = vsub.s32 0, %v563
        %v565 = vrot.slane %v560, %v564
        %v568 = vsel %vm459, %v551, 0
        %v571 = vsel %vm459, %v552, 0
        %v574 = vsel %vm459, %v553, 0
        %v577 = vsel %vm459, %v554, 0
        %v580 = vsel %vm459, %v555, 0
        %v583 = vsel %vm459, %v556, 0
        %v586 = vsel %vm459, %v557, 0
        %v589 = vsel %vm459, %v558, 0
        %591 = vmatprep.subr.mxu0 0.0
        %592 = vmatpush1.msra.mxu0 0.0
        %593 = vmatprep.subr.mxu0 0.0
        %594 = vmatpush1.msra.mxu0 0.0
        %595 = vmatprep.subr.mxu0 0.0
        %596 = vmatpush1.msra.mxu0 0.0
        %597 = vmatprep.subr.mxu0 0.0
        %598 = vmatpush1.msra.mxu0 0.0
        %599 = vmatprep.subr.mxu0 0.0
        %600 = vmatpush1.msra.mxu0 0.0
        %601 = vmatprep.subr.mxu0 0.0
        %602 = vmatpush1.msra.mxu0 0.0
        %603 = vmatprep.subr.mxu0 0.0
        %604 = vmatpush1.msra.mxu0 0.0
        %605 = vmatprep.subr.mxu0 0.0
        %606 = vmatpush1.msra.mxu0 0.0
        %607 = vmatprep.subr.mxu0 0.0
        %608 = vmatpush1.msra.mxu0 0.0
        %609 = vmatprep.subr.mxu0 0.0
        %610 = vmatpush1.msra.mxu0 0.0
        %611 = vmatprep.subr.mxu0 0.0
        %612 = vmatpush1.msra.mxu0 0.0
        %613 = vmatprep.subr.mxu0 0.0
        %614 = vmatpush1.msra.mxu0 0.0
        %615 = vmatprep.subr.mxu0 0.0
        %616 = vmatpush1.msra.mxu0 0.0
        %617 = vmatprep.subr.mxu0 0.0
        %618 = vmatpush1.msra.mxu0 0.0
        %619 = vmatprep.subr.mxu0 0.0
        %620 = vmatpush1.msra.mxu0 0.0
        %621 = vmatprep.subr.mxu0 0.0
        %622 = vmatpush1.msra.mxu0 %v559
        %623 = vmatprep.subr.mxu0 0.0
        %624 = vmatpush2.msra.mxu0 0.0
        %625 = vmatprep.subr.mxu0 0.0
        %626 = vmatpush2.msra.mxu0 0.0
        %627 = vmatprep.subr.mxu0 0.0
        %628 = vmatpush2.msra.mxu0 0.0
        %629 = vmatprep.subr.mxu0 0.0
        %630 = vmatpush2.msra.mxu0 0.0
        %631 = vmatprep.subr.mxu0 0.0
        %632 = vmatpush2.msra.mxu0 0.0
        %633 = vmatprep.subr.mxu0 0.0
        %634 = vmatpush2.msra.mxu0 0.0
        %635 = vmatprep.subr.mxu0 0.0
        %636 = vmatpush2.msra.mxu0 0.0
        %637 = vmatprep.subr.mxu0 0.0
        %638 = vmatpush2.msra.mxu0 0.0
        %639 = vmatprep.subr.mxu0 0.0
        %640 = vmatpush2.msra.mxu0 0.0
        %641 = vmatprep.subr.mxu0 0.0
        %642 = vmatpush2.msra.mxu0 0.0
        %643 = vmatprep.subr.mxu0 0.0
        %644 = vmatpush2.msra.mxu0 0.0
        %645 = vmatprep.subr.mxu0 0.0
        %646 = vmatpush2.msra.mxu0 0.0
        %647 = vmatprep.subr.mxu0 0.0
        %648 = vmatpush2.msra.mxu0 0.0
        %649 = vmatprep.subr.mxu0 0.0
        %650 = vmatpush2.msra.mxu0 0.0
        %651 = vmatprep.subr.mxu0 0.0
        %652 = vmatpush2.msra.mxu0 0.0
        %653 = vmatprep.subr.mxu0 0.0
        %654 = vmatpush2.msra.mxu0 0.0
        %655 = vmatprep.mubr.f32.mxu0 0.0
        %656 = vmatmul.mubr.f32.gmra.mxu0 %v568
        %v657 = vpop.f32.mrf.mxu0
        %v658 = vadd.f32 %v565, %v657
        %v659 = vpop.f32.mrf.mxu0
        %660 = vmatprep.mubr.f32.mxu0 0.0
        %661 = vmatmul.mubr.f32.gmra.mxu0 %v571
        %v662 = vpop.f32.mrf.mxu0
        %v663 = vadd.f32 %v565, %v662
        %v664 = vpop.f32.mrf.mxu0
        %665 = vmatprep.mubr.f32.mxu0 0.0
        %666 = vmatmul.mubr.f32.gmra.mxu0 %v574
        %v667 = vpop.f32.mrf.mxu0
        %v668 = vadd.f32 %v565, %v667
        %v669 = vpop.f32.mrf.mxu0
        %670 = vmatprep.mubr.f32.mxu0 0.0
        %671 = vmatmul.mubr.f32.gmra.mxu0 %v577
        %v672 = vpop.f32.mrf.mxu0
        %v673 = vadd.f32 %v565, %v672
        %v674 = vpop.f32.mrf.mxu0
        %675 = vmatprep.mubr.f32.mxu0 0.0
        %676 = vmatmul.mubr.f32.gmra.mxu0 %v580
        %v677 = vpop.f32.mrf.mxu0
        %v678 = vadd.f32 %v565, %v677
        %v679 = vpop.f32.mrf.mxu0
        %680 = vmatprep.mubr.f32.mxu0 0.0
        %681 = vmatmul.mubr.f32.gmra.mxu0 %v583
        %v682 = vpop.f32.mrf.mxu0
        %v683 = vadd.f32 %v565, %v682
        %v684 = vpop.f32.mrf.mxu0
        %685 = vmatprep.mubr.f32.mxu0 0.0
        %686 = vmatmul.mubr.f32.gmra.mxu0 %v586
        %v687 = vpop.f32.mrf.mxu0
        %v688 = vadd.f32 %v565, %v687
        %v689 = vpop.f32.mrf.mxu0
        %690 = vmatprep.mubr.f32.mxu0 0.0
        %691 = vmatmul.mubr.f32.gmra.mxu0 %v589
        %v692 = vpop.f32.mrf.mxu0
        %v693 = vadd.f32 %v565, %v692
        %v694 = vpop.f32.mrf.mxu0
        %695 = vdwg.mxu0
        %v704 = vcombine.high %v658, %v658
        %v706 = vunpack.c.l.s4 1966171168
        %v707 = vunpack.c.0.s8 %v706
        %v708 = vlaneseq
        %v709 = vshrl.u32 %v708, 7
        %v710 = vsub.s32 %v707, %v709
        %v711 = vrot.slane %v658, %v710
        %v713 = vunpack.c.l.s4 1966171168
        %v714 = vunpack.c.0.s8 %v713
        %v715 = vlaneseq
        %v716 = vshrl.u32 %v715, 7
        %v717 = vsub.s32 %v714, %v716
        %v718 = vrot.slane %v704, %v717
        %v719 = vcombine.high %v711, %v711
        %v720 = vcombine.high %v718, %v718
        %v722 = vunpack.c.l.s4 1966171168
        %v723 = vunpack.c.0.s8 %v722
        %v724 = vlaneseq
        %v725 = vshrl.u32 %v724, 7
        %v726 = vsub.s32 %v723, %v725
        %v727 = vrot.slane %v711, %v726
        %v729 = vunpack.c.l.s4 1966171168
        %v730 = vunpack.c.0.s8 %v729
        %v731 = vlaneseq
        %v732 = vshrl.u32 %v731, 7
        %v733 = vsub.s32 %v730, %v732
        %v734 = vrot.slane %v718, %v733
        %v736 = vunpack.c.l.s4 1966171168
        %v737 = vunpack.c.0.s8 %v736
        %v738 = vlaneseq
        %v739 = vshrl.u32 %v738, 7
        %v740 = vsub.s32 %v737, %v739
        %v741 = vrot.slane %v719, %v740
        %v743 = vunpack.c.l.s4 1966171168
        %v744 = vunpack.c.0.s8 %v743
        %v745 = vlaneseq
        %v746 = vshrl.u32 %v745, 7
        %v747 = vsub.s32 %v744, %v746
        %v748 = vrot.slane %v720, %v747
        %v749 = vcombine.high %v727, %v727
        %v750 = vcombine.high %v734, %v734
        %v751 = vcombine.high %v741, %v741
        %v752 = vcombine.high %v748, %v748
        %v753 = vcombine.high %v663, %v663
        %v755 = vunpack.c.l.s4 1966171168
        %v756 = vunpack.c.0.s8 %v755
        %v757 = vlaneseq
        %v758 = vshrl.u32 %v757, 7
        %v759 = vsub.s32 %v756, %v758
        %v760 = vrot.slane %v663, %v759
        %v762 = vunpack.c.l.s4 1966171168
        %v763 = vunpack.c.0.s8 %v762
        %v764 = vlaneseq
        %v765 = vshrl.u32 %v764, 7
        %v766 = vsub.s32 %v763, %v765
        %v767 = vrot.slane %v753, %v766
        %v768 = vcombine.high %v760, %v760
        %v769 = vcombine.high %v767, %v767
        %v771 = vunpack.c.l.s4 1966171168
        %v772 = vunpack.c.0.s8 %v771
        %v773 = vlaneseq
        %v774 = vshrl.u32 %v773, 7
        %v775 = vsub.s32 %v772, %v774
        %v776 = vrot.slane %v760, %v775
        %v778 = vunpack.c.l.s4 1966171168
        %v779 = vunpack.c.0.s8 %v778
        %v780 = vlaneseq
        %v781 = vshrl.u32 %v780, 7
        %v782 = vsub.s32 %v779, %v781
        %v783 = vrot.slane %v767, %v782
        %v785 = vunpack.c.l.s4 1966171168
        %v786 = vunpack.c.0.s8 %v785
        %v787 = vlaneseq
        %v788 = vshrl.u32 %v787, 7
        %v789 = vsub.s32 %v786, %v788
        %v790 = vrot.slane %v768, %v789
        %v792 = vunpack.c.l.s4 1966171168
        %v793 = vunpack.c.0.s8 %v792
        %v794 = vlaneseq
        %v795 = vshrl.u32 %v794, 7
        %v796 = vsub.s32 %v793, %v795
        %v797 = vrot.slane %v769, %v796
        %v798 = vcombine.high %v776, %v776
        %v799 = vcombine.high %v783, %v783
        %v800 = vcombine.high %v790, %v790
        %v801 = vcombine.high %v797, %v797
        %v802 = vcombine.high %v668, %v668
        %v804 = vunpack.c.l.s4 1966171168
        %v805 = vunpack.c.0.s8 %v804
        %v806 = vlaneseq
        %v807 = vshrl.u32 %v806, 7
        %v808 = vsub.s32 %v805, %v807
        %v809 = vrot.slane %v668, %v808
        %v811 = vunpack.c.l.s4 1966171168
        %v812 = vunpack.c.0.s8 %v811
        %v813 = vlaneseq
        %v814 = vshrl.u32 %v813, 7
        %v815 = vsub.s32 %v812, %v814
        %v816 = vrot.slane %v802, %v815
        %v817 = vcombine.high %v809, %v809
        %v818 = vcombine.high %v816, %v816
        %v820 = vunpack.c.l.s4 1966171168
        %v821 = vunpack.c.0.s8 %v820
        %v822 = vlaneseq
        %v823 = vshrl.u32 %v822, 7
        %v824 = vsub.s32 %v821, %v823
        %v825 = vrot.slane %v809, %v824
        %v827 = vunpack.c.l.s4 1966171168
        %v828 = vunpack.c.0.s8 %v827
        %v829 = vlaneseq
        %v830 = vshrl.u32 %v829, 7
        %v831 = vsub.s32 %v828, %v830
        %v832 = vrot.slane %v816, %v831
        %v834 = vunpack.c.l.s4 1966171168
        %v835 = vunpack.c.0.s8 %v834
        %v836 = vlaneseq
        %v837 = vshrl.u32 %v836, 7
        %v838 = vsub.s32 %v835, %v837
        %v839 = vrot.slane %v817, %v838
        %v841 = vunpack.c.l.s4 1966171168
        %v842 = vunpack.c.0.s8 %v841
        %v843 = vlaneseq
        %v844 = vshrl.u32 %v843, 7
        %v845 = vsub.s32 %v842, %v844
        %v846 = vrot.slane %v818, %v845
        %v847 = vcombine.high %v825, %v825
        %v848 = vcombine.high %v832, %v832
        %v849 = vcombine.high %v839, %v839
        %v850 = vcombine.high %v846, %v846
        %v851 = vcombine.high %v673, %v673
        %v853 = vunpack.c.l.s4 1966171168
        %v854 = vunpack.c.0.s8 %v853
        %v855 = vlaneseq
        %v856 = vshrl.u32 %v855, 7
        %v857 = vsub.s32 %v854, %v856
        %v858 = vrot.slane %v673, %v857
        %v860 = vunpack.c.l.s4 1966171168
        %v861 = vunpack.c.0.s8 %v860
        %v862 = vlaneseq
        %v863 = vshrl.u32 %v862, 7
        %v864 = vsub.s32 %v861, %v863
        %v865 = vrot.slane %v851, %v864
        %v866 = vcombine.high %v858, %v858
        %v867 = vcombine.high %v865, %v865
        %v869 = vunpack.c.l.s4 1966171168
        %v870 = vunpack.c.0.s8 %v869
        %v871 = vlaneseq
        %v872 = vshrl.u32 %v871, 7
        %v873 = vsub.s32 %v870, %v872
        %v874 = vrot.slane %v858, %v873
        %v876 = vunpack.c.l.s4 1966171168
        %v877 = vunpack.c.0.s8 %v876
        %v878 = vlaneseq
        %v879 = vshrl.u32 %v878, 7
        %v880 = vsub.s32 %v877, %v879
        %v881 = vrot.slane %v865, %v880
        %v883 = vunpack.c.l.s4 1966171168
        %v884 = vunpack.c.0.s8 %v883
        %v885 = vlaneseq
        %v886 = vshrl.u32 %v885, 7
        %v887 = vsub.s32 %v884, %v886
        %v888 = vrot.slane %v866, %v887
        %v890 = vunpack.c.l.s4 1966171168
        %v891 = vunpack.c.0.s8 %v890
        %v892 = vlaneseq
        %v893 = vshrl.u32 %v892, 7
        %v894 = vsub.s32 %v891, %v893
        %v895 = vrot.slane %v867, %v894
        %v896 = vcombine.high %v874, %v874
        %v897 = vcombine.high %v881, %v881
        %v898 = vcombine.high %v888, %v888
        %v899 = vcombine.high %v895, %v895
        %v900 = vcombine.high %v678, %v678
        %v902 = vunpack.c.l.s4 1966171168
        %v903 = vunpack.c.0.s8 %v902
        %v904 = vlaneseq
        %v905 = vshrl.u32 %v904, 7
        %v906 = vsub.s32 %v903, %v905
        %v907 = vrot.slane %v678, %v906
        %v909 = vunpack.c.l.s4 1966171168
        %v910 = vunpack.c.0.s8 %v909
        %v911 = vlaneseq
        %v912 = vshrl.u32 %v911, 7
        %v913 = vsub.s32 %v910, %v912
        %v914 = vrot.slane %v900, %v913
        %v915 = vcombine.high %v907, %v907
        %v916 = vcombine.high %v914, %v914
        %v918 = vunpack.c.l.s4 1966171168
        %v919 = vunpack.c.0.s8 %v918
        %v920 = vlaneseq
        %v921 = vshrl.u32 %v920, 7
        %v922 = vsub.s32 %v919, %v921
        %v923 = vrot.slane %v907, %v922
        %v925 = vunpack.c.l.s4 1966171168
        %v926 = vunpack.c.0.s8 %v925
        %v927 = vlaneseq
        %v928 = vshrl.u32 %v927, 7
        %v929 = vsub.s32 %v926, %v928
        %v930 = vrot.slane %v914, %v929
        %v932 = vunpack.c.l.s4 1966171168
        %v933 = vunpack.c.0.s8 %v932
        %v934 = vlaneseq
        %v935 = vshrl.u32 %v934, 7
        %v936 = vsub.s32 %v933, %v935
        %v937 = vrot.slane %v915, %v936
        %v939 = vunpack.c.l.s4 1966171168
        %v940 = vunpack.c.0.s8 %v939
        %v941 = vlaneseq
        %v942 = vshrl.u32 %v941, 7
        %v943 = vsub.s32 %v940, %v942
        %v944 = vrot.slane %v916, %v943
        %v945 = vcombine.high %v923, %v923
        %v946 = vcombine.high %v930, %v930
        %v947 = vcombine.high %v937, %v937
        %v948 = vcombine.high %v944, %v944
        %v949 = vcombine.high %v683, %v683
        %v951 = vunpack.c.l.s4 1966171168
        %v952 = vunpack.c.0.s8 %v951
        %v953 = vlaneseq
        %v954 = vshrl.u32 %v953, 7
        %v955 = vsub.s32 %v952, %v954
        %v956 = vrot.slane %v683, %v955
        %v958 = vunpack.c.l.s4 1966171168
        %v959 = vunpack.c.0.s8 %v958
        %v960 = vlaneseq
        %v961 = vshrl.u32 %v960, 7
        %v962 = vsub.s32 %v959, %v961
        %v963 = vrot.slane %v949, %v962
        %v964 = vcombine.high %v956, %v956
        %v965 = vcombine.high %v963, %v963
        %v967 = vunpack.c.l.s4 1966171168
        %v968 = vunpack.c.0.s8 %v967
        %v969 = vlaneseq
        %v970 = vshrl.u32 %v969, 7
        %v971 = vsub.s32 %v968, %v970
        %v972 = vrot.slane %v956, %v971
        %v974 = vunpack.c.l.s4 1966171168
        %v975 = vunpack.c.0.s8 %v974
        %v976 = vlaneseq
        %v977 = vshrl.u32 %v976, 7
        %v978 = vsub.s32 %v975, %v977
        %v979 = vrot.slane %v963, %v978
        %v981 = vunpack.c.l.s4 1966171168
        %v982 = vunpack.c.0.s8 %v981
        %v983 = vlaneseq
        %v984 = vshrl.u32 %v983, 7
        %v985 = vsub.s32 %v982, %v984
        %v986 = vrot.slane %v964, %v985
        %v988 = vunpack.c.l.s4 1966171168
        %v989 = vunpack.c.0.s8 %v988
        %v990 = vlaneseq
        %v991 = vshrl.u32 %v990, 7
        %v992 = vsub.s32 %v989, %v991
        %v993 = vrot.slane %v965, %v992
        %v994 = vcombine.high %v972, %v972
        %v995 = vcombine.high %v979, %v979
        %v996 = vcombine.high %v986, %v986
        %v997 = vcombine.high %v993, %v993
        %v998 = vcombine.high %v688, %v688
        %v1000 = vunpack.c.l.s4 1966171168
        %v1001 = vunpack.c.0.s8 %v1000
        %v1002 = vlaneseq
        %v1003 = vshrl.u32 %v1002, 7
        %v1004 = vsub.s32 %v1001, %v1003
        %v1005 = vrot.slane %v688, %v1004
        %v1007 = vunpack.c.l.s4 1966171168
        %v1008 = vunpack.c.0.s8 %v1007
        %v1009 = vlaneseq
        %v1010 = vshrl.u32 %v1009, 7
        %v1011 = vsub.s32 %v1008, %v1010
        %v1012 = vrot.slane %v998, %v1011
        %v1013 = vcombine.high %v1005, %v1005
        %v1014 = vcombine.high %v1012, %v1012
        %v1016 = vunpack.c.l.s4 1966171168
        %v1017 = vunpack.c.0.s8 %v1016
        %v1018 = vlaneseq
        %v1019 = vshrl.u32 %v1018, 7
        %v1020 = vsub.s32 %v1017, %v1019
        %v1021 = vrot.slane %v1005, %v1020
        %v1023 = vunpack.c.l.s4 1966171168
        %v1024 = vunpack.c.0.s8 %v1023
        %v1025 = vlaneseq
        %v1026 = vshrl.u32 %v1025, 7
        %v1027 = vsub.s32 %v1024, %v1026
        %v1028 = vrot.slane %v1012, %v1027
        %v1030 = vunpack.c.l.s4 1966171168
        %v1031 = vunpack.c.0.s8 %v1030
        %v1032 = vlaneseq
        %v1033 = vshrl.u32 %v1032, 7
        %v1034 = vsub.s32 %v1031, %v1033
        %v1035 = vrot.slane %v1013, %v1034
        %v1037 = vunpack.c.l.s4 1966171168
        %v1038 = vunpack.c.0.s8 %v1037
        %v1039 = vlaneseq
        %v1040 = vshrl.u32 %v1039, 7
        %v1041 = vsub.s32 %v1038, %v1040
        %v1042 = vrot.slane %v1014, %v1041
        %v1043 = vcombine.high %v1021, %v1021
        %v1044 = vcombine.high %v1028, %v1028
        %v1045 = vcombine.high %v1035, %v1035
        %v1046 = vcombine.high %v1042, %v1042
        %v1047 = vcombine.high %v693, %v693
        %v1049 = vunpack.c.l.s4 1966171168
        %v1050 = vunpack.c.0.s8 %v1049
        %v1051 = vlaneseq
        %v1052 = vshrl.u32 %v1051, 7
        %v1053 = vsub.s32 %v1050, %v1052
        %v1054 = vrot.slane %v693, %v1053
        %v1056 = vunpack.c.l.s4 1966171168
        %v1057 = vunpack.c.0.s8 %v1056
        %v1058 = vlaneseq
        %v1059 = vshrl.u32 %v1058, 7
        %v1060 = vsub.s32 %v1057, %v1059
        %v1061 = vrot.slane %v1047, %v1060
        %v1062 = vcombine.high %v1054, %v1054
        %v1063 = vcombine.high %v1061, %v1061
        %v1065 = vunpack.c.l.s4 1966171168
        %v1066 = vunpack.c.0.s8 %v1065
        %v1067 = vlaneseq
        %v1068 = vshrl.u32 %v1067, 7
        %v1069 = vsub.s32 %v1066, %v1068
        %v1070 = vrot.slane %v1054, %v1069
        %v1072 = vunpack.c.l.s4 1966171168
        %v1073 = vunpack.c.0.s8 %v1072
        %v1074 = vlaneseq
        %v1075 = vshrl.u32 %v1074, 7
        %v1076 = vsub.s32 %v1073, %v1075
        %v1077 = vrot.slane %v1061, %v1076
        %v1079 = vunpack.c.l.s4 1966171168
        %v1080 = vunpack.c.0.s8 %v1079
        %v1081 = vlaneseq
        %v1082 = vshrl.u32 %v1081, 7
        %v1083 = vsub.s32 %v1080, %v1082
        %v1084 = vrot.slane %v1062, %v1083
        %v1086 = vunpack.c.l.s4 1966171168
        %v1087 = vunpack.c.0.s8 %v1086
        %v1088 = vlaneseq
        %v1089 = vshrl.u32 %v1088, 7
        %v1090 = vsub.s32 %v1087, %v1089
        %v1091 = vrot.slane %v1063, %v1090
        %v1092 = vcombine.high %v1070, %v1070
        %v1093 = vcombine.high %v1077, %v1077
        %v1094 = vcombine.high %v1084, %v1084
        %v1095 = vcombine.high %v1091, %v1091
        %v1096 = vlaneseq
        %v1097 = vshrl.u32 %v1096, 7
        %v1098 = vsub.s32 0, %v1097
        %v1099 = vrot.slane %v727, %v1098
        %v1100 = vlaneseq
        %v1101 = vshrl.u32 %v1100, 7
        %v1102 = vsub.s32 0, %v1101
        %v1103 = vrot.slane %v741, %v1102
        %v1104 = vlaneseq
        %v1105 = vshrl.u32 %v1104, 7
        %v1106 = vsub.s32 0, %v1105
        %v1107 = vrot.slane %v749, %v1106
        %v1108 = vlaneseq
        %v1109 = vshrl.u32 %v1108, 7
        %v1110 = vsub.s32 0, %v1109
        %v1111 = vrot.slane %v751, %v1110
        %v1112 = vlaneseq
        %v1113 = vshrl.u32 %v1112, 7
        %v1114 = vsub.s32 0, %v1113
        %v1115 = vrot.slane %v734, %v1114
        %v1116 = vlaneseq
        %v1117 = vshrl.u32 %v1116, 7
        %v1118 = vsub.s32 0, %v1117
        %v1119 = vrot.slane %v748, %v1118
        %v1120 = vlaneseq
        %v1121 = vshrl.u32 %v1120, 7
        %v1122 = vsub.s32 0, %v1121
        %v1123 = vrot.slane %v750, %v1122
        %v1124 = vlaneseq
        %v1125 = vshrl.u32 %v1124, 7
        %v1126 = vsub.s32 0, %v1125
        %v1127 = vrot.slane %v752, %v1126
        %v1128 = vlaneseq
        %v1129 = vshrl.u32 %v1128, 7
        %v1130 = vsub.s32 0, %v1129
        %v1131 = vrot.slane %v776, %v1130
        %v1132 = vlaneseq
        %v1133 = vshrl.u32 %v1132, 7
        %v1134 = vsub.s32 0, %v1133
        %v1135 = vrot.slane %v790, %v1134
        %v1136 = vlaneseq
        %v1137 = vshrl.u32 %v1136, 7
        %v1138 = vsub.s32 0, %v1137
        %v1139 = vrot.slane %v798, %v1138
        %v1140 = vlaneseq
        %v1141 = vshrl.u32 %v1140, 7
        %v1142 = vsub.s32 0, %v1141
        %v1143 = vrot.slane %v800, %v1142
        %v1144 = vlaneseq
        %v1145 = vshrl.u32 %v1144, 7
        %v1146 = vsub.s32 0, %v1145
        %v1147 = vrot.slane %v783, %v1146
        %v1148 = vlaneseq
        %v1149 = vshrl.u32 %v1148, 7
        %v1150 = vsub.s32 0, %v1149
        %v1151 = vrot.slane %v797, %v1150
        %v1152 = vlaneseq
        %v1153 = vshrl.u32 %v1152, 7
        %v1154 = vsub.s32 0, %v1153
        %v1155 = vrot.slane %v799, %v1154
        %v1156 = vlaneseq
        %v1157 = vshrl.u32 %v1156, 7
        %v1158 = vsub.s32 0, %v1157
        %v1159 = vrot.slane %v801, %v1158
        %v1160 = vlaneseq
        %v1161 = vshrl.u32 %v1160, 7
        %v1162 = vsub.s32 0, %v1161
        %v1163 = vrot.slane %v825, %v1162
        %v1164 = vlaneseq
        %v1165 = vshrl.u32 %v1164, 7
        %v1166 = vsub.s32 0, %v1165
        %v1167 = vrot.slane %v839, %v1166
        %v1168 = vlaneseq
        %v1169 = vshrl.u32 %v1168, 7
        %v1170 = vsub.s32 0, %v1169
        %v1171 = vrot.slane %v847, %v1170
        %v1172 = vlaneseq
        %v1173 = vshrl.u32 %v1172, 7
        %v1174 = vsub.s32 0, %v1173
        %v1175 = vrot.slane %v849, %v1174
        %v1176 = vlaneseq
        %v1177 = vshrl.u32 %v1176, 7
        %v1178 = vsub.s32 0, %v1177
        %v1179 = vrot.slane %v832, %v1178
        %v1180 = vlaneseq
        %v1181 = vshrl.u32 %v1180, 7
        %v1182 = vsub.s32 0, %v1181
        %v1183 = vrot.slane %v846, %v1182
        %v1184 = vlaneseq
        %v1185 = vshrl.u32 %v1184, 7
        %v1186 = vsub.s32 0, %v1185
        %v1187 = vrot.slane %v848, %v1186
        %v1188 = vlaneseq
        %v1189 = vshrl.u32 %v1188, 7
        %v1190 = vsub.s32 0, %v1189
        %v1191 = vrot.slane %v850, %v1190
        %v1192 = vlaneseq
        %v1193 = vshrl.u32 %v1192, 7
        %v1194 = vsub.s32 0, %v1193
        %v1195 = vrot.slane %v874, %v1194
        %v1196 = vlaneseq
        %v1197 = vshrl.u32 %v1196, 7
        %v1198 = vsub.s32 0, %v1197
        %v1199 = vrot.slane %v888, %v1198
        %v1200 = vlaneseq
        %v1201 = vshrl.u32 %v1200, 7
        %v1202 = vsub.s32 0, %v1201
        %v1203 = vrot.slane %v896, %v1202
        %v1204 = vlaneseq
        %v1205 = vshrl.u32 %v1204, 7
        %v1206 = vsub.s32 0, %v1205
        %v1207 = vrot.slane %v898, %v1206
        %v1208 = vlaneseq
        %v1209 = vshrl.u32 %v1208, 7
        %v1210 = vsub.s32 0, %v1209
        %v1211 = vrot.slane %v881, %v1210
        %v1212 = vlaneseq
        %v1213 = vshrl.u32 %v1212, 7
        %v1214 = vsub.s32 0, %v1213
        %v1215 = vrot.slane %v895, %v1214
        %v1216 = vlaneseq
        %v1217 = vshrl.u32 %v1216, 7
        %v1218 = vsub.s32 0, %v1217
        %v1219 = vrot.slane %v897, %v1218
        %v1220 = vlaneseq
        %v1221 = vshrl.u32 %v1220, 7
        %v1222 = vsub.s32 0, %v1221
        %v1223 = vrot.slane %v899, %v1222
        %v1224 = vlaneseq
        %v1225 = vshrl.u32 %v1224, 7
        %v1226 = vsub.s32 0, %v1225
        %v1227 = vrot.slane %v923, %v1226
        %v1228 = vlaneseq
        %v1229 = vshrl.u32 %v1228, 7
        %v1230 = vsub.s32 0, %v1229
        %v1231 = vrot.slane %v937, %v1230
        %v1232 = vlaneseq
        %v1233 = vshrl.u32 %v1232, 7
        %v1234 = vsub.s32 0, %v1233
        %v1235 = vrot.slane %v945, %v1234
        %v1236 = vlaneseq
        %v1237 = vshrl.u32 %v1236, 7
        %v1238 = vsub.s32 0, %v1237
        %v1239 = vrot.slane %v947, %v1238
        %v1240 = vlaneseq
        %v1241 = vshrl.u32 %v1240, 7
        %v1242 = vsub.s32 0, %v1241
        %v1243 = vrot.slane %v930, %v1242
        %v1244 = vlaneseq
        %v1245 = vshrl.u32 %v1244, 7
        %v1246 = vsub.s32 0, %v1245
        %v1247 = vrot.slane %v944, %v1246
        %v1248 = vlaneseq
        %v1249 = vshrl.u32 %v1248, 7
        %v1250 = vsub.s32 0, %v1249
        %v1251 = vrot.slane %v946, %v1250
        %v1252 = vlaneseq
        %v1253 = vshrl.u32 %v1252, 7
        %v1254 = vsub.s32 0, %v1253
        %v1255 = vrot.slane %v948, %v1254
        %v1256 = vlaneseq
        %v1257 = vshrl.u32 %v1256, 7
        %v1258 = vsub.s32 0, %v1257
        %v1259 = vrot.slane %v972, %v1258
        %v1260 = vlaneseq
        %v1261 = vshrl.u32 %v1260, 7
        %v1262 = vsub.s32 0, %v1261
        %v1263 = vrot.slane %v986, %v1262
        %v1264 = vlaneseq
        %v1265 = vshrl.u32 %v1264, 7
        %v1266 = vsub.s32 0, %v1265
        %v1267 = vrot.slane %v994, %v1266
        %v1268 = vlaneseq
        %v1269 = vshrl.u32 %v1268, 7
        %v1270 = vsub.s32 0, %v1269
        %v1271 = vrot.slane %v996, %v1270
        %v1272 = vlaneseq
        %v1273 = vshrl.u32 %v1272, 7
        %v1274 = vsub.s32 0, %v1273
        %v1275 = vrot.slane %v979, %v1274
        %v1276 = vlaneseq
        %v1277 = vshrl.u32 %v1276, 7
        %v1278 = vsub.s32 0, %v1277
        %v1279 = vrot.slane %v993, %v1278
        %v1280 = vlaneseq
        %v1281 = vshrl.u32 %v1280, 7
        %v1282 = vsub.s32 0, %v1281
        %v1283 = vrot.slane %v995, %v1282
        %v1284 = vlaneseq
        %v1285 = vshrl.u32 %v1284, 7
        %v1286 = vsub.s32 0, %v1285
        %v1287 = vrot.slane %v997, %v1286
        %v1288 = vlaneseq
        %v1289 = vshrl.u32 %v1288, 7
        %v1290 = vsub.s32 0, %v1289
        %v1291 = vrot.slane %v1021, %v1290
        %v1292 = vlaneseq
        %v1293 = vshrl.u32 %v1292, 7
        %v1294 = vsub.s32 0, %v1293
        %v1295 = vrot.slane %v1035, %v1294
        %v1296 = vlaneseq
        %v1297 = vshrl.u32 %v1296, 7
        %v1298 = vsub.s32 0, %v1297
        %v1299 = vrot.slane %v1043, %v1298
        %v1300 = vlaneseq
        %v1301 = vshrl.u32 %v1300, 7
        %v1302 = vsub.s32 0, %v1301
        %v1303 = vrot.slane %v1045, %v1302
        %v1304 = vlaneseq
        %v1305 = vshrl.u32 %v1304, 7
        %v1306 = vsub.s32 0, %v1305
        %v1307 = vrot.slane %v1028, %v1306
        %v1308 = vlaneseq
        %v1309 = vshrl.u32 %v1308, 7
        %v1310 = vsub.s32 0, %v1309
        %v1311 = vrot.slane %v1042, %v1310
        %v1312 = vlaneseq
        %v1313 = vshrl.u32 %v1312, 7
        %v1314 = vsub.s32 0, %v1313
        %v1315 = vrot.slane %v1044, %v1314
        %v1316 = vlaneseq
        %v1317 = vshrl.u32 %v1316, 7
        %v1318 = vsub.s32 0, %v1317
        %v1319 = vrot.slane %v1046, %v1318
        %v1320 = vlaneseq
        %v1321 = vshrl.u32 %v1320, 7
        %v1322 = vsub.s32 0, %v1321
        %v1323 = vrot.slane %v1070, %v1322
        %v1324 = vlaneseq
        %v1325 = vshrl.u32 %v1324, 7
        %v1326 = vsub.s32 0, %v1325
        %v1327 = vrot.slane %v1084, %v1326
        %v1328 = vlaneseq
        %v1329 = vshrl.u32 %v1328, 7
        %v1330 = vsub.s32 0, %v1329
        %v1331 = vrot.slane %v1092, %v1330
        %v1332 = vlaneseq
        %v1333 = vshrl.u32 %v1332, 7
        %v1334 = vsub.s32 0, %v1333
        %v1335 = vrot.slane %v1094, %v1334
        %v1336 = vlaneseq
        %v1337 = vshrl.u32 %v1336, 7
        %v1338 = vsub.s32 0, %v1337
        %v1339 = vrot.slane %v1077, %v1338
        %v1340 = vlaneseq
        %v1341 = vshrl.u32 %v1340, 7
        %v1342 = vsub.s32 0, %v1341
        %v1343 = vrot.slane %v1091, %v1342
        %v1344 = vlaneseq
        %v1345 = vshrl.u32 %v1344, 7
        %v1346 = vsub.s32 0, %v1345
        %v1347 = vrot.slane %v1093, %v1346
        %v1348 = vlaneseq
        %v1349 = vshrl.u32 %v1348, 7
        %v1350 = vsub.s32 0, %v1349
        %v1351 = vrot.slane %v1095, %v1350
        %v1416 = vld [vmem:[%s4] sm:$0xff]
        %v1417 = vld [vmem:[%s4 + $0x8] sm:$0xff]
        %v1418 = vld [vmem:[%s4 + $0x10] sm:$0xff]
        %v1419 = vld [vmem:[%s4 + $0x18] sm:$0xff]
        %v1420 = vld [vmem:[%s4 + $0x20] sm:$0xff]
        %v1421 = vld [vmem:[%s4 + $0x28] sm:$0xff]
        %v1422 = vld [vmem:[%s4 + $0x30] sm:$0xff]
        %v1423 = vld [vmem:[%s4 + $0x38] sm:$0xff]
        %v1424 = vld [vmem:[%s4 + $0x40] sm:$0xff]
        %v1425 = vld [vmem:[%s4 + $0x48] sm:$0xff]
        %v1426 = vld [vmem:[%s4 + $0x50] sm:$0xff]
        %v1427 = vld [vmem:[%s4 + $0x58] sm:$0xff]
        %v1428 = vld [vmem:[%s4 + $0x60] sm:$0xff]
        %v1429 = vld [vmem:[%s4 + $0x68] sm:$0xff]
        %v1430 = vld [vmem:[%s4 + $0x70] sm:$0xff]
        %v1431 = vld [vmem:[%s4 + $0x78] sm:$0xff]
        %v1432 = vld [vmem:[%s4 + $0x80] sm:$0xff]
        %v1433 = vld [vmem:[%s4 + $0x88] sm:$0xff]
        %v1434 = vld [vmem:[%s4 + $0x90] sm:$0xff]
        %v1435 = vld [vmem:[%s4 + $0x98] sm:$0xff]
        %v1436 = vld [vmem:[%s4 + $0xa0] sm:$0xff]
        %v1437 = vld [vmem:[%s4 + $0xa8] sm:$0xff]
        %v1438 = vld [vmem:[%s4 + $0xb0] sm:$0xff]
        %v1439 = vld [vmem:[%s4 + $0xb8] sm:$0xff]
        %v1440 = vld [vmem:[%s4 + $0xc0] sm:$0xff]
        %v1441 = vld [vmem:[%s4 + $0xc8] sm:$0xff]
        %v1442 = vld [vmem:[%s4 + $0xd0] sm:$0xff]
        %v1443 = vld [vmem:[%s4 + $0xd8] sm:$0xff]
        %v1444 = vld [vmem:[%s4 + $0xe0] sm:$0xff]
        %v1445 = vld [vmem:[%s4 + $0xe8] sm:$0xff]
        %v1446 = vld [vmem:[%s4 + $0xf0] sm:$0xff]
        %v1447 = vld [vmem:[%s4 + $0xf8] sm:$0xff]
        %v1480 = vcombine.high %v1416, %v1416
        %v1482 = vunpack.c.l.s4 1983009808
        %v1483 = vunpack.c.0.s8 %v1482
        %v1484 = vlaneseq
        %v1485 = vshrl.u32 %v1484, 7
        %v1486 = vsub.s32 %v1483, %v1485
        %v1487 = vrot.slane %v1416, %v1486
        %v1489 = vunpack.c.l.s4 1983009808
        %v1490 = vunpack.c.0.s8 %v1489
        %v1491 = vlaneseq
        %v1492 = vshrl.u32 %v1491, 7
        %v1493 = vsub.s32 %v1490, %v1492
        %v1494 = vrot.slane %v1480, %v1493
        %v1495 = vcombine.high %v1487, %v1487
        %v1496 = vcombine.high %v1494, %v1494
        %v1497 = vcombine.high %v1417, %v1417
        %v1499 = vunpack.c.l.s4 1983009808
        %v1500 = vunpack.c.0.s8 %v1499
        %v1501 = vlaneseq
        %v1502 = vshrl.u32 %v1501, 7
        %v1503 = vsub.s32 %v1500, %v1502
        %v1504 = vrot.slane %v1417, %v1503
        %v1506 = vunpack.c.l.s4 1983009808
        %v1507 = vunpack.c.0.s8 %v1506
        %v1508 = vlaneseq
        %v1509 = vshrl.u32 %v1508, 7
        %v1510 = vsub.s32 %v1507, %v1509
        %v1511 = vrot.slane %v1497, %v1510
        %v1512 = vcombine.high %v1504, %v1504
        %v1513 = vcombine.high %v1511, %v1511
        %v1514 = vcombine.high %v1418, %v1418
        %v1516 = vunpack.c.l.s4 1983009808
        %v1517 = vunpack.c.0.s8 %v1516
        %v1518 = vlaneseq
        %v1519 = vshrl.u32 %v1518, 7
        %v1520 = vsub.s32 %v1517, %v1519
        %v1521 = vrot.slane %v1418, %v1520
        %v1523 = vunpack.c.l.s4 1983009808
        %v1524 = vunpack.c.0.s8 %v1523
        %v1525 = vlaneseq
        %v1526 = vshrl.u32 %v1525, 7
        %v1527 = vsub.s32 %v1524, %v1526
        %v1528 = vrot.slane %v1514, %v1527
        %v1529 = vcombine.high %v1521, %v1521
        %v1530 = vcombine.high %v1528, %v1528
        %v1531 = vcombine.high %v1419, %v1419
        %v1533 = vunpack.c.l.s4 1983009808
        %v1534 = vunpack.c.0.s8 %v1533
        %v1535 = vlaneseq
        %v1536 = vshrl.u32 %v1535, 7
        %v1537 = vsub.s32 %v1534, %v1536
        %v1538 = vrot.slane %v1419, %v1537
        %v1540 = vunpack.c.l.s4 1983009808
        %v1541 = vunpack.c.0.s8 %v1540
        %v1542 = vlaneseq
        %v1543 = vshrl.u32 %v1542, 7
        %v1544 = vsub.s32 %v1541, %v1543
        %v1545 = vrot.slane %v1531, %v1544
        %v1546 = vcombine.high %v1538, %v1538
        %v1547 = vcombine.high %v1545, %v1545
        %v1548 = vcombine.high %v1420, %v1420
        %v1550 = vunpack.c.l.s4 1983009808
        %v1551 = vunpack.c.0.s8 %v1550
        %v1552 = vlaneseq
        %v1553 = vshrl.u32 %v1552, 7
        %v1554 = vsub.s32 %v1551, %v1553
        %v1555 = vrot.slane %v1420, %v1554
        %v1557 = vunpack.c.l.s4 1983009808
        %v1558 = vunpack.c.0.s8 %v1557
        %v1559 = vlaneseq
        %v1560 = vshrl.u32 %v1559, 7
        %v1561 = vsub.s32 %v1558, %v1560
        %v1562 = vrot.slane %v1548, %v1561
        %v1563 = vcombine.high %v1555, %v1555
        %v1564 = vcombine.high %v1562, %v1562
        %v1565 = vcombine.high %v1421, %v1421
        %v1567 = vunpack.c.l.s4 1983009808
        %v1568 = vunpack.c.0.s8 %v1567
        %v1569 = vlaneseq
        %v1570 = vshrl.u32 %v1569, 7
        %v1571 = vsub.s32 %v1568, %v1570
        %v1572 = vrot.slane %v1421, %v1571
        %v1574 = vunpack.c.l.s4 1983009808
        %v1575 = vunpack.c.0.s8 %v1574
        %v1576 = vlaneseq
        %v1577 = vshrl.u32 %v1576, 7
        %v1578 = vsub.s32 %v1575, %v1577
        %v1579 = vrot.slane %v1565, %v1578
        %v1580 = vcombine.high %v1572, %v1572
        %v1581 = vcombine.high %v1579, %v1579
        %v1582 = vcombine.high %v1422, %v1422
        %v1584 = vunpack.c.l.s4 1983009808
        %v1585 = vunpack.c.0.s8 %v1584
        %v1586 = vlaneseq
        %v1587 = vshrl.u32 %v1586, 7
        %v1588 = vsub.s32 %v1585, %v1587
        %v1589 = vrot.slane %v1422, %v1588
        %v1591 = vunpack.c.l.s4 1983009808
        %v1592 = vunpack.c.0.s8 %v1591
        %v1593 = vlaneseq
        %v1594 = vshrl.u32 %v1593, 7
        %v1595 = vsub.s32 %v1592, %v1594
        %v1596 = vrot.slane %v1582, %v1595
        %v1597 = vcombine.high %v1589, %v1589
        %v1598 = vcombine.high %v1596, %v1596
        %v1599 = vcombine.high %v1423, %v1423
        %v1601 = vunpack.c.l.s4 1983009808
        %v1602 = vunpack.c.0.s8 %v1601
        %v1603 = vlaneseq
        %v1604 = vshrl.u32 %v1603, 7
        %v1605 = vsub.s32 %v1602, %v1604
        %v1606 = vrot.slane %v1423, %v1605
        %v1608 = vunpack.c.l.s4 1983009808
        %v1609 = vunpack.c.0.s8 %v1608
        %v1610 = vlaneseq
        %v1611 = vshrl.u32 %v1610, 7
        %v1612 = vsub.s32 %v1609, %v1611
        %v1613 = vrot.slane %v1599, %v1612
        %v1614 = vcombine.high %v1606, %v1606
        %v1615 = vcombine.high %v1613, %v1613
        %v1616 = vcombine.high %v1424, %v1424
        %v1618 = vunpack.c.l.s4 1983009808
        %v1619 = vunpack.c.0.s8 %v1618
        %v1620 = vlaneseq
        %v1621 = vshrl.u32 %v1620, 7
        %v1622 = vsub.s32 %v1619, %v1621
        %v1623 = vrot.slane %v1424, %v1622
        %v1625 = vunpack.c.l.s4 1983009808
        %v1626 = vunpack.c.0.s8 %v1625
        %v1627 = vlaneseq
        %v1628 = vshrl.u32 %v1627, 7
        %v1629 = vsub.s32 %v1626, %v1628
        %v1630 = vrot.slane %v1616, %v1629
        %v1631 = vcombine.high %v1623, %v1623
        %v1632 = vcombine.high %v1630, %v1630
        %v1633 = vcombine.high %v1425, %v1425
        %v1635 = vunpack.c.l.s4 1983009808
        %v1636 = vunpack.c.0.s8 %v1635
        %v1637 = vlaneseq
        %v1638 = vshrl.u32 %v1637, 7
        %v1639 = vsub.s32 %v1636, %v1638
        %v1640 = vrot.slane %v1425, %v1639
        %v1642 = vunpack.c.l.s4 1983009808
        %v1643 = vunpack.c.0.s8 %v1642
        %v1644 = vlaneseq
        %v1645 = vshrl.u32 %v1644, 7
        %v1646 = vsub.s32 %v1643, %v1645
        %v1647 = vrot.slane %v1633, %v1646
        %v1648 = vcombine.high %v1640, %v1640
        %v1649 = vcombine.high %v1647, %v1647
        %v1650 = vcombine.high %v1426, %v1426
        %v1652 = vunpack.c.l.s4 1983009808
        %v1653 = vunpack.c.0.s8 %v1652
        %v1654 = vlaneseq
        %v1655 = vshrl.u32 %v1654, 7
        %v1656 = vsub.s32 %v1653, %v1655
        %v1657 = vrot.slane %v1426, %v1656
        %v1659 = vunpack.c.l.s4 1983009808
        %v1660 = vunpack.c.0.s8 %v1659
        %v1661 = vlaneseq
        %v1662 = vshrl.u32 %v1661, 7
        %v1663 = vsub.s32 %v1660, %v1662
        %v1664 = vrot.slane %v1650, %v1663
        %v1665 = vcombine.high %v1657, %v1657
        %v1666 = vcombine.high %v1664, %v1664
        %v1667 = vcombine.high %v1427, %v1427
        %v1669 = vunpack.c.l.s4 1983009808
        %v1670 = vunpack.c.0.s8 %v1669
        %v1671 = vlaneseq
        %v1672 = vshrl.u32 %v1671, 7
        %v1673 = vsub.s32 %v1670, %v1672
        %v1674 = vrot.slane %v1427, %v1673
        %v1676 = vunpack.c.l.s4 1983009808
        %v1677 = vunpack.c.0.s8 %v1676
        %v1678 = vlaneseq
        %v1679 = vshrl.u32 %v1678, 7
        %v1680 = vsub.s32 %v1677, %v1679
        %v1681 = vrot.slane %v1667, %v1680
        %v1682 = vcombine.high %v1674, %v1674
        %v1683 = vcombine.high %v1681, %v1681
        %v1684 = vcombine.high %v1428, %v1428
        %v1686 = vunpack.c.l.s4 1983009808
        %v1687 = vunpack.c.0.s8 %v1686
        %v1688 = vlaneseq
        %v1689 = vshrl.u32 %v1688, 7
        %v1690 = vsub.s32 %v1687, %v1689
        %v1691 = vrot.slane %v1428, %v1690
        %v1693 = vunpack.c.l.s4 1983009808
        %v1694 = vunpack.c.0.s8 %v1693
        %v1695 = vlaneseq
        %v1696 = vshrl.u32 %v1695, 7
        %v1697 = vsub.s32 %v1694, %v1696
        %v1698 = vrot.slane %v1684, %v1697
        %v1699 = vcombine.high %v1691, %v1691
        %v1700 = vcombine.high %v1698, %v1698
        %v1701 = vcombine.high %v1429, %v1429
        %v1703 = vunpack.c.l.s4 1983009808
        %v1704 = vunpack.c.0.s8 %v1703
        %v1705 = vlaneseq
        %v1706 = vshrl.u32 %v1705, 7
        %v1707 = vsub.s32 %v1704, %v1706
        %v1708 = vrot.slane %v1429, %v1707
        %v1710 = vunpack.c.l.s4 1983009808
        %v1711 = vunpack.c.0.s8 %v1710
        %v1712 = vlaneseq
        %v1713 = vshrl.u32 %v1712, 7
        %v1714 = vsub.s32 %v1711, %v1713
        %v1715 = vrot.slane %v1701, %v1714
        %v1716 = vcombine.high %v1708, %v1708
        %v1717 = vcombine.high %v1715, %v1715
        %v1718 = vcombine.high %v1430, %v1430
        %v1720 = vunpack.c.l.s4 1983009808
        %v1721 = vunpack.c.0.s8 %v1720
        %v1722 = vlaneseq
        %v1723 = vshrl.u32 %v1722, 7
        %v1724 = vsub.s32 %v1721, %v1723
        %v1725 = vrot.slane %v1430, %v1724
        %v1727 = vunpack.c.l.s4 1983009808
        %v1728 = vunpack.c.0.s8 %v1727
        %v1729 = vlaneseq
        %v1730 = vshrl.u32 %v1729, 7
        %v1731 = vsub.s32 %v1728, %v1730
        %v1732 = vrot.slane %v1718, %v1731
        %v1733 = vcombine.high %v1725, %v1725
        %v1734 = vcombine.high %v1732, %v1732
        %v1735 = vcombine.high %v1431, %v1431
        %v1737 = vunpack.c.l.s4 1983009808
        %v1738 = vunpack.c.0.s8 %v1737
        %v1739 = vlaneseq
        %v1740 = vshrl.u32 %v1739, 7
        %v1741 = vsub.s32 %v1738, %v1740
        %v1742 = vrot.slane %v1431, %v1741
        %v1744 = vunpack.c.l.s4 1983009808
        %v1745 = vunpack.c.0.s8 %v1744
        %v1746 = vlaneseq
        %v1747 = vshrl.u32 %v1746, 7
        %v1748 = vsub.s32 %v1745, %v1747
        %v1749 = vrot.slane %v1735, %v1748
        %v1750 = vcombine.high %v1742, %v1742
        %v1751 = vcombine.high %v1749, %v1749
        %v1752 = vcombine.high %v1432, %v1432
        %v1754 = vunpack.c.l.s4 1983009808
        %v1755 = vunpack.c.0.s8 %v1754
        %v1756 = vlaneseq
        %v1757 = vshrl.u32 %v1756, 7
        %v1758 = vsub.s32 %v1755, %v1757
        %v1759 = vrot.slane %v1432, %v1758
        %v1761 = vunpack.c.l.s4 1983009808
        %v1762 = vunpack.c.0.s8 %v1761
        %v1763 = vlaneseq
        %v1764 = vshrl.u32 %v1763, 7
        %v1765 = vsub.s32 %v1762, %v1764
        %v1766 = vrot.slane %v1752, %v1765
        %v1767 = vcombine.high %v1759, %v1759
        %v1768 = vcombine.high %v1766, %v1766
        %v1769 = vcombine.high %v1433, %v1433
        %v1771 = vunpack.c.l.s4 1983009808
        %v1772 = vunpack.c.0.s8 %v1771
        %v1773 = vlaneseq
        %v1774 = vshrl.u32 %v1773, 7
        %v1775 = vsub.s32 %v1772, %v1774
        %v1776 = vrot.slane %v1433, %v1775
        %v1778 = vunpack.c.l.s4 1983009808
        %v1779 = vunpack.c.0.s8 %v1778
        %v1780 = vlaneseq
        %v1781 = vshrl.u32 %v1780, 7
        %v1782 = vsub.s32 %v1779, %v1781
        %v1783 = vrot.slane %v1769, %v1782
        %v1784 = vcombine.high %v1776, %v1776
        %v1785 = vcombine.high %v1783, %v1783
        %v1786 = vcombine.high %v1434, %v1434
        %v1788 = vunpack.c.l.s4 1983009808
        %v1789 = vunpack.c.0.s8 %v1788
        %v1790 = vlaneseq
        %v1791 = vshrl.u32 %v1790, 7
        %v1792 = vsub.s32 %v1789, %v1791
        %v1793 = vrot.slane %v1434, %v1792
        %v1795 = vunpack.c.l.s4 1983009808
        %v1796 = vunpack.c.0.s8 %v1795
        %v1797 = vlaneseq
        %v1798 = vshrl.u32 %v1797, 7
        %v1799 = vsub.s32 %v1796, %v1798
        %v1800 = vrot.slane %v1786, %v1799
        %v1801 = vcombine.high %v1793, %v1793
        %v1802 = vcombine.high %v1800, %v1800
        %v1803 = vcombine.high %v1435, %v1435
        %v1805 = vunpack.c.l.s4 1983009808
        %v1806 = vunpack.c.0.s8 %v1805
        %v1807 = vlaneseq
        %v1808 = vshrl.u32 %v1807, 7
        %v1809 = vsub.s32 %v1806, %v1808
        %v1810 = vrot.slane %v1435, %v1809
        %v1812 = vunpack.c.l.s4 1983009808
        %v1813 = vunpack.c.0.s8 %v1812
        %v1814 = vlaneseq
        %v1815 = vshrl.u32 %v1814, 7
        %v1816 = vsub.s32 %v1813, %v1815
        %v1817 = vrot.slane %v1803, %v1816
        %v1818 = vcombine.high %v1810, %v1810
        %v1819 = vcombine.high %v1817, %v1817
        %v1820 = vcombine.high %v1436, %v1436
        %v1822 = vunpack.c.l.s4 1983009808
        %v1823 = vunpack.c.0.s8 %v1822
        %v1824 = vlaneseq
        %v1825 = vshrl.u32 %v1824, 7
        %v1826 = vsub.s32 %v1823, %v1825
        %v1827 = vrot.slane %v1436, %v1826
        %v1829 = vunpack.c.l.s4 1983009808
        %v1830 = vunpack.c.0.s8 %v1829
        %v1831 = vlaneseq
        %v1832 = vshrl.u32 %v1831, 7
        %v1833 = vsub.s32 %v1830, %v1832
        %v1834 = vrot.slane %v1820, %v1833
        %v1835 = vcombine.high %v1827, %v1827
        %v1836 = vcombine.high %v1834, %v1834
        %v1837 = vcombine.high %v1437, %v1437
        %v1839 = vunpack.c.l.s4 1983009808
        %v1840 = vunpack.c.0.s8 %v1839
        %v1841 = vlaneseq
        %v1842 = vshrl.u32 %v1841, 7
        %v1843 = vsub.s32 %v1840, %v1842
        %v1844 = vrot.slane %v1437, %v1843
        %v1846 = vunpack.c.l.s4 1983009808
        %v1847 = vunpack.c.0.s8 %v1846
        %v1848 = vlaneseq
        %v1849 = vshrl.u32 %v1848, 7
        %v1850 = vsub.s32 %v1847, %v1849
        %v1851 = vrot.slane %v1837, %v1850
        %v1852 = vcombine.high %v1844, %v1844
        %v1853 = vcombine.high %v1851, %v1851
        %v1854 = vcombine.high %v1438, %v1438
        %v1856 = vunpack.c.l.s4 1983009808
        %v1857 = vunpack.c.0.s8 %v1856
        %v1858 = vlaneseq
        %v1859 = vshrl.u32 %v1858, 7
        %v1860 = vsub.s32 %v1857, %v1859
        %v1861 = vrot.slane %v1438, %v1860
        %v1863 = vunpack.c.l.s4 1983009808
        %v1864 = vunpack.c.0.s8 %v1863
        %v1865 = vlaneseq
        %v1866 = vshrl.u32 %v1865, 7
        %v1867 = vsub.s32 %v1864, %v1866
        %v1868 = vrot.slane %v1854, %v1867
        %v1869 = vcombine.high %v1861, %v1861
        %v1870 = vcombine.high %v1868, %v1868
        %v1871 = vcombine.high %v1439, %v1439
        %v1873 = vunpack.c.l.s4 1983009808
        %v1874 = vunpack.c.0.s8 %v1873
        %v1875 = vlaneseq
        %v1876 = vshrl.u32 %v1875, 7
        %v1877 = vsub.s32 %v1874, %v1876
        %v1878 = vrot.slane %v1439, %v1877
        %v1880 = vunpack.c.l.s4 1983009808
        %v1881 = vunpack.c.0.s8 %v1880
        %v1882 = vlaneseq
        %v1883 = vshrl.u32 %v1882, 7
        %v1884 = vsub.s32 %v1881, %v1883
        %v1885 = vrot.slane %v1871, %v1884
        %v1886 = vcombine.high %v1878, %v1878
        %v1887 = vcombine.high %v1885, %v1885
        %v1888 = vcombine.high %v1440, %v1440
        %v1890 = vunpack.c.l.s4 1983009808
        %v1891 = vunpack.c.0.s8 %v1890
        %v1892 = vlaneseq
        %v1893 = vshrl.u32 %v1892, 7
        %v1894 = vsub.s32 %v1891, %v1893
        %v1895 = vrot.slane %v1440, %v1894
        %v1897 = vunpack.c.l.s4 1983009808
        %v1898 = vunpack.c.0.s8 %v1897
        %v1899 = vlaneseq
        %v1900 = vshrl.u32 %v1899, 7
        %v1901 = vsub.s32 %v1898, %v1900
        %v1902 = vrot.slane %v1888, %v1901
        %v1903 = vcombine.high %v1895, %v1895
        %v1904 = vcombine.high %v1902, %v1902
        %v1905 = vcombine.high %v1441, %v1441
        %v1907 = vunpack.c.l.s4 1983009808
        %v1908 = vunpack.c.0.s8 %v1907
        %v1909 = vlaneseq
        %v1910 = vshrl.u32 %v1909, 7
        %v1911 = vsub.s32 %v1908, %v1910
        %v1912 = vrot.slane %v1441, %v1911
        %v1914 = vunpack.c.l.s4 1983009808
        %v1915 = vunpack.c.0.s8 %v1914
        %v1916 = vlaneseq
        %v1917 = vshrl.u32 %v1916, 7
        %v1918 = vsub.s32 %v1915, %v1917
        %v1919 = vrot.slane %v1905, %v1918
        %v1920 = vcombine.high %v1912, %v1912
        %v1921 = vcombine.high %v1919, %v1919
        %v1922 = vcombine.high %v1442, %v1442
        %v1924 = vunpack.c.l.s4 1983009808
        %v1925 = vunpack.c.0.s8 %v1924
        %v1926 = vlaneseq
        %v1927 = vshrl.u32 %v1926, 7
        %v1928 = vsub.s32 %v1925, %v1927
        %v1929 = vrot.slane %v1442, %v1928
        %v1931 = vunpack.c.l.s4 1983009808
        %v1932 = vunpack.c.0.s8 %v1931
        %v1933 = vlaneseq
        %v1934 = vshrl.u32 %v1933, 7
        %v1935 = vsub.s32 %v1932, %v1934
        %v1936 = vrot.slane %v1922, %v1935
        %v1937 = vcombine.high %v1929, %v1929
        %v1938 = vcombine.high %v1936, %v1936
        %v1939 = vcombine.high %v1443, %v1443
        %v1941 = vunpack.c.l.s4 1983009808
        %v1942 = vunpack.c.0.s8 %v1941
        %v1943 = vlaneseq
        %v1944 = vshrl.u32 %v1943, 7
        %v1945 = vsub.s32 %v1942, %v1944
        %v1946 = vrot.slane %v1443, %v1945
        %v1948 = vunpack.c.l.s4 1983009808
        %v1949 = vunpack.c.0.s8 %v1948
        %v1950 = vlaneseq
        %v1951 = vshrl.u32 %v1950, 7
        %v1952 = vsub.s32 %v1949, %v1951
        %v1953 = vrot.slane %v1939, %v1952
        %v1954 = vcombine.high %v1946, %v1946
        %v1955 = vcombine.high %v1953, %v1953
        %v1956 = vcombine.high %v1444, %v1444
        %v1958 = vunpack.c.l.s4 1983009808
        %v1959 = vunpack.c.0.s8 %v1958
        %v1960 = vlaneseq
        %v1961 = vshrl.u32 %v1960, 7
        %v1962 = vsub.s32 %v1959, %v1961
        %v1963 = vrot.slane %v1444, %v1962
        %v1965 = vunpack.c.l.s4 1983009808
        %v1966 = vunpack.c.0.s8 %v1965
        %v1967 = vlaneseq
        %v1968 = vshrl.u32 %v1967, 7
        %v1969 = vsub.s32 %v1966, %v1968
        %v1970 = vrot.slane %v1956, %v1969
        %v1971 = vcombine.high %v1963, %v1963
        %v1972 = vcombine.high %v1970, %v1970
        %v1973 = vcombine.high %v1445, %v1445
        %v1975 = vunpack.c.l.s4 1983009808
        %v1976 = vunpack.c.0.s8 %v1975
        %v1977 = vlaneseq
        %v1978 = vshrl.u32 %v1977, 7
        %v1979 = vsub.s32 %v1976, %v1978
        %v1980 = vrot.slane %v1445, %v1979
        %v1982 = vunpack.c.l.s4 1983009808
        %v1983 = vunpack.c.0.s8 %v1982
        %v1984 = vlaneseq
        %v1985 = vshrl.u32 %v1984, 7
        %v1986 = vsub.s32 %v1983, %v1985
        %v1987 = vrot.slane %v1973, %v1986
        %v1988 = vcombine.high %v1980, %v1980
        %v1989 = vcombine.high %v1987, %v1987
        %v1990 = vcombine.high %v1446, %v1446
        %v1992 = vunpack.c.l.s4 1983009808
        %v1993 = vunpack.c.0.s8 %v1992
        %v1994 = vlaneseq
        %v1995 = vshrl.u32 %v1994, 7
        %v1996 = vsub.s32 %v1993, %v1995
        %v1997 = vrot.slane %v1446, %v1996
        %v1999 = vunpack.c.l.s4 1983009808
        %v2000 = vunpack.c.0.s8 %v1999
        %v2001 = vlaneseq
        %v2002 = vshrl.u32 %v2001, 7
        %v2003 = vsub.s32 %v2000, %v2002
        %v2004 = vrot.slane %v1990, %v2003
        %v2005 = vcombine.high %v1997, %v1997
        %v2006 = vcombine.high %v2004, %v2004
        %v2007 = vcombine.high %v1447, %v1447
        %v2009 = vunpack.c.l.s4 1983009808
        %v2010 = vunpack.c.0.s8 %v2009
        %v2011 = vlaneseq
        %v2012 = vshrl.u32 %v2011, 7
        %v2013 = vsub.s32 %v2010, %v2012
        %v2014 = vrot.slane %v1447, %v2013
        %v2016 = vunpack.c.l.s4 1983009808
        %v2017 = vunpack.c.0.s8 %v2016
        %v2018 = vlaneseq
        %v2019 = vshrl.u32 %v2018, 7
        %v2020 = vsub.s32 %v2017, %v2019
        %v2021 = vrot.slane %v2007, %v2020
        %v2022 = vcombine.high %v2014, %v2014
        %v2023 = vcombine.high %v2021, %v2021
        %v2152 = vmul.f32 %v1099, %v1487
        %v2153 = vmul.f32 %v1103, %v1495
        %v2154 = vmul.f32 %v1107, %v1494
        %v2155 = vmul.f32 %v1111, %v1496
        %v2156 = vmul.f32 %v1115, %v1504
        %v2157 = vmul.f32 %v1119, %v1512
        %v2158 = vmul.f32 %v1123, %v1511
        %v2159 = vmul.f32 %v1127, %v1513
        %v2160 = vmul.f32 %v1099, %v1521
        %v2161 = vmul.f32 %v1103, %v1529
        %v2162 = vmul.f32 %v1107, %v1528
        %v2163 = vmul.f32 %v1111, %v1530
        %v2164 = vmul.f32 %v1115, %v1538
        %v2165 = vmul.f32 %v1119, %v1546
        %v2166 = vmul.f32 %v1123, %v1545
        %v2167 = vmul.f32 %v1127, %v1547
        %v2168 = vmul.f32 %v1131, %v1555
        %v2169 = vmul.f32 %v1135, %v1563
        %v2170 = vmul.f32 %v1139, %v1562
        %v2171 = vmul.f32 %v1143, %v1564
        %v2172 = vmul.f32 %v1147, %v1572
        %v2173 = vmul.f32 %v1151, %v1580
        %v2174 = vmul.f32 %v1155, %v1579
        %v2175 = vmul.f32 %v1159, %v1581
        %v2176 = vmul.f32 %v1131, %v1589
        %v2177 = vmul.f32 %v1135, %v1597
        %v2178 = vmul.f32 %v1139, %v1596
        %v2179 = vmul.f32 %v1143, %v1598
        %v2180 = vmul.f32 %v1147, %v1606
        %v2181 = vmul.f32 %v1151, %v1614
        %v2182 = vmul.f32 %v1155, %v1613
        %v2183 = vmul.f32 %v1159, %v1615
        %v2184 = vmul.f32 %v1163, %v1623
        %v2185 = vmul.f32 %v1167, %v1631
        %v2186 = vmul.f32 %v1171, %v1630
        %v2187 = vmul.f32 %v1175, %v1632
        %v2188 = vmul.f32 %v1179, %v1640
        %v2189 = vmul.f32 %v1183, %v1648
        %v2190 = vmul.f32 %v1187, %v1647
        %v2191 = vmul.f32 %v1191, %v1649
        %v2192 = vmul.f32 %v1163, %v1657
        %v2193 = vmul.f32 %v1167, %v1665
        %v2194 = vmul.f32 %v1171, %v1664
        %v2195 = vmul.f32 %v1175, %v1666
        %v2196 = vmul.f32 %v1179, %v1674
        %v2197 = vmul.f32 %v1183, %v1682
        %v2198 = vmul.f32 %v1187, %v1681
        %v2199 = vmul.f32 %v1191, %v1683
        %v2200 = vmul.f32 %v1195, %v1691
        %v2201 = vmul.f32 %v1199, %v1699
        %v2202 = vmul.f32 %v1203, %v1698
        %v2203 = vmul.f32 %v1207, %v1700
        %v2204 = vmul.f32 %v1211, %v1708
        %v2205 = vmul.f32 %v1215, %v1716
        %v2206 = vmul.f32 %v1219, %v1715
        %v2207 = vmul.f32 %v1223, %v1717
        %v2208 = vmul.f32 %v1195, %v1725
        %v2209 = vmul.f32 %v1199, %v1733
        %v2210 = vmul.f32 %v1203, %v1732
        %v2211 = vmul.f32 %v1207, %v1734
        %v2212 = vmul.f32 %v1211, %v1742
        %v2213 = vmul.f32 %v1215, %v1750
        %v2214 = vmul.f32 %v1219, %v1749
        %v2215 = vmul.f32 %v1223, %v1751
        %v2216 = vmul.f32 %v1227, %v1759
        %v2217 = vmul.f32 %v1231, %v1767
        %v2218 = vmul.f32 %v1235, %v1766
        %v2219 = vmul.f32 %v1239, %v1768
        %v2220 = vmul.f32 %v1243, %v1776
        %v2221 = vmul.f32 %v1247, %v1784
        %v2222 = vmul.f32 %v1251, %v1783
        %v2223 = vmul.f32 %v1255, %v1785
        %v2224 = vmul.f32 %v1227, %v1793
        %v2225 = vmul.f32 %v1231, %v1801
        %v2226 = vmul.f32 %v1235, %v1800
        %v2227 = vmul.f32 %v1239, %v1802
        %v2228 = vmul.f32 %v1243, %v1810
        %v2229 = vmul.f32 %v1247, %v1818
        %v2230 = vmul.f32 %v1251, %v1817
        %v2231 = vmul.f32 %v1255, %v1819
        %v2232 = vmul.f32 %v1259, %v1827
        %v2233 = vmul.f32 %v1263, %v1835
        %v2234 = vmul.f32 %v1267, %v1834
        %v2235 = vmul.f32 %v1271, %v1836
        %v2236 = vmul.f32 %v1275, %v1844
        %v2237 = vmul.f32 %v1279, %v1852
        %v2238 = vmul.f32 %v1283, %v1851
        %v2239 = vmul.f32 %v1287, %v1853
        %v2240 = vmul.f32 %v1259, %v1861
        %v2241 = vmul.f32 %v1263, %v1869
        %v2242 = vmul.f32 %v1267, %v1868
        %v2243 = vmul.f32 %v1271, %v1870
        %v2244 = vmul.f32 %v1275, %v1878
        %v2245 = vmul.f32 %v1279, %v1886
        %v2246 = vmul.f32 %v1283, %v1885
        %v2247 = vmul.f32 %v1287, %v1887
        %v2248 = vmul.f32 %v1291, %v1895
        %v2249 = vmul.f32 %v1295, %v1903
        %v2250 = vmul.f32 %v1299, %v1902
        %v2251 = vmul.f32 %v1303, %v1904
        %v2252 = vmul.f32 %v1307, %v1912
        %v2253 = vmul.f32 %v1311, %v1920
        %v2254 = vmul.f32 %v1315, %v1919
        %v2255 = vmul.f32 %v1319, %v1921
        %v2256 = vmul.f32 %v1291, %v1929
        %v2257 = vmul.f32 %v1295, %v1937
        %v2258 = vmul.f32 %v1299, %v1936
        %v2259 = vmul.f32 %v1303, %v1938
        %v2260 = vmul.f32 %v1307, %v1946
        %v2261 = vmul.f32 %v1311, %v1954
        %v2262 = vmul.f32 %v1315, %v1953
        %v2263 = vmul.f32 %v1319, %v1955
        %v2264 = vmul.f32 %v1323, %v1963
        %v2265 = vmul.f32 %v1327, %v1971
        %v2266 = vmul.f32 %v1331, %v1970
        %v2267 = vmul.f32 %v1335, %v1972
        %v2268 = vmul.f32 %v1339, %v1980
        %v2269 = vmul.f32 %v1343, %v1988
        %v2270 = vmul.f32 %v1347, %v1987
        %v2271 = vmul.f32 %v1351, %v1989
        %v2272 = vmul.f32 %v1323, %v1997
        %v2273 = vmul.f32 %v1327, %v2005
        %v2274 = vmul.f32 %v1331, %v2004
        %v2275 = vmul.f32 %v1335, %v2006
        %v2276 = vmul.f32 %v1339, %v2014
        %v2277 = vmul.f32 %v1343, %v2022
        %v2278 = vmul.f32 %v1347, %v2021
        %v2279 = vmul.f32 %v1351, %v2023
        %2408 = vrot.lane.b32.xlu0 %v2152, 124
        %v2409 = vpop.permute.xlu0 %2408
        %2410 = vrot.lane.b32.xlu0 %v2153, 124
        %v2411 = vpop.permute.xlu0 %2410
        %2412 = vrot.lane.b32.xlu0 %v2154, 124
        %v2413 = vpop.permute.xlu0 %2412
        %2414 = vrot.lane.b32.xlu0 %v2155, 124
        %v2415 = vpop.permute.xlu0 %2414
        %2416 = vrot.lane.b32.xlu0 %v2156, 124
        %v2417 = vpop.permute.xlu0 %2416
        %2418 = vrot.lane.b32.xlu0 %v2157, 124
        %v2419 = vpop.permute.xlu0 %2418
        %2420 = vrot.lane.b32.xlu0 %v2158, 124
        %v2421 = vpop.permute.xlu0 %2420
        %2422 = vrot.lane.b32.xlu0 %v2159, 124
        %v2423 = vpop.permute.xlu0 %2422
        %2424 = vrot.lane.b32.xlu0 %v2160, 124
        %v2425 = vpop.permute.xlu0 %2424
        %2426 = vrot.lane.b32.xlu0 %v2161, 124
        %v2427 = vpop.permute.xlu0 %2426
        %2428 = vrot.lane.b32.xlu0 %v2162, 124
        %v2429 = vpop.permute.xlu0 %2428
        %2430 = vrot.lane.b32.xlu0 %v2163, 124
        %v2431 = vpop.permute.xlu0 %2430
        %2432 = vrot.lane.b32.xlu0 %v2164, 124
        %v2433 = vpop.permute.xlu0 %2432
        %2434 = vrot.lane.b32.xlu0 %v2165, 124
        %v2435 = vpop.permute.xlu0 %2434
        %2436 = vrot.lane.b32.xlu0 %v2166, 124
        %v2437 = vpop.permute.xlu0 %2436
        %2438 = vrot.lane.b32.xlu0 %v2167, 124
        %v2439 = vpop.permute.xlu0 %2438
        %2440 = vrot.lane.b32.xlu0 %v2168, 124
        %v2441 = vpop.permute.xlu0 %2440
        %2442 = vrot.lane.b32.xlu0 %v2169, 124
        %v2443 = vpop.permute.xlu0 %2442
        %2444 = vrot.lane.b32.xlu0 %v2170, 124
        %v2445 = vpop.permute.xlu0 %2444
        %2446 = vrot.lane.b32.xlu0 %v2171, 124
        %v2447 = vpop.permute.xlu0 %2446
        %2448 = vrot.lane.b32.xlu0 %v2172, 124
        %v2449 = vpop.permute.xlu0 %2448
        %2450 = vrot.lane.b32.xlu0 %v2173, 124
        %v2451 = vpop.permute.xlu0 %2450
        %2452 = vrot.lane.b32.xlu0 %v2174, 124
        %v2453 = vpop.permute.xlu0 %2452
        %2454 = vrot.lane.b32.xlu0 %v2175, 124
        %v2455 = vpop.permute.xlu0 %2454
        %2456 = vrot.lane.b32.xlu0 %v2176, 124
        %v2457 = vpop.permute.xlu0 %2456
        %2458 = vrot.lane.b32.xlu0 %v2177, 124
        %v2459 = vpop.permute.xlu0 %2458
        %2460 = vrot.lane.b32.xlu0 %v2178, 124
        %v2461 = vpop.permute.xlu0 %2460
        %2462 = vrot.lane.b32.xlu0 %v2179, 124
        %v2463 = vpop.permute.xlu0 %2462
        %2464 = vrot.lane.b32.xlu0 %v2180, 124
        %v2465 = vpop.permute.xlu0 %2464
        %2466 = vrot.lane.b32.xlu0 %v2181, 124
        %v2467 = vpop.permute.xlu0 %2466
        %2468 = vrot.lane.b32.xlu0 %v2182, 124
        %v2469 = vpop.permute.xlu0 %2468
        %2470 = vrot.lane.b32.xlu0 %v2183, 124
        %v2471 = vpop.permute.xlu0 %2470
        %2472 = vrot.lane.b32.xlu0 %v2184, 124
        %v2473 = vpop.permute.xlu0 %2472
        %2474 = vrot.lane.b32.xlu0 %v2185, 124
        %v2475 = vpop.permute.xlu0 %2474
        %2476 = vrot.lane.b32.xlu0 %v2186, 124
        %v2477 = vpop.permute.xlu0 %2476
        %2478 = vrot.lane.b32.xlu0 %v2187, 124
        %v2479 = vpop.permute.xlu0 %2478
        %2480 = vrot.lane.b32.xlu0 %v2188, 124
        %v2481 = vpop.permute.xlu0 %2480
        %2482 = vrot.lane.b32.xlu0 %v2189, 124
        %v2483 = vpop.permute.xlu0 %2482
        %2484 = vrot.lane.b32.xlu0 %v2190, 124
        %v2485 = vpop.permute.xlu0 %2484
        %2486 = vrot.lane.b32.xlu0 %v2191, 124
        %v2487 = vpop.permute.xlu0 %2486
        %2488 = vrot.lane.b32.xlu0 %v2192, 124
        %v2489 = vpop.permute.xlu0 %2488
        %2490 = vrot.lane.b32.xlu0 %v2193, 124
        %v2491 = vpop.permute.xlu0 %2490
        %2492 = vrot.lane.b32.xlu0 %v2194, 124
        %v2493 = vpop.permute.xlu0 %2492
        %2494 = vrot.lane.b32.xlu0 %v2195, 124
        %v2495 = vpop.permute.xlu0 %2494
        %2496 = vrot.lane.b32.xlu0 %v2196, 124
        %v2497 = vpop.permute.xlu0 %2496
        %2498 = vrot.lane.b32.xlu0 %v2197, 124
        %v2499 = vpop.permute.xlu0 %2498
        %2500 = vrot.lane.b32.xlu0 %v2198, 124
        %v2501 = vpop.permute.xlu0 %2500
        %2502 = vrot.lane.b32.xlu0 %v2199, 124
        %v2503 = vpop.permute.xlu0 %2502
        %2504 = vrot.lane.b32.xlu0 %v2200, 124
        %v2505 = vpop.permute.xlu0 %2504
        %2506 = vrot.lane.b32.xlu0 %v2201, 124
        %v2507 = vpop.permute.xlu0 %2506
        %2508 = vrot.lane.b32.xlu0 %v2202, 124
        %v2509 = vpop.permute.xlu0 %2508
        %2510 = vrot.lane.b32.xlu0 %v2203, 124
        %v2511 = vpop.permute.xlu0 %2510
        %2512 = vrot.lane.b32.xlu0 %v2204, 124
        %v2513 = vpop.permute.xlu0 %2512
        %2514 = vrot.lane.b32.xlu0 %v2205, 124
        %v2515 = vpop.permute.xlu0 %2514
        %2516 = vrot.lane.b32.xlu0 %v2206, 124
        %v2517 = vpop.permute.xlu0 %2516
        %2518 = vrot.lane.b32.xlu0 %v2207, 124
        %v2519 = vpop.permute.xlu0 %2518
        %2520 = vrot.lane.b32.xlu0 %v2208, 124
        %v2521 = vpop.permute.xlu0 %2520
        %2522 = vrot.lane.b32.xlu0 %v2209, 124
        %v2523 = vpop.permute.xlu0 %2522
        %2524 = vrot.lane.b32.xlu0 %v2210, 124
        %v2525 = vpop.permute.xlu0 %2524
        %2526 = vrot.lane.b32.xlu0 %v2211, 124
        %v2527 = vpop.permute.xlu0 %2526
        %2528 = vrot.lane.b32.xlu0 %v2212, 124
        %v2529 = vpop.permute.xlu0 %2528
        %2530 = vrot.lane.b32.xlu0 %v2213, 124
        %v2531 = vpop.permute.xlu0 %2530
        %2532 = vrot.lane.b32.xlu0 %v2214, 124
        %v2533 = vpop.permute.xlu0 %2532
        %2534 = vrot.lane.b32.xlu0 %v2215, 124
        %v2535 = vpop.permute.xlu0 %2534
        %2536 = vrot.lane.b32.xlu0 %v2216, 124
        %v2537 = vpop.permute.xlu0 %2536
        %2538 = vrot.lane.b32.xlu0 %v2217, 124
        %v2539 = vpop.permute.xlu0 %2538
        %2540 = vrot.lane.b32.xlu0 %v2218, 124
        %v2541 = vpop.permute.xlu0 %2540
        %2542 = vrot.lane.b32.xlu0 %v2219, 124
        %v2543 = vpop.permute.xlu0 %2542
        %2544 = vrot.lane.b32.xlu0 %v2220, 124
        %v2545 = vpop.permute.xlu0 %2544
        %2546 = vrot.lane.b32.xlu0 %v2221, 124
        %v2547 = vpop.permute.xlu0 %2546
        %2548 = vrot.lane.b32.xlu0 %v2222, 124
        %v2549 = vpop.permute.xlu0 %2548
        %2550 = vrot.lane.b32.xlu0 %v2223, 124
        %v2551 = vpop.permute.xlu0 %2550
        %2552 = vrot.lane.b32.xlu0 %v2224, 124
        %v2553 = vpop.permute.xlu0 %2552
        %2554 = vrot.lane.b32.xlu0 %v2225, 124
        %v2555 = vpop.permute.xlu0 %2554
        %2556 = vrot.lane.b32.xlu0 %v2226, 124
        %v2557 = vpop.permute.xlu0 %2556
        %2558 = vrot.lane.b32.xlu0 %v2227, 124
        %v2559 = vpop.permute.xlu0 %2558
        %2560 = vrot.lane.b32.xlu0 %v2228, 124
        %v2561 = vpop.permute.xlu0 %2560
        %2562 = vrot.lane.b32.xlu0 %v2229, 124
        %v2563 = vpop.permute.xlu0 %2562
        %2564 = vrot.lane.b32.xlu0 %v2230, 124
        %v2565 = vpop.permute.xlu0 %2564
        %2566 = vrot.lane.b32.xlu0 %v2231, 124
        %v2567 = vpop.permute.xlu0 %2566
        %2568 = vrot.lane.b32.xlu0 %v2232, 124
        %v2569 = vpop.permute.xlu0 %2568
        %2570 = vrot.lane.b32.xlu0 %v2233, 124
        %v2571 = vpop.permute.xlu0 %2570
        %2572 = vrot.lane.b32.xlu0 %v2234, 124
        %v2573 = vpop.permute.xlu0 %2572
        %2574 = vrot.lane.b32.xlu0 %v2235, 124
        %v2575 = vpop.permute.xlu0 %2574
        %2576 = vrot.lane.b32.xlu0 %v2236, 124
        %v2577 = vpop.permute.xlu0 %2576
        %2578 = vrot.lane.b32.xlu0 %v2237, 124
        %v2579 = vpop.permute.xlu0 %2578
        %2580 = vrot.lane.b32.xlu0 %v2238, 124
        %v2581 = vpop.permute.xlu0 %2580
        %2582 = vrot.lane.b32.xlu0 %v2239, 124
        %v2583 = vpop.permute.xlu0 %2582
        %2584 = vrot.lane.b32.xlu0 %v2240, 124
        %v2585 = vpop.permute.xlu0 %2584
        %2586 = vrot.lane.b32.xlu0 %v2241, 124
        %v2587 = vpop.permute.xlu0 %2586
        %2588 = vrot.lane.b32.xlu0 %v2242, 124
        %v2589 = vpop.permute.xlu0 %2588
        %2590 = vrot.lane.b32.xlu0 %v2243, 124
        %v2591 = vpop.permute.xlu0 %2590
        %2592 = vrot.lane.b32.xlu0 %v2244, 124
        %v2593 = vpop.permute.xlu0 %2592
        %2594 = vrot.lane.b32.xlu0 %v2245, 124
        %v2595 = vpop.permute.xlu0 %2594
        %2596 = vrot.lane.b32.xlu0 %v2246, 124
        %v2597 = vpop.permute.xlu0 %2596
        %2598 = vrot.lane.b32.xlu0 %v2247, 124
        %v2599 = vpop.permute.xlu0 %2598
        %2600 = vrot.lane.b32.xlu0 %v2248, 124
        %v2601 = vpop.permute.xlu0 %2600
        %2602 = vrot.lane.b32.xlu0 %v2249, 124
        %v2603 = vpop.permute.xlu0 %2602
        %2604 = vrot.lane.b32.xlu0 %v2250, 124
        %v2605 = vpop.permute.xlu0 %2604
        %2606 = vrot.lane.b32.xlu0 %v2251, 124
        %v2607 = vpop.permute.xlu0 %2606
        %2608 = vrot.lane.b32.xlu0 %v2252, 124
        %v2609 = vpop.permute.xlu0 %2608
        %2610 = vrot.lane.b32.xlu0 %v2253, 124
        %v2611 = vpop.permute.xlu0 %2610
        %2612 = vrot.lane.b32.xlu0 %v2254, 124
        %v2613 = vpop.permute.xlu0 %2612
        %2614 = vrot.lane.b32.xlu0 %v2255, 124
        %v2615 = vpop.permute.xlu0 %2614
        %2616 = vrot.lane.b32.xlu0 %v2256, 124
        %v2617 = vpop.permute.xlu0 %2616
        %2618 = vrot.lane.b32.xlu0 %v2257, 124
        %v2619 = vpop.permute.xlu0 %2618
        %2620 = vrot.lane.b32.xlu0 %v2258, 124
        %v2621 = vpop.permute.xlu0 %2620
        %2622 = vrot.lane.b32.xlu0 %v2259, 124
        %v2623 = vpop.permute.xlu0 %2622
        %2624 = vrot.lane.b32.xlu0 %v2260, 124
        %v2625 = vpop.permute.xlu0 %2624
        %2626 = vrot.lane.b32.xlu0 %v2261, 124
        %v2627 = vpop.permute.xlu0 %2626
        %2628 = vrot.lane.b32.xlu0 %v2262, 124
        %v2629 = vpop.permute.xlu0 %2628
        %2630 = vrot.lane.b32.xlu0 %v2263, 124
        %v2631 = vpop.permute.xlu0 %2630
        %2632 = vrot.lane.b32.xlu0 %v2264, 124
        %v2633 = vpop.permute.xlu0 %2632
        %2634 = vrot.lane.b32.xlu0 %v2265, 124
        %v2635 = vpop.permute.xlu0 %2634
        %2636 = vrot.lane.b32.xlu0 %v2266, 124
        %v2637 = vpop.permute.xlu0 %2636
        %2638 = vrot.lane.b32.xlu0 %v2267, 124
        %v2639 = vpop.permute.xlu0 %2638
        %2640 = vrot.lane.b32.xlu0 %v2268, 124
        %v2641 = vpop.permute.xlu0 %2640
        %2642 = vrot.lane.b32.xlu0 %v2269, 124
        %v2643 = vpop.permute.xlu0 %2642
        %2644 = vrot.lane.b32.xlu0 %v2270, 124
        %v2645 = vpop.permute.xlu0 %2644
        %2646 = vrot.lane.b32.xlu0 %v2271, 124
        %v2647 = vpop.permute.xlu0 %2646
        %2648 = vrot.lane.b32.xlu0 %v2272, 124
        %v2649 = vpop.permute.xlu0 %2648
        %2650 = vrot.lane.b32.xlu0 %v2273, 124
        %v2651 = vpop.permute.xlu0 %2650
        %2652 = vrot.lane.b32.xlu0 %v2274, 124
        %v2653 = vpop.permute.xlu0 %2652
        %2654 = vrot.lane.b32.xlu0 %v2275, 124
        %v2655 = vpop.permute.xlu0 %2654
        %2656 = vrot.lane.b32.xlu0 %v2276, 124
        %v2657 = vpop.permute.xlu0 %2656
        %2658 = vrot.lane.b32.xlu0 %v2277, 124
        %v2659 = vpop.permute.xlu0 %2658
        %2660 = vrot.lane.b32.xlu0 %v2278, 124
        %v2661 = vpop.permute.xlu0 %2660
        %2662 = vrot.lane.b32.xlu0 %v2279, 124
        %v2663 = vpop.permute.xlu0 %2662
        %v2792 = vadd.f32 %v2152, %v2409
        %v2793 = vadd.f32 %v2153, %v2411
        %v2794 = vadd.f32 %v2154, %v2413
        %v2795 = vadd.f32 %v2155, %v2415
        %v2796 = vadd.f32 %v2156, %v2417
        %v2797 = vadd.f32 %v2157, %v2419
        %v2798 = vadd.f32 %v2158, %v2421
        %v2799 = vadd.f32 %v2159, %v2423
        %v2800 = vadd.f32 %v2160, %v2425
        %v2801 = vadd.f32 %v2161, %v2427
        %v2802 = vadd.f32 %v2162, %v2429
        %v2803 = vadd.f32 %v2163, %v2431
        %v2804 = vadd.f32 %v2164, %v2433
        %v2805 = vadd.f32 %v2165, %v2435
        %v2806 = vadd.f32 %v2166, %v2437
        %v2807 = vadd.f32 %v2167, %v2439
        %v2808 = vadd.f32 %v2168, %v2441
        %v2809 = vadd.f32 %v2169, %v2443
        %v2810 = vadd.f32 %v2170, %v2445
        %v2811 = vadd.f32 %v2171, %v2447
        %v2812 = vadd.f32 %v2172, %v2449
        %v2813 = vadd.f32 %v2173, %v2451
        %v2814 = vadd.f32 %v2174, %v2453
        %v2815 = vadd.f32 %v2175, %v2455
        %v2816 = vadd.f32 %v2176, %v2457
        %v2817 = vadd.f32 %v2177, %v2459
        %v2818 = vadd.f32 %v2178, %v2461
        %v2819 = vadd.f32 %v2179, %v2463
        %v2820 = vadd.f32 %v2180, %v2465
        %v2821 = vadd.f32 %v2181, %v2467
        %v2822 = vadd.f32 %v2182, %v2469
        %v2823 = vadd.f32 %v2183, %v2471
        %v2824 = vadd.f32 %v2184, %v2473
        %v2825 = vadd.f32 %v2185, %v2475
        %v2826 = vadd.f32 %v2186, %v2477
        %v2827 = vadd.f32 %v2187, %v2479
        %v2828 = vadd.f32 %v2188, %v2481
        %v2829 = vadd.f32 %v2189, %v2483
        %v2830 = vadd.f32 %v2190, %v2485
        %v2831 = vadd.f32 %v2191, %v2487
        %v2832 = vadd.f32 %v2192, %v2489
        %v2833 = vadd.f32 %v2193, %v2491
        %v2834 = vadd.f32 %v2194, %v2493
        %v2835 = vadd.f32 %v2195, %v2495
        %v2836 = vadd.f32 %v2196, %v2497
        %v2837 = vadd.f32 %v2197, %v2499
        %v2838 = vadd.f32 %v2198, %v2501
        %v2839 = vadd.f32 %v2199, %v2503
        %v2840 = vadd.f32 %v2200, %v2505
        %v2841 = vadd.f32 %v2201, %v2507
        %v2842 = vadd.f32 %v2202, %v2509
        %v2843 = vadd.f32 %v2203, %v2511
        %v2844 = vadd.f32 %v2204, %v2513
        %v2845 = vadd.f32 %v2205, %v2515
        %v2846 = vadd.f32 %v2206, %v2517
        %v2847 = vadd.f32 %v2207, %v2519
        %v2848 = vadd.f32 %v2208, %v2521
        %v2849 = vadd.f32 %v2209, %v2523
        %v2850 = vadd.f32 %v2210, %v2525
        %v2851 = vadd.f32 %v2211, %v2527
        %v2852 = vadd.f32 %v2212, %v2529
        %v2853 = vadd.f32 %v2213, %v2531
        %v2854 = vadd.f32 %v2214, %v2533
        %v2855 = vadd.f32 %v2215, %v2535
        %v2856 = vadd.f32 %v2216, %v2537
        %v2857 = vadd.f32 %v2217, %v2539
        %v2858 = vadd.f32 %v2218, %v2541
        %v2859 = vadd.f32 %v2219, %v2543
        %v2860 = vadd.f32 %v2220, %v2545
        %v2861 = vadd.f32 %v2221, %v2547
        %v2862 = vadd.f32 %v2222, %v2549
        %v2863 = vadd.f32 %v2223, %v2551
        %v2864 = vadd.f32 %v2224, %v2553
        %v2865 = vadd.f32 %v2225, %v2555
        %v2866 = vadd.f32 %v2226, %v2557
        %v2867 = vadd.f32 %v2227, %v2559
        %v2868 = vadd.f32 %v2228, %v2561
        %v2869 = vadd.f32 %v2229, %v2563
        %v2870 = vadd.f32 %v2230, %v2565
        %v2871 = vadd.f32 %v2231, %v2567
        %v2872 = vadd.f32 %v2232, %v2569
        %v2873 = vadd.f32 %v2233, %v2571
        %v2874 = vadd.f32 %v2234, %v2573
        %v2875 = vadd.f32 %v2235, %v2575
        %v2876 = vadd.f32 %v2236, %v2577
        %v2877 = vadd.f32 %v2237, %v2579
        %v2878 = vadd.f32 %v2238, %v2581
        %v2879 = vadd.f32 %v2239, %v2583
        %v2880 = vadd.f32 %v2240, %v2585
        %v2881 = vadd.f32 %v2241, %v2587
        %v2882 = vadd.f32 %v2242, %v2589
        %v2883 = vadd.f32 %v2243, %v2591
        %v2884 = vadd.f32 %v2244, %v2593
        %v2885 = vadd.f32 %v2245, %v2595
        %v2886 = vadd.f32 %v2246, %v2597
        %v2887 = vadd.f32 %v2247, %v2599
        %v2888 = vadd.f32 %v2248, %v2601
        %v2889 = vadd.f32 %v2249, %v2603
        %v2890 = vadd.f32 %v2250, %v2605
        %v2891 = vadd.f32 %v2251, %v2607
        %v2892 = vadd.f32 %v2252, %v2609
        %v2893 = vadd.f32 %v2253, %v2611
        %v2894 = vadd.f32 %v2254, %v2613
        %v2895 = vadd.f32 %v2255, %v2615
        %v2896 = vadd.f32 %v2256, %v2617
        %v2897 = vadd.f32 %v2257, %v2619
        %v2898 = vadd.f32 %v2258, %v2621
        %v2899 = vadd.f32 %v2259, %v2623
        %v2900 = vadd.f32 %v2260, %v2625
        %v2901 = vadd.f32 %v2261, %v2627
        %v2902 = vadd.f32 %v2262, %v2629
        %v2903 = vadd.f32 %v2263, %v2631
        %v2904 = vadd.f32 %v2264, %v2633
        %v2905 = vadd.f32 %v2265, %v2635
        %v2906 = vadd.f32 %v2266, %v2637
        %v2907 = vadd.f32 %v2267, %v2639
        %v2908 = vadd.f32 %v2268, %v2641
        %v2909 = vadd.f32 %v2269, %v2643
        %v2910 = vadd.f32 %v2270, %v2645
        %v2911 = vadd.f32 %v2271, %v2647
        %v2912 = vadd.f32 %v2272, %v2649
        %v2913 = vadd.f32 %v2273, %v2651
        %v2914 = vadd.f32 %v2274, %v2653
        %v2915 = vadd.f32 %v2275, %v2655
        %v2916 = vadd.f32 %v2276, %v2657
        %v2917 = vadd.f32 %v2277, %v2659
        %v2918 = vadd.f32 %v2278, %v2661
        %v2919 = vadd.f32 %v2279, %v2663
        %2920 = vrot.lane.b32.xlu0 %v2152, 120
        %v2921 = vpop.permute.xlu0 %2920
        %2922 = vrot.lane.b32.xlu0 %v2153, 120
        %v2923 = vpop.permute.xlu0 %2922
        %2924 = vrot.lane.b32.xlu0 %v2154, 120
        %v2925 = vpop.permute.xlu0 %2924
        %2926 = vrot.lane.b32.xlu0 %v2155, 120
        %v2927 = vpop.permute.xlu0 %2926
        %2928 = vrot.lane.b32.xlu0 %v2156, 120
        %v2929 = vpop.permute.xlu0 %2928
        %2930 = vrot.lane.b32.xlu0 %v2157, 120
        %v2931 = vpop.permute.xlu0 %2930
        %2932 = vrot.lane.b32.xlu0 %v2158, 120
        %v2933 = vpop.permute.xlu0 %2932
        %2934 = vrot.lane.b32.xlu0 %v2159, 120
        %v2935 = vpop.permute.xlu0 %2934
        %2936 = vrot.lane.b32.xlu0 %v2160, 120
        %v2937 = vpop.permute.xlu0 %2936
        %2938 = vrot.lane.b32.xlu0 %v2161, 120
        %v2939 = vpop.permute.xlu0 %2938
        %2940 = vrot.lane.b32.xlu0 %v2162, 120
        %v2941 = vpop.permute.xlu0 %2940
        %2942 = vrot.lane.b32.xlu0 %v2163, 120
        %v2943 = vpop.permute.xlu0 %2942
        %2944 = vrot.lane.b32.xlu0 %v2164, 120
        %v2945 = vpop.permute.xlu0 %2944
        %2946 = vrot.lane.b32.xlu0 %v2165, 120
        %v2947 = vpop.permute.xlu0 %2946
        %2948 = vrot.lane.b32.xlu0 %v2166, 120
        %v2949 = vpop.permute.xlu0 %2948
        %2950 = vrot.lane.b32.xlu0 %v2167, 120
        %v2951 = vpop.permute.xlu0 %2950
        %2952 = vrot.lane.b32.xlu0 %v2168, 120
        %v2953 = vpop.permute.xlu0 %2952
        %2954 = vrot.lane.b32.xlu0 %v2169, 120
        %v2955 = vpop.permute.xlu0 %2954
        %2956 = vrot.lane.b32.xlu0 %v2170, 120
        %v2957 = vpop.permute.xlu0 %2956
        %2958 = vrot.lane.b32.xlu0 %v2171, 120
        %v2959 = vpop.permute.xlu0 %2958
        %2960 = vrot.lane.b32.xlu0 %v2172, 120
        %v2961 = vpop.permute.xlu0 %2960
        %2962 = vrot.lane.b32.xlu0 %v2173, 120
        %v2963 = vpop.permute.xlu0 %2962
        %2964 = vrot.lane.b32.xlu0 %v2174, 120
        %v2965 = vpop.permute.xlu0 %2964
        %2966 = vrot.lane.b32.xlu0 %v2175, 120
        %v2967 = vpop.permute.xlu0 %2966
        %2968 = vrot.lane.b32.xlu0 %v2176, 120
        %v2969 = vpop.permute.xlu0 %2968
        %2970 = vrot.lane.b32.xlu0 %v2177, 120
        %v2971 = vpop.permute.xlu0 %2970
        %2972 = vrot.lane.b32.xlu0 %v2178, 120
        %v2973 = vpop.permute.xlu0 %2972
        %2974 = vrot.lane.b32.xlu0 %v2179, 120
        %v2975 = vpop.permute.xlu0 %2974
        %2976 = vrot.lane.b32.xlu0 %v2180, 120
        %v2977 = vpop.permute.xlu0 %2976
        %2978 = vrot.lane.b32.xlu0 %v2181, 120
        %v2979 = vpop.permute.xlu0 %2978
        %2980 = vrot.lane.b32.xlu0 %v2182, 120
        %v2981 = vpop.permute.xlu0 %2980
        %2982 = vrot.lane.b32.xlu0 %v2183, 120
        %v2983 = vpop.permute.xlu0 %2982
        %2984 = vrot.lane.b32.xlu0 %v2184, 120
        %v2985 = vpop.permute.xlu0 %2984
        %2986 = vrot.lane.b32.xlu0 %v2185, 120
        %v2987 = vpop.permute.xlu0 %2986
        %2988 = vrot.lane.b32.xlu0 %v2186, 120
        %v2989 = vpop.permute.xlu0 %2988
        %2990 = vrot.lane.b32.xlu0 %v2187, 120
        %v2991 = vpop.permute.xlu0 %2990
        %2992 = vrot.lane.b32.xlu0 %v2188, 120
        %v2993 = vpop.permute.xlu0 %2992
        %2994 = vrot.lane.b32.xlu0 %v2189, 120
        %v2995 = vpop.permute.xlu0 %2994
        %2996 = vrot.lane.b32.xlu0 %v2190, 120
        %v2997 = vpop.permute.xlu0 %2996
        %2998 = vrot.lane.b32.xlu0 %v2191, 120
        %v2999 = vpop.permute.xlu0 %2998
        %3000 = vrot.lane.b32.xlu0 %v2192, 120
        %v3001 = vpop.permute.xlu0 %3000
        %3002 = vrot.lane.b32.xlu0 %v2193, 120
        %v3003 = vpop.permute.xlu0 %3002
        %3004 = vrot.lane.b32.xlu0 %v2194, 120
        %v3005 = vpop.permute.xlu0 %3004
        %3006 = vrot.lane.b32.xlu0 %v2195, 120
        %v3007 = vpop.permute.xlu0 %3006
        %3008 = vrot.lane.b32.xlu0 %v2196, 120
        %v3009 = vpop.permute.xlu0 %3008
        %3010 = vrot.lane.b32.xlu0 %v2197, 120
        %v3011 = vpop.permute.xlu0 %3010
        %3012 = vrot.lane.b32.xlu0 %v2198, 120
        %v3013 = vpop.permute.xlu0 %3012
        %3014 = vrot.lane.b32.xlu0 %v2199, 120
        %v3015 = vpop.permute.xlu0 %3014
        %3016 = vrot.lane.b32.xlu0 %v2200, 120
        %v3017 = vpop.permute.xlu0 %3016
        %3018 = vrot.lane.b32.xlu0 %v2201, 120
        %v3019 = vpop.permute.xlu0 %3018
        %3020 = vrot.lane.b32.xlu0 %v2202, 120
        %v3021 = vpop.permute.xlu0 %3020
        %3022 = vrot.lane.b32.xlu0 %v2203, 120
        %v3023 = vpop.permute.xlu0 %3022
        %3024 = vrot.lane.b32.xlu0 %v2204, 120
        %v3025 = vpop.permute.xlu0 %3024
        %3026 = vrot.lane.b32.xlu0 %v2205, 120
        %v3027 = vpop.permute.xlu0 %3026
        %3028 = vrot.lane.b32.xlu0 %v2206, 120
        %v3029 = vpop.permute.xlu0 %3028
        %3030 = vrot.lane.b32.xlu0 %v2207, 120
        %v3031 = vpop.permute.xlu0 %3030
        %3032 = vrot.lane.b32.xlu0 %v2208, 120
        %v3033 = vpop.permute.xlu0 %3032
        %3034 = vrot.lane.b32.xlu0 %v2209, 120
        %v3035 = vpop.permute.xlu0 %3034
        %3036 = vrot.lane.b32.xlu0 %v2210, 120
        %v3037 = vpop.permute.xlu0 %3036
        %3038 = vrot.lane.b32.xlu0 %v2211, 120
        %v3039 = vpop.permute.xlu0 %3038
        %3040 = vrot.lane.b32.xlu0 %v2212, 120
        %v3041 = vpop.permute.xlu0 %3040
        %3042 = vrot.lane.b32.xlu0 %v2213, 120
        %v3043 = vpop.permute.xlu0 %3042
        %3044 = vrot.lane.b32.xlu0 %v2214, 120
        %v3045 = vpop.permute.xlu0 %3044
        %3046 = vrot.lane.b32.xlu0 %v2215, 120
        %v3047 = vpop.permute.xlu0 %3046
        %3048 = vrot.lane.b32.xlu0 %v2216, 120
        %v3049 = vpop.permute.xlu0 %3048
        %3050 = vrot.lane.b32.xlu0 %v2217, 120
        %v3051 = vpop.permute.xlu0 %3050
        %3052 = vrot.lane.b32.xlu0 %v2218, 120
        %v3053 = vpop.permute.xlu0 %3052
        %3054 = vrot.lane.b32.xlu0 %v2219, 120
        %v3055 = vpop.permute.xlu0 %3054
        %3056 = vrot.lane.b32.xlu0 %v2220, 120
        %v3057 = vpop.permute.xlu0 %3056
        %3058 = vrot.lane.b32.xlu0 %v2221, 120
        %v3059 = vpop.permute.xlu0 %3058
        %3060 = vrot.lane.b32.xlu0 %v2222, 120
        %v3061 = vpop.permute.xlu0 %3060
        %3062 = vrot.lane.b32.xlu0 %v2223, 120
        %v3063 = vpop.permute.xlu0 %3062
        %3064 = vrot.lane.b32.xlu0 %v2224, 120
        %v3065 = vpop.permute.xlu0 %3064
        %3066 = vrot.lane.b32.xlu0 %v2225, 120
        %v3067 = vpop.permute.xlu0 %3066
        %3068 = vrot.lane.b32.xlu0 %v2226, 120
        %v3069 = vpop.permute.xlu0 %3068
        %3070 = vrot.lane.b32.xlu0 %v2227, 120
        %v3071 = vpop.permute.xlu0 %3070
        %3072 = vrot.lane.b32.xlu0 %v2228, 120
        %v3073 = vpop.permute.xlu0 %3072
        %3074 = vrot.lane.b32.xlu0 %v2229, 120
        %v3075 = vpop.permute.xlu0 %3074
        %3076 = vrot.lane.b32.xlu0 %v2230, 120
        %v3077 = vpop.permute.xlu0 %3076
        %3078 = vrot.lane.b32.xlu0 %v2231, 120
        %v3079 = vpop.permute.xlu0 %3078
        %3080 = vrot.lane.b32.xlu0 %v2232, 120
        %v3081 = vpop.permute.xlu0 %3080
        %3082 = vrot.lane.b32.xlu0 %v2233, 120
        %v3083 = vpop.permute.xlu0 %3082
        %3084 = vrot.lane.b32.xlu0 %v2234, 120
        %v3085 = vpop.permute.xlu0 %3084
        %3086 = vrot.lane.b32.xlu0 %v2235, 120
        %v3087 = vpop.permute.xlu0 %3086
        %3088 = vrot.lane.b32.xlu0 %v2236, 120
        %v3089 = vpop.permute.xlu0 %3088
        %3090 = vrot.lane.b32.xlu0 %v2237, 120
        %v3091 = vpop.permute.xlu0 %3090
        %3092 = vrot.lane.b32.xlu0 %v2238, 120
        %v3093 = vpop.permute.xlu0 %3092
        %3094 = vrot.lane.b32.xlu0 %v2239, 120
        %v3095 = vpop.permute.xlu0 %3094
        %3096 = vrot.lane.b32.xlu0 %v2240, 120
        %v3097 = vpop.permute.xlu0 %3096
        %3098 = vrot.lane.b32.xlu0 %v2241, 120
        %v3099 = vpop.permute.xlu0 %3098
        %3100 = vrot.lane.b32.xlu0 %v2242, 120
        %v3101 = vpop.permute.xlu0 %3100
        %3102 = vrot.lane.b32.xlu0 %v2243, 120
        %v3103 = vpop.permute.xlu0 %3102
        %3104 = vrot.lane.b32.xlu0 %v2244, 120
        %v3105 = vpop.permute.xlu0 %3104
        %3106 = vrot.lane.b32.xlu0 %v2245, 120
        %v3107 = vpop.permute.xlu0 %3106
        %3108 = vrot.lane.b32.xlu0 %v2246, 120
        %v3109 = vpop.permute.xlu0 %3108
        %3110 = vrot.lane.b32.xlu0 %v2247, 120
        %v3111 = vpop.permute.xlu0 %3110
        %3112 = vrot.lane.b32.xlu0 %v2248, 120
        %v3113 = vpop.permute.xlu0 %3112
        %3114 = vrot.lane.b32.xlu0 %v2249, 120
        %v3115 = vpop.permute.xlu0 %3114
        %3116 = vrot.lane.b32.xlu0 %v2250, 120
        %v3117 = vpop.permute.xlu0 %3116
        %3118 = vrot.lane.b32.xlu0 %v2251, 120
        %v3119 = vpop.permute.xlu0 %3118
        %3120 = vrot.lane.b32.xlu0 %v2252, 120
        %v3121 = vpop.permute.xlu0 %3120
        %3122 = vrot.lane.b32.xlu0 %v2253, 120
        %v3123 = vpop.permute.xlu0 %3122
        %3124 = vrot.lane.b32.xlu0 %v2254, 120
        %v3125 = vpop.permute.xlu0 %3124
        %3126 = vrot.lane.b32.xlu0 %v2255, 120
        %v3127 = vpop.permute.xlu0 %3126
        %3128 = vrot.lane.b32.xlu0 %v2256, 120
        %v3129 = vpop.permute.xlu0 %3128
        %3130 = vrot.lane.b32.xlu0 %v2257, 120
        %v3131 = vpop.permute.xlu0 %3130
        %3132 = vrot.lane.b32.xlu0 %v2258, 120
        %v3133 = vpop.permute.xlu0 %3132
        %3134 = vrot.lane.b32.xlu0 %v2259, 120
        %v3135 = vpop.permute.xlu0 %3134
        %3136 = vrot.lane.b32.xlu0 %v2260, 120
        %v3137 = vpop.permute.xlu0 %3136
        %3138 = vrot.lane.b32.xlu0 %v2261, 120
        %v3139 = vpop.permute.xlu0 %3138
        %3140 = vrot.lane.b32.xlu0 %v2262, 120
        %v3141 = vpop.permute.xlu0 %3140
        %3142 = vrot.lane.b32.xlu0 %v2263, 120
        %v3143 = vpop.permute.xlu0 %3142
        %3144 = vrot.lane.b32.xlu0 %v2264, 120
        %v3145 = vpop.permute.xlu0 %3144
        %3146 = vrot.lane.b32.xlu0 %v2265, 120
        %v3147 = vpop.permute.xlu0 %3146
        %3148 = vrot.lane.b32.xlu0 %v2266, 120
        %v3149 = vpop.permute.xlu0 %3148
        %3150 = vrot.lane.b32.xlu0 %v2267, 120
        %v3151 = vpop.permute.xlu0 %3150
        %3152 = vrot.lane.b32.xlu0 %v2268, 120
        %v3153 = vpop.permute.xlu0 %3152
        %3154 = vrot.lane.b32.xlu0 %v2269, 120
        %v3155 = vpop.permute.xlu0 %3154
        %3156 = vrot.lane.b32.xlu0 %v2270, 120
        %v3157 = vpop.permute.xlu0 %3156
        %3158 = vrot.lane.b32.xlu0 %v2271, 120
        %v3159 = vpop.permute.xlu0 %3158
        %3160 = vrot.lane.b32.xlu0 %v2272, 120
        %v3161 = vpop.permute.xlu0 %3160
        %3162 = vrot.lane.b32.xlu0 %v2273, 120
        %v3163 = vpop.permute.xlu0 %3162
        %3164 = vrot.lane.b32.xlu0 %v2274, 120
        %v3165 = vpop.permute.xlu0 %3164
        %3166 = vrot.lane.b32.xlu0 %v2275, 120
        %v3167 = vpop.permute.xlu0 %3166
        %3168 = vrot.lane.b32.xlu0 %v2276, 120
        %v3169 = vpop.permute.xlu0 %3168
        %3170 = vrot.lane.b32.xlu0 %v2277, 120
        %v3171 = vpop.permute.xlu0 %3170
        %3172 = vrot.lane.b32.xlu0 %v2278, 120
        %v3173 = vpop.permute.xlu0 %3172
        %3174 = vrot.lane.b32.xlu0 %v2279, 120
        %v3175 = vpop.permute.xlu0 %3174
        %v3304 = vadd.f32 %v2792, %v2921
        %v3305 = vadd.f32 %v2793, %v2923
        %v3306 = vadd.f32 %v2794, %v2925
        %v3307 = vadd.f32 %v2795, %v2927
        %v3308 = vadd.f32 %v2796, %v2929
        %v3309 = vadd.f32 %v2797, %v2931
        %v3310 = vadd.f32 %v2798, %v2933
        %v3311 = vadd.f32 %v2799, %v2935
        %v3312 = vadd.f32 %v2800, %v2937
        %v3313 = vadd.f32 %v2801, %v2939
        %v3314 = vadd.f32 %v2802, %v2941
        %v3315 = vadd.f32 %v2803, %v2943
        %v3316 = vadd.f32 %v2804, %v2945
        %v3317 = vadd.f32 %v2805, %v2947
        %v3318 = vadd.f32 %v2806, %v2949
        %v3319 = vadd.f32 %v2807, %v2951
        %v3320 = vadd.f32 %v2808, %v2953
        %v3321 = vadd.f32 %v2809, %v2955
        %v3322 = vadd.f32 %v2810, %v2957
        %v3323 = vadd.f32 %v2811, %v2959
        %v3324 = vadd.f32 %v2812, %v2961
        %v3325 = vadd.f32 %v2813, %v2963
        %v3326 = vadd.f32 %v2814, %v2965
        %v3327 = vadd.f32 %v2815, %v2967
        %v3328 = vadd.f32 %v2816, %v2969
        %v3329 = vadd.f32 %v2817, %v2971
        %v3330 = vadd.f32 %v2818, %v2973
        %v3331 = vadd.f32 %v2819, %v2975
        %v3332 = vadd.f32 %v2820, %v2977
        %v3333 = vadd.f32 %v2821, %v2979
        %v3334 = vadd.f32 %v2822, %v2981
        %v3335 = vadd.f32 %v2823, %v2983
        %v3336 = vadd.f32 %v2824, %v2985
        %v3337 = vadd.f32 %v2825, %v2987
        %v3338 = vadd.f32 %v2826, %v2989
        %v3339 = vadd.f32 %v2827, %v2991
        %v3340 = vadd.f32 %v2828, %v2993
        %v3341 = vadd.f32 %v2829, %v2995
        %v3342 = vadd.f32 %v2830, %v2997
        %v3343 = vadd.f32 %v2831, %v2999
        %v3344 = vadd.f32 %v2832, %v3001
        %v3345 = vadd.f32 %v2833, %v3003
        %v3346 = vadd.f32 %v2834, %v3005
        %v3347 = vadd.f32 %v2835, %v3007
        %v3348 = vadd.f32 %v2836, %v3009
        %v3349 = vadd.f32 %v2837, %v3011
        %v3350 = vadd.f32 %v2838, %v3013
        %v3351 = vadd.f32 %v2839, %v3015
        %v3352 = vadd.f32 %v2840, %v3017
        %v3353 = vadd.f32 %v2841, %v3019
        %v3354 = vadd.f32 %v2842, %v3021
        %v3355 = vadd.f32 %v2843, %v3023
        %v3356 = vadd.f32 %v2844, %v3025
        %v3357 = vadd.f32 %v2845, %v3027
        %v3358 = vadd.f32 %v2846, %v3029
        %v3359 = vadd.f32 %v2847, %v3031
        %v3360 = vadd.f32 %v2848, %v3033
        %v3361 = vadd.f32 %v2849, %v3035
        %v3362 = vadd.f32 %v2850, %v3037
        %v3363 = vadd.f32 %v2851, %v3039
        %v3364 = vadd.f32 %v2852, %v3041
        %v3365 = vadd.f32 %v2853, %v3043
        %v3366 = vadd.f32 %v2854, %v3045
        %v3367 = vadd.f32 %v2855, %v3047
        %v3368 = vadd.f32 %v2856, %v3049
        %v3369 = vadd.f32 %v2857, %v3051
        %v3370 = vadd.f32 %v2858, %v3053
        %v3371 = vadd.f32 %v2859, %v3055
        %v3372 = vadd.f32 %v2860, %v3057
        %v3373 = vadd.f32 %v2861, %v3059
        %v3374 = vadd.f32 %v2862, %v3061
        %v3375 = vadd.f32 %v2863, %v3063
        %v3376 = vadd.f32 %v2864, %v3065
        %v3377 = vadd.f32 %v2865, %v3067
        %v3378 = vadd.f32 %v2866, %v3069
        %v3379 = vadd.f32 %v2867, %v3071
        %v3380 = vadd.f32 %v2868, %v3073
        %v3381 = vadd.f32 %v2869, %v3075
        %v3382 = vadd.f32 %v2870, %v3077
        %v3383 = vadd.f32 %v2871, %v3079
        %v3384 = vadd.f32 %v2872, %v3081
        %v3385 = vadd.f32 %v2873, %v3083
        %v3386 = vadd.f32 %v2874, %v3085
        %v3387 = vadd.f32 %v2875, %v3087
        %v3388 = vadd.f32 %v2876, %v3089
        %v3389 = vadd.f32 %v2877, %v3091
        %v3390 = vadd.f32 %v2878, %v3093
        %v3391 = vadd.f32 %v2879, %v3095
        %v3392 = vadd.f32 %v2880, %v3097
        %v3393 = vadd.f32 %v2881, %v3099
        %v3394 = vadd.f32 %v2882, %v3101
        %v3395 = vadd.f32 %v2883, %v3103
        %v3396 = vadd.f32 %v2884, %v3105
        %v3397 = vadd.f32 %v2885, %v3107
        %v3398 = vadd.f32 %v2886, %v3109
        %v3399 = vadd.f32 %v2887, %v3111
        %v3400 = vadd.f32 %v2888, %v3113
        %v3401 = vadd.f32 %v2889, %v3115
        %v3402 = vadd.f32 %v2890, %v3117
        %v3403 = vadd.f32 %v2891, %v3119
        %v3404 = vadd.f32 %v2892, %v3121
        %v3405 = vadd.f32 %v2893, %v3123
        %v3406 = vadd.f32 %v2894, %v3125
        %v3407 = vadd.f32 %v2895, %v3127
        %v3408 = vadd.f32 %v2896, %v3129
        %v3409 = vadd.f32 %v2897, %v3131
        %v3410 = vadd.f32 %v2898, %v3133
        %v3411 = vadd.f32 %v2899, %v3135
        %v3412 = vadd.f32 %v2900, %v3137
        %v3413 = vadd.f32 %v2901, %v3139
        %v3414 = vadd.f32 %v2902, %v3141
        %v3415 = vadd.f32 %v2903, %v3143
        %v3416 = vadd.f32 %v2904, %v3145
        %v3417 = vadd.f32 %v2905, %v3147
        %v3418 = vadd.f32 %v2906, %v3149
        %v3419 = vadd.f32 %v2907, %v3151
        %v3420 = vadd.f32 %v2908, %v3153
        %v3421 = vadd.f32 %v2909, %v3155
        %v3422 = vadd.f32 %v2910, %v3157
        %v3423 = vadd.f32 %v2911, %v3159
        %v3424 = vadd.f32 %v2912, %v3161
        %v3425 = vadd.f32 %v2913, %v3163
        %v3426 = vadd.f32 %v2914, %v3165
        %v3427 = vadd.f32 %v2915, %v3167
        %v3428 = vadd.f32 %v2916, %v3169
        %v3429 = vadd.f32 %v2917, %v3171
        %v3430 = vadd.f32 %v2918, %v3173
        %v3431 = vadd.f32 %v2919, %v3175
        %3432 = vrot.lane.b32.xlu0 %v2152, 116
        %v3433 = vpop.permute.xlu0 %3432
        %3434 = vrot.lane.b32.xlu0 %v2153, 116
        %v3435 = vpop.permute.xlu0 %3434
        %3436 = vrot.lane.b32.xlu0 %v2154, 116
        %v3437 = vpop.permute.xlu0 %3436
        %3438 = vrot.lane.b32.xlu0 %v2155, 116
        %v3439 = vpop.permute.xlu0 %3438
        %3440 = vrot.lane.b32.xlu0 %v2156, 116
        %v3441 = vpop.permute.xlu0 %3440
        %3442 = vrot.lane.b32.xlu0 %v2157, 116
        %v3443 = vpop.permute.xlu0 %3442
        %3444 = vrot.lane.b32.xlu0 %v2158, 116
        %v3445 = vpop.permute.xlu0 %3444
        %3446 = vrot.lane.b32.xlu0 %v2159, 116
        %v3447 = vpop.permute.xlu0 %3446
        %3448 = vrot.lane.b32.xlu0 %v2160, 116
        %v3449 = vpop.permute.xlu0 %3448
        %3450 = vrot.lane.b32.xlu0 %v2161, 116
        %v3451 = vpop.permute.xlu0 %3450
        %3452 = vrot.lane.b32.xlu0 %v2162, 116
        %v3453 = vpop.permute.xlu0 %3452
        %3454 = vrot.lane.b32.xlu0 %v2163, 116
        %v3455 = vpop.permute.xlu0 %3454
        %3456 = vrot.lane.b32.xlu0 %v2164, 116
        %v3457 = vpop.permute.xlu0 %3456
        %3458 = vrot.lane.b32.xlu0 %v2165, 116
        %v3459 = vpop.permute.xlu0 %3458
        %3460 = vrot.lane.b32.xlu0 %v2166, 116
        %v3461 = vpop.permute.xlu0 %3460
        %3462 = vrot.lane.b32.xlu0 %v2167, 116
        %v3463 = vpop.permute.xlu0 %3462
        %3464 = vrot.lane.b32.xlu0 %v2168, 116
        %v3465 = vpop.permute.xlu0 %3464
        %3466 = vrot.lane.b32.xlu0 %v2169, 116
        %v3467 = vpop.permute.xlu0 %3466
        %3468 = vrot.lane.b32.xlu0 %v2170, 116
        %v3469 = vpop.permute.xlu0 %3468
        %3470 = vrot.lane.b32.xlu0 %v2171, 116
        %v3471 = vpop.permute.xlu0 %3470
        %3472 = vrot.lane.b32.xlu0 %v2172, 116
        %v3473 = vpop.permute.xlu0 %3472
        %3474 = vrot.lane.b32.xlu0 %v2173, 116
        %v3475 = vpop.permute.xlu0 %3474
        %3476 = vrot.lane.b32.xlu0 %v2174, 116
        %v3477 = vpop.permute.xlu0 %3476
        %3478 = vrot.lane.b32.xlu0 %v2175, 116
        %v3479 = vpop.permute.xlu0 %3478
        %3480 = vrot.lane.b32.xlu0 %v2176, 116
        %v3481 = vpop.permute.xlu0 %3480
        %3482 = vrot.lane.b32.xlu0 %v2177, 116
        %v3483 = vpop.permute.xlu0 %3482
        %3484 = vrot.lane.b32.xlu0 %v2178, 116
        %v3485 = vpop.permute.xlu0 %3484
        %3486 = vrot.lane.b32.xlu0 %v2179, 116
        %v3487 = vpop.permute.xlu0 %3486
        %3488 = vrot.lane.b32.xlu0 %v2180, 116
        %v3489 = vpop.permute.xlu0 %3488
        %3490 = vrot.lane.b32.xlu0 %v2181, 116
        %v3491 = vpop.permute.xlu0 %3490
        %3492 = vrot.lane.b32.xlu0 %v2182, 116
        %v3493 = vpop.permute.xlu0 %3492
        %3494 = vrot.lane.b32.xlu0 %v2183, 116
        %v3495 = vpop.permute.xlu0 %3494
        %3496 = vrot.lane.b32.xlu0 %v2184, 116
        %v3497 = vpop.permute.xlu0 %3496
        %3498 = vrot.lane.b32.xlu0 %v2185, 116
        %v3499 = vpop.permute.xlu0 %3498
        %3500 = vrot.lane.b32.xlu0 %v2186, 116
        %v3501 = vpop.permute.xlu0 %3500
        %3502 = vrot.lane.b32.xlu0 %v2187, 116
        %v3503 = vpop.permute.xlu0 %3502
        %3504 = vrot.lane.b32.xlu0 %v2188, 116
        %v3505 = vpop.permute.xlu0 %3504
        %3506 = vrot.lane.b32.xlu0 %v2189, 116
        %v3507 = vpop.permute.xlu0 %3506
        %3508 = vrot.lane.b32.xlu0 %v2190, 116
        %v3509 = vpop.permute.xlu0 %3508
        %3510 = vrot.lane.b32.xlu0 %v2191, 116
        %v3511 = vpop.permute.xlu0 %3510
        %3512 = vrot.lane.b32.xlu0 %v2192, 116
        %v3513 = vpop.permute.xlu0 %3512
        %3514 = vrot.lane.b32.xlu0 %v2193, 116
        %v3515 = vpop.permute.xlu0 %3514
        %3516 = vrot.lane.b32.xlu0 %v2194, 116
        %v3517 = vpop.permute.xlu0 %3516
        %3518 = vrot.lane.b32.xlu0 %v2195, 116
        %v3519 = vpop.permute.xlu0 %3518
        %3520 = vrot.lane.b32.xlu0 %v2196, 116
        %v3521 = vpop.permute.xlu0 %3520
        %3522 = vrot.lane.b32.xlu0 %v2197, 116
        %v3523 = vpop.permute.xlu0 %3522
        %3524 = vrot.lane.b32.xlu0 %v2198, 116
        %v3525 = vpop.permute.xlu0 %3524
        %3526 = vrot.lane.b32.xlu0 %v2199, 116
        %v3527 = vpop.permute.xlu0 %3526
        %3528 = vrot.lane.b32.xlu0 %v2200, 116
        %v3529 = vpop.permute.xlu0 %3528
        %3530 = vrot.lane.b32.xlu0 %v2201, 116
        %v3531 = vpop.permute.xlu0 %3530
        %3532 = vrot.lane.b32.xlu0 %v2202, 116
        %v3533 = vpop.permute.xlu0 %3532
        %3534 = vrot.lane.b32.xlu0 %v2203, 116
        %v3535 = vpop.permute.xlu0 %3534
        %3536 = vrot.lane.b32.xlu0 %v2204, 116
        %v3537 = vpop.permute.xlu0 %3536
        %3538 = vrot.lane.b32.xlu0 %v2205, 116
        %v3539 = vpop.permute.xlu0 %3538
        %3540 = vrot.lane.b32.xlu0 %v2206, 116
        %v3541 = vpop.permute.xlu0 %3540
        %3542 = vrot.lane.b32.xlu0 %v2207, 116
        %v3543 = vpop.permute.xlu0 %3542
        %3544 = vrot.lane.b32.xlu0 %v2208, 116
        %v3545 = vpop.permute.xlu0 %3544
        %3546 = vrot.lane.b32.xlu0 %v2209, 116
        %v3547 = vpop.permute.xlu0 %3546
        %3548 = vrot.lane.b32.xlu0 %v2210, 116
        %v3549 = vpop.permute.xlu0 %3548
        %3550 = vrot.lane.b32.xlu0 %v2211, 116
        %v3551 = vpop.permute.xlu0 %3550
        %3552 = vrot.lane.b32.xlu0 %v2212, 116
        %v3553 = vpop.permute.xlu0 %3552
        %3554 = vrot.lane.b32.xlu0 %v2213, 116
        %v3555 = vpop.permute.xlu0 %3554
        %3556 = vrot.lane.b32.xlu0 %v2214, 116
        %v3557 = vpop.permute.xlu0 %3556
        %3558 = vrot.lane.b32.xlu0 %v2215, 116
        %v3559 = vpop.permute.xlu0 %3558
        %3560 = vrot.lane.b32.xlu0 %v2216, 116
        %v3561 = vpop.permute.xlu0 %3560
        %3562 = vrot.lane.b32.xlu0 %v2217, 116
        %v3563 = vpop.permute.xlu0 %3562
        %3564 = vrot.lane.b32.xlu0 %v2218, 116
        %v3565 = vpop.permute.xlu0 %3564
        %3566 = vrot.lane.b32.xlu0 %v2219, 116
        %v3567 = vpop.permute.xlu0 %3566
        %3568 = vrot.lane.b32.xlu0 %v2220, 116
        %v3569 = vpop.permute.xlu0 %3568
        %3570 = vrot.lane.b32.xlu0 %v2221, 116
        %v3571 = vpop.permute.xlu0 %3570
        %3572 = vrot.lane.b32.xlu0 %v2222, 116
        %v3573 = vpop.permute.xlu0 %3572
        %3574 = vrot.lane.b32.xlu0 %v2223, 116
        %v3575 = vpop.permute.xlu0 %3574
        %3576 = vrot.lane.b32.xlu0 %v2224, 116
        %v3577 = vpop.permute.xlu0 %3576
        %3578 = vrot.lane.b32.xlu0 %v2225, 116
        %v3579 = vpop.permute.xlu0 %3578
        %3580 = vrot.lane.b32.xlu0 %v2226, 116
        %v3581 = vpop.permute.xlu0 %3580
        %3582 = vrot.lane.b32.xlu0 %v2227, 116
        %v3583 = vpop.permute.xlu0 %3582
        %3584 = vrot.lane.b32.xlu0 %v2228, 116
        %v3585 = vpop.permute.xlu0 %3584
        %3586 = vrot.lane.b32.xlu0 %v2229, 116
        %v3587 = vpop.permute.xlu0 %3586
        %3588 = vrot.lane.b32.xlu0 %v2230, 116
        %v3589 = vpop.permute.xlu0 %3588
        %3590 = vrot.lane.b32.xlu0 %v2231, 116
        %v3591 = vpop.permute.xlu0 %3590
        %3592 = vrot.lane.b32.xlu0 %v2232, 116
        %v3593 = vpop.permute.xlu0 %3592
        %3594 = vrot.lane.b32.xlu0 %v2233, 116
        %v3595 = vpop.permute.xlu0 %3594
        %3596 = vrot.lane.b32.xlu0 %v2234, 116
        %v3597 = vpop.permute.xlu0 %3596
        %3598 = vrot.lane.b32.xlu0 %v2235, 116
        %v3599 = vpop.permute.xlu0 %3598
        %3600 = vrot.lane.b32.xlu0 %v2236, 116
        %v3601 = vpop.permute.xlu0 %3600
        %3602 = vrot.lane.b32.xlu0 %v2237, 116
        %v3603 = vpop.permute.xlu0 %3602
        %3604 = vrot.lane.b32.xlu0 %v2238, 116
        %v3605 = vpop.permute.xlu0 %3604
        %3606 = vrot.lane.b32.xlu0 %v2239, 116
        %v3607 = vpop.permute.xlu0 %3606
        %3608 = vrot.lane.b32.xlu0 %v2240, 116
        %v3609 = vpop.permute.xlu0 %3608
        %3610 = vrot.lane.b32.xlu0 %v2241, 116
        %v3611 = vpop.permute.xlu0 %3610
        %3612 = vrot.lane.b32.xlu0 %v2242, 116
        %v3613 = vpop.permute.xlu0 %3612
        %3614 = vrot.lane.b32.xlu0 %v2243, 116
        %v3615 = vpop.permute.xlu0 %3614
        %3616 = vrot.lane.b32.xlu0 %v2244, 116
        %v3617 = vpop.permute.xlu0 %3616
        %3618 = vrot.lane.b32.xlu0 %v2245, 116
        %v3619 = vpop.permute.xlu0 %3618
        %3620 = vrot.lane.b32.xlu0 %v2246, 116
        %v3621 = vpop.permute.xlu0 %3620
        %3622 = vrot.lane.b32.xlu0 %v2247, 116
        %v3623 = vpop.permute.xlu0 %3622
        %3624 = vrot.lane.b32.xlu0 %v2248, 116
        %v3625 = vpop.permute.xlu0 %3624
        %3626 = vrot.lane.b32.xlu0 %v2249, 116
        %v3627 = vpop.permute.xlu0 %3626
        %3628 = vrot.lane.b32.xlu0 %v2250, 116
        %v3629 = vpop.permute.xlu0 %3628
        %3630 = vrot.lane.b32.xlu0 %v2251, 116
        %v3631 = vpop.permute.xlu0 %3630
        %3632 = vrot.lane.b32.xlu0 %v2252, 116
        %v3633 = vpop.permute.xlu0 %3632
        %3634 = vrot.lane.b32.xlu0 %v2253, 116
        %v3635 = vpop.permute.xlu0 %3634
        %3636 = vrot.lane.b32.xlu0 %v2254, 116
        %v3637 = vpop.permute.xlu0 %3636
        %3638 = vrot.lane.b32.xlu0 %v2255, 116
        %v3639 = vpop.permute.xlu0 %3638
        %3640 = vrot.lane.b32.xlu0 %v2256, 116
        %v3641 = vpop.permute.xlu0 %3640
        %3642 = vrot.lane.b32.xlu0 %v2257, 116
        %v3643 = vpop.permute.xlu0 %3642
        %3644 = vrot.lane.b32.xlu0 %v2258, 116
        %v3645 = vpop.permute.xlu0 %3644
        %3646 = vrot.lane.b32.xlu0 %v2259, 116
        %v3647 = vpop.permute.xlu0 %3646
        %3648 = vrot.lane.b32.xlu0 %v2260, 116
        %v3649 = vpop.permute.xlu0 %3648
        %3650 = vrot.lane.b32.xlu0 %v2261, 116
        %v3651 = vpop.permute.xlu0 %3650
        %3652 = vrot.lane.b32.xlu0 %v2262, 116
        %v3653 = vpop.permute.xlu0 %3652
        %3654 = vrot.lane.b32.xlu0 %v2263, 116
        %v3655 = vpop.permute.xlu0 %3654
        %3656 = vrot.lane.b32.xlu0 %v2264, 116
        %v3657 = vpop.permute.xlu0 %3656
        %3658 = vrot.lane.b32.xlu0 %v2265, 116
        %v3659 = vpop.permute.xlu0 %3658
        %3660 = vrot.lane.b32.xlu0 %v2266, 116
        %v3661 = vpop.permute.xlu0 %3660
        %3662 = vrot.lane.b32.xlu0 %v2267, 116
        %v3663 = vpop.permute.xlu0 %3662
        %3664 = vrot.lane.b32.xlu0 %v2268, 116
        %v3665 = vpop.permute.xlu0 %3664
        %3666 = vrot.lane.b32.xlu0 %v2269, 116
        %v3667 = vpop.permute.xlu0 %3666
        %3668 = vrot.lane.b32.xlu0 %v2270, 116
        %v3669 = vpop.permute.xlu0 %3668
        %3670 = vrot.lane.b32.xlu0 %v2271, 116
        %v3671 = vpop.permute.xlu0 %3670
        %3672 = vrot.lane.b32.xlu0 %v2272, 116
        %v3673 = vpop.permute.xlu0 %3672
        %3674 = vrot.lane.b32.xlu0 %v2273, 116
        %v3675 = vpop.permute.xlu0 %3674
        %3676 = vrot.lane.b32.xlu0 %v2274, 116
        %v3677 = vpop.permute.xlu0 %3676
        %3678 = vrot.lane.b32.xlu0 %v2275, 116
        %v3679 = vpop.permute.xlu0 %3678
        %3680 = vrot.lane.b32.xlu0 %v2276, 116
        %v3681 = vpop.permute.xlu0 %3680
        %3682 = vrot.lane.b32.xlu0 %v2277, 116
        %v3683 = vpop.permute.xlu0 %3682
        %3684 = vrot.lane.b32.xlu0 %v2278, 116
        %v3685 = vpop.permute.xlu0 %3684
        %3686 = vrot.lane.b32.xlu0 %v2279, 116
        %v3687 = vpop.permute.xlu0 %3686
        %v3816 = vadd.f32 %v3304, %v3433
        %v3817 = vadd.f32 %v3305, %v3435
        %v3818 = vadd.f32 %v3306, %v3437
        %v3819 = vadd.f32 %v3307, %v3439
        %v3820 = vadd.f32 %v3308, %v3441
        %v3821 = vadd.f32 %v3309, %v3443
        %v3822 = vadd.f32 %v3310, %v3445
        %v3823 = vadd.f32 %v3311, %v3447
        %v3824 = vadd.f32 %v3312, %v3449
        %v3825 = vadd.f32 %v3313, %v3451
        %v3826 = vadd.f32 %v3314, %v3453
        %v3827 = vadd.f32 %v3315, %v3455
        %v3828 = vadd.f32 %v3316, %v3457
        %v3829 = vadd.f32 %v3317, %v3459
        %v3830 = vadd.f32 %v3318, %v3461
        %v3831 = vadd.f32 %v3319, %v3463
        %v3832 = vadd.f32 %v3320, %v3465
        %v3833 = vadd.f32 %v3321, %v3467
        %v3834 = vadd.f32 %v3322, %v3469
        %v3835 = vadd.f32 %v3323, %v3471
        %v3836 = vadd.f32 %v3324, %v3473
        %v3837 = vadd.f32 %v3325, %v3475
        %v3838 = vadd.f32 %v3326, %v3477
        %v3839 = vadd.f32 %v3327, %v3479
        %v3840 = vadd.f32 %v3328, %v3481
        %v3841 = vadd.f32 %v3329, %v3483
        %v3842 = vadd.f32 %v3330, %v3485
        %v3843 = vadd.f32 %v3331, %v3487
        %v3844 = vadd.f32 %v3332, %v3489
        %v3845 = vadd.f32 %v3333, %v3491
        %v3846 = vadd.f32 %v3334, %v3493
        %v3847 = vadd.f32 %v3335, %v3495
        %v3848 = vadd.f32 %v3336, %v3497
        %v3849 = vadd.f32 %v3337, %v3499
        %v3850 = vadd.f32 %v3338, %v3501
        %v3851 = vadd.f32 %v3339, %v3503
        %v3852 = vadd.f32 %v3340, %v3505
        %v3853 = vadd.f32 %v3341, %v3507
        %v3854 = vadd.f32 %v3342, %v3509
        %v3855 = vadd.f32 %v3343, %v3511
        %v3856 = vadd.f32 %v3344, %v3513
        %v3857 = vadd.f32 %v3345, %v3515
        %v3858 = vadd.f32 %v3346, %v3517
        %v3859 = vadd.f32 %v3347, %v3519
        %v3860 = vadd.f32 %v3348, %v3521
        %v3861 = vadd.f32 %v3349, %v3523
        %v3862 = vadd.f32 %v3350, %v3525
        %v3863 = vadd.f32 %v3351, %v3527
        %v3864 = vadd.f32 %v3352, %v3529
        %v3865 = vadd.f32 %v3353, %v3531
        %v3866 = vadd.f32 %v3354, %v3533
        %v3867 = vadd.f32 %v3355, %v3535
        %v3868 = vadd.f32 %v3356, %v3537
        %v3869 = vadd.f32 %v3357, %v3539
        %v3870 = vadd.f32 %v3358, %v3541
        %v3871 = vadd.f32 %v3359, %v3543
        %v3872 = vadd.f32 %v3360, %v3545
        %v3873 = vadd.f32 %v3361, %v3547
        %v3874 = vadd.f32 %v3362, %v3549
        %v3875 = vadd.f32 %v3363, %v3551
        %v3876 = vadd.f32 %v3364, %v3553
        %v3877 = vadd.f32 %v3365, %v3555
        %v3878 = vadd.f32 %v3366, %v3557
        %v3879 = vadd.f32 %v3367, %v3559
        %v3880 = vadd.f32 %v3368, %v3561
        %v3881 = vadd.f32 %v3369, %v3563
        %v3882 = vadd.f32 %v3370, %v3565
        %v3883 = vadd.f32 %v3371, %v3567
        %v3884 = vadd.f32 %v3372, %v3569
        %v3885 = vadd.f32 %v3373, %v3571
        %v3886 = vadd.f32 %v3374, %v3573
        %v3887 = vadd.f32 %v3375, %v3575
        %v3888 = vadd.f32 %v3376, %v3577
        %v3889 = vadd.f32 %v3377, %v3579
        %v3890 = vadd.f32 %v3378, %v3581
        %v3891 = vadd.f32 %v3379, %v3583
        %v3892 = vadd.f32 %v3380, %v3585
        %v3893 = vadd.f32 %v3381, %v3587
        %v3894 = vadd.f32 %v3382, %v3589
        %v3895 = vadd.f32 %v3383, %v3591
        %v3896 = vadd.f32 %v3384, %v3593
        %v3897 = vadd.f32 %v3385, %v3595
        %v3898 = vadd.f32 %v3386, %v3597
        %v3899 = vadd.f32 %v3387, %v3599
        %v3900 = vadd.f32 %v3388, %v3601
        %v3901 = vadd.f32 %v3389, %v3603
        %v3902 = vadd.f32 %v3390, %v3605
        %v3903 = vadd.f32 %v3391, %v3607
        %v3904 = vadd.f32 %v3392, %v3609
        %v3905 = vadd.f32 %v3393, %v3611
        %v3906 = vadd.f32 %v3394, %v3613
        %v3907 = vadd.f32 %v3395, %v3615
        %v3908 = vadd.f32 %v3396, %v3617
        %v3909 = vadd.f32 %v3397, %v3619
        %v3910 = vadd.f32 %v3398, %v3621
        %v3911 = vadd.f32 %v3399, %v3623
        %v3912 = vadd.f32 %v3400, %v3625
        %v3913 = vadd.f32 %v3401, %v3627
        %v3914 = vadd.f32 %v3402, %v3629
        %v3915 = vadd.f32 %v3403, %v3631
        %v3916 = vadd.f32 %v3404, %v3633
        %v3917 = vadd.f32 %v3405, %v3635
        %v3918 = vadd.f32 %v3406, %v3637
        %v3919 = vadd.f32 %v3407, %v3639
        %v3920 = vadd.f32 %v3408, %v3641
        %v3921 = vadd.f32 %v3409, %v3643
        %v3922 = vadd.f32 %v3410, %v3645
        %v3923 = vadd.f32 %v3411, %v3647
        %v3924 = vadd.f32 %v3412, %v3649
        %v3925 = vadd.f32 %v3413, %v3651
        %v3926 = vadd.f32 %v3414, %v3653
        %v3927 = vadd.f32 %v3415, %v3655
        %v3928 = vadd.f32 %v3416, %v3657
        %v3929 = vadd.f32 %v3417, %v3659
        %v3930 = vadd.f32 %v3418, %v3661
        %v3931 = vadd.f32 %v3419, %v3663
        %v3932 = vadd.f32 %v3420, %v3665
        %v3933 = vadd.f32 %v3421, %v3667
        %v3934 = vadd.f32 %v3422, %v3669
        %v3935 = vadd.f32 %v3423, %v3671
        %v3936 = vadd.f32 %v3424, %v3673
        %v3937 = vadd.f32 %v3425, %v3675
        %v3938 = vadd.f32 %v3426, %v3677
        %v3939 = vadd.f32 %v3427, %v3679
        %v3940 = vadd.f32 %v3428, %v3681
        %v3941 = vadd.f32 %v3429, %v3683
        %v3942 = vadd.f32 %v3430, %v3685
        %v3943 = vadd.f32 %v3431, %v3687
        %v4072 = vcombine.low %v3816, %v3817
        %v4073 = vcombine.low %v3818, %v3819
        %v4075 = vunpack.c.l.s4 1983009808
        %v4076 = vunpack.c.0.s8 %v4075
        %v4077 = vlaneseq
        %v4078 = vshrl.u32 %v4077, 7
        %v4079 = vsub.s32 %v4076, %v4078
        %v4080 = vrot.slane %v4072, %v4079
        %v4082 = vunpack.c.l.s4 1983009808
        %v4083 = vunpack.c.0.s8 %v4082
        %v4084 = vlaneseq
        %v4085 = vshrl.u32 %v4084, 7
        %v4086 = vsub.s32 %v4083, %v4085
        %v4087 = vrot.slane %v4073, %v4086
        %v4088 = vcombine.low %v4080, %v4087
        %v4089 = vcombine.low %v3820, %v3821
        %v4090 = vcombine.low %v3822, %v3823
        %v4092 = vunpack.c.l.s4 1983009808
        %v4093 = vunpack.c.0.s8 %v4092
        %v4094 = vlaneseq
        %v4095 = vshrl.u32 %v4094, 7
        %v4096 = vsub.s32 %v4093, %v4095
        %v4097 = vrot.slane %v4089, %v4096
        %v4099 = vunpack.c.l.s4 1983009808
        %v4100 = vunpack.c.0.s8 %v4099
        %v4101 = vlaneseq
        %v4102 = vshrl.u32 %v4101, 7
        %v4103 = vsub.s32 %v4100, %v4102
        %v4104 = vrot.slane %v4090, %v4103
        %v4105 = vcombine.low %v4097, %v4104
        %v4106 = vcombine.low %v3824, %v3825
        %v4107 = vcombine.low %v3826, %v3827
        %v4109 = vunpack.c.l.s4 1983009808
        %v4110 = vunpack.c.0.s8 %v4109
        %v4111 = vlaneseq
        %v4112 = vshrl.u32 %v4111, 7
        %v4113 = vsub.s32 %v4110, %v4112
        %v4114 = vrot.slane %v4106, %v4113
        %v4116 = vunpack.c.l.s4 1983009808
        %v4117 = vunpack.c.0.s8 %v4116
        %v4118 = vlaneseq
        %v4119 = vshrl.u32 %v4118, 7
        %v4120 = vsub.s32 %v4117, %v4119
        %v4121 = vrot.slane %v4107, %v4120
        %v4122 = vcombine.low %v4114, %v4121
        %v4123 = vcombine.low %v3828, %v3829
        %v4124 = vcombine.low %v3830, %v3831
        %v4126 = vunpack.c.l.s4 1983009808
        %v4127 = vunpack.c.0.s8 %v4126
        %v4128 = vlaneseq
        %v4129 = vshrl.u32 %v4128, 7
        %v4130 = vsub.s32 %v4127, %v4129
        %v4131 = vrot.slane %v4123, %v4130
        %v4133 = vunpack.c.l.s4 1983009808
        %v4134 = vunpack.c.0.s8 %v4133
        %v4135 = vlaneseq
        %v4136 = vshrl.u32 %v4135, 7
        %v4137 = vsub.s32 %v4134, %v4136
        %v4138 = vrot.slane %v4124, %v4137
        %v4139 = vcombine.low %v4131, %v4138
        %v4140 = vcombine.low %v3832, %v3833
        %v4141 = vcombine.low %v3834, %v3835
        %v4143 = vunpack.c.l.s4 1983009808
        %v4144 = vunpack.c.0.s8 %v4143
        %v4145 = vlaneseq
        %v4146 = vshrl.u32 %v4145, 7
        %v4147 = vsub.s32 %v4144, %v4146
        %v4148 = vrot.slane %v4140, %v4147
        %v4150 = vunpack.c.l.s4 1983009808
        %v4151 = vunpack.c.0.s8 %v4150
        %v4152 = vlaneseq
        %v4153 = vshrl.u32 %v4152, 7
        %v4154 = vsub.s32 %v4151, %v4153
        %v4155 = vrot.slane %v4141, %v4154
        %v4156 = vcombine.low %v4148, %v4155
        %v4157 = vcombine.low %v3836, %v3837
        %v4158 = vcombine.low %v3838, %v3839
        %v4160 = vunpack.c.l.s4 1983009808
        %v4161 = vunpack.c.0.s8 %v4160
        %v4162 = vlaneseq
        %v4163 = vshrl.u32 %v4162, 7
        %v4164 = vsub.s32 %v4161, %v4163
        %v4165 = vrot.slane %v4157, %v4164
        %v4167 = vunpack.c.l.s4 1983009808
        %v4168 = vunpack.c.0.s8 %v4167
        %v4169 = vlaneseq
        %v4170 = vshrl.u32 %v4169, 7
        %v4171 = vsub.s32 %v4168, %v4170
        %v4172 = vrot.slane %v4158, %v4171
        %v4173 = vcombine.low %v4165, %v4172
        %v4174 = vcombine.low %v3840, %v3841
        %v4175 = vcombine.low %v3842, %v3843
        %v4177 = vunpack.c.l.s4 1983009808
        %v4178 = vunpack.c.0.s8 %v4177
        %v4179 = vlaneseq
        %v4180 = vshrl.u32 %v4179, 7
        %v4181 = vsub.s32 %v4178, %v4180
        %v4182 = vrot.slane %v4174, %v4181
        %v4184 = vunpack.c.l.s4 1983009808
        %v4185 = vunpack.c.0.s8 %v4184
        %v4186 = vlaneseq
        %v4187 = vshrl.u32 %v4186, 7
        %v4188 = vsub.s32 %v4185, %v4187
        %v4189 = vrot.slane %v4175, %v4188
        %v4190 = vcombine.low %v4182, %v4189
        %v4191 = vcombine.low %v3844, %v3845
        %v4192 = vcombine.low %v3846, %v3847
        %v4194 = vunpack.c.l.s4 1983009808
        %v4195 = vunpack.c.0.s8 %v4194
        %v4196 = vlaneseq
        %v4197 = vshrl.u32 %v4196, 7
        %v4198 = vsub.s32 %v4195, %v4197
        %v4199 = vrot.slane %v4191, %v4198
        %v4201 = vunpack.c.l.s4 1983009808
        %v4202 = vunpack.c.0.s8 %v4201
        %v4203 = vlaneseq
        %v4204 = vshrl.u32 %v4203, 7
        %v4205 = vsub.s32 %v4202, %v4204
        %v4206 = vrot.slane %v4192, %v4205
        %v4207 = vcombine.low %v4199, %v4206
        %v4208 = vcombine.low %v3848, %v3849
        %v4209 = vcombine.low %v3850, %v3851
        %v4211 = vunpack.c.l.s4 1983009808
        %v4212 = vunpack.c.0.s8 %v4211
        %v4213 = vlaneseq
        %v4214 = vshrl.u32 %v4213, 7
        %v4215 = vsub.s32 %v4212, %v4214
        %v4216 = vrot.slane %v4208, %v4215
        %v4218 = vunpack.c.l.s4 1983009808
        %v4219 = vunpack.c.0.s8 %v4218
        %v4220 = vlaneseq
        %v4221 = vshrl.u32 %v4220, 7
        %v4222 = vsub.s32 %v4219, %v4221
        %v4223 = vrot.slane %v4209, %v4222
        %v4224 = vcombine.low %v4216, %v4223
        %v4225 = vcombine.low %v3852, %v3853
        %v4226 = vcombine.low %v3854, %v3855
        %v4228 = vunpack.c.l.s4 1983009808
        %v4229 = vunpack.c.0.s8 %v4228
        %v4230 = vlaneseq
        %v4231 = vshrl.u32 %v4230, 7
        %v4232 = vsub.s32 %v4229, %v4231
        %v4233 = vrot.slane %v4225, %v4232
        %v4235 = vunpack.c.l.s4 1983009808
        %v4236 = vunpack.c.0.s8 %v4235
        %v4237 = vlaneseq
        %v4238 = vshrl.u32 %v4237, 7
        %v4239 = vsub.s32 %v4236, %v4238
        %v4240 = vrot.slane %v4226, %v4239
        %v4241 = vcombine.low %v4233, %v4240
        %v4242 = vcombine.low %v3856, %v3857
        %v4243 = vcombine.low %v3858, %v3859
        %v4245 = vunpack.c.l.s4 1983009808
        %v4246 = vunpack.c.0.s8 %v4245
        %v4247 = vlaneseq
        %v4248 = vshrl.u32 %v4247, 7
        %v4249 = vsub.s32 %v4246, %v4248
        %v4250 = vrot.slane %v4242, %v4249
        %v4252 = vunpack.c.l.s4 1983009808
        %v4253 = vunpack.c.0.s8 %v4252
        %v4254 = vlaneseq
        %v4255 = vshrl.u32 %v4254, 7
        %v4256 = vsub.s32 %v4253, %v4255
        %v4257 = vrot.slane %v4243, %v4256
        %v4258 = vcombine.low %v4250, %v4257
        %v4259 = vcombine.low %v3860, %v3861
        %v4260 = vcombine.low %v3862, %v3863
        %v4262 = vunpack.c.l.s4 1983009808
        %v4263 = vunpack.c.0.s8 %v4262
        %v4264 = vlaneseq
        %v4265 = vshrl.u32 %v4264, 7
        %v4266 = vsub.s32 %v4263, %v4265
        %v4267 = vrot.slane %v4259, %v4266
        %v4269 = vunpack.c.l.s4 1983009808
        %v4270 = vunpack.c.0.s8 %v4269
        %v4271 = vlaneseq
        %v4272 = vshrl.u32 %v4271, 7
        %v4273 = vsub.s32 %v4270, %v4272
        %v4274 = vrot.slane %v4260, %v4273
        %v4275 = vcombine.low %v4267, %v4274
        %v4276 = vcombine.low %v3864, %v3865
        %v4277 = vcombine.low %v3866, %v3867
        %v4279 = vunpack.c.l.s4 1983009808
        %v4280 = vunpack.c.0.s8 %v4279
        %v4281 = vlaneseq
        %v4282 = vshrl.u32 %v4281, 7
        %v4283 = vsub.s32 %v4280, %v4282
        %v4284 = vrot.slane %v4276, %v4283
        %v4286 = vunpack.c.l.s4 1983009808
        %v4287 = vunpack.c.0.s8 %v4286
        %v4288 = vlaneseq
        %v4289 = vshrl.u32 %v4288, 7
        %v4290 = vsub.s32 %v4287, %v4289
        %v4291 = vrot.slane %v4277, %v4290
        %v4292 = vcombine.low %v4284, %v4291
        %v4293 = vcombine.low %v3868, %v3869
        %v4294 = vcombine.low %v3870, %v3871
        %v4296 = vunpack.c.l.s4 1983009808
        %v4297 = vunpack.c.0.s8 %v4296
        %v4298 = vlaneseq
        %v4299 = vshrl.u32 %v4298, 7
        %v4300 = vsub.s32 %v4297, %v4299
        %v4301 = vrot.slane %v4293, %v4300
        %v4303 = vunpack.c.l.s4 1983009808
        %v4304 = vunpack.c.0.s8 %v4303
        %v4305 = vlaneseq
        %v4306 = vshrl.u32 %v4305, 7
        %v4307 = vsub.s32 %v4304, %v4306
        %v4308 = vrot.slane %v4294, %v4307
        %v4309 = vcombine.low %v4301, %v4308
        %v4310 = vcombine.low %v3872, %v3873
        %v4311 = vcombine.low %v3874, %v3875
        %v4313 = vunpack.c.l.s4 1983009808
        %v4314 = vunpack.c.0.s8 %v4313
        %v4315 = vlaneseq
        %v4316 = vshrl.u32 %v4315, 7
        %v4317 = vsub.s32 %v4314, %v4316
        %v4318 = vrot.slane %v4310, %v4317
        %v4320 = vunpack.c.l.s4 1983009808
        %v4321 = vunpack.c.0.s8 %v4320
        %v4322 = vlaneseq
        %v4323 = vshrl.u32 %v4322, 7
        %v4324 = vsub.s32 %v4321, %v4323
        %v4325 = vrot.slane %v4311, %v4324
        %v4326 = vcombine.low %v4318, %v4325
        %v4327 = vcombine.low %v3876, %v3877
        %v4328 = vcombine.low %v3878, %v3879
        %v4330 = vunpack.c.l.s4 1983009808
        %v4331 = vunpack.c.0.s8 %v4330
        %v4332 = vlaneseq
        %v4333 = vshrl.u32 %v4332, 7
        %v4334 = vsub.s32 %v4331, %v4333
        %v4335 = vrot.slane %v4327, %v4334
        %v4337 = vunpack.c.l.s4 1983009808
        %v4338 = vunpack.c.0.s8 %v4337
        %v4339 = vlaneseq
        %v4340 = vshrl.u32 %v4339, 7
        %v4341 = vsub.s32 %v4338, %v4340
        %v4342 = vrot.slane %v4328, %v4341
        %v4343 = vcombine.low %v4335, %v4342
        %v4344 = vcombine.low %v3880, %v3881
        %v4345 = vcombine.low %v3882, %v3883
        %v4347 = vunpack.c.l.s4 1983009808
        %v4348 = vunpack.c.0.s8 %v4347
        %v4349 = vlaneseq
        %v4350 = vshrl.u32 %v4349, 7
        %v4351 = vsub.s32 %v4348, %v4350
        %v4352 = vrot.slane %v4344, %v4351
        %v4354 = vunpack.c.l.s4 1983009808
        %v4355 = vunpack.c.0.s8 %v4354
        %v4356 = vlaneseq
        %v4357 = vshrl.u32 %v4356, 7
        %v4358 = vsub.s32 %v4355, %v4357
        %v4359 = vrot.slane %v4345, %v4358
        %v4360 = vcombine.low %v4352, %v4359
        %v4361 = vcombine.low %v3884, %v3885
        %v4362 = vcombine.low %v3886, %v3887
        %v4364 = vunpack.c.l.s4 1983009808
        %v4365 = vunpack.c.0.s8 %v4364
        %v4366 = vlaneseq
        %v4367 = vshrl.u32 %v4366, 7
        %v4368 = vsub.s32 %v4365, %v4367
        %v4369 = vrot.slane %v4361, %v4368
        %v4371 = vunpack.c.l.s4 1983009808
        %v4372 = vunpack.c.0.s8 %v4371
        %v4373 = vlaneseq
        %v4374 = vshrl.u32 %v4373, 7
        %v4375 = vsub.s32 %v4372, %v4374
        %v4376 = vrot.slane %v4362, %v4375
        %v4377 = vcombine.low %v4369, %v4376
        %v4378 = vcombine.low %v3888, %v3889
        %v4379 = vcombine.low %v3890, %v3891
        %v4381 = vunpack.c.l.s4 1983009808
        %v4382 = vunpack.c.0.s8 %v4381
        %v4383 = vlaneseq
        %v4384 = vshrl.u32 %v4383, 7
        %v4385 = vsub.s32 %v4382, %v4384
        %v4386 = vrot.slane %v4378, %v4385
        %v4388 = vunpack.c.l.s4 1983009808
        %v4389 = vunpack.c.0.s8 %v4388
        %v4390 = vlaneseq
        %v4391 = vshrl.u32 %v4390, 7
        %v4392 = vsub.s32 %v4389, %v4391
        %v4393 = vrot.slane %v4379, %v4392
        %v4394 = vcombine.low %v4386, %v4393
        %v4395 = vcombine.low %v3892, %v3893
        %v4396 = vcombine.low %v3894, %v3895
        %v4398 = vunpack.c.l.s4 1983009808
        %v4399 = vunpack.c.0.s8 %v4398
        %v4400 = vlaneseq
        %v4401 = vshrl.u32 %v4400, 7
        %v4402 = vsub.s32 %v4399, %v4401
        %v4403 = vrot.slane %v4395, %v4402
        %v4405 = vunpack.c.l.s4 1983009808
        %v4406 = vunpack.c.0.s8 %v4405
        %v4407 = vlaneseq
        %v4408 = vshrl.u32 %v4407, 7
        %v4409 = vsub.s32 %v4406, %v4408
        %v4410 = vrot.slane %v4396, %v4409
        %v4411 = vcombine.low %v4403, %v4410
        %v4412 = vcombine.low %v3896, %v3897
        %v4413 = vcombine.low %v3898, %v3899
        %v4415 = vunpack.c.l.s4 1983009808
        %v4416 = vunpack.c.0.s8 %v4415
        %v4417 = vlaneseq
        %v4418 = vshrl.u32 %v4417, 7
        %v4419 = vsub.s32 %v4416, %v4418
        %v4420 = vrot.slane %v4412, %v4419
        %v4422 = vunpack.c.l.s4 1983009808
        %v4423 = vunpack.c.0.s8 %v4422
        %v4424 = vlaneseq
        %v4425 = vshrl.u32 %v4424, 7
        %v4426 = vsub.s32 %v4423, %v4425
        %v4427 = vrot.slane %v4413, %v4426
        %v4428 = vcombine.low %v4420, %v4427
        %v4429 = vcombine.low %v3900, %v3901
        %v4430 = vcombine.low %v3902, %v3903
        %v4432 = vunpack.c.l.s4 1983009808
        %v4433 = vunpack.c.0.s8 %v4432
        %v4434 = vlaneseq
        %v4435 = vshrl.u32 %v4434, 7
        %v4436 = vsub.s32 %v4433, %v4435
        %v4437 = vrot.slane %v4429, %v4436
        %v4439 = vunpack.c.l.s4 1983009808
        %v4440 = vunpack.c.0.s8 %v4439
        %v4441 = vlaneseq
        %v4442 = vshrl.u32 %v4441, 7
        %v4443 = vsub.s32 %v4440, %v4442
        %v4444 = vrot.slane %v4430, %v4443
        %v4445 = vcombine.low %v4437, %v4444
        %v4446 = vcombine.low %v3904, %v3905
        %v4447 = vcombine.low %v3906, %v3907
        %v4449 = vunpack.c.l.s4 1983009808
        %v4450 = vunpack.c.0.s8 %v4449
        %v4451 = vlaneseq
        %v4452 = vshrl.u32 %v4451, 7
        %v4453 = vsub.s32 %v4450, %v4452
        %v4454 = vrot.slane %v4446, %v4453
        %v4456 = vunpack.c.l.s4 1983009808
        %v4457 = vunpack.c.0.s8 %v4456
        %v4458 = vlaneseq
        %v4459 = vshrl.u32 %v4458, 7
        %v4460 = vsub.s32 %v4457, %v4459
        %v4461 = vrot.slane %v4447, %v4460
        %v4462 = vcombine.low %v4454, %v4461
        %v4463 = vcombine.low %v3908, %v3909
        %v4464 = vcombine.low %v3910, %v3911
        %v4466 = vunpack.c.l.s4 1983009808
        %v4467 = vunpack.c.0.s8 %v4466
        %v4468 = vlaneseq
        %v4469 = vshrl.u32 %v4468, 7
        %v4470 = vsub.s32 %v4467, %v4469
        %v4471 = vrot.slane %v4463, %v4470
        %v4473 = vunpack.c.l.s4 1983009808
        %v4474 = vunpack.c.0.s8 %v4473
        %v4475 = vlaneseq
        %v4476 = vshrl.u32 %v4475, 7
        %v4477 = vsub.s32 %v4474, %v4476
        %v4478 = vrot.slane %v4464, %v4477
        %v4479 = vcombine.low %v4471, %v4478
        %v4480 = vcombine.low %v3912, %v3913
        %v4481 = vcombine.low %v3914, %v3915
        %v4483 = vunpack.c.l.s4 1983009808
        %v4484 = vunpack.c.0.s8 %v4483
        %v4485 = vlaneseq
        %v4486 = vshrl.u32 %v4485, 7
        %v4487 = vsub.s32 %v4484, %v4486
        %v4488 = vrot.slane %v4480, %v4487
        %v4490 = vunpack.c.l.s4 1983009808
        %v4491 = vunpack.c.0.s8 %v4490
        %v4492 = vlaneseq
        %v4493 = vshrl.u32 %v4492, 7
        %v4494 = vsub.s32 %v4491, %v4493
        %v4495 = vrot.slane %v4481, %v4494
        %v4496 = vcombine.low %v4488, %v4495
        %v4497 = vcombine.low %v3916, %v3917
        %v4498 = vcombine.low %v3918, %v3919
        %v4500 = vunpack.c.l.s4 1983009808
        %v4501 = vunpack.c.0.s8 %v4500
        %v4502 = vlaneseq
        %v4503 = vshrl.u32 %v4502, 7
        %v4504 = vsub.s32 %v4501, %v4503
        %v4505 = vrot.slane %v4497, %v4504
        %v4507 = vunpack.c.l.s4 1983009808
        %v4508 = vunpack.c.0.s8 %v4507
        %v4509 = vlaneseq
        %v4510 = vshrl.u32 %v4509, 7
        %v4511 = vsub.s32 %v4508, %v4510
        %v4512 = vrot.slane %v4498, %v4511
        %v4513 = vcombine.low %v4505, %v4512
        %v4514 = vcombine.low %v3920, %v3921
        %v4515 = vcombine.low %v3922, %v3923
        %v4517 = vunpack.c.l.s4 1983009808
        %v4518 = vunpack.c.0.s8 %v4517
        %v4519 = vlaneseq
        %v4520 = vshrl.u32 %v4519, 7
        %v4521 = vsub.s32 %v4518, %v4520
        %v4522 = vrot.slane %v4514, %v4521
        %v4524 = vunpack.c.l.s4 1983009808
        %v4525 = vunpack.c.0.s8 %v4524
        %v4526 = vlaneseq
        %v4527 = vshrl.u32 %v4526, 7
        %v4528 = vsub.s32 %v4525, %v4527
        %v4529 = vrot.slane %v4515, %v4528
        %v4530 = vcombine.low %v4522, %v4529
        %v4531 = vcombine.low %v3924, %v3925
        %v4532 = vcombine.low %v3926, %v3927
        %v4534 = vunpack.c.l.s4 1983009808
        %v4535 = vunpack.c.0.s8 %v4534
        %v4536 = vlaneseq
        %v4537 = vshrl.u32 %v4536, 7
        %v4538 = vsub.s32 %v4535, %v4537
        %v4539 = vrot.slane %v4531, %v4538
        %v4541 = vunpack.c.l.s4 1983009808
        %v4542 = vunpack.c.0.s8 %v4541
        %v4543 = vlaneseq
        %v4544 = vshrl.u32 %v4543, 7
        %v4545 = vsub.s32 %v4542, %v4544
        %v4546 = vrot.slane %v4532, %v4545
        %v4547 = vcombine.low %v4539, %v4546
        %v4548 = vcombine.low %v3928, %v3929
        %v4549 = vcombine.low %v3930, %v3931
        %v4551 = vunpack.c.l.s4 1983009808
        %v4552 = vunpack.c.0.s8 %v4551
        %v4553 = vlaneseq
        %v4554 = vshrl.u32 %v4553, 7
        %v4555 = vsub.s32 %v4552, %v4554
        %v4556 = vrot.slane %v4548, %v4555
        %v4558 = vunpack.c.l.s4 1983009808
        %v4559 = vunpack.c.0.s8 %v4558
        %v4560 = vlaneseq
        %v4561 = vshrl.u32 %v4560, 7
        %v4562 = vsub.s32 %v4559, %v4561
        %v4563 = vrot.slane %v4549, %v4562
        %v4564 = vcombine.low %v4556, %v4563
        %v4565 = vcombine.low %v3932, %v3933
        %v4566 = vcombine.low %v3934, %v3935
        %v4568 = vunpack.c.l.s4 1983009808
        %v4569 = vunpack.c.0.s8 %v4568
        %v4570 = vlaneseq
        %v4571 = vshrl.u32 %v4570, 7
        %v4572 = vsub.s32 %v4569, %v4571
        %v4573 = vrot.slane %v4565, %v4572
        %v4575 = vunpack.c.l.s4 1983009808
        %v4576 = vunpack.c.0.s8 %v4575
        %v4577 = vlaneseq
        %v4578 = vshrl.u32 %v4577, 7
        %v4579 = vsub.s32 %v4576, %v4578
        %v4580 = vrot.slane %v4566, %v4579
        %v4581 = vcombine.low %v4573, %v4580
        %v4582 = vcombine.low %v3936, %v3937
        %v4583 = vcombine.low %v3938, %v3939
        %v4585 = vunpack.c.l.s4 1983009808
        %v4586 = vunpack.c.0.s8 %v4585
        %v4587 = vlaneseq
        %v4588 = vshrl.u32 %v4587, 7
        %v4589 = vsub.s32 %v4586, %v4588
        %v4590 = vrot.slane %v4582, %v4589
        %v4592 = vunpack.c.l.s4 1983009808
        %v4593 = vunpack.c.0.s8 %v4592
        %v4594 = vlaneseq
        %v4595 = vshrl.u32 %v4594, 7
        %v4596 = vsub.s32 %v4593, %v4595
        %v4597 = vrot.slane %v4583, %v4596
        %v4598 = vcombine.low %v4590, %v4597
        %v4599 = vcombine.low %v3940, %v3941
        %v4600 = vcombine.low %v3942, %v3943
        %v4602 = vunpack.c.l.s4 1983009808
        %v4603 = vunpack.c.0.s8 %v4602
        %v4604 = vlaneseq
        %v4605 = vshrl.u32 %v4604, 7
        %v4606 = vsub.s32 %v4603, %v4605
        %v4607 = vrot.slane %v4599, %v4606
        %v4609 = vunpack.c.l.s4 1983009808
        %v4610 = vunpack.c.0.s8 %v4609
        %v4611 = vlaneseq
        %v4612 = vshrl.u32 %v4611, 7
        %v4613 = vsub.s32 %v4610, %v4612
        %v4614 = vrot.slane %v4600, %v4613
        %v4615 = vcombine.low %v4607, %v4614
        %s4648 = scalar_lea.vmem [#allocation2], 24
        %4649 = vst.msk [vmem:[%s4648 + $0x1] sm:$0xff] %vm505, %v4088
        %4650 = vst.msk [vmem:[%s4648 + $0x9] sm:$0xff] %vm505, %v4105
        %4651 = vst.msk [vmem:[%s4648 + $0x19] sm:$0xff] %vm505, %v4122
        %4652 = vst.msk [vmem:[%s4648 + $0x21] sm:$0xff] %vm505, %v4139
        %4653 = vst.msk [vmem:[%s4648 + $0x31] sm:$0xff] %vm505, %v4156
        %4654 = vst.msk [vmem:[%s4648 + $0x39] sm:$0xff] %vm505, %v4173
        %4655 = vst.msk [vmem:[%s4648 + $0x49] sm:$0xff] %vm505, %v4190
        %4656 = vst.msk [vmem:[%s4648 + $0x51] sm:$0xff] %vm505, %v4207
        %4657 = vst.msk [vmem:[%s4648 + $0x61] sm:$0xff] %vm505, %v4224
        %4658 = vst.msk [vmem:[%s4648 + $0x69] sm:$0xff] %vm505, %v4241
        %4659 = vst.msk [vmem:[%s4648 + $0x79] sm:$0xff] %vm505, %v4258
        %4660 = vst.msk [vmem:[%s4648 + $0x81] sm:$0xff] %vm505, %v4275
        %4661 = vst.msk [vmem:[%s4648 + $0x91] sm:$0xff] %vm505, %v4292
        %4662 = vst.msk [vmem:[%s4648 + $0x99] sm:$0xff] %vm505, %v4309
        %4663 = vst.msk [vmem:[%s4648 + $0xa9] sm:$0xff] %vm505, %v4326
        %4664 = vst.msk [vmem:[%s4648 + $0xb1] sm:$0xff] %vm505, %v4343
        %4665 = vst.msk [vmem:[%s4648 + $0xc1] sm:$0xff] %vm505, %v4360
        %4666 = vst.msk [vmem:[%s4648 + $0xc9] sm:$0xff] %vm505, %v4377
        %4667 = vst.msk [vmem:[%s4648 + $0xd9] sm:$0xff] %vm505, %v4394
        %4668 = vst.msk [vmem:[%s4648 + $0xe1] sm:$0xff] %vm505, %v4411
        %4669 = vst.msk [vmem:[%s4648 + $0xf1] sm:$0xff] %vm505, %v4428
        %4670 = vst.msk [vmem:[%s4648 + $0xf9] sm:$0xff] %vm505, %v4445
        %4671 = vst.msk [vmem:[%s4648 + $0x109] sm:$0xff] %vm505, %v4462
        %4672 = vst.msk [vmem:[%s4648 + $0x111] sm:$0xff] %vm505, %v4479
        %4673 = vst.msk [vmem:[%s4648 + $0x121] sm:$0xff] %vm505, %v4496
        %4674 = vst.msk [vmem:[%s4648 + $0x129] sm:$0xff] %vm505, %v4513
        %4675 = vst.msk [vmem:[%s4648 + $0x139] sm:$0xff] %vm505, %v4530
        %4676 = vst.msk [vmem:[%s4648 + $0x141] sm:$0xff] %vm505, %v4547
        %4677 = vst.msk [vmem:[%s4648 + $0x151] sm:$0xff] %vm505, %v4564
        %4678 = vst.msk [vmem:[%s4648 + $0x159] sm:$0xff] %vm505, %v4581
        %4679 = vst.msk [vmem:[%s4648 + $0x169] sm:$0xff] %vm505, %v4598
        %4680 = vst.msk [vmem:[%s4648 + $0x171] sm:$0xff] %vm505, %v4615
        %v4681 = vld [vmem:[%s458] sm:$0xff]
        %v4682 = vld [vmem:[%s458 + $0x8] sm:$0xff]
        %v4683 = vld [vmem:[%s458 + $0x10] sm:$0xff]
        %v4684 = vld [vmem:[%s458 + $0x18] sm:$0xff]
        %v4685 = vld [vmem:[%s458 + $0x20] sm:$0xff]
        %v4686 = vld [vmem:[%s458 + $0x28] sm:$0xff]
        %v4687 = vld [vmem:[%s458 + $0x30] sm:$0xff]
        %v4688 = vld [vmem:[%s458 + $0x38] sm:$0xff]
        %v4689 = vld [vmem:[%s458 + $0x40] sm:$0xff]
        %v4690 = vld [vmem:[%s458 + $0x48] sm:$0xff]
        %v4691 = vld [vmem:[%s458 + $0x50] sm:$0xff]
        %v4692 = vld [vmem:[%s458 + $0x58] sm:$0xff]
        %v4693 = vld [vmem:[%s458 + $0x60] sm:$0xff]
        %v4694 = vld [vmem:[%s458 + $0x68] sm:$0xff]
        %v4695 = vld [vmem:[%s458 + $0x70] sm:$0xff]
        %v4696 = vld [vmem:[%s458 + $0x78] sm:$0xff]
        %v4697 = vld [vmem:[%s458 + $0x80] sm:$0xff]
        %v4698 = vld [vmem:[%s458 + $0x88] sm:$0xff]
        %v4699 = vld [vmem:[%s458 + $0x90] sm:$0xff]
        %v4700 = vld [vmem:[%s458 + $0x98] sm:$0xff]
        %v4701 = vld [vmem:[%s458 + $0xa0] sm:$0xff]
        %v4702 = vld [vmem:[%s458 + $0xa8] sm:$0xff]
        %v4703 = vld [vmem:[%s458 + $0xb0] sm:$0xff]
        %v4704 = vld [vmem:[%s458 + $0xb8] sm:$0xff]
        %v4705 = vld [vmem:[%s458 + $0xc0] sm:$0xff]
        %v4706 = vld [vmem:[%s458 + $0xc8] sm:$0xff]
        %v4707 = vld [vmem:[%s458 + $0xd0] sm:$0xff]
        %v4708 = vld [vmem:[%s458 + $0xd8] sm:$0xff]
        %v4709 = vld [vmem:[%s458 + $0xe0] sm:$0xff]
        %v4710 = vld [vmem:[%s458 + $0xe8] sm:$0xff]
        %v4711 = vld [vmem:[%s458 + $0xf0] sm:$0xff]
        %v4712 = vld [vmem:[%s458 + $0xf8] sm:$0xff]
        %4745 = vrot.lane.b32.xlu0 %v4681, 4
        %v4746 = vpop.permute.xlu0 %4745
        %4747 = vrot.lane.b32.xlu0 %v4682, 4
        %v4748 = vpop.permute.xlu0 %4747
        %4749 = vrot.lane.b32.xlu0 %v4683, 4
        %v4750 = vpop.permute.xlu0 %4749
        %4751 = vrot.lane.b32.xlu0 %v4684, 4
        %v4752 = vpop.permute.xlu0 %4751
        %4753 = vrot.lane.b32.xlu0 %v4685, 4
        %v4754 = vpop.permute.xlu0 %4753
        %4755 = vrot.lane.b32.xlu0 %v4686, 4
        %v4756 = vpop.permute.xlu0 %4755
        %4757 = vrot.lane.b32.xlu0 %v4687, 4
        %v4758 = vpop.permute.xlu0 %4757
        %4759 = vrot.lane.b32.xlu0 %v4688, 4
        %v4760 = vpop.permute.xlu0 %4759
        %4761 = vrot.lane.b32.xlu0 %v4689, 4
        %v4762 = vpop.permute.xlu0 %4761
        %4763 = vrot.lane.b32.xlu0 %v4690, 4
        %v4764 = vpop.permute.xlu0 %4763
        %4765 = vrot.lane.b32.xlu0 %v4691, 4
        %v4766 = vpop.permute.xlu0 %4765
        %4767 = vrot.lane.b32.xlu0 %v4692, 4
        %v4768 = vpop.permute.xlu0 %4767
        %4769 = vrot.lane.b32.xlu0 %v4693, 4
        %v4770 = vpop.permute.xlu0 %4769
        %4771 = vrot.lane.b32.xlu0 %v4694, 4
        %v4772 = vpop.permute.xlu0 %4771
        %4773 = vrot.lane.b32.xlu0 %v4695, 4
        %v4774 = vpop.permute.xlu0 %4773
        %4775 = vrot.lane.b32.xlu0 %v4696, 4
        %v4776 = vpop.permute.xlu0 %4775
        %4777 = vrot.lane.b32.xlu0 %v4697, 4
        %v4778 = vpop.permute.xlu0 %4777
        %4779 = vrot.lane.b32.xlu0 %v4698, 4
        %v4780 = vpop.permute.xlu0 %4779
        %4781 = vrot.lane.b32.xlu0 %v4699, 4
        %v4782 = vpop.permute.xlu0 %4781
        %4783 = vrot.lane.b32.xlu0 %v4700, 4
        %v4784 = vpop.permute.xlu0 %4783
        %4785 = vrot.lane.b32.xlu0 %v4701, 4
        %v4786 = vpop.permute.xlu0 %4785
        %4787 = vrot.lane.b32.xlu0 %v4702, 4
        %v4788 = vpop.permute.xlu0 %4787
        %4789 = vrot.lane.b32.xlu0 %v4703, 4
        %v4790 = vpop.permute.xlu0 %4789
        %4791 = vrot.lane.b32.xlu0 %v4704, 4
        %v4792 = vpop.permute.xlu0 %4791
        %4793 = vrot.lane.b32.xlu0 %v4705, 4
        %v4794 = vpop.permute.xlu0 %4793
        %4795 = vrot.lane.b32.xlu0 %v4706, 4
        %v4796 = vpop.permute.xlu0 %4795
        %4797 = vrot.lane.b32.xlu0 %v4707, 4
        %v4798 = vpop.permute.xlu0 %4797
        %4799 = vrot.lane.b32.xlu0 %v4708, 4
        %v4800 = vpop.permute.xlu0 %4799
        %4801 = vrot.lane.b32.xlu0 %v4709, 4
        %v4802 = vpop.permute.xlu0 %4801
        %4803 = vrot.lane.b32.xlu0 %v4710, 4
        %v4804 = vpop.permute.xlu0 %4803
        %4805 = vrot.lane.b32.xlu0 %v4711, 4
        %v4806 = vpop.permute.xlu0 %4805
        %4807 = vrot.lane.b32.xlu0 %v4712, 4
        %v4808 = vpop.permute.xlu0 %4807
        %vm4841 = vcmask 64544
        %4842 = vst.msk [vmem:[%s4648 + $0x1] sm:$0xff] %vm4841, %v4746
        %4843 = vst.msk [vmem:[%s4648 + $0x9] sm:$0xff] %vm4841, %v4748
        %4844 = vst.msk [vmem:[%s4648 + $0x19] sm:$0xff] %vm4841, %v4750
        %4845 = vst.msk [vmem:[%s4648 + $0x21] sm:$0xff] %vm4841, %v4752
        %4846 = vst.msk [vmem:[%s4648 + $0x31] sm:$0xff] %vm4841, %v4754
        %4847 = vst.msk [vmem:[%s4648 + $0x39] sm:$0xff] %vm4841, %v4756
        %4848 = vst.msk [vmem:[%s4648 + $0x49] sm:$0xff] %vm4841, %v4758
        %4849 = vst.msk [vmem:[%s4648 + $0x51] sm:$0xff] %vm4841, %v4760
        %4850 = vst.msk [vmem:[%s4648 + $0x61] sm:$0xff] %vm4841, %v4762
        %4851 = vst.msk [vmem:[%s4648 + $0x69] sm:$0xff] %vm4841, %v4764
        %4852 = vst.msk [vmem:[%s4648 + $0x79] sm:$0xff] %vm4841, %v4766
        %4853 = vst.msk [vmem:[%s4648 + $0x81] sm:$0xff] %vm4841, %v4768
        %4854 = vst.msk [vmem:[%s4648 + $0x91] sm:$0xff] %vm4841, %v4770
        %4855 = vst.msk [vmem:[%s4648 + $0x99] sm:$0xff] %vm4841, %v4772
        %4856 = vst.msk [vmem:[%s4648 + $0xa9] sm:$0xff] %vm4841, %v4774
        %4857 = vst.msk [vmem:[%s4648 + $0xb1] sm:$0xff] %vm4841, %v4776
        %4858 = vst.msk [vmem:[%s4648 + $0xc1] sm:$0xff] %vm4841, %v4778
        %4859 = vst.msk [vmem:[%s4648 + $0xc9] sm:$0xff] %vm4841, %v4780
        %4860 = vst.msk [vmem:[%s4648 + $0xd9] sm:$0xff] %vm4841, %v4782
        %4861 = vst.msk [vmem:[%s4648 + $0xe1] sm:$0xff] %vm4841, %v4784
        %4862 = vst.msk [vmem:[%s4648 + $0xf1] sm:$0xff] %vm4841, %v4786
        %4863 = vst.msk [vmem:[%s4648 + $0xf9] sm:$0xff] %vm4841, %v4788
        %4864 = vst.msk [vmem:[%s4648 + $0x109] sm:$0xff] %vm4841, %v4790
        %4865 = vst.msk [vmem:[%s4648 + $0x111] sm:$0xff] %vm4841, %v4792
        %4866 = vst.msk [vmem:[%s4648 + $0x121] sm:$0xff] %vm4841, %v4794
        %4867 = vst.msk [vmem:[%s4648 + $0x129] sm:$0xff] %vm4841, %v4796
        %4868 = vst.msk [vmem:[%s4648 + $0x139] sm:$0xff] %vm4841, %v4798
        %4869 = vst.msk [vmem:[%s4648 + $0x141] sm:$0xff] %vm4841, %v4800
        %4870 = vst.msk [vmem:[%s4648 + $0x151] sm:$0xff] %vm4841, %v4802
        %4871 = vst.msk [vmem:[%s4648 + $0x159] sm:$0xff] %vm4841, %v4804
        %4872 = vst.msk [vmem:[%s4648 + $0x169] sm:$0xff] %vm4841, %v4806
        %4873 = vst.msk [vmem:[%s4648 + $0x171] sm:$0xff] %vm4841, %v4808
        %v4874 = vld [vmem:[#allocation2] sm:$0xff]
        %v4875 = vld [vmem:[#allocation2 + $0x8] sm:$0xff]
        %v4876 = vld [vmem:[#allocation2 + $0x18] sm:$0xff]
        %v4877 = vld [vmem:[#allocation2 + $0x20] sm:$0xff]
        %v4878 = vld [vmem:[#allocation2 + $0x30] sm:$0xff]
        %v4879 = vld [vmem:[#allocation2 + $0x38] sm:$0xff]
        %v4880 = vld [vmem:[#allocation2 + $0x48] sm:$0xff]
        %v4881 = vld [vmem:[#allocation2 + $0x50] sm:$0xff]
        %v4882 = vld [vmem:[#allocation2 + $0x60] sm:$0xff]
        %v4883 = vld [vmem:[#allocation2 + $0x68] sm:$0xff]
        %v4884 = vld [vmem:[#allocation2 + $0x78] sm:$0xff]
        %v4885 = vld [vmem:[#allocation2 + $0x80] sm:$0xff]
        %v4886 = vld [vmem:[#allocation2 + $0x90] sm:$0xff]
        %v4887 = vld [vmem:[#allocation2 + $0x98] sm:$0xff]
        %v4888 = vld [vmem:[#allocation2 + $0xa8] sm:$0xff]
        %v4889 = vld [vmem:[#allocation2 + $0xb0] sm:$0xff]
        %v4890 = vld [vmem:[#allocation2 + $0xc0] sm:$0xff]
        %v4891 = vld [vmem:[#allocation2 + $0xc8] sm:$0xff]
        %v4892 = vld [vmem:[#allocation2 + $0xd8] sm:$0xff]
        %v4893 = vld [vmem:[#allocation2 + $0xe0] sm:$0xff]
        %v4894 = vld [vmem:[#allocation2 + $0xf0] sm:$0xff]
        %v4895 = vld [vmem:[#allocation2 + $0xf8] sm:$0xff]
        %v4896 = vld [vmem:[#allocation2 + $0x108] sm:$0xff]
        %v4897 = vld [vmem:[#allocation2 + $0x110] sm:$0xff]
        %v4898 = vld [vmem:[#allocation2 + $0x120] sm:$0xff]
        %v4899 = vld [vmem:[#allocation2 + $0x128] sm:$0xff]
        %v4900 = vld [vmem:[#allocation2 + $0x138] sm:$0xff]
        %v4901 = vld [vmem:[#allocation2 + $0x140] sm:$0xff]
        %v4902 = vld [vmem:[#allocation2 + $0x150] sm:$0xff]
        %v4903 = vld [vmem:[#allocation2 + $0x158] sm:$0xff]
        %v4904 = vld [vmem:[#allocation2 + $0x168] sm:$0xff]
        %v4905 = vld [vmem:[#allocation2 + $0x170] sm:$0xff]
        %v4906 = vld [vmem:[#allocation2 + $0x1] sm:$0xff]
        %v4907 = vld [vmem:[#allocation2 + $0x9] sm:$0xff]
        %v4908 = vld [vmem:[#allocation2 + $0x19] sm:$0xff]
        %v4909 = vld [vmem:[#allocation2 + $0x21] sm:$0xff]
        %v4910 = vld [vmem:[#allocation2 + $0x31] sm:$0xff]
        %v4911 = vld [vmem:[#allocation2 + $0x39] sm:$0xff]
        %v4912 = vld [vmem:[#allocation2 + $0x49] sm:$0xff]
        %v4913 = vld [vmem:[#allocation2 + $0x51] sm:$0xff]
        %v4914 = vld [vmem:[#allocation2 + $0x61] sm:$0xff]
        %v4915 = vld [vmem:[#allocation2 + $0x69] sm:$0xff]
        %v4916 = vld [vmem:[#allocation2 + $0x79] sm:$0xff]
        %v4917 = vld [vmem:[#allocation2 + $0x81] sm:$0xff]
        %v4918 = vld [vmem:[#allocation2 + $0x91] sm:$0xff]
        %v4919 = vld [vmem:[#allocation2 + $0x99] sm:$0xff]
        %v4920 = vld [vmem:[#allocation2 + $0xa9] sm:$0xff]
        %v4921 = vld [vmem:[#allocation2 + $0xb1] sm:$0xff]
        %v4922 = vld [vmem:[#allocation2 + $0xc1] sm:$0xff]
        %v4923 = vld [vmem:[#allocation2 + $0xc9] sm:$0xff]
        %v4924 = vld [vmem:[#allocation2 + $0xd9] sm:$0xff]
        %v4925 = vld [vmem:[#allocation2 + $0xe1] sm:$0xff]
        %v4926 = vld [vmem:[#allocation2 + $0xf1] sm:$0xff]
        %v4927 = vld [vmem:[#allocation2 + $0xf9] sm:$0xff]
        %v4928 = vld [vmem:[#allocation2 + $0x109] sm:$0xff]
        %v4929 = vld [vmem:[#allocation2 + $0x111] sm:$0xff]
        %v4930 = vld [vmem:[#allocation2 + $0x121] sm:$0xff]
        %v4931 = vld [vmem:[#allocation2 + $0x129] sm:$0xff]
        %v4932 = vld [vmem:[#allocation2 + $0x139] sm:$0xff]
        %v4933 = vld [vmem:[#allocation2 + $0x141] sm:$0xff]
        %v4934 = vld [vmem:[#allocation2 + $0x151] sm:$0xff]
        %v4935 = vld [vmem:[#allocation2 + $0x159] sm:$0xff]
        %v4936 = vld [vmem:[#allocation2 + $0x169] sm:$0xff]
        %v4937 = vld [vmem:[#allocation2 + $0x171] sm:$0xff]
        %v4938 = vld [vmem:[#allocation2 + $0x2] sm:$0xff]
        %v4939 = vld [vmem:[#allocation2 + $0xa] sm:$0xff]
        %v4940 = vld [vmem:[#allocation2 + $0x1a] sm:$0xff]
        %v4941 = vld [vmem:[#allocation2 + $0x22] sm:$0xff]
        %v4942 = vld [vmem:[#allocation2 + $0x32] sm:$0xff]
        %v4943 = vld [vmem:[#allocation2 + $0x3a] sm:$0xff]
        %v4944 = vld [vmem:[#allocation2 + $0x4a] sm:$0xff]
        %v4945 = vld [vmem:[#allocation2 + $0x52] sm:$0xff]
        %v4946 = vld [vmem:[#allocation2 + $0x62] sm:$0xff]
        %v4947 = vld [vmem:[#allocation2 + $0x6a] sm:$0xff]
        %v4948 = vld [vmem:[#allocation2 + $0x7a] sm:$0xff]
        %v4949 = vld [vmem:[#allocation2 + $0x82] sm:$0xff]
        %v4950 = vld [vmem:[#allocation2 + $0x92] sm:$0xff]
        %v4951 = vld [vmem:[#allocation2 + $0x9a] sm:$0xff]
        %v4952 = vld [vmem:[#allocation2 + $0xaa] sm:$0xff]
        %v4953 = vld [vmem:[#allocation2 + $0xb2] sm:$0xff]
        %v4954 = vld [vmem:[#allocation2 + $0xc2] sm:$0xff]
        %v4955 = vld [vmem:[#allocation2 + $0xca] sm:$0xff]
        %v4956 = vld [vmem:[#allocation2 + $0xda] sm:$0xff]
        %v4957 = vld [vmem:[#allocation2 + $0xe2] sm:$0xff]
        %v4958 = vld [vmem:[#allocation2 + $0xf2] sm:$0xff]
        %v4959 = vld [vmem:[#allocation2 + $0xfa] sm:$0xff]
        %v4960 = vld [vmem:[#allocation2 + $0x10a] sm:$0xff]
        %v4961 = vld [vmem:[#allocation2 + $0x112] sm:$0xff]
        %v4962 = vld [vmem:[#allocation2 + $0x122] sm:$0xff]
        %v4963 = vld [vmem:[#allocation2 + $0x12a] sm:$0xff]
        %v4964 = vld [vmem:[#allocation2 + $0x13a] sm:$0xff]
        %v4965 = vld [vmem:[#allocation2 + $0x142] sm:$0xff]
        %v4966 = vld [vmem:[#allocation2 + $0x152] sm:$0xff]
        %v4967 = vld [vmem:[#allocation2 + $0x15a] sm:$0xff]
        %v4968 = vld [vmem:[#allocation2 + $0x16a] sm:$0xff]
        %v4969 = vld [vmem:[#allocation2 + $0x172] sm:$0xff]
        %v4970 = vld [vmem:[%s4648] sm:$0xff]
        %v4971 = vld [vmem:[%s4648 + $0x8] sm:$0xff]
        %v4972 = vld [vmem:[%s4648 + $0x18] sm:$0xff]
        %v4973 = vld [vmem:[%s4648 + $0x20] sm:$0xff]
        %v4974 = vld [vmem:[%s4648 + $0x30] sm:$0xff]
        %v4975 = vld [vmem:[%s4648 + $0x38] sm:$0xff]
        %v4976 = vld [vmem:[%s4648 + $0x48] sm:$0xff]
        %v4977 = vld [vmem:[%s4648 + $0x50] sm:$0xff]
        %v4978 = vld [vmem:[%s4648 + $0x60] sm:$0xff]
        %v4979 = vld [vmem:[%s4648 + $0x68] sm:$0xff]
        %v4980 = vld [vmem:[%s4648 + $0x78] sm:$0xff]
        %v4981 = vld [vmem:[%s4648 + $0x80] sm:$0xff]
        %v4982 = vld [vmem:[%s4648 + $0x90] sm:$0xff]
        %v4983 = vld [vmem:[%s4648 + $0x98] sm:$0xff]
        %v4984 = vld [vmem:[%s4648 + $0xa8] sm:$0xff]
        %v4985 = vld [vmem:[%s4648 + $0xb0] sm:$0xff]
        %v4986 = vld [vmem:[%s4648 + $0xc0] sm:$0xff]
        %v4987 = vld [vmem:[%s4648 + $0xc8] sm:$0xff]
        %v4988 = vld [vmem:[%s4648 + $0xd8] sm:$0xff]
        %v4989 = vld [vmem:[%s4648 + $0xe0] sm:$0xff]
        %v4990 = vld [vmem:[%s4648 + $0xf0] sm:$0xff]
        %v4991 = vld [vmem:[%s4648 + $0xf8] sm:$0xff]
        %v4992 = vld [vmem:[%s4648 + $0x108] sm:$0xff]
        %v4993 = vld [vmem:[%s4648 + $0x110] sm:$0xff]
        %v4994 = vld [vmem:[%s4648 + $0x120] sm:$0xff]
        %v4995 = vld [vmem:[%s4648 + $0x128] sm:$0xff]
        %v4996 = vld [vmem:[%s4648 + $0x138] sm:$0xff]
        %v4997 = vld [vmem:[%s4648 + $0x140] sm:$0xff]
        %v4998 = vld [vmem:[%s4648 + $0x150] sm:$0xff]
        %v4999 = vld [vmem:[%s4648 + $0x158] sm:$0xff]
        %v5000 = vld [vmem:[%s4648 + $0x168] sm:$0xff]
        %v5001 = vld [vmem:[%s4648 + $0x170] sm:$0xff]
        %v5002 = vld [vmem:[%s4648 + $0x1] sm:$0xff]
        %v5003 = vld [vmem:[%s4648 + $0x9] sm:$0xff]
        %v5004 = vld [vmem:[%s4648 + $0x19] sm:$0xff]
        %v5005 = vld [vmem:[%s4648 + $0x21] sm:$0xff]
        %v5006 = vld [vmem:[%s4648 + $0x31] sm:$0xff]
        %v5007 = vld [vmem:[%s4648 + $0x39] sm:$0xff]
        %v5008 = vld [vmem:[%s4648 + $0x49] sm:$0xff]
        %v5009 = vld [vmem:[%s4648 + $0x51] sm:$0xff]
        %v5010 = vld [vmem:[%s4648 + $0x61] sm:$0xff]
        %v5011 = vld [vmem:[%s4648 + $0x69] sm:$0xff]
        %v5012 = vld [vmem:[%s4648 + $0x79] sm:$0xff]
        %v5013 = vld [vmem:[%s4648 + $0x81] sm:$0xff]
        %v5014 = vld [vmem:[%s4648 + $0x91] sm:$0xff]
        %v5015 = vld [vmem:[%s4648 + $0x99] sm:$0xff]
        %v5016 = vld [vmem:[%s4648 + $0xa9] sm:$0xff]
        %v5017 = vld [vmem:[%s4648 + $0xb1] sm:$0xff]
        %v5018 = vld [vmem:[%s4648 + $0xc1] sm:$0xff]
        %v5019 = vld [vmem:[%s4648 + $0xc9] sm:$0xff]
        %v5020 = vld [vmem:[%s4648 + $0xd9] sm:$0xff]
        %v5021 = vld [vmem:[%s4648 + $0xe1] sm:$0xff]
        %v5022 = vld [vmem:[%s4648 + $0xf1] sm:$0xff]
        %v5023 = vld [vmem:[%s4648 + $0xf9] sm:$0xff]
        %v5024 = vld [vmem:[%s4648 + $0x109] sm:$0xff]
        %v5025 = vld [vmem:[%s4648 + $0x111] sm:$0xff]
        %v5026 = vld [vmem:[%s4648 + $0x121] sm:$0xff]
        %v5027 = vld [vmem:[%s4648 + $0x129] sm:$0xff]
        %v5028 = vld [vmem:[%s4648 + $0x139] sm:$0xff]
        %v5029 = vld [vmem:[%s4648 + $0x141] sm:$0xff]
        %v5030 = vld [vmem:[%s4648 + $0x151] sm:$0xff]
        %v5031 = vld [vmem:[%s4648 + $0x159] sm:$0xff]
        %v5032 = vld [vmem:[%s4648 + $0x169] sm:$0xff]
        %v5033 = vld [vmem:[%s4648 + $0x171] sm:$0xff]
        %v5034 = vld [vmem:[%s4648 + $0x2] sm:$0xff]
        %v5035 = vld [vmem:[%s4648 + $0xa] sm:$0xff]
        %v5036 = vld [vmem:[%s4648 + $0x1a] sm:$0xff]
        %v5037 = vld [vmem:[%s4648 + $0x22] sm:$0xff]
        %v5038 = vld [vmem:[%s4648 + $0x32] sm:$0xff]
        %v5039 = vld [vmem:[%s4648 + $0x3a] sm:$0xff]
        %v5040 = vld [vmem:[%s4648 + $0x4a] sm:$0xff]
        %v5041 = vld [vmem:[%s4648 + $0x52] sm:$0xff]
        %v5042 = vld [vmem:[%s4648 + $0x62] sm:$0xff]
        %v5043 = vld [vmem:[%s4648 + $0x6a] sm:$0xff]
        %v5044 = vld [vmem:[%s4648 + $0x7a] sm:$0xff]
        %v5045 = vld [vmem:[%s4648 + $0x82] sm:$0xff]
        %v5046 = vld [vmem:[%s4648 + $0x92] sm:$0xff]
        %v5047 = vld [vmem:[%s4648 + $0x9a] sm:$0xff]
        %v5048 = vld [vmem:[%s4648 + $0xaa] sm:$0xff]
        %v5049 = vld [vmem:[%s4648 + $0xb2] sm:$0xff]
        %v5050 = vld [vmem:[%s4648 + $0xc2] sm:$0xff]
        %v5051 = vld [vmem:[%s4648 + $0xca] sm:$0xff]
        %v5052 = vld [vmem:[%s4648 + $0xda] sm:$0xff]
        %v5053 = vld [vmem:[%s4648 + $0xe2] sm:$0xff]
        %v5054 = vld [vmem:[%s4648 + $0xf2] sm:$0xff]
        %v5055 = vld [vmem:[%s4648 + $0xfa] sm:$0xff]
        %v5056 = vld [vmem:[%s4648 + $0x10a] sm:$0xff]
        %v5057 = vld [vmem:[%s4648 + $0x112] sm:$0xff]
        %v5058 = vld [vmem:[%s4648 + $0x122] sm:$0xff]
        %v5059 = vld [vmem:[%s4648 + $0x12a] sm:$0xff]
        %v5060 = vld [vmem:[%s4648 + $0x13a] sm:$0xff]
        %v5061 = vld [vmem:[%s4648 + $0x142] sm:$0xff]
        %v5062 = vld [vmem:[%s4648 + $0x152] sm:$0xff]
        %v5063 = vld [vmem:[%s4648 + $0x15a] sm:$0xff]
        %v5064 = vld [vmem:[%s4648 + $0x16a] sm:$0xff]
        %v5065 = vld [vmem:[%s4648 + $0x172] sm:$0xff]
        %s5066 = scalar_lea.vmem [#allocation2], 48
        %v5067 = vld [vmem:[%s5066] sm:$0xff]
        %v5068 = vld [vmem:[%s5066 + $0x8] sm:$0xff]
        %v5069 = vld [vmem:[%s5066 + $0x18] sm:$0xff]
        %v5070 = vld [vmem:[%s5066 + $0x20] sm:$0xff]
        %v5071 = vld [vmem:[%s5066 + $0x30] sm:$0xff]
        %v5072 = vld [vmem:[%s5066 + $0x38] sm:$0xff]
        %v5073 = vld [vmem:[%s5066 + $0x48] sm:$0xff]
        %v5074 = vld [vmem:[%s5066 + $0x50] sm:$0xff]
        %v5075 = vld [vmem:[%s5066 + $0x60] sm:$0xff]
        %v5076 = vld [vmem:[%s5066 + $0x68] sm:$0xff]
        %v5077 = vld [vmem:[%s5066 + $0x78] sm:$0xff]
        %v5078 = vld [vmem:[%s5066 + $0x80] sm:$0xff]
        %v5079 = vld [vmem:[%s5066 + $0x90] sm:$0xff]
        %v5080 = vld [vmem:[%s5066 + $0x98] sm:$0xff]
        %v5081 = vld [vmem:[%s5066 + $0xa8] sm:$0xff]
        %v5082 = vld [vmem:[%s5066 + $0xb0] sm:$0xff]
        %v5083 = vld [vmem:[%s5066 + $0xc0] sm:$0xff]
        %v5084 = vld [vmem:[%s5066 + $0xc8] sm:$0xff]
        %v5085 = vld [vmem:[%s5066 + $0xd8] sm:$0xff]
        %v5086 = vld [vmem:[%s5066 + $0xe0] sm:$0xff]
        %v5087 = vld [vmem:[%s5066 + $0xf0] sm:$0xff]
        %v5088 = vld [vmem:[%s5066 + $0xf8] sm:$0xff]
        %v5089 = vld [vmem:[%s5066 + $0x108] sm:$0xff]
        %v5090 = vld [vmem:[%s5066 + $0x110] sm:$0xff]
        %v5091 = vld [vmem:[%s5066 + $0x120] sm:$0xff]
        %v5092 = vld [vmem:[%s5066 + $0x128] sm:$0xff]
        %v5093 = vld [vmem:[%s5066 + $0x138] sm:$0xff]
        %v5094 = vld [vmem:[%s5066 + $0x140] sm:$0xff]
        %v5095 = vld [vmem:[%s5066 + $0x150] sm:$0xff]
        %v5096 = vld [vmem:[%s5066 + $0x158] sm:$0xff]
        %v5097 = vld [vmem:[%s5066 + $0x168] sm:$0xff]
        %v5098 = vld [vmem:[%s5066 + $0x170] sm:$0xff]
        %v5099 = vld [vmem:[%s5066 + $0x1] sm:$0xff]
        %v5100 = vld [vmem:[%s5066 + $0x9] sm:$0xff]
        %v5101 = vld [vmem:[%s5066 + $0x19] sm:$0xff]
        %v5102 = vld [vmem:[%s5066 + $0x21] sm:$0xff]
        %v5103 = vld [vmem:[%s5066 + $0x31] sm:$0xff]
        %v5104 = vld [vmem:[%s5066 + $0x39] sm:$0xff]
        %v5105 = vld [vmem:[%s5066 + $0x49] sm:$0xff]
        %v5106 = vld [vmem:[%s5066 + $0x51] sm:$0xff]
        %v5107 = vld [vmem:[%s5066 + $0x61] sm:$0xff]
        %v5108 = vld [vmem:[%s5066 + $0x69] sm:$0xff]
        %v5109 = vld [vmem:[%s5066 + $0x79] sm:$0xff]
        %v5110 = vld [vmem:[%s5066 + $0x81] sm:$0xff]
        %v5111 = vld [vmem:[%s5066 + $0x91] sm:$0xff]
        %v5112 = vld [vmem:[%s5066 + $0x99] sm:$0xff]
        %v5113 = vld [vmem:[%s5066 + $0xa9] sm:$0xff]
        %v5114 = vld [vmem:[%s5066 + $0xb1] sm:$0xff]
        %v5115 = vld [vmem:[%s5066 + $0xc1] sm:$0xff]
        %v5116 = vld [vmem:[%s5066 + $0xc9] sm:$0xff]
        %v5117 = vld [vmem:[%s5066 + $0xd9] sm:$0xff]
        %v5118 = vld [vmem:[%s5066 + $0xe1] sm:$0xff]
        %v5119 = vld [vmem:[%s5066 + $0xf1] sm:$0xff]
        %v5120 = vld [vmem:[%s5066 + $0xf9] sm:$0xff]
        %v5121 = vld [vmem:[%s5066 + $0x109] sm:$0xff]
        %v5122 = vld [vmem:[%s5066 + $0x111] sm:$0xff]
        %v5123 = vld [vmem:[%s5066 + $0x121] sm:$0xff]
        %v5124 = vld [vmem:[%s5066 + $0x129] sm:$0xff]
        %v5125 = vld [vmem:[%s5066 + $0x139] sm:$0xff]
        %v5126 = vld [vmem:[%s5066 + $0x141] sm:$0xff]
        %v5127 = vld [vmem:[%s5066 + $0x151] sm:$0xff]
        %v5128 = vld [vmem:[%s5066 + $0x159] sm:$0xff]
        %v5129 = vld [vmem:[%s5066 + $0x169] sm:$0xff]
        %v5130 = vld [vmem:[%s5066 + $0x171] sm:$0xff]
        %v5131 = vld [vmem:[%s5066 + $0x2] sm:$0xff]
        %v5132 = vld [vmem:[%s5066 + $0xa] sm:$0xff]
        %v5133 = vld [vmem:[%s5066 + $0x1a] sm:$0xff]
        %v5134 = vld [vmem:[%s5066 + $0x22] sm:$0xff]
        %v5135 = vld [vmem:[%s5066 + $0x32] sm:$0xff]
        %v5136 = vld [vmem:[%s5066 + $0x3a] sm:$0xff]
        %v5137 = vld [vmem:[%s5066 + $0x4a] sm:$0xff]
        %v5138 = vld [vmem:[%s5066 + $0x52] sm:$0xff]
        %v5139 = vld [vmem:[%s5066 + $0x62] sm:$0xff]
        %v5140 = vld [vmem:[%s5066 + $0x6a] sm:$0xff]
        %v5141 = vld [vmem:[%s5066 + $0x7a] sm:$0xff]
        %v5142 = vld [vmem:[%s5066 + $0x82] sm:$0xff]
        %v5143 = vld [vmem:[%s5066 + $0x92] sm:$0xff]
        %v5144 = vld [vmem:[%s5066 + $0x9a] sm:$0xff]
        %v5145 = vld [vmem:[%s5066 + $0xaa] sm:$0xff]
        %v5146 = vld [vmem:[%s5066 + $0xb2] sm:$0xff]
        %v5147 = vld [vmem:[%s5066 + $0xc2] sm:$0xff]
        %v5148 = vld [vmem:[%s5066 + $0xca] sm:$0xff]
        %v5149 = vld [vmem:[%s5066 + $0xda] sm:$0xff]
        %v5150 = vld [vmem:[%s5066 + $0xe2] sm:$0xff]
        %v5151 = vld [vmem:[%s5066 + $0xf2] sm:$0xff]
        %v5152 = vld [vmem:[%s5066 + $0xfa] sm:$0xff]
        %v5153 = vld [vmem:[%s5066 + $0x10a] sm:$0xff]
        %v5154 = vld [vmem:[%s5066 + $0x112] sm:$0xff]
        %v5155 = vld [vmem:[%s5066 + $0x122] sm:$0xff]
        %v5156 = vld [vmem:[%s5066 + $0x12a] sm:$0xff]
        %v5157 = vld [vmem:[%s5066 + $0x13a] sm:$0xff]
        %v5158 = vld [vmem:[%s5066 + $0x142] sm:$0xff]
        %v5159 = vld [vmem:[%s5066 + $0x152] sm:$0xff]
        %v5160 = vld [vmem:[%s5066 + $0x15a] sm:$0xff]
        %v5161 = vld [vmem:[%s5066 + $0x16a] sm:$0xff]
        %v5162 = vld [vmem:[%s5066 + $0x172] sm:$0xff]
        %5195 = vrot.lane.b32.xlu0 %v4906, 8
        %v5196 = vpop.permute.xlu0 %5195
        %5197 = vrot.lane.b32.xlu0 %v4907, 8
        %v5198 = vpop.permute.xlu0 %5197
        %5199 = vrot.lane.b32.xlu0 %v4908, 8
        %v5200 = vpop.permute.xlu0 %5199
        %5201 = vrot.lane.b32.xlu0 %v4909, 8
        %v5202 = vpop.permute.xlu0 %5201
        %5203 = vrot.lane.b32.xlu0 %v4910, 8
        %v5204 = vpop.permute.xlu0 %5203
        %5205 = vrot.lane.b32.xlu0 %v4911, 8
        %v5206 = vpop.permute.xlu0 %5205
        %5207 = vrot.lane.b32.xlu0 %v4912, 8
        %v5208 = vpop.permute.xlu0 %5207
        %5209 = vrot.lane.b32.xlu0 %v4913, 8
        %v5210 = vpop.permute.xlu0 %5209
        %5211 = vrot.lane.b32.xlu0 %v4914, 8
        %v5212 = vpop.permute.xlu0 %5211
        %5213 = vrot.lane.b32.xlu0 %v4915, 8
        %v5214 = vpop.permute.xlu0 %5213
        %5215 = vrot.lane.b32.xlu0 %v4916, 8
        %v5216 = vpop.permute.xlu0 %5215
        %5217 = vrot.lane.b32.xlu0 %v4917, 8
        %v5218 = vpop.permute.xlu0 %5217
        %5219 = vrot.lane.b32.xlu0 %v4918, 8
        %v5220 = vpop.permute.xlu0 %5219
        %5221 = vrot.lane.b32.xlu0 %v4919, 8
        %v5222 = vpop.permute.xlu0 %5221
        %5223 = vrot.lane.b32.xlu0 %v4920, 8
        %v5224 = vpop.permute.xlu0 %5223
        %5225 = vrot.lane.b32.xlu0 %v4921, 8
        %v5226 = vpop.permute.xlu0 %5225
        %5227 = vrot.lane.b32.xlu0 %v4922, 8
        %v5228 = vpop.permute.xlu0 %5227
        %5229 = vrot.lane.b32.xlu0 %v4923, 8
        %v5230 = vpop.permute.xlu0 %5229
        %5231 = vrot.lane.b32.xlu0 %v4924, 8
        %v5232 = vpop.permute.xlu0 %5231
        %5233 = vrot.lane.b32.xlu0 %v4925, 8
        %v5234 = vpop.permute.xlu0 %5233
        %5235 = vrot.lane.b32.xlu0 %v4926, 8
        %v5236 = vpop.permute.xlu0 %5235
        %5237 = vrot.lane.b32.xlu0 %v4927, 8
        %v5238 = vpop.permute.xlu0 %5237
        %5239 = vrot.lane.b32.xlu0 %v4928, 8
        %v5240 = vpop.permute.xlu0 %5239
        %5241 = vrot.lane.b32.xlu0 %v4929, 8
        %v5242 = vpop.permute.xlu0 %5241
        %5243 = vrot.lane.b32.xlu0 %v4930, 8
        %v5244 = vpop.permute.xlu0 %5243
        %5245 = vrot.lane.b32.xlu0 %v4931, 8
        %v5246 = vpop.permute.xlu0 %5245
        %5247 = vrot.lane.b32.xlu0 %v4932, 8
        %v5248 = vpop.permute.xlu0 %5247
        %5249 = vrot.lane.b32.xlu0 %v4933, 8
        %v5250 = vpop.permute.xlu0 %5249
        %5251 = vrot.lane.b32.xlu0 %v4934, 8
        %v5252 = vpop.permute.xlu0 %5251
        %5253 = vrot.lane.b32.xlu0 %v4935, 8
        %v5254 = vpop.permute.xlu0 %5253
        %5255 = vrot.lane.b32.xlu0 %v4936, 8
        %v5256 = vpop.permute.xlu0 %5255
        %5257 = vrot.lane.b32.xlu0 %v4937, 8
        %v5258 = vpop.permute.xlu0 %5257
        %5323 = vrot.lane.b32.xlu0 %v4938, 16
        %v5324 = vpop.permute.xlu0 %5323
        %5325 = vrot.lane.b32.xlu0 %v4939, 16
        %v5326 = vpop.permute.xlu0 %5325
        %5327 = vrot.lane.b32.xlu0 %v4940, 16
        %v5328 = vpop.permute.xlu0 %5327
        %5329 = vrot.lane.b32.xlu0 %v4941, 16
        %v5330 = vpop.permute.xlu0 %5329
        %5331 = vrot.lane.b32.xlu0 %v4942, 16
        %v5332 = vpop.permute.xlu0 %5331
        %5333 = vrot.lane.b32.xlu0 %v4943, 16
        %v5334 = vpop.permute.xlu0 %5333
        %5335 = vrot.lane.b32.xlu0 %v4944, 16
        %v5336 = vpop.permute.xlu0 %5335
        %5337 = vrot.lane.b32.xlu0 %v4945, 16
        %v5338 = vpop.permute.xlu0 %5337
        %5339 = vrot.lane.b32.xlu0 %v4946, 16
        %v5340 = vpop.permute.xlu0 %5339
        %5341 = vrot.lane.b32.xlu0 %v4947, 16
        %v5342 = vpop.permute.xlu0 %5341
        %5343 = vrot.lane.b32.xlu0 %v4948, 16
        %v5344 = vpop.permute.xlu0 %5343
        %5345 = vrot.lane.b32.xlu0 %v4949, 16
        %v5346 = vpop.permute.xlu0 %5345
        %5347 = vrot.lane.b32.xlu0 %v4950, 16
        %v5348 = vpop.permute.xlu0 %5347
        %5349 = vrot.lane.b32.xlu0 %v4951, 16
        %v5350 = vpop.permute.xlu0 %5349
        %5351 = vrot.lane.b32.xlu0 %v4952, 16
        %v5352 = vpop.permute.xlu0 %5351
        %5353 = vrot.lane.b32.xlu0 %v4953, 16
        %v5354 = vpop.permute.xlu0 %5353
        %5355 = vrot.lane.b32.xlu0 %v4954, 16
        %v5356 = vpop.permute.xlu0 %5355
        %5357 = vrot.lane.b32.xlu0 %v4955, 16
        %v5358 = vpop.permute.xlu0 %5357
        %5359 = vrot.lane.b32.xlu0 %v4956, 16
        %v5360 = vpop.permute.xlu0 %5359
        %5361 = vrot.lane.b32.xlu0 %v4957, 16
        %v5362 = vpop.permute.xlu0 %5361
        %5363 = vrot.lane.b32.xlu0 %v4958, 16
        %v5364 = vpop.permute.xlu0 %5363
        %5365 = vrot.lane.b32.xlu0 %v4959, 16
        %v5366 = vpop.permute.xlu0 %5365
        %5367 = vrot.lane.b32.xlu0 %v4960, 16
        %v5368 = vpop.permute.xlu0 %5367
        %5369 = vrot.lane.b32.xlu0 %v4961, 16
        %v5370 = vpop.permute.xlu0 %5369
        %5371 = vrot.lane.b32.xlu0 %v4962, 16
        %v5372 = vpop.permute.xlu0 %5371
        %5373 = vrot.lane.b32.xlu0 %v4963, 16
        %v5374 = vpop.permute.xlu0 %5373
        %5375 = vrot.lane.b32.xlu0 %v4964, 16
        %v5376 = vpop.permute.xlu0 %5375
        %5377 = vrot.lane.b32.xlu0 %v4965, 16
        %v5378 = vpop.permute.xlu0 %5377
        %5379 = vrot.lane.b32.xlu0 %v4966, 16
        %v5380 = vpop.permute.xlu0 %5379
        %5381 = vrot.lane.b32.xlu0 %v4967, 16
        %v5382 = vpop.permute.xlu0 %5381
        %5383 = vrot.lane.b32.xlu0 %v4968, 16
        %v5384 = vpop.permute.xlu0 %5383
        %5385 = vrot.lane.b32.xlu0 %v4969, 16
        %v5386 = vpop.permute.xlu0 %5385
        %5451 = vrot.lane.b32.xlu0 %v4970, 24
        %v5452 = vpop.permute.xlu0 %5451
        %5453 = vrot.lane.b32.xlu0 %v4971, 24
        %v5454 = vpop.permute.xlu0 %5453
        %5455 = vrot.lane.b32.xlu0 %v4972, 24
        %v5456 = vpop.permute.xlu0 %5455
        %5457 = vrot.lane.b32.xlu0 %v4973, 24
        %v5458 = vpop.permute.xlu0 %5457
        %5459 = vrot.lane.b32.xlu0 %v4974, 24
        %v5460 = vpop.permute.xlu0 %5459
        %5461 = vrot.lane.b32.xlu0 %v4975, 24
        %v5462 = vpop.permute.xlu0 %5461
        %5463 = vrot.lane.b32.xlu0 %v4976, 24
        %v5464 = vpop.permute.xlu0 %5463
        %5465 = vrot.lane.b32.xlu0 %v4977, 24
        %v5466 = vpop.permute.xlu0 %5465
        %5467 = vrot.lane.b32.xlu0 %v4978, 24
        %v5468 = vpop.permute.xlu0 %5467
        %5469 = vrot.lane.b32.xlu0 %v4979, 24
        %v5470 = vpop.permute.xlu0 %5469
        %5471 = vrot.lane.b32.xlu0 %v4980, 24
        %v5472 = vpop.permute.xlu0 %5471
        %5473 = vrot.lane.b32.xlu0 %v4981, 24
        %v5474 = vpop.permute.xlu0 %5473
        %5475 = vrot.lane.b32.xlu0 %v4982, 24
        %v5476 = vpop.permute.xlu0 %5475
        %5477 = vrot.lane.b32.xlu0 %v4983, 24
        %v5478 = vpop.permute.xlu0 %5477
        %5479 = vrot.lane.b32.xlu0 %v4984, 24
        %v5480 = vpop.permute.xlu0 %5479
        %5481 = vrot.lane.b32.xlu0 %v4985, 24
        %v5482 = vpop.permute.xlu0 %5481
        %5483 = vrot.lane.b32.xlu0 %v4986, 24
        %v5484 = vpop.permute.xlu0 %5483
        %5485 = vrot.lane.b32.xlu0 %v4987, 24
        %v5486 = vpop.permute.xlu0 %5485
        %5487 = vrot.lane.b32.xlu0 %v4988, 24
        %v5488 = vpop.permute.xlu0 %5487
        %5489 = vrot.lane.b32.xlu0 %v4989, 24
        %v5490 = vpop.permute.xlu0 %5489
        %5491 = vrot.lane.b32.xlu0 %v4990, 24
        %v5492 = vpop.permute.xlu0 %5491
        %5493 = vrot.lane.b32.xlu0 %v4991, 24
        %v5494 = vpop.permute.xlu0 %5493
        %5495 = vrot.lane.b32.xlu0 %v4992, 24
        %v5496 = vpop.permute.xlu0 %5495
        %5497 = vrot.lane.b32.xlu0 %v4993, 24
        %v5498 = vpop.permute.xlu0 %5497
        %5499 = vrot.lane.b32.xlu0 %v4994, 24
        %v5500 = vpop.permute.xlu0 %5499
        %5501 = vrot.lane.b32.xlu0 %v4995, 24
        %v5502 = vpop.permute.xlu0 %5501
        %5503 = vrot.lane.b32.xlu0 %v4996, 24
        %v5504 = vpop.permute.xlu0 %5503
        %5505 = vrot.lane.b32.xlu0 %v4997, 24
        %v5506 = vpop.permute.xlu0 %5505
        %5507 = vrot.lane.b32.xlu0 %v4998, 24
        %v5508 = vpop.permute.xlu0 %5507
        %5509 = vrot.lane.b32.xlu0 %v4999, 24
        %v5510 = vpop.permute.xlu0 %5509
        %5511 = vrot.lane.b32.xlu0 %v5000, 24
        %v5512 = vpop.permute.xlu0 %5511
        %5513 = vrot.lane.b32.xlu0 %v5001, 24
        %v5514 = vpop.permute.xlu0 %5513
        %5579 = vrot.lane.b32.xlu0 %v5002, 32
        %v5580 = vpop.permute.xlu0 %5579
        %5581 = vrot.lane.b32.xlu0 %v5003, 32
        %v5582 = vpop.permute.xlu0 %5581
        %5583 = vrot.lane.b32.xlu0 %v5004, 32
        %v5584 = vpop.permute.xlu0 %5583
        %5585 = vrot.lane.b32.xlu0 %v5005, 32
        %v5586 = vpop.permute.xlu0 %5585
        %5587 = vrot.lane.b32.xlu0 %v5006, 32
        %v5588 = vpop.permute.xlu0 %5587
        %5589 = vrot.lane.b32.xlu0 %v5007, 32
        %v5590 = vpop.permute.xlu0 %5589
        %5591 = vrot.lane.b32.xlu0 %v5008, 32
        %v5592 = vpop.permute.xlu0 %5591
        %5593 = vrot.lane.b32.xlu0 %v5009, 32
        %v5594 = vpop.permute.xlu0 %5593
        %5595 = vrot.lane.b32.xlu0 %v5010, 32
        %v5596 = vpop.permute.xlu0 %5595
        %5597 = vrot.lane.b32.xlu0 %v5011, 32
        %v5598 = vpop.permute.xlu0 %5597
        %5599 = vrot.lane.b32.xlu0 %v5012, 32
        %v5600 = vpop.permute.xlu0 %5599
        %5601 = vrot.lane.b32.xlu0 %v5013, 32
        %v5602 = vpop.permute.xlu0 %5601
        %5603 = vrot.lane.b32.xlu0 %v5014, 32
        %v5604 = vpop.permute.xlu0 %5603
        %5605 = vrot.lane.b32.xlu0 %v5015, 32
        %v5606 = vpop.permute.xlu0 %5605
        %5607 = vrot.lane.b32.xlu0 %v5016, 32
        %v5608 = vpop.permute.xlu0 %5607
        %5609 = vrot.lane.b32.xlu0 %v5017, 32
        %v5610 = vpop.permute.xlu0 %5609
        %5611 = vrot.lane.b32.xlu0 %v5018, 32
        %v5612 = vpop.permute.xlu0 %5611
        %5613 = vrot.lane.b32.xlu0 %v5019, 32
        %v5614 = vpop.permute.xlu0 %5613
        %5615 = vrot.lane.b32.xlu0 %v5020, 32
        %v5616 = vpop.permute.xlu0 %5615
        %5617 = vrot.lane.b32.xlu0 %v5021, 32
        %v5618 = vpop.permute.xlu0 %5617
        %5619 = vrot.lane.b32.xlu0 %v5022, 32
        %v5620 = vpop.permute.xlu0 %5619
        %5621 = vrot.lane.b32.xlu0 %v5023, 32
        %v5622 = vpop.permute.xlu0 %5621
        %5623 = vrot.lane.b32.xlu0 %v5024, 32
        %v5624 = vpop.permute.xlu0 %5623
        %5625 = vrot.lane.b32.xlu0 %v5025, 32
        %v5626 = vpop.permute.xlu0 %5625
        %5627 = vrot.lane.b32.xlu0 %v5026, 32
        %v5628 = vpop.permute.xlu0 %5627
        %5629 = vrot.lane.b32.xlu0 %v5027, 32
        %v5630 = vpop.permute.xlu0 %5629
        %5631 = vrot.lane.b32.xlu0 %v5028, 32
        %v5632 = vpop.permute.xlu0 %5631
        %5633 = vrot.lane.b32.xlu0 %v5029, 32
        %v5634 = vpop.permute.xlu0 %5633
        %5635 = vrot.lane.b32.xlu0 %v5030, 32
        %v5636 = vpop.permute.xlu0 %5635
        %5637 = vrot.lane.b32.xlu0 %v5031, 32
        %v5638 = vpop.permute.xlu0 %5637
        %5639 = vrot.lane.b32.xlu0 %v5032, 32
        %v5640 = vpop.permute.xlu0 %5639
        %5641 = vrot.lane.b32.xlu0 %v5033, 32
        %v5642 = vpop.permute.xlu0 %5641
        %5707 = vrot.lane.b32.xlu0 %v5034, 40
        %v5708 = vpop.permute.xlu0 %5707
        %5709 = vrot.lane.b32.xlu0 %v5035, 40
        %v5710 = vpop.permute.xlu0 %5709
        %5711 = vrot.lane.b32.xlu0 %v5036, 40
        %v5712 = vpop.permute.xlu0 %5711
        %5713 = vrot.lane.b32.xlu0 %v5037, 40
        %v5714 = vpop.permute.xlu0 %5713
        %5715 = vrot.lane.b32.xlu0 %v5038, 40
        %v5716 = vpop.permute.xlu0 %5715
        %5717 = vrot.lane.b32.xlu0 %v5039, 40
        %v5718 = vpop.permute.xlu0 %5717
        %5719 = vrot.lane.b32.xlu0 %v5040, 40
        %v5720 = vpop.permute.xlu0 %5719
        %5721 = vrot.lane.b32.xlu0 %v5041, 40
        %v5722 = vpop.permute.xlu0 %5721
        %5723 = vrot.lane.b32.xlu0 %v5042, 40
        %v5724 = vpop.permute.xlu0 %5723
        %5725 = vrot.lane.b32.xlu0 %v5043, 40
        %v5726 = vpop.permute.xlu0 %5725
        %5727 = vrot.lane.b32.xlu0 %v5044, 40
        %v5728 = vpop.permute.xlu0 %5727
        %5729 = vrot.lane.b32.xlu0 %v5045, 40
        %v5730 = vpop.permute.xlu0 %5729
        %5731 = vrot.lane.b32.xlu0 %v5046, 40
        %v5732 = vpop.permute.xlu0 %5731
        %5733 = vrot.lane.b32.xlu0 %v5047, 40
        %v5734 = vpop.permute.xlu0 %5733
        %5735 = vrot.lane.b32.xlu0 %v5048, 40
        %v5736 = vpop.permute.xlu0 %5735
        %5737 = vrot.lane.b32.xlu0 %v5049, 40
        %v5738 = vpop.permute.xlu0 %5737
        %5739 = vrot.lane.b32.xlu0 %v5050, 40
        %v5740 = vpop.permute.xlu0 %5739
        %5741 = vrot.lane.b32.xlu0 %v5051, 40
        %v5742 = vpop.permute.xlu0 %5741
        %5743 = vrot.lane.b32.xlu0 %v5052, 40
        %v5744 = vpop.permute.xlu0 %5743
        %5745 = vrot.lane.b32.xlu0 %v5053, 40
        %v5746 = vpop.permute.xlu0 %5745
        %5747 = vrot.lane.b32.xlu0 %v5054, 40
        %v5748 = vpop.permute.xlu0 %5747
        %5749 = vrot.lane.b32.xlu0 %v5055, 40
        %v5750 = vpop.permute.xlu0 %5749
        %5751 = vrot.lane.b32.xlu0 %v5056, 40
        %v5752 = vpop.permute.xlu0 %5751
        %5753 = vrot.lane.b32.xlu0 %v5057, 40
        %v5754 = vpop.permute.xlu0 %5753
        %5755 = vrot.lane.b32.xlu0 %v5058, 40
        %v5756 = vpop.permute.xlu0 %5755
        %5757 = vrot.lane.b32.xlu0 %v5059, 40
        %v5758 = vpop.permute.xlu0 %5757
        %5759 = vrot.lane.b32.xlu0 %v5060, 40
        %v5760 = vpop.permute.xlu0 %5759
        %5761 = vrot.lane.b32.xlu0 %v5061, 40
        %v5762 = vpop.permute.xlu0 %5761
        %5763 = vrot.lane.b32.xlu0 %v5062, 40
        %v5764 = vpop.permute.xlu0 %5763
        %5765 = vrot.lane.b32.xlu0 %v5063, 40
        %v5766 = vpop.permute.xlu0 %5765
        %5767 = vrot.lane.b32.xlu0 %v5064, 40
        %v5768 = vpop.permute.xlu0 %5767
        %5769 = vrot.lane.b32.xlu0 %v5065, 40
        %v5770 = vpop.permute.xlu0 %5769
        %5835 = vrot.lane.b32.xlu0 %v5067, 48
        %v5836 = vpop.permute.xlu0 %5835
        %5837 = vrot.lane.b32.xlu0 %v5068, 48
        %v5838 = vpop.permute.xlu0 %5837
        %5839 = vrot.lane.b32.xlu0 %v5069, 48
        %v5840 = vpop.permute.xlu0 %5839
        %5841 = vrot.lane.b32.xlu0 %v5070, 48
        %v5842 = vpop.permute.xlu0 %5841
        %5843 = vrot.lane.b32.xlu0 %v5071, 48
        %v5844 = vpop.permute.xlu0 %5843
        %5845 = vrot.lane.b32.xlu0 %v5072, 48
        %v5846 = vpop.permute.xlu0 %5845
        %5847 = vrot.lane.b32.xlu0 %v5073, 48
        %v5848 = vpop.permute.xlu0 %5847
        %5849 = vrot.lane.b32.xlu0 %v5074, 48
        %v5850 = vpop.permute.xlu0 %5849
        %5851 = vrot.lane.b32.xlu0 %v5075, 48
        %v5852 = vpop.permute.xlu0 %5851
        %5853 = vrot.lane.b32.xlu0 %v5076, 48
        %v5854 = vpop.permute.xlu0 %5853
        %5855 = vrot.lane.b32.xlu0 %v5077, 48
        %v5856 = vpop.permute.xlu0 %5855
        %5857 = vrot.lane.b32.xlu0 %v5078, 48
        %v5858 = vpop.permute.xlu0 %5857
        %5859 = vrot.lane.b32.xlu0 %v5079, 48
        %v5860 = vpop.permute.xlu0 %5859
        %5861 = vrot.lane.b32.xlu0 %v5080, 48
        %v5862 = vpop.permute.xlu0 %5861
        %5863 = vrot.lane.b32.xlu0 %v5081, 48
        %v5864 = vpop.permute.xlu0 %5863
        %5865 = vrot.lane.b32.xlu0 %v5082, 48
        %v5866 = vpop.permute.xlu0 %5865
        %5867 = vrot.lane.b32.xlu0 %v5083, 48
        %v5868 = vpop.permute.xlu0 %5867
        %5869 = vrot.lane.b32.xlu0 %v5084, 48
        %v5870 = vpop.permute.xlu0 %5869
        %5871 = vrot.lane.b32.xlu0 %v5085, 48
        %v5872 = vpop.permute.xlu0 %5871
        %5873 = vrot.lane.b32.xlu0 %v5086, 48
        %v5874 = vpop.permute.xlu0 %5873
        %5875 = vrot.lane.b32.xlu0 %v5087, 48
        %v5876 = vpop.permute.xlu0 %5875
        %5877 = vrot.lane.b32.xlu0 %v5088, 48
        %v5878 = vpop.permute.xlu0 %5877
        %5879 = vrot.lane.b32.xlu0 %v5089, 48
        %v5880 = vpop.permute.xlu0 %5879
        %5881 = vrot.lane.b32.xlu0 %v5090, 48
        %v5882 = vpop.permute.xlu0 %5881
        %5883 = vrot.lane.b32.xlu0 %v5091, 48
        %v5884 = vpop.permute.xlu0 %5883
        %5885 = vrot.lane.b32.xlu0 %v5092, 48
        %v5886 = vpop.permute.xlu0 %5885
        %5887 = vrot.lane.b32.xlu0 %v5093, 48
        %v5888 = vpop.permute.xlu0 %5887
        %5889 = vrot.lane.b32.xlu0 %v5094, 48
        %v5890 = vpop.permute.xlu0 %5889
        %5891 = vrot.lane.b32.xlu0 %v5095, 48
        %v5892 = vpop.permute.xlu0 %5891
        %5893 = vrot.lane.b32.xlu0 %v5096, 48
        %v5894 = vpop.permute.xlu0 %5893
        %5895 = vrot.lane.b32.xlu0 %v5097, 48
        %v5896 = vpop.permute.xlu0 %5895
        %5897 = vrot.lane.b32.xlu0 %v5098, 48
        %v5898 = vpop.permute.xlu0 %5897
        %5963 = vrot.lane.b32.xlu0 %v5099, 56
        %v5964 = vpop.permute.xlu0 %5963
        %5965 = vrot.lane.b32.xlu0 %v5100, 56
        %v5966 = vpop.permute.xlu0 %5965
        %5967 = vrot.lane.b32.xlu0 %v5101, 56
        %v5968 = vpop.permute.xlu0 %5967
        %5969 = vrot.lane.b32.xlu0 %v5102, 56
        %v5970 = vpop.permute.xlu0 %5969
        %5971 = vrot.lane.b32.xlu0 %v5103, 56
        %v5972 = vpop.permute.xlu0 %5971
        %5973 = vrot.lane.b32.xlu0 %v5104, 56
        %v5974 = vpop.permute.xlu0 %5973
        %5975 = vrot.lane.b32.xlu0 %v5105, 56
        %v5976 = vpop.permute.xlu0 %5975
        %5977 = vrot.lane.b32.xlu0 %v5106, 56
        %v5978 = vpop.permute.xlu0 %5977
        %5979 = vrot.lane.b32.xlu0 %v5107, 56
        %v5980 = vpop.permute.xlu0 %5979
        %5981 = vrot.lane.b32.xlu0 %v5108, 56
        %v5982 = vpop.permute.xlu0 %5981
        %5983 = vrot.lane.b32.xlu0 %v5109, 56
        %v5984 = vpop.permute.xlu0 %5983
        %5985 = vrot.lane.b32.xlu0 %v5110, 56
        %v5986 = vpop.permute.xlu0 %5985
        %5987 = vrot.lane.b32.xlu0 %v5111, 56
        %v5988 = vpop.permute.xlu0 %5987
        %5989 = vrot.lane.b32.xlu0 %v5112, 56
        %v5990 = vpop.permute.xlu0 %5989
        %5991 = vrot.lane.b32.xlu0 %v5113, 56
        %v5992 = vpop.permute.xlu0 %5991
        %5993 = vrot.lane.b32.xlu0 %v5114, 56
        %v5994 = vpop.permute.xlu0 %5993
        %5995 = vrot.lane.b32.xlu0 %v5115, 56
        %v5996 = vpop.permute.xlu0 %5995
        %5997 = vrot.lane.b32.xlu0 %v5116, 56
        %v5998 = vpop.permute.xlu0 %5997
        %5999 = vrot.lane.b32.xlu0 %v5117, 56
        %v6000 = vpop.permute.xlu0 %5999
        %6001 = vrot.lane.b32.xlu0 %v5118, 56
        %v6002 = vpop.permute.xlu0 %6001
        %6003 = vrot.lane.b32.xlu0 %v5119, 56
        %v6004 = vpop.permute.xlu0 %6003
        %6005 = vrot.lane.b32.xlu0 %v5120, 56
        %v6006 = vpop.permute.xlu0 %6005
        %6007 = vrot.lane.b32.xlu0 %v5121, 56
        %v6008 = vpop.permute.xlu0 %6007
        %6009 = vrot.lane.b32.xlu0 %v5122, 56
        %v6010 = vpop.permute.xlu0 %6009
        %6011 = vrot.lane.b32.xlu0 %v5123, 56
        %v6012 = vpop.permute.xlu0 %6011
        %6013 = vrot.lane.b32.xlu0 %v5124, 56
        %v6014 = vpop.permute.xlu0 %6013
        %6015 = vrot.lane.b32.xlu0 %v5125, 56
        %v6016 = vpop.permute.xlu0 %6015
        %6017 = vrot.lane.b32.xlu0 %v5126, 56
        %v6018 = vpop.permute.xlu0 %6017
        %6019 = vrot.lane.b32.xlu0 %v5127, 56
        %v6020 = vpop.permute.xlu0 %6019
        %6021 = vrot.lane.b32.xlu0 %v5128, 56
        %v6022 = vpop.permute.xlu0 %6021
        %6023 = vrot.lane.b32.xlu0 %v5129, 56
        %v6024 = vpop.permute.xlu0 %6023
        %6025 = vrot.lane.b32.xlu0 %v5130, 56
        %v6026 = vpop.permute.xlu0 %6025
        %6091 = vrot.lane.b32.xlu0 %v5131, 64
        %v6092 = vpop.permute.xlu0 %6091
        %6093 = vrot.lane.b32.xlu0 %v5132, 64
        %v6094 = vpop.permute.xlu0 %6093
        %6095 = vrot.lane.b32.xlu0 %v5133, 64
        %v6096 = vpop.permute.xlu0 %6095
        %6097 = vrot.lane.b32.xlu0 %v5134, 64
        %v6098 = vpop.permute.xlu0 %6097
        %6099 = vrot.lane.b32.xlu0 %v5135, 64
        %v6100 = vpop.permute.xlu0 %6099
        %6101 = vrot.lane.b32.xlu0 %v5136, 64
        %v6102 = vpop.permute.xlu0 %6101
        %6103 = vrot.lane.b32.xlu0 %v5137, 64
        %v6104 = vpop.permute.xlu0 %6103
        %6105 = vrot.lane.b32.xlu0 %v5138, 64
        %v6106 = vpop.permute.xlu0 %6105
        %6107 = vrot.lane.b32.xlu0 %v5139, 64
        %v6108 = vpop.permute.xlu0 %6107
        %6109 = vrot.lane.b32.xlu0 %v5140, 64
        %v6110 = vpop.permute.xlu0 %6109
        %6111 = vrot.lane.b32.xlu0 %v5141, 64
        %v6112 = vpop.permute.xlu0 %6111
        %6113 = vrot.lane.b32.xlu0 %v5142, 64
        %v6114 = vpop.permute.xlu0 %6113
        %6115 = vrot.lane.b32.xlu0 %v5143, 64
        %v6116 = vpop.permute.xlu0 %6115
        %6117 = vrot.lane.b32.xlu0 %v5144, 64
        %v6118 = vpop.permute.xlu0 %6117
        %6119 = vrot.lane.b32.xlu0 %v5145, 64
        %v6120 = vpop.permute.xlu0 %6119
        %6121 = vrot.lane.b32.xlu0 %v5146, 64
        %v6122 = vpop.permute.xlu0 %6121
        %6123 = vrot.lane.b32.xlu0 %v5147, 64
        %v6124 = vpop.permute.xlu0 %6123
        %6125 = vrot.lane.b32.xlu0 %v5148, 64
        %v6126 = vpop.permute.xlu0 %6125
        %6127 = vrot.lane.b32.xlu0 %v5149, 64
        %v6128 = vpop.permute.xlu0 %6127
        %6129 = vrot.lane.b32.xlu0 %v5150, 64
        %v6130 = vpop.permute.xlu0 %6129
        %6131 = vrot.lane.b32.xlu0 %v5151, 64
        %v6132 = vpop.permute.xlu0 %6131
        %6133 = vrot.lane.b32.xlu0 %v5152, 64
        %v6134 = vpop.permute.xlu0 %6133
        %6135 = vrot.lane.b32.xlu0 %v5153, 64
        %v6136 = vpop.permute.xlu0 %6135
        %6137 = vrot.lane.b32.xlu0 %v5154, 64
        %v6138 = vpop.permute.xlu0 %6137
        %6139 = vrot.lane.b32.xlu0 %v5155, 64
        %v6140 = vpop.permute.xlu0 %6139
        %6141 = vrot.lane.b32.xlu0 %v5156, 64
        %v6142 = vpop.permute.xlu0 %6141
        %6143 = vrot.lane.b32.xlu0 %v5157, 64
        %v6144 = vpop.permute.xlu0 %6143
        %6145 = vrot.lane.b32.xlu0 %v5158, 64
        %v6146 = vpop.permute.xlu0 %6145
        %6147 = vrot.lane.b32.xlu0 %v5159, 64
        %v6148 = vpop.permute.xlu0 %6147
        %6149 = vrot.lane.b32.xlu0 %v5160, 64
        %v6150 = vpop.permute.xlu0 %6149
        %6151 = vrot.lane.b32.xlu0 %v5161, 64
        %v6152 = vpop.permute.xlu0 %6151
        %6153 = vrot.lane.b32.xlu0 %v5162, 64
        %v6154 = vpop.permute.xlu0 %6153
        %v6187 = vsel %vm459, %v4874, %v5196
        %v6188 = vsel %vm459, %v4875, %v5198
        %v6189 = vsel %vm459, %v4876, %v5200
        %v6190 = vsel %vm459, %v4877, %v5202
        %v6191 = vsel %vm459, %v4878, %v5204
        %v6192 = vsel %vm459, %v4879, %v5206
        %v6193 = vsel %vm459, %v4880, %v5208
        %v6194 = vsel %vm459, %v4881, %v5210
        %v6195 = vsel %vm459, %v4882, %v5212
        %v6196 = vsel %vm459, %v4883, %v5214
        %v6197 = vsel %vm459, %v4884, %v5216
        %v6198 = vsel %vm459, %v4885, %v5218
        %v6199 = vsel %vm459, %v4886, %v5220
        %v6200 = vsel %vm459, %v4887, %v5222
        %v6201 = vsel %vm459, %v4888, %v5224
        %v6202 = vsel %vm459, %v4889, %v5226
        %v6203 = vsel %vm459, %v4890, %v5228
        %v6204 = vsel %vm459, %v4891, %v5230
        %v6205 = vsel %vm459, %v4892, %v5232
        %v6206 = vsel %vm459, %v4893, %v5234
        %v6207 = vsel %vm459, %v4894, %v5236
        %v6208 = vsel %vm459, %v4895, %v5238
        %v6209 = vsel %vm459, %v4896, %v5240
        %v6210 = vsel %vm459, %v4897, %v5242
        %v6211 = vsel %vm459, %v4898, %v5244
        %v6212 = vsel %vm459, %v4899, %v5246
        %v6213 = vsel %vm459, %v4900, %v5248
        %v6214 = vsel %vm459, %v4901, %v5250
        %v6215 = vsel %vm459, %v4902, %v5252
        %v6216 = vsel %vm459, %v4903, %v5254
        %v6217 = vsel %vm459, %v4904, %v5256
        %v6218 = vsel %vm459, %v4905, %v5258
        %vm6219 = vcmask 130048
        %v6220 = vsel %vm6219, %v6187, %v5324
        %v6221 = vsel %vm6219, %v6188, %v5326
        %v6222 = vsel %vm6219, %v6189, %v5328
        %v6223 = vsel %vm6219, %v6190, %v5330
        %v6224 = vsel %vm6219, %v6191, %v5332
        %v6225 = vsel %vm6219, %v6192, %v5334
        %v6226 = vsel %vm6219, %v6193, %v5336
        %v6227 = vsel %vm6219, %v6194, %v5338
        %v6228 = vsel %vm6219, %v6195, %v5340
        %v6229 = vsel %vm6219, %v6196, %v5342
        %v6230 = vsel %vm6219, %v6197, %v5344
        %v6231 = vsel %vm6219, %v6198, %v5346
        %v6232 = vsel %vm6219, %v6199, %v5348
        %v6233 = vsel %vm6219, %v6200, %v5350
        %v6234 = vsel %vm6219, %v6201, %v5352
        %v6235 = vsel %vm6219, %v6202, %v5354
        %v6236 = vsel %vm6219, %v6203, %v5356
        %v6237 = vsel %vm6219, %v6204, %v5358
        %v6238 = vsel %vm6219, %v6205, %v5360
        %v6239 = vsel %vm6219, %v6206, %v5362
        %v6240 = vsel %vm6219, %v6207, %v5364
        %v6241 = vsel %vm6219, %v6208, %v5366
        %v6242 = vsel %vm6219, %v6209, %v5368
        %v6243 = vsel %vm6219, %v6210, %v5370
        %v6244 = vsel %vm6219, %v6211, %v5372
        %v6245 = vsel %vm6219, %v6212, %v5374
        %v6246 = vsel %vm6219, %v6213, %v5376
        %v6247 = vsel %vm6219, %v6214, %v5378
        %v6248 = vsel %vm6219, %v6215, %v5380
        %v6249 = vsel %vm6219, %v6216, %v5382
        %v6250 = vsel %vm6219, %v6217, %v5384
        %v6251 = vsel %vm6219, %v6218, %v5386
        %vm6252 = vcmask 195584
        %v6253 = vsel %vm6252, %v6220, %v5452
        %v6254 = vsel %vm6252, %v6221, %v5454
        %v6255 = vsel %vm6252, %v6222, %v5456
        %v6256 = vsel %vm6252, %v6223, %v5458
        %v6257 = vsel %vm6252, %v6224, %v5460
        %v6258 = vsel %vm6252, %v6225, %v5462
        %v6259 = vsel %vm6252, %v6226, %v5464
        %v6260 = vsel %vm6252, %v6227, %v5466
        %v6261 = vsel %vm6252, %v6228, %v5468
        %v6262 = vsel %vm6252, %v6229, %v5470
        %v6263 = vsel %vm6252, %v6230, %v5472
        %v6264 = vsel %vm6252, %v6231, %v5474
        %v6265 = vsel %vm6252, %v6232, %v5476
        %v6266 = vsel %vm6252, %v6233, %v5478
        %v6267 = vsel %vm6252, %v6234, %v5480
        %v6268 = vsel %vm6252, %v6235, %v5482
        %v6269 = vsel %vm6252, %v6236, %v5484
        %v6270 = vsel %vm6252, %v6237, %v5486
        %v6271 = vsel %vm6252, %v6238, %v5488
        %v6272 = vsel %vm6252, %v6239, %v5490
        %v6273 = vsel %vm6252, %v6240, %v5492
        %v6274 = vsel %vm6252, %v6241, %v5494
        %v6275 = vsel %vm6252, %v6242, %v5496
        %v6276 = vsel %vm6252, %v6243, %v5498
        %v6277 = vsel %vm6252, %v6244, %v5500
        %v6278 = vsel %vm6252, %v6245, %v5502
        %v6279 = vsel %vm6252, %v6246, %v5504
        %v6280 = vsel %vm6252, %v6247, %v5506
        %v6281 = vsel %vm6252, %v6248, %v5508
        %v6282 = vsel %vm6252, %v6249, %v5510
        %v6283 = vsel %vm6252, %v6250, %v5512
        %v6284 = vsel %vm6252, %v6251, %v5514
        %vm6285 = vcmask 261120
        %v6286 = vsel %vm6285, %v6253, %v5580
        %v6287 = vsel %vm6285, %v6254, %v5582
        %v6288 = vsel %vm6285, %v6255, %v5584
        %v6289 = vsel %vm6285, %v6256, %v5586
        %v6290 = vsel %vm6285, %v6257, %v5588
        %v6291 = vsel %vm6285, %v6258, %v5590
        %v6292 = vsel %vm6285, %v6259, %v5592
        %v6293 = vsel %vm6285, %v6260, %v5594
        %v6294 = vsel %vm6285, %v6261, %v5596
        %v6295 = vsel %vm6285, %v6262, %v5598
        %v6296 = vsel %vm6285, %v6263, %v5600
        %v6297 = vsel %vm6285, %v6264, %v5602
        %v6298 = vsel %vm6285, %v6265, %v5604
        %v6299 = vsel %vm6285, %v6266, %v5606
        %v6300 = vsel %vm6285, %v6267, %v5608
        %v6301 = vsel %vm6285, %v6268, %v5610
        %v6302 = vsel %vm6285, %v6269, %v5612
        %v6303 = vsel %vm6285, %v6270, %v5614
        %v6304 = vsel %vm6285, %v6271, %v5616
        %v6305 = vsel %vm6285, %v6272, %v5618
        %v6306 = vsel %vm6285, %v6273, %v5620
        %v6307 = vsel %vm6285, %v6274, %v5622
        %v6308 = vsel %vm6285, %v6275, %v5624
        %v6309 = vsel %vm6285, %v6276, %v5626
        %v6310 = vsel %vm6285, %v6277, %v5628
        %v6311 = vsel %vm6285, %v6278, %v5630
        %v6312 = vsel %vm6285, %v6279, %v5632
        %v6313 = vsel %vm6285, %v6280, %v5634
        %v6314 = vsel %vm6285, %v6281, %v5636
        %v6315 = vsel %vm6285, %v6282, %v5638
        %v6316 = vsel %vm6285, %v6283, %v5640
        %v6317 = vsel %vm6285, %v6284, %v5642
        %vm6318 = vcmask 326656
        %v6319 = vsel %vm6318, %v6286, %v5708
        %v6320 = vsel %vm6318, %v6287, %v5710
        %v6321 = vsel %vm6318, %v6288, %v5712
        %v6322 = vsel %vm6318, %v6289, %v5714
        %v6323 = vsel %vm6318, %v6290, %v5716
        %v6324 = vsel %vm6318, %v6291, %v5718
        %v6325 = vsel %vm6318, %v6292, %v5720
        %v6326 = vsel %vm6318, %v6293, %v5722
        %v6327 = vsel %vm6318, %v6294, %v5724
        %v6328 = vsel %vm6318, %v6295, %v5726
        %v6329 = vsel %vm6318, %v6296, %v5728
        %v6330 = vsel %vm6318, %v6297, %v5730
        %v6331 = vsel %vm6318, %v6298, %v5732
        %v6332 = vsel %vm6318, %v6299, %v5734
        %v6333 = vsel %vm6318, %v6300, %v5736
        %v6334 = vsel %vm6318, %v6301, %v5738
        %v6335 = vsel %vm6318, %v6302, %v5740
        %v6336 = vsel %vm6318, %v6303, %v5742
        %v6337 = vsel %vm6318, %v6304, %v5744
        %v6338 = vsel %vm6318, %v6305, %v5746
        %v6339 = vsel %vm6318, %v6306, %v5748
        %v6340 = vsel %vm6318, %v6307, %v5750
        %v6341 = vsel %vm6318, %v6308, %v5752
        %v6342 = vsel %vm6318, %v6309, %v5754
        %v6343 = vsel %vm6318, %v6310, %v5756
        %v6344 = vsel %vm6318, %v6311, %v5758
        %v6345 = vsel %vm6318, %v6312, %v5760
        %v6346 = vsel %vm6318, %v6313, %v5762
        %v6347 = vsel %vm6318, %v6314, %v5764
        %v6348 = vsel %vm6318, %v6315, %v5766
        %v6349 = vsel %vm6318, %v6316, %v5768
        %v6350 = vsel %vm6318, %v6317, %v5770
        %vm6351 = vcmask 392192
        %v6352 = vsel %vm6351, %v6319, %v5836
        %v6353 = vsel %vm6351, %v6320, %v5838
        %v6354 = vsel %vm6351, %v6321, %v5840
        %v6355 = vsel %vm6351, %v6322, %v5842
        %v6356 = vsel %vm6351, %v6323, %v5844
        %v6357 = vsel %vm6351, %v6324, %v5846
        %v6358 = vsel %vm6351, %v6325, %v5848
        %v6359 = vsel %vm6351, %v6326, %v5850
        %v6360 = vsel %vm6351, %v6327, %v5852
        %v6361 = vsel %vm6351, %v6328, %v5854
        %v6362 = vsel %vm6351, %v6329, %v5856
        %v6363 = vsel %vm6351, %v6330, %v5858
        %v6364 = vsel %vm6351, %v6331, %v5860
        %v6365 = vsel %vm6351, %v6332, %v5862
        %v6366 = vsel %vm6351, %v6333, %v5864
        %v6367 = vsel %vm6351, %v6334, %v5866
        %v6368 = vsel %vm6351, %v6335, %v5868
        %v6369 = vsel %vm6351, %v6336, %v5870
        %v6370 = vsel %vm6351, %v6337, %v5872
        %v6371 = vsel %vm6351, %v6338, %v5874
        %v6372 = vsel %vm6351, %v6339, %v5876
        %v6373 = vsel %vm6351, %v6340, %v5878
        %v6374 = vsel %vm6351, %v6341, %v5880
        %v6375 = vsel %vm6351, %v6342, %v5882
        %v6376 = vsel %vm6351, %v6343, %v5884
        %v6377 = vsel %vm6351, %v6344, %v5886
        %v6378 = vsel %vm6351, %v6345, %v5888
        %v6379 = vsel %vm6351, %v6346, %v5890
        %v6380 = vsel %vm6351, %v6347, %v5892
        %v6381 = vsel %vm6351, %v6348, %v5894
        %v6382 = vsel %vm6351, %v6349, %v5896
        %v6383 = vsel %vm6351, %v6350, %v5898
        %vm6384 = vcmask 457728
        %v6385 = vsel %vm6384, %v6352, %v5964
        %v6386 = vsel %vm6384, %v6353, %v5966
        %v6387 = vsel %vm6384, %v6354, %v5968
        %v6388 = vsel %vm6384, %v6355, %v5970
        %v6389 = vsel %vm6384, %v6356, %v5972
        %v6390 = vsel %vm6384, %v6357, %v5974
        %v6391 = vsel %vm6384, %v6358, %v5976
        %v6392 = vsel %vm6384, %v6359, %v5978
        %v6393 = vsel %vm6384, %v6360, %v5980
        %v6394 = vsel %vm6384, %v6361, %v5982
        %v6395 = vsel %vm6384, %v6362, %v5984
        %v6396 = vsel %vm6384, %v6363, %v5986
        %v6397 = vsel %vm6384, %v6364, %v5988
        %v6398 = vsel %vm6384, %v6365, %v5990
        %v6399 = vsel %vm6384, %v6366, %v5992
        %v6400 = vsel %vm6384, %v6367, %v5994
        %v6401 = vsel %vm6384, %v6368, %v5996
        %v6402 = vsel %vm6384, %v6369, %v5998
        %v6403 = vsel %vm6384, %v6370, %v6000
        %v6404 = vsel %vm6384, %v6371, %v6002
        %v6405 = vsel %vm6384, %v6372, %v6004
        %v6406 = vsel %vm6384, %v6373, %v6006
        %v6407 = vsel %vm6384, %v6374, %v6008
        %v6408 = vsel %vm6384, %v6375, %v6010
        %v6409 = vsel %vm6384, %v6376, %v6012
        %v6410 = vsel %vm6384, %v6377, %v6014
        %v6411 = vsel %vm6384, %v6378, %v6016
        %v6412 = vsel %vm6384, %v6379, %v6018
        %v6413 = vsel %vm6384, %v6380, %v6020
        %v6414 = vsel %vm6384, %v6381, %v6022
        %v6415 = vsel %vm6384, %v6382, %v6024
        %v6416 = vsel %vm6384, %v6383, %v6026
        %vm6417 = vcmask 523264
        %v6418 = vsel %vm6417, %v6385, %v6092
        %v6419 = vsel %vm6417, %v6386, %v6094
        %v6420 = vsel %vm6417, %v6387, %v6096
        %v6421 = vsel %vm6417, %v6388, %v6098
        %v6422 = vsel %vm6417, %v6389, %v6100
        %v6423 = vsel %vm6417, %v6390, %v6102
        %v6424 = vsel %vm6417, %v6391, %v6104
        %v6425 = vsel %vm6417, %v6392, %v6106
        %v6426 = vsel %vm6417, %v6393, %v6108
        %v6427 = vsel %vm6417, %v6394, %v6110
        %v6428 = vsel %vm6417, %v6395, %v6112
        %v6429 = vsel %vm6417, %v6396, %v6114
        %v6430 = vsel %vm6417, %v6397, %v6116
        %v6431 = vsel %vm6417, %v6398, %v6118
        %v6432 = vsel %vm6417, %v6399, %v6120
        %v6433 = vsel %vm6417, %v6400, %v6122
        %v6434 = vsel %vm6417, %v6401, %v6124
        %v6435 = vsel %vm6417, %v6402, %v6126
        %v6436 = vsel %vm6417, %v6403, %v6128
        %v6437 = vsel %vm6417, %v6404, %v6130
        %v6438 = vsel %vm6417, %v6405, %v6132
        %v6439 = vsel %vm6417, %v6406, %v6134
        %v6440 = vsel %vm6417, %v6407, %v6136
        %v6441 = vsel %vm6417, %v6408, %v6138
        %v6442 = vsel %vm6417, %v6409, %v6140
        %v6443 = vsel %vm6417, %v6410, %v6142
        %v6444 = vsel %vm6417, %v6411, %v6144
        %v6445 = vsel %vm6417, %v6412, %v6146
        %v6446 = vsel %vm6417, %v6413, %v6148
        %v6447 = vsel %vm6417, %v6414, %v6150
        %v6448 = vsel %vm6417, %v6415, %v6152
        %v6449 = vsel %vm6417, %v6416, %v6154
        %v6450 = vld [vmem:[%s5] sm:$0xff]
        %v6451 = vld [vmem:[%s5 + $0x8] sm:$0xff]
        %v6452 = vld [vmem:[%s5 + $0x10] sm:$0xff]
        %v6453 = vld [vmem:[%s5 + $0x18] sm:$0xff]
        %v6454 = vld [vmem:[%s5 + $0x20] sm:$0xff]
        %v6455 = vld [vmem:[%s5 + $0x28] sm:$0xff]
        %v6456 = vld [vmem:[%s5 + $0x30] sm:$0xff]
        %v6457 = vld [vmem:[%s5 + $0x38] sm:$0xff]
        %v6458 = vld [vmem:[%s5 + $0x40] sm:$0xff]
        %v6459 = vld [vmem:[%s6] sm:$0x1]
        %v6461 = vlaneseq
        %v6462 = vshrl.u32 %v6461, 7
        %v6463 = vsub.s32 0, %v6462
        %v6464 = vrot.slane %v6459, %v6463
        %vm6466 = vcmask 588800
        %v6468 = vsel %vm6466, %v6418, 0
        %v6471 = vsel %vm6466, %v6419, 0
        %v6474 = vsel %vm6466, %v6420, 0
        %v6477 = vsel %vm6466, %v6421, 0
        %v6480 = vsel %vm6466, %v6422, 0
        %v6483 = vsel %vm6466, %v6423, 0
        %v6486 = vsel %vm6466, %v6424, 0
        %v6489 = vsel %vm6466, %v6425, 0
        %v6492 = vsel %vm6466, %v6426, 0
        %v6495 = vsel %vm6466, %v6427, 0
        %v6498 = vsel %vm6466, %v6428, 0
        %v6501 = vsel %vm6466, %v6429, 0
        %v6504 = vsel %vm6466, %v6430, 0
        %v6507 = vsel %vm6466, %v6431, 0
        %v6510 = vsel %vm6466, %v6432, 0
        %v6513 = vsel %vm6466, %v6433, 0
        %v6516 = vsel %vm6466, %v6434, 0
        %v6519 = vsel %vm6466, %v6435, 0
        %v6522 = vsel %vm6466, %v6436, 0
        %v6525 = vsel %vm6466, %v6437, 0
        %v6528 = vsel %vm6466, %v6438, 0
        %v6531 = vsel %vm6466, %v6439, 0
        %v6534 = vsel %vm6466, %v6440, 0
        %v6537 = vsel %vm6466, %v6441, 0
        %v6540 = vsel %vm6466, %v6442, 0
        %v6543 = vsel %vm6466, %v6443, 0
        %v6546 = vsel %vm6466, %v6444, 0
        %v6549 = vsel %vm6466, %v6445, 0
        %v6552 = vsel %vm6466, %v6446, 0
        %v6555 = vsel %vm6466, %v6447, 0
        %v6558 = vsel %vm6466, %v6448, 0
        %v6561 = vsel %vm6466, %v6449, 0
        %6563 = vmatprep.subr.mxu0 0.0
        %6564 = vmatpush1.msra.mxu0 0.0
        %6565 = vmatprep.subr.mxu0 0.0
        %6566 = vmatpush1.msra.mxu0 0.0
        %6567 = vmatprep.subr.mxu0 0.0
        %6568 = vmatpush1.msra.mxu0 0.0
        %6569 = vmatprep.subr.mxu0 0.0
        %6570 = vmatpush1.msra.mxu0 0.0
        %6571 = vmatprep.subr.mxu0 0.0
        %6572 = vmatpush1.msra.mxu0 0.0
        %6573 = vmatprep.subr.mxu0 0.0
        %6574 = vmatpush1.msra.mxu0 0.0
        %6575 = vmatprep.subr.mxu0 0.0
        %6576 = vmatpush1.msra.mxu0 0.0
        %6577 = vmatprep.subr.mxu0 0.0
        %6578 = vmatpush1.msra.mxu0 %v6458
        %6579 = vmatprep.subr.mxu0 0.0
        %6580 = vmatpush1.msra.mxu0 %v6457
        %6581 = vmatprep.subr.mxu0 0.0
        %6582 = vmatpush1.msra.mxu0 %v6456
        %6583 = vmatprep.subr.mxu0 0.0
        %6584 = vmatpush1.msra.mxu0 %v6455
        %6585 = vmatprep.subr.mxu0 0.0
        %6586 = vmatpush1.msra.mxu0 %v6454
        %6587 = vmatprep.subr.mxu0 0.0
        %6588 = vmatpush1.msra.mxu0 %v6453
        %6589 = vmatprep.subr.mxu0 0.0
        %6590 = vmatpush1.msra.mxu0 %v6452
        %6591 = vmatprep.subr.mxu0 0.0
        %6592 = vmatpush1.msra.mxu0 %v6451
        %6593 = vmatprep.subr.mxu0 0.0
        %6594 = vmatpush1.msra.mxu0 %v6450
        %6595 = vmatprep.subr.mxu0 0.0
        %6596 = vmatpush2.msra.mxu0 0.0
        %6597 = vmatprep.subr.mxu0 0.0
        %6598 = vmatpush2.msra.mxu0 0.0
        %6599 = vmatprep.subr.mxu0 0.0
        %6600 = vmatpush2.msra.mxu0 0.0
        %6601 = vmatprep.subr.mxu0 0.0
        %6602 = vmatpush2.msra.mxu0 0.0
        %6603 = vmatprep.subr.mxu0 0.0
        %6604 = vmatpush2.msra.mxu0 0.0
        %6605 = vmatprep.subr.mxu0 0.0
        %6606 = vmatpush2.msra.mxu0 0.0
        %6607 = vmatprep.subr.mxu0 0.0
        %6608 = vmatpush2.msra.mxu0 0.0
        %6609 = vmatprep.subr.mxu0 0.0
        %6610 = vmatpush2.msra.mxu0 0.0
        %6611 = vmatprep.subr.mxu0 0.0
        %6612 = vmatpush2.msra.mxu0 0.0
        %6613 = vmatprep.subr.mxu0 0.0
        %6614 = vmatpush2.msra.mxu0 0.0
        %6615 = vmatprep.subr.mxu0 0.0
        %6616 = vmatpush2.msra.mxu0 0.0
        %6617 = vmatprep.subr.mxu0 0.0
        %6618 = vmatpush2.msra.mxu0 0.0
        %6619 = vmatprep.subr.mxu0 0.0
        %6620 = vmatpush2.msra.mxu0 0.0
        %6621 = vmatprep.subr.mxu0 0.0
        %6622 = vmatpush2.msra.mxu0 0.0
        %6623 = vmatprep.subr.mxu0 0.0
        %6624 = vmatpush2.msra.mxu0 0.0
        %6625 = vmatprep.subr.mxu0 0.0
        %6626 = vmatpush2.msra.mxu0 0.0
        %6627 = vmatprep.mubr.f32.mxu0 0.0
        %6628 = vmatmul.mubr.f32.gmra.mxu0 %v6468
        %v6629 = vpop.f32.mrf.mxu0
        %v6630 = vadd.f32 %v6464, %v6629
        %v6631 = vpop.f32.mrf.mxu0
        %6632 = vmatprep.mubr.f32.mxu0 0.0
        %6633 = vmatmul.mubr.f32.gmra.mxu0 %v6471
        %v6634 = vpop.f32.mrf.mxu0
        %v6635 = vadd.f32 %v6464, %v6634
        %v6636 = vpop.f32.mrf.mxu0
        %6637 = vmatprep.mubr.f32.mxu0 0.0
        %6638 = vmatmul.mubr.f32.gmra.mxu0 %v6474
        %v6639 = vpop.f32.mrf.mxu0
        %v6640 = vadd.f32 %v6464, %v6639
        %v6641 = vpop.f32.mrf.mxu0
        %6642 = vmatprep.mubr.f32.mxu0 0.0
        %6643 = vmatmul.mubr.f32.gmra.mxu0 %v6477
        %v6644 = vpop.f32.mrf.mxu0
        %v6645 = vadd.f32 %v6464, %v6644
        %v6646 = vpop.f32.mrf.mxu0
        %6647 = vmatprep.mubr.f32.mxu0 0.0
        %6648 = vmatmul.mubr.f32.gmra.mxu0 %v6480
        %v6649 = vpop.f32.mrf.mxu0
        %v6650 = vadd.f32 %v6464, %v6649
        %v6651 = vpop.f32.mrf.mxu0
        %6652 = vmatprep.mubr.f32.mxu0 0.0
        %6653 = vmatmul.mubr.f32.gmra.mxu0 %v6483
        %v6654 = vpop.f32.mrf.mxu0
        %v6655 = vadd.f32 %v6464, %v6654
        %v6656 = vpop.f32.mrf.mxu0
        %6657 = vmatprep.mubr.f32.mxu0 0.0
        %6658 = vmatmul.mubr.f32.gmra.mxu0 %v6486
        %v6659 = vpop.f32.mrf.mxu0
        %v6660 = vadd.f32 %v6464, %v6659
        %v6661 = vpop.f32.mrf.mxu0
        %6662 = vmatprep.mubr.f32.mxu0 0.0
        %6663 = vmatmul.mubr.f32.gmra.mxu0 %v6489
        %v6664 = vpop.f32.mrf.mxu0
        %v6665 = vadd.f32 %v6464, %v6664
        %v6666 = vpop.f32.mrf.mxu0
        %6667 = vmatprep.mubr.f32.mxu0 0.0
        %6668 = vmatmul.mubr.f32.gmra.mxu0 %v6492
        %v6669 = vpop.f32.mrf.mxu0
        %v6670 = vadd.f32 %v6464, %v6669
        %v6671 = vpop.f32.mrf.mxu0
        %6672 = vmatprep.mubr.f32.mxu0 0.0
        %6673 = vmatmul.mubr.f32.gmra.mxu0 %v6495
        %v6674 = vpop.f32.mrf.mxu0
        %v6675 = vadd.f32 %v6464, %v6674
        %v6676 = vpop.f32.mrf.mxu0
        %6677 = vmatprep.mubr.f32.mxu0 0.0
        %6678 = vmatmul.mubr.f32.gmra.mxu0 %v6498
        %v6679 = vpop.f32.mrf.mxu0
        %v6680 = vadd.f32 %v6464, %v6679
        %v6681 = vpop.f32.mrf.mxu0
        %6682 = vmatprep.mubr.f32.mxu0 0.0
        %6683 = vmatmul.mubr.f32.gmra.mxu0 %v6501
        %v6684 = vpop.f32.mrf.mxu0
        %v6685 = vadd.f32 %v6464, %v6684
        %v6686 = vpop.f32.mrf.mxu0
        %6687 = vmatprep.mubr.f32.mxu0 0.0
        %6688 = vmatmul.mubr.f32.gmra.mxu0 %v6504
        %v6689 = vpop.f32.mrf.mxu0
        %v6690 = vadd.f32 %v6464, %v6689
        %v6691 = vpop.f32.mrf.mxu0
        %6692 = vmatprep.mubr.f32.mxu0 0.0
        %6693 = vmatmul.mubr.f32.gmra.mxu0 %v6507
        %v6694 = vpop.f32.mrf.mxu0
        %v6695 = vadd.f32 %v6464, %v6694
        %v6696 = vpop.f32.mrf.mxu0
        %6697 = vmatprep.mubr.f32.mxu0 0.0
        %6698 = vmatmul.mubr.f32.gmra.mxu0 %v6510
        %v6699 = vpop.f32.mrf.mxu0
        %v6700 = vadd.f32 %v6464, %v6699
        %v6701 = vpop.f32.mrf.mxu0
        %6702 = vmatprep.mubr.f32.mxu0 0.0
        %6703 = vmatmul.mubr.f32.gmra.mxu0 %v6513
        %v6704 = vpop.f32.mrf.mxu0
        %v6705 = vadd.f32 %v6464, %v6704
        %v6706 = vpop.f32.mrf.mxu0
        %6707 = vmatprep.mubr.f32.mxu0 0.0
        %6708 = vmatmul.mubr.f32.gmra.mxu0 %v6516
        %v6709 = vpop.f32.mrf.mxu0
        %v6710 = vadd.f32 %v6464, %v6709
        %v6711 = vpop.f32.mrf.mxu0
        %6712 = vmatprep.mubr.f32.mxu0 0.0
        %6713 = vmatmul.mubr.f32.gmra.mxu0 %v6519
        %v6714 = vpop.f32.mrf.mxu0
        %v6715 = vadd.f32 %v6464, %v6714
        %v6716 = vpop.f32.mrf.mxu0
        %6717 = vmatprep.mubr.f32.mxu0 0.0
        %6718 = vmatmul.mubr.f32.gmra.mxu0 %v6522
        %v6719 = vpop.f32.mrf.mxu0
        %v6720 = vadd.f32 %v6464, %v6719
        %v6721 = vpop.f32.mrf.mxu0
        %6722 = vmatprep.mubr.f32.mxu0 0.0
        %6723 = vmatmul.mubr.f32.gmra.mxu0 %v6525
        %v6724 = vpop.f32.mrf.mxu0
        %v6725 = vadd.f32 %v6464, %v6724
        %v6726 = vpop.f32.mrf.mxu0
        %6727 = vmatprep.mubr.f32.mxu0 0.0
        %6728 = vmatmul.mubr.f32.gmra.mxu0 %v6528
        %v6729 = vpop.f32.mrf.mxu0
        %v6730 = vadd.f32 %v6464, %v6729
        %v6731 = vpop.f32.mrf.mxu0
        %6732 = vmatprep.mubr.f32.mxu0 0.0
        %6733 = vmatmul.mubr.f32.gmra.mxu0 %v6531
        %v6734 = vpop.f32.mrf.mxu0
        %v6735 = vadd.f32 %v6464, %v6734
        %v6736 = vpop.f32.mrf.mxu0
        %6737 = vmatprep.mubr.f32.mxu0 0.0
        %6738 = vmatmul.mubr.f32.gmra.mxu0 %v6534
        %v6739 = vpop.f32.mrf.mxu0
        %v6740 = vadd.f32 %v6464, %v6739
        %v6741 = vpop.f32.mrf.mxu0
        %6742 = vmatprep.mubr.f32.mxu0 0.0
        %6743 = vmatmul.mubr.f32.gmra.mxu0 %v6537
        %v6744 = vpop.f32.mrf.mxu0
        %v6745 = vadd.f32 %v6464, %v6744
        %v6746 = vpop.f32.mrf.mxu0
        %6747 = vmatprep.mubr.f32.mxu0 0.0
        %6748 = vmatmul.mubr.f32.gmra.mxu0 %v6540
        %v6749 = vpop.f32.mrf.mxu0
        %v6750 = vadd.f32 %v6464, %v6749
        %v6751 = vpop.f32.mrf.mxu0
        %6752 = vmatprep.mubr.f32.mxu0 0.0
        %6753 = vmatmul.mubr.f32.gmra.mxu0 %v6543
        %v6754 = vpop.f32.mrf.mxu0
        %v6755 = vadd.f32 %v6464, %v6754
        %v6756 = vpop.f32.mrf.mxu0
        %6757 = vmatprep.mubr.f32.mxu0 0.0
        %6758 = vmatmul.mubr.f32.gmra.mxu0 %v6546
        %v6759 = vpop.f32.mrf.mxu0
        %v6760 = vadd.f32 %v6464, %v6759
        %v6761 = vpop.f32.mrf.mxu0
        %6762 = vmatprep.mubr.f32.mxu0 0.0
        %6763 = vmatmul.mubr.f32.gmra.mxu0 %v6549
        %v6764 = vpop.f32.mrf.mxu0
        %v6765 = vadd.f32 %v6464, %v6764
        %v6766 = vpop.f32.mrf.mxu0
        %6767 = vmatprep.mubr.f32.mxu0 0.0
        %6768 = vmatmul.mubr.f32.gmra.mxu0 %v6552
        %v6769 = vpop.f32.mrf.mxu0
        %v6770 = vadd.f32 %v6464, %v6769
        %v6771 = vpop.f32.mrf.mxu0
        %6772 = vmatprep.mubr.f32.mxu0 0.0
        %6773 = vmatmul.mubr.f32.gmra.mxu0 %v6555
        %v6774 = vpop.f32.mrf.mxu0
        %v6775 = vadd.f32 %v6464, %v6774
        %v6776 = vpop.f32.mrf.mxu0
        %6777 = vmatprep.mubr.f32.mxu0 0.0
        %6778 = vmatmul.mubr.f32.gmra.mxu0 %v6558
        %v6779 = vpop.f32.mrf.mxu0
        %v6780 = vadd.f32 %v6464, %v6779
        %v6781 = vpop.f32.mrf.mxu0
        %6782 = vmatprep.mubr.f32.mxu0 0.0
        %6783 = vmatmul.mubr.f32.gmra.mxu0 %v6561
        %v6784 = vpop.f32.mrf.mxu0
        %v6785 = vadd.f32 %v6464, %v6784
        %v6786 = vpop.f32.mrf.mxu0
        %6787 = vdwg.mxu0
        %v6788 = vmax.f32 %v6630, 0.0
        %v6789 = vmax.f32 %v6635, 0.0
        %v6790 = vmax.f32 %v6640, 0.0
        %v6791 = vmax.f32 %v6645, 0.0
        %v6792 = vmax.f32 %v6650, 0.0
        %v6793 = vmax.f32 %v6655, 0.0
        %v6794 = vmax.f32 %v6660, 0.0
        %v6795 = vmax.f32 %v6665, 0.0
        %v6796 = vmax.f32 %v6670, 0.0
        %v6797 = vmax.f32 %v6675, 0.0
        %v6798 = vmax.f32 %v6680, 0.0
        %v6799 = vmax.f32 %v6685, 0.0
        %v6800 = vmax.f32 %v6690, 0.0
        %v6801 = vmax.f32 %v6695, 0.0
        %v6802 = vmax.f32 %v6700, 0.0
        %v6803 = vmax.f32 %v6705, 0.0
        %v6804 = vmax.f32 %v6710, 0.0
        %v6805 = vmax.f32 %v6715, 0.0
        %v6806 = vmax.f32 %v6720, 0.0
        %v6807 = vmax.f32 %v6725, 0.0
        %v6808 = vmax.f32 %v6730, 0.0
        %v6809 = vmax.f32 %v6735, 0.0
        %v6810 = vmax.f32 %v6740, 0.0
        %v6811 = vmax.f32 %v6745, 0.0
        %v6812 = vmax.f32 %v6750, 0.0
        %v6813 = vmax.f32 %v6755, 0.0
        %v6814 = vmax.f32 %v6760, 0.0
        %v6815 = vmax.f32 %v6765, 0.0
        %v6816 = vmax.f32 %v6770, 0.0
        %v6817 = vmax.f32 %v6775, 0.0
        %v6818 = vmax.f32 %v6780, 0.0
        %v6819 = vmax.f32 %v6785, 0.0
        %v6820 = vld [vmem:[%s7] sm:$0x1]
        %v6822 = vlaneseq
        %v6823 = vshrl.u32 %v6822, 7
        %v6824 = vsub.s32 0, %v6823
        %v6825 = vrot.slane %v6820, %v6824
        %v6827 = vmul.f32 %v6788, %v6825
        %v6828 = vmul.f32 %v6789, %v6825
        %v6829 = vmul.f32 %v6790, %v6825
        %v6830 = vmul.f32 %v6791, %v6825
        %v6831 = vmul.f32 %v6792, %v6825
        %v6832 = vmul.f32 %v6793, %v6825
        %v6833 = vmul.f32 %v6794, %v6825
        %v6834 = vmul.f32 %v6795, %v6825
        %v6835 = vmul.f32 %v6796, %v6825
        %v6836 = vmul.f32 %v6797, %v6825
        %v6837 = vmul.f32 %v6798, %v6825
        %v6838 = vmul.f32 %v6799, %v6825
        %v6839 = vmul.f32 %v6800, %v6825
        %v6840 = vmul.f32 %v6801, %v6825
        %v6841 = vmul.f32 %v6802, %v6825
        %v6842 = vmul.f32 %v6803, %v6825
        %v6843 = vmul.f32 %v6804, %v6825
        %v6844 = vmul.f32 %v6805, %v6825
        %v6845 = vmul.f32 %v6806, %v6825
        %v6846 = vmul.f32 %v6807, %v6825
        %v6847 = vmul.f32 %v6808, %v6825
        %v6848 = vmul.f32 %v6809, %v6825
        %v6849 = vmul.f32 %v6810, %v6825
        %v6850 = vmul.f32 %v6811, %v6825
        %v6851 = vmul.f32 %v6812, %v6825
        %v6852 = vmul.f32 %v6813, %v6825
        %v6853 = vmul.f32 %v6814, %v6825
        %v6854 = vmul.f32 %v6815, %v6825
        %v6855 = vmul.f32 %v6816, %v6825
        %v6856 = vmul.f32 %v6817, %v6825
        %v6857 = vmul.f32 %v6818, %v6825
        %v6858 = vmul.f32 %v6819, %v6825
        %v6859 = vld [vmem:[%s8] sm:$0x1]
        %v6861 = vlaneseq
        %v6862 = vshrl.u32 %v6861, 7
        %v6863 = vsub.s32 0, %v6862
        %v6864 = vrot.slane %v6859, %v6863
        %v6866 = vadd.f32 %v6827, %v6864
        %v6867 = vadd.f32 %v6828, %v6864
        %v6868 = vadd.f32 %v6829, %v6864
        %v6869 = vadd.f32 %v6830, %v6864
        %v6870 = vadd.f32 %v6831, %v6864
        %v6871 = vadd.f32 %v6832, %v6864
        %v6872 = vadd.f32 %v6833, %v6864
        %v6873 = vadd.f32 %v6834, %v6864
        %v6874 = vadd.f32 %v6835, %v6864
        %v6875 = vadd.f32 %v6836, %v6864
        %v6876 = vadd.f32 %v6837, %v6864
        %v6877 = vadd.f32 %v6838, %v6864
        %v6878 = vadd.f32 %v6839, %v6864
        %v6879 = vadd.f32 %v6840, %v6864
        %v6880 = vadd.f32 %v6841, %v6864
        %v6881 = vadd.f32 %v6842, %v6864
        %v6882 = vadd.f32 %v6843, %v6864
        %v6883 = vadd.f32 %v6844, %v6864
        %v6884 = vadd.f32 %v6845, %v6864
        %v6885 = vadd.f32 %v6846, %v6864
        %v6886 = vadd.f32 %v6847, %v6864
        %v6887 = vadd.f32 %v6848, %v6864
        %v6888 = vadd.f32 %v6849, %v6864
        %v6889 = vadd.f32 %v6850, %v6864
        %v6890 = vadd.f32 %v6851, %v6864
        %v6891 = vadd.f32 %v6852, %v6864
        %v6892 = vadd.f32 %v6853, %v6864
        %v6893 = vadd.f32 %v6854, %v6864
        %v6894 = vadd.f32 %v6855, %v6864
        %v6895 = vadd.f32 %v6856, %v6864
        %v6896 = vadd.f32 %v6857, %v6864
        %v6897 = vadd.f32 %v6858, %v6864
        %s6898 = scalar_lea.vmem [#allocation3], 24
        %6899 = vst.msk [vmem:[%s6898 + $0x1] sm:$0xff] %vm505, %v6866
        %6900 = vst.msk [vmem:[%s6898 + $0x9] sm:$0xff] %vm505, %v6867
        %6901 = vst.msk [vmem:[%s6898 + $0x19] sm:$0xff] %vm505, %v6868
        %6902 = vst.msk [vmem:[%s6898 + $0x21] sm:$0xff] %vm505, %v6869
        %6903 = vst.msk [vmem:[%s6898 + $0x31] sm:$0xff] %vm505, %v6870
        %6904 = vst.msk [vmem:[%s6898 + $0x39] sm:$0xff] %vm505, %v6871
        %6905 = vst.msk [vmem:[%s6898 + $0x49] sm:$0xff] %vm505, %v6872
        %6906 = vst.msk [vmem:[%s6898 + $0x51] sm:$0xff] %vm505, %v6873
        %6907 = vst.msk [vmem:[%s6898 + $0x61] sm:$0xff] %vm505, %v6874
        %6908 = vst.msk [vmem:[%s6898 + $0x69] sm:$0xff] %vm505, %v6875
        %6909 = vst.msk [vmem:[%s6898 + $0x79] sm:$0xff] %vm505, %v6876
        %6910 = vst.msk [vmem:[%s6898 + $0x81] sm:$0xff] %vm505, %v6877
        %6911 = vst.msk [vmem:[%s6898 + $0x91] sm:$0xff] %vm505, %v6878
        %6912 = vst.msk [vmem:[%s6898 + $0x99] sm:$0xff] %vm505, %v6879
        %6913 = vst.msk [vmem:[%s6898 + $0xa9] sm:$0xff] %vm505, %v6880
        %6914 = vst.msk [vmem:[%s6898 + $0xb1] sm:$0xff] %vm505, %v6881
        %6915 = vst.msk [vmem:[%s6898 + $0xc1] sm:$0xff] %vm505, %v6882
        %6916 = vst.msk [vmem:[%s6898 + $0xc9] sm:$0xff] %vm505, %v6883
        %6917 = vst.msk [vmem:[%s6898 + $0xd9] sm:$0xff] %vm505, %v6884
        %6918 = vst.msk [vmem:[%s6898 + $0xe1] sm:$0xff] %vm505, %v6885
        %6919 = vst.msk [vmem:[%s6898 + $0xf1] sm:$0xff] %vm505, %v6886
        %6920 = vst.msk [vmem:[%s6898 + $0xf9] sm:$0xff] %vm505, %v6887
        %6921 = vst.msk [vmem:[%s6898 + $0x109] sm:$0xff] %vm505, %v6888
        %6922 = vst.msk [vmem:[%s6898 + $0x111] sm:$0xff] %vm505, %v6889
        %6923 = vst.msk [vmem:[%s6898 + $0x121] sm:$0xff] %vm505, %v6890
        %6924 = vst.msk [vmem:[%s6898 + $0x129] sm:$0xff] %vm505, %v6891
        %6925 = vst.msk [vmem:[%s6898 + $0x139] sm:$0xff] %vm505, %v6892
        %6926 = vst.msk [vmem:[%s6898 + $0x141] sm:$0xff] %vm505, %v6893
        %6927 = vst.msk [vmem:[%s6898 + $0x151] sm:$0xff] %vm505, %v6894
        %6928 = vst.msk [vmem:[%s6898 + $0x159] sm:$0xff] %vm505, %v6895
        %6929 = vst.msk [vmem:[%s6898 + $0x169] sm:$0xff] %vm505, %v6896
        %6930 = vst.msk [vmem:[%s6898 + $0x171] sm:$0xff] %vm505, %v6897
        %v6931 = vld [vmem:[#allocation3] sm:$0xff]
        %v6932 = vld [vmem:[#allocation3 + $0x8] sm:$0xff]
        %v6933 = vld [vmem:[#allocation3 + $0x18] sm:$0xff]
        %v6934 = vld [vmem:[#allocation3 + $0x20] sm:$0xff]
        %v6935 = vld [vmem:[#allocation3 + $0x30] sm:$0xff]
        %v6936 = vld [vmem:[#allocation3 + $0x38] sm:$0xff]
        %v6937 = vld [vmem:[#allocation3 + $0x48] sm:$0xff]
        %v6938 = vld [vmem:[#allocation3 + $0x50] sm:$0xff]
        %v6939 = vld [vmem:[#allocation3 + $0x60] sm:$0xff]
        %v6940 = vld [vmem:[#allocation3 + $0x68] sm:$0xff]
        %v6941 = vld [vmem:[#allocation3 + $0x78] sm:$0xff]
        %v6942 = vld [vmem:[#allocation3 + $0x80] sm:$0xff]
        %v6943 = vld [vmem:[#allocation3 + $0x90] sm:$0xff]
        %v6944 = vld [vmem:[#allocation3 + $0x98] sm:$0xff]
        %v6945 = vld [vmem:[#allocation3 + $0xa8] sm:$0xff]
        %v6946 = vld [vmem:[#allocation3 + $0xb0] sm:$0xff]
        %v6947 = vld [vmem:[#allocation3 + $0xc0] sm:$0xff]
        %v6948 = vld [vmem:[#allocation3 + $0xc8] sm:$0xff]
        %v6949 = vld [vmem:[#allocation3 + $0xd8] sm:$0xff]
        %v6950 = vld [vmem:[#allocation3 + $0xe0] sm:$0xff]
        %v6951 = vld [vmem:[#allocation3 + $0xf0] sm:$0xff]
        %v6952 = vld [vmem:[#allocation3 + $0xf8] sm:$0xff]
        %v6953 = vld [vmem:[#allocation3 + $0x108] sm:$0xff]
        %v6954 = vld [vmem:[#allocation3 + $0x110] sm:$0xff]
        %v6955 = vld [vmem:[#allocation3 + $0x120] sm:$0xff]
        %v6956 = vld [vmem:[#allocation3 + $0x128] sm:$0xff]
        %v6957 = vld [vmem:[#allocation3 + $0x138] sm:$0xff]
        %v6958 = vld [vmem:[#allocation3 + $0x140] sm:$0xff]
        %v6959 = vld [vmem:[#allocation3 + $0x150] sm:$0xff]
        %v6960 = vld [vmem:[#allocation3 + $0x158] sm:$0xff]
        %v6961 = vld [vmem:[#allocation3 + $0x168] sm:$0xff]
        %v6962 = vld [vmem:[#allocation3 + $0x170] sm:$0xff]
        %v6963 = vld [vmem:[#allocation3 + $0x1] sm:$0xff]
        %v6964 = vld [vmem:[#allocation3 + $0x9] sm:$0xff]
        %v6965 = vld [vmem:[#allocation3 + $0x19] sm:$0xff]
        %v6966 = vld [vmem:[#allocation3 + $0x21] sm:$0xff]
        %v6967 = vld [vmem:[#allocation3 + $0x31] sm:$0xff]
        %v6968 = vld [vmem:[#allocation3 + $0x39] sm:$0xff]
        %v6969 = vld [vmem:[#allocation3 + $0x49] sm:$0xff]
        %v6970 = vld [vmem:[#allocation3 + $0x51] sm:$0xff]
        %v6971 = vld [vmem:[#allocation3 + $0x61] sm:$0xff]
        %v6972 = vld [vmem:[#allocation3 + $0x69] sm:$0xff]
        %v6973 = vld [vmem:[#allocation3 + $0x79] sm:$0xff]
        %v6974 = vld [vmem:[#allocation3 + $0x81] sm:$0xff]
        %v6975 = vld [vmem:[#allocation3 + $0x91] sm:$0xff]
        %v6976 = vld [vmem:[#allocation3 + $0x99] sm:$0xff]
        %v6977 = vld [vmem:[#allocation3 + $0xa9] sm:$0xff]
        %v6978 = vld [vmem:[#allocation3 + $0xb1] sm:$0xff]
        %v6979 = vld [vmem:[#allocation3 + $0xc1] sm:$0xff]
        %v6980 = vld [vmem:[#allocation3 + $0xc9] sm:$0xff]
        %v6981 = vld [vmem:[#allocation3 + $0xd9] sm:$0xff]
        %v6982 = vld [vmem:[#allocation3 + $0xe1] sm:$0xff]
        %v6983 = vld [vmem:[#allocation3 + $0xf1] sm:$0xff]
        %v6984 = vld [vmem:[#allocation3 + $0xf9] sm:$0xff]
        %v6985 = vld [vmem:[#allocation3 + $0x109] sm:$0xff]
        %v6986 = vld [vmem:[#allocation3 + $0x111] sm:$0xff]
        %v6987 = vld [vmem:[#allocation3 + $0x121] sm:$0xff]
        %v6988 = vld [vmem:[#allocation3 + $0x129] sm:$0xff]
        %v6989 = vld [vmem:[#allocation3 + $0x139] sm:$0xff]
        %v6990 = vld [vmem:[#allocation3 + $0x141] sm:$0xff]
        %v6991 = vld [vmem:[#allocation3 + $0x151] sm:$0xff]
        %v6992 = vld [vmem:[#allocation3 + $0x159] sm:$0xff]
        %v6993 = vld [vmem:[#allocation3 + $0x169] sm:$0xff]
        %v6994 = vld [vmem:[#allocation3 + $0x171] sm:$0xff]
        %v6995 = vld [vmem:[#allocation3 + $0x2] sm:$0xff]
        %v6996 = vld [vmem:[#allocation3 + $0xa] sm:$0xff]
        %v6997 = vld [vmem:[#allocation3 + $0x1a] sm:$0xff]
        %v6998 = vld [vmem:[#allocation3 + $0x22] sm:$0xff]
        %v6999 = vld [vmem:[#allocation3 + $0x32] sm:$0xff]
        %v7000 = vld [vmem:[#allocation3 + $0x3a] sm:$0xff]
        %v7001 = vld [vmem:[#allocation3 + $0x4a] sm:$0xff]
        %v7002 = vld [vmem:[#allocation3 + $0x52] sm:$0xff]
        %v7003 = vld [vmem:[#allocation3 + $0x62] sm:$0xff]
        %v7004 = vld [vmem:[#allocation3 + $0x6a] sm:$0xff]
        %v7005 = vld [vmem:[#allocation3 + $0x7a] sm:$0xff]
        %v7006 = vld [vmem:[#allocation3 + $0x82] sm:$0xff]
        %v7007 = vld [vmem:[#allocation3 + $0x92] sm:$0xff]
        %v7008 = vld [vmem:[#allocation3 + $0x9a] sm:$0xff]
        %v7009 = vld [vmem:[#allocation3 + $0xaa] sm:$0xff]
        %v7010 = vld [vmem:[#allocation3 + $0xb2] sm:$0xff]
        %v7011 = vld [vmem:[#allocation3 + $0xc2] sm:$0xff]
        %v7012 = vld [vmem:[#allocation3 + $0xca] sm:$0xff]
        %v7013 = vld [vmem:[#allocation3 + $0xda] sm:$0xff]
        %v7014 = vld [vmem:[#allocation3 + $0xe2] sm:$0xff]
        %v7015 = vld [vmem:[#allocation3 + $0xf2] sm:$0xff]
        %v7016 = vld [vmem:[#allocation3 + $0xfa] sm:$0xff]
        %v7017 = vld [vmem:[#allocation3 + $0x10a] sm:$0xff]
        %v7018 = vld [vmem:[#allocation3 + $0x112] sm:$0xff]
        %v7019 = vld [vmem:[#allocation3 + $0x122] sm:$0xff]
        %v7020 = vld [vmem:[#allocation3 + $0x12a] sm:$0xff]
        %v7021 = vld [vmem:[#allocation3 + $0x13a] sm:$0xff]
        %v7022 = vld [vmem:[#allocation3 + $0x142] sm:$0xff]
        %v7023 = vld [vmem:[#allocation3 + $0x152] sm:$0xff]
        %v7024 = vld [vmem:[#allocation3 + $0x15a] sm:$0xff]
        %v7025 = vld [vmem:[#allocation3 + $0x16a] sm:$0xff]
        %v7026 = vld [vmem:[#allocation3 + $0x172] sm:$0xff]
        %v7027 = vld [vmem:[%s6898] sm:$0xff]
        %v7028 = vld [vmem:[%s6898 + $0x8] sm:$0xff]
        %v7029 = vld [vmem:[%s6898 + $0x18] sm:$0xff]
        %v7030 = vld [vmem:[%s6898 + $0x20] sm:$0xff]
        %v7031 = vld [vmem:[%s6898 + $0x30] sm:$0xff]
        %v7032 = vld [vmem:[%s6898 + $0x38] sm:$0xff]
        %v7033 = vld [vmem:[%s6898 + $0x48] sm:$0xff]
        %v7034 = vld [vmem:[%s6898 + $0x50] sm:$0xff]
        %v7035 = vld [vmem:[%s6898 + $0x60] sm:$0xff]
        %v7036 = vld [vmem:[%s6898 + $0x68] sm:$0xff]
        %v7037 = vld [vmem:[%s6898 + $0x78] sm:$0xff]
        %v7038 = vld [vmem:[%s6898 + $0x80] sm:$0xff]
        %v7039 = vld [vmem:[%s6898 + $0x90] sm:$0xff]
        %v7040 = vld [vmem:[%s6898 + $0x98] sm:$0xff]
        %v7041 = vld [vmem:[%s6898 + $0xa8] sm:$0xff]
        %v7042 = vld [vmem:[%s6898 + $0xb0] sm:$0xff]
        %v7043 = vld [vmem:[%s6898 + $0xc0] sm:$0xff]
        %v7044 = vld [vmem:[%s6898 + $0xc8] sm:$0xff]
        %v7045 = vld [vmem:[%s6898 + $0xd8] sm:$0xff]
        %v7046 = vld [vmem:[%s6898 + $0xe0] sm:$0xff]
        %v7047 = vld [vmem:[%s6898 + $0xf0] sm:$0xff]
        %v7048 = vld [vmem:[%s6898 + $0xf8] sm:$0xff]
        %v7049 = vld [vmem:[%s6898 + $0x108] sm:$0xff]
        %v7050 = vld [vmem:[%s6898 + $0x110] sm:$0xff]
        %v7051 = vld [vmem:[%s6898 + $0x120] sm:$0xff]
        %v7052 = vld [vmem:[%s6898 + $0x128] sm:$0xff]
        %v7053 = vld [vmem:[%s6898 + $0x138] sm:$0xff]
        %v7054 = vld [vmem:[%s6898 + $0x140] sm:$0xff]
        %v7055 = vld [vmem:[%s6898 + $0x150] sm:$0xff]
        %v7056 = vld [vmem:[%s6898 + $0x158] sm:$0xff]
        %v7057 = vld [vmem:[%s6898 + $0x168] sm:$0xff]
        %v7058 = vld [vmem:[%s6898 + $0x170] sm:$0xff]
        %v7059 = vld [vmem:[%s6898 + $0x1] sm:$0xff]
        %v7060 = vld [vmem:[%s6898 + $0x9] sm:$0xff]
        %v7061 = vld [vmem:[%s6898 + $0x19] sm:$0xff]
        %v7062 = vld [vmem:[%s6898 + $0x21] sm:$0xff]
        %v7063 = vld [vmem:[%s6898 + $0x31] sm:$0xff]
        %v7064 = vld [vmem:[%s6898 + $0x39] sm:$0xff]
        %v7065 = vld [vmem:[%s6898 + $0x49] sm:$0xff]
        %v7066 = vld [vmem:[%s6898 + $0x51] sm:$0xff]
        %v7067 = vld [vmem:[%s6898 + $0x61] sm:$0xff]
        %v7068 = vld [vmem:[%s6898 + $0x69] sm:$0xff]
        %v7069 = vld [vmem:[%s6898 + $0x79] sm:$0xff]
        %v7070 = vld [vmem:[%s6898 + $0x81] sm:$0xff]
        %v7071 = vld [vmem:[%s6898 + $0x91] sm:$0xff]
        %v7072 = vld [vmem:[%s6898 + $0x99] sm:$0xff]
        %v7073 = vld [vmem:[%s6898 + $0xa9] sm:$0xff]
        %v7074 = vld [vmem:[%s6898 + $0xb1] sm:$0xff]
        %v7075 = vld [vmem:[%s6898 + $0xc1] sm:$0xff]
        %v7076 = vld [vmem:[%s6898 + $0xc9] sm:$0xff]
        %v7077 = vld [vmem:[%s6898 + $0xd9] sm:$0xff]
        %v7078 = vld [vmem:[%s6898 + $0xe1] sm:$0xff]
        %v7079 = vld [vmem:[%s6898 + $0xf1] sm:$0xff]
        %v7080 = vld [vmem:[%s6898 + $0xf9] sm:$0xff]
        %v7081 = vld [vmem:[%s6898 + $0x109] sm:$0xff]
        %v7082 = vld [vmem:[%s6898 + $0x111] sm:$0xff]
        %v7083 = vld [vmem:[%s6898 + $0x121] sm:$0xff]
        %v7084 = vld [vmem:[%s6898 + $0x129] sm:$0xff]
        %v7085 = vld [vmem:[%s6898 + $0x139] sm:$0xff]
        %v7086 = vld [vmem:[%s6898 + $0x141] sm:$0xff]
        %v7087 = vld [vmem:[%s6898 + $0x151] sm:$0xff]
        %v7088 = vld [vmem:[%s6898 + $0x159] sm:$0xff]
        %v7089 = vld [vmem:[%s6898 + $0x169] sm:$0xff]
        %v7090 = vld [vmem:[%s6898 + $0x171] sm:$0xff]
        %v7091 = vld [vmem:[%s6898 + $0x2] sm:$0xff]
        %v7092 = vld [vmem:[%s6898 + $0xa] sm:$0xff]
        %v7093 = vld [vmem:[%s6898 + $0x1a] sm:$0xff]
        %v7094 = vld [vmem:[%s6898 + $0x22] sm:$0xff]
        %v7095 = vld [vmem:[%s6898 + $0x32] sm:$0xff]
        %v7096 = vld [vmem:[%s6898 + $0x3a] sm:$0xff]
        %v7097 = vld [vmem:[%s6898 + $0x4a] sm:$0xff]
        %v7098 = vld [vmem:[%s6898 + $0x52] sm:$0xff]
        %v7099 = vld [vmem:[%s6898 + $0x62] sm:$0xff]
        %v7100 = vld [vmem:[%s6898 + $0x6a] sm:$0xff]
        %v7101 = vld [vmem:[%s6898 + $0x7a] sm:$0xff]
        %v7102 = vld [vmem:[%s6898 + $0x82] sm:$0xff]
        %v7103 = vld [vmem:[%s6898 + $0x92] sm:$0xff]
        %v7104 = vld [vmem:[%s6898 + $0x9a] sm:$0xff]
        %v7105 = vld [vmem:[%s6898 + $0xaa] sm:$0xff]
        %v7106 = vld [vmem:[%s6898 + $0xb2] sm:$0xff]
        %v7107 = vld [vmem:[%s6898 + $0xc2] sm:$0xff]
        %v7108 = vld [vmem:[%s6898 + $0xca] sm:$0xff]
        %v7109 = vld [vmem:[%s6898 + $0xda] sm:$0xff]
        %v7110 = vld [vmem:[%s6898 + $0xe2] sm:$0xff]
        %v7111 = vld [vmem:[%s6898 + $0xf2] sm:$0xff]
        %v7112 = vld [vmem:[%s6898 + $0xfa] sm:$0xff]
        %v7113 = vld [vmem:[%s6898 + $0x10a] sm:$0xff]
        %v7114 = vld [vmem:[%s6898 + $0x112] sm:$0xff]
        %v7115 = vld [vmem:[%s6898 + $0x122] sm:$0xff]
        %v7116 = vld [vmem:[%s6898 + $0x12a] sm:$0xff]
        %v7117 = vld [vmem:[%s6898 + $0x13a] sm:$0xff]
        %v7118 = vld [vmem:[%s6898 + $0x142] sm:$0xff]
        %v7119 = vld [vmem:[%s6898 + $0x152] sm:$0xff]
        %v7120 = vld [vmem:[%s6898 + $0x15a] sm:$0xff]
        %v7121 = vld [vmem:[%s6898 + $0x16a] sm:$0xff]
        %v7122 = vld [vmem:[%s6898 + $0x172] sm:$0xff]
        %s7123 = scalar_lea.vmem [#allocation3], 48
        %v7124 = vld [vmem:[%s7123] sm:$0xff]
        %v7125 = vld [vmem:[%s7123 + $0x8] sm:$0xff]
        %v7126 = vld [vmem:[%s7123 + $0x18] sm:$0xff]
        %v7127 = vld [vmem:[%s7123 + $0x20] sm:$0xff]
        %v7128 = vld [vmem:[%s7123 + $0x30] sm:$0xff]
        %v7129 = vld [vmem:[%s7123 + $0x38] sm:$0xff]
        %v7130 = vld [vmem:[%s7123 + $0x48] sm:$0xff]
        %v7131 = vld [vmem:[%s7123 + $0x50] sm:$0xff]
        %v7132 = vld [vmem:[%s7123 + $0x60] sm:$0xff]
        %v7133 = vld [vmem:[%s7123 + $0x68] sm:$0xff]
        %v7134 = vld [vmem:[%s7123 + $0x78] sm:$0xff]
        %v7135 = vld [vmem:[%s7123 + $0x80] sm:$0xff]
        %v7136 = vld [vmem:[%s7123 + $0x90] sm:$0xff]
        %v7137 = vld [vmem:[%s7123 + $0x98] sm:$0xff]
        %v7138 = vld [vmem:[%s7123 + $0xa8] sm:$0xff]
        %v7139 = vld [vmem:[%s7123 + $0xb0] sm:$0xff]
        %v7140 = vld [vmem:[%s7123 + $0xc0] sm:$0xff]
        %v7141 = vld [vmem:[%s7123 + $0xc8] sm:$0xff]
        %v7142 = vld [vmem:[%s7123 + $0xd8] sm:$0xff]
        %v7143 = vld [vmem:[%s7123 + $0xe0] sm:$0xff]
        %v7144 = vld [vmem:[%s7123 + $0xf0] sm:$0xff]
        %v7145 = vld [vmem:[%s7123 + $0xf8] sm:$0xff]
        %v7146 = vld [vmem:[%s7123 + $0x108] sm:$0xff]
        %v7147 = vld [vmem:[%s7123 + $0x110] sm:$0xff]
        %v7148 = vld [vmem:[%s7123 + $0x120] sm:$0xff]
        %v7149 = vld [vmem:[%s7123 + $0x128] sm:$0xff]
        %v7150 = vld [vmem:[%s7123 + $0x138] sm:$0xff]
        %v7151 = vld [vmem:[%s7123 + $0x140] sm:$0xff]
        %v7152 = vld [vmem:[%s7123 + $0x150] sm:$0xff]
        %v7153 = vld [vmem:[%s7123 + $0x158] sm:$0xff]
        %v7154 = vld [vmem:[%s7123 + $0x168] sm:$0xff]
        %v7155 = vld [vmem:[%s7123 + $0x170] sm:$0xff]
        %v7156 = vld [vmem:[%s7123 + $0x1] sm:$0xff]
        %v7157 = vld [vmem:[%s7123 + $0x9] sm:$0xff]
        %v7158 = vld [vmem:[%s7123 + $0x19] sm:$0xff]
        %v7159 = vld [vmem:[%s7123 + $0x21] sm:$0xff]
        %v7160 = vld [vmem:[%s7123 + $0x31] sm:$0xff]
        %v7161 = vld [vmem:[%s7123 + $0x39] sm:$0xff]
        %v7162 = vld [vmem:[%s7123 + $0x49] sm:$0xff]
        %v7163 = vld [vmem:[%s7123 + $0x51] sm:$0xff]
        %v7164 = vld [vmem:[%s7123 + $0x61] sm:$0xff]
        %v7165 = vld [vmem:[%s7123 + $0x69] sm:$0xff]
        %v7166 = vld [vmem:[%s7123 + $0x79] sm:$0xff]
        %v7167 = vld [vmem:[%s7123 + $0x81] sm:$0xff]
        %v7168 = vld [vmem:[%s7123 + $0x91] sm:$0xff]
        %v7169 = vld [vmem:[%s7123 + $0x99] sm:$0xff]
        %v7170 = vld [vmem:[%s7123 + $0xa9] sm:$0xff]
        %v7171 = vld [vmem:[%s7123 + $0xb1] sm:$0xff]
        %v7172 = vld [vmem:[%s7123 + $0xc1] sm:$0xff]
        %v7173 = vld [vmem:[%s7123 + $0xc9] sm:$0xff]
        %v7174 = vld [vmem:[%s7123 + $0xd9] sm:$0xff]
        %v7175 = vld [vmem:[%s7123 + $0xe1] sm:$0xff]
        %v7176 = vld [vmem:[%s7123 + $0xf1] sm:$0xff]
        %v7177 = vld [vmem:[%s7123 + $0xf9] sm:$0xff]
        %v7178 = vld [vmem:[%s7123 + $0x109] sm:$0xff]
        %v7179 = vld [vmem:[%s7123 + $0x111] sm:$0xff]
        %v7180 = vld [vmem:[%s7123 + $0x121] sm:$0xff]
        %v7181 = vld [vmem:[%s7123 + $0x129] sm:$0xff]
        %v7182 = vld [vmem:[%s7123 + $0x139] sm:$0xff]
        %v7183 = vld [vmem:[%s7123 + $0x141] sm:$0xff]
        %v7184 = vld [vmem:[%s7123 + $0x151] sm:$0xff]
        %v7185 = vld [vmem:[%s7123 + $0x159] sm:$0xff]
        %v7186 = vld [vmem:[%s7123 + $0x169] sm:$0xff]
        %v7187 = vld [vmem:[%s7123 + $0x171] sm:$0xff]
        %v7188 = vld [vmem:[%s7123 + $0x2] sm:$0xff]
        %v7189 = vld [vmem:[%s7123 + $0xa] sm:$0xff]
        %v7190 = vld [vmem:[%s7123 + $0x1a] sm:$0xff]
        %v7191 = vld [vmem:[%s7123 + $0x22] sm:$0xff]
        %v7192 = vld [vmem:[%s7123 + $0x32] sm:$0xff]
        %v7193 = vld [vmem:[%s7123 + $0x3a] sm:$0xff]
        %v7194 = vld [vmem:[%s7123 + $0x4a] sm:$0xff]
        %v7195 = vld [vmem:[%s7123 + $0x52] sm:$0xff]
        %v7196 = vld [vmem:[%s7123 + $0x62] sm:$0xff]
        %v7197 = vld [vmem:[%s7123 + $0x6a] sm:$0xff]
        %v7198 = vld [vmem:[%s7123 + $0x7a] sm:$0xff]
        %v7199 = vld [vmem:[%s7123 + $0x82] sm:$0xff]
        %v7200 = vld [vmem:[%s7123 + $0x92] sm:$0xff]
        %v7201 = vld [vmem:[%s7123 + $0x9a] sm:$0xff]
        %v7202 = vld [vmem:[%s7123 + $0xaa] sm:$0xff]
        %v7203 = vld [vmem:[%s7123 + $0xb2] sm:$0xff]
        %v7204 = vld [vmem:[%s7123 + $0xc2] sm:$0xff]
        %v7205 = vld [vmem:[%s7123 + $0xca] sm:$0xff]
        %v7206 = vld [vmem:[%s7123 + $0xda] sm:$0xff]
        %v7207 = vld [vmem:[%s7123 + $0xe2] sm:$0xff]
        %v7208 = vld [vmem:[%s7123 + $0xf2] sm:$0xff]
        %v7209 = vld [vmem:[%s7123 + $0xfa] sm:$0xff]
        %v7210 = vld [vmem:[%s7123 + $0x10a] sm:$0xff]
        %v7211 = vld [vmem:[%s7123 + $0x112] sm:$0xff]
        %v7212 = vld [vmem:[%s7123 + $0x122] sm:$0xff]
        %v7213 = vld [vmem:[%s7123 + $0x12a] sm:$0xff]
        %v7214 = vld [vmem:[%s7123 + $0x13a] sm:$0xff]
        %v7215 = vld [vmem:[%s7123 + $0x142] sm:$0xff]
        %v7216 = vld [vmem:[%s7123 + $0x152] sm:$0xff]
        %v7217 = vld [vmem:[%s7123 + $0x15a] sm:$0xff]
        %v7218 = vld [vmem:[%s7123 + $0x16a] sm:$0xff]
        %v7219 = vld [vmem:[%s7123 + $0x172] sm:$0xff]
        %7252 = vrot.lane.b32.xlu0 %v6963, 4
        %v7253 = vpop.permute.xlu0 %7252
        %7254 = vrot.lane.b32.xlu0 %v6964, 4
        %v7255 = vpop.permute.xlu0 %7254
        %7256 = vrot.lane.b32.xlu0 %v6965, 4
        %v7257 = vpop.permute.xlu0 %7256
        %7258 = vrot.lane.b32.xlu0 %v6966, 4
        %v7259 = vpop.permute.xlu0 %7258
        %7260 = vrot.lane.b32.xlu0 %v6967, 4
        %v7261 = vpop.permute.xlu0 %7260
        %7262 = vrot.lane.b32.xlu0 %v6968, 4
        %v7263 = vpop.permute.xlu0 %7262
        %7264 = vrot.lane.b32.xlu0 %v6969, 4
        %v7265 = vpop.permute.xlu0 %7264
        %7266 = vrot.lane.b32.xlu0 %v6970, 4
        %v7267 = vpop.permute.xlu0 %7266
        %7268 = vrot.lane.b32.xlu0 %v6971, 4
        %v7269 = vpop.permute.xlu0 %7268
        %7270 = vrot.lane.b32.xlu0 %v6972, 4
        %v7271 = vpop.permute.xlu0 %7270
        %7272 = vrot.lane.b32.xlu0 %v6973, 4
        %v7273 = vpop.permute.xlu0 %7272
        %7274 = vrot.lane.b32.xlu0 %v6974, 4
        %v7275 = vpop.permute.xlu0 %7274
        %7276 = vrot.lane.b32.xlu0 %v6975, 4
        %v7277 = vpop.permute.xlu0 %7276
        %7278 = vrot.lane.b32.xlu0 %v6976, 4
        %v7279 = vpop.permute.xlu0 %7278
        %7280 = vrot.lane.b32.xlu0 %v6977, 4
        %v7281 = vpop.permute.xlu0 %7280
        %7282 = vrot.lane.b32.xlu0 %v6978, 4
        %v7283 = vpop.permute.xlu0 %7282
        %7284 = vrot.lane.b32.xlu0 %v6979, 4
        %v7285 = vpop.permute.xlu0 %7284
        %7286 = vrot.lane.b32.xlu0 %v6980, 4
        %v7287 = vpop.permute.xlu0 %7286
        %7288 = vrot.lane.b32.xlu0 %v6981, 4
        %v7289 = vpop.permute.xlu0 %7288
        %7290 = vrot.lane.b32.xlu0 %v6982, 4
        %v7291 = vpop.permute.xlu0 %7290
        %7292 = vrot.lane.b32.xlu0 %v6983, 4
        %v7293 = vpop.permute.xlu0 %7292
        %7294 = vrot.lane.b32.xlu0 %v6984, 4
        %v7295 = vpop.permute.xlu0 %7294
        %7296 = vrot.lane.b32.xlu0 %v6985, 4
        %v7297 = vpop.permute.xlu0 %7296
        %7298 = vrot.lane.b32.xlu0 %v6986, 4
        %v7299 = vpop.permute.xlu0 %7298
        %7300 = vrot.lane.b32.xlu0 %v6987, 4
        %v7301 = vpop.permute.xlu0 %7300
        %7302 = vrot.lane.b32.xlu0 %v6988, 4
        %v7303 = vpop.permute.xlu0 %7302
        %7304 = vrot.lane.b32.xlu0 %v6989, 4
        %v7305 = vpop.permute.xlu0 %7304
        %7306 = vrot.lane.b32.xlu0 %v6990, 4
        %v7307 = vpop.permute.xlu0 %7306
        %7308 = vrot.lane.b32.xlu0 %v6991, 4
        %v7309 = vpop.permute.xlu0 %7308
        %7310 = vrot.lane.b32.xlu0 %v6992, 4
        %v7311 = vpop.permute.xlu0 %7310
        %7312 = vrot.lane.b32.xlu0 %v6993, 4
        %v7313 = vpop.permute.xlu0 %7312
        %7314 = vrot.lane.b32.xlu0 %v6994, 4
        %v7315 = vpop.permute.xlu0 %7314
        %7380 = vrot.lane.b32.xlu0 %v6995, 8
        %v7381 = vpop.permute.xlu0 %7380
        %7382 = vrot.lane.b32.xlu0 %v6996, 8
        %v7383 = vpop.permute.xlu0 %7382
        %7384 = vrot.lane.b32.xlu0 %v6997, 8
        %v7385 = vpop.permute.xlu0 %7384
        %7386 = vrot.lane.b32.xlu0 %v6998, 8
        %v7387 = vpop.permute.xlu0 %7386
        %7388 = vrot.lane.b32.xlu0 %v6999, 8
        %v7389 = vpop.permute.xlu0 %7388
        %7390 = vrot.lane.b32.xlu0 %v7000, 8
        %v7391 = vpop.permute.xlu0 %7390
        %7392 = vrot.lane.b32.xlu0 %v7001, 8
        %v7393 = vpop.permute.xlu0 %7392
        %7394 = vrot.lane.b32.xlu0 %v7002, 8
        %v7395 = vpop.permute.xlu0 %7394
        %7396 = vrot.lane.b32.xlu0 %v7003, 8
        %v7397 = vpop.permute.xlu0 %7396
        %7398 = vrot.lane.b32.xlu0 %v7004, 8
        %v7399 = vpop.permute.xlu0 %7398
        %7400 = vrot.lane.b32.xlu0 %v7005, 8
        %v7401 = vpop.permute.xlu0 %7400
        %7402 = vrot.lane.b32.xlu0 %v7006, 8
        %v7403 = vpop.permute.xlu0 %7402
        %7404 = vrot.lane.b32.xlu0 %v7007, 8
        %v7405 = vpop.permute.xlu0 %7404
        %7406 = vrot.lane.b32.xlu0 %v7008, 8
        %v7407 = vpop.permute.xlu0 %7406
        %7408 = vrot.lane.b32.xlu0 %v7009, 8
        %v7409 = vpop.permute.xlu0 %7408
        %7410 = vrot.lane.b32.xlu0 %v7010, 8
        %v7411 = vpop.permute.xlu0 %7410
        %7412 = vrot.lane.b32.xlu0 %v7011, 8
        %v7413 = vpop.permute.xlu0 %7412
        %7414 = vrot.lane.b32.xlu0 %v7012, 8
        %v7415 = vpop.permute.xlu0 %7414
        %7416 = vrot.lane.b32.xlu0 %v7013, 8
        %v7417 = vpop.permute.xlu0 %7416
        %7418 = vrot.lane.b32.xlu0 %v7014, 8
        %v7419 = vpop.permute.xlu0 %7418
        %7420 = vrot.lane.b32.xlu0 %v7015, 8
        %v7421 = vpop.permute.xlu0 %7420
        %7422 = vrot.lane.b32.xlu0 %v7016, 8
        %v7423 = vpop.permute.xlu0 %7422
        %7424 = vrot.lane.b32.xlu0 %v7017, 8
        %v7425 = vpop.permute.xlu0 %7424
        %7426 = vrot.lane.b32.xlu0 %v7018, 8
        %v7427 = vpop.permute.xlu0 %7426
        %7428 = vrot.lane.b32.xlu0 %v7019, 8
        %v7429 = vpop.permute.xlu0 %7428
        %7430 = vrot.lane.b32.xlu0 %v7020, 8
        %v7431 = vpop.permute.xlu0 %7430
        %7432 = vrot.lane.b32.xlu0 %v7021, 8
        %v7433 = vpop.permute.xlu0 %7432
        %7434 = vrot.lane.b32.xlu0 %v7022, 8
        %v7435 = vpop.permute.xlu0 %7434
        %7436 = vrot.lane.b32.xlu0 %v7023, 8
        %v7437 = vpop.permute.xlu0 %7436
        %7438 = vrot.lane.b32.xlu0 %v7024, 8
        %v7439 = vpop.permute.xlu0 %7438
        %7440 = vrot.lane.b32.xlu0 %v7025, 8
        %v7441 = vpop.permute.xlu0 %7440
        %7442 = vrot.lane.b32.xlu0 %v7026, 8
        %v7443 = vpop.permute.xlu0 %7442
        %7508 = vrot.lane.b32.xlu0 %v7027, 12
        %v7509 = vpop.permute.xlu0 %7508
        %7510 = vrot.lane.b32.xlu0 %v7028, 12
        %v7511 = vpop.permute.xlu0 %7510
        %7512 = vrot.lane.b32.xlu0 %v7029, 12
        %v7513 = vpop.permute.xlu0 %7512
        %7514 = vrot.lane.b32.xlu0 %v7030, 12
        %v7515 = vpop.permute.xlu0 %7514
        %7516 = vrot.lane.b32.xlu0 %v7031, 12
        %v7517 = vpop.permute.xlu0 %7516
        %7518 = vrot.lane.b32.xlu0 %v7032, 12
        %v7519 = vpop.permute.xlu0 %7518
        %7520 = vrot.lane.b32.xlu0 %v7033, 12
        %v7521 = vpop.permute.xlu0 %7520
        %7522 = vrot.lane.b32.xlu0 %v7034, 12
        %v7523 = vpop.permute.xlu0 %7522
        %7524 = vrot.lane.b32.xlu0 %v7035, 12
        %v7525 = vpop.permute.xlu0 %7524
        %7526 = vrot.lane.b32.xlu0 %v7036, 12
        %v7527 = vpop.permute.xlu0 %7526
        %7528 = vrot.lane.b32.xlu0 %v7037, 12
        %v7529 = vpop.permute.xlu0 %7528
        %7530 = vrot.lane.b32.xlu0 %v7038, 12
        %v7531 = vpop.permute.xlu0 %7530
        %7532 = vrot.lane.b32.xlu0 %v7039, 12
        %v7533 = vpop.permute.xlu0 %7532
        %7534 = vrot.lane.b32.xlu0 %v7040, 12
        %v7535 = vpop.permute.xlu0 %7534
        %7536 = vrot.lane.b32.xlu0 %v7041, 12
        %v7537 = vpop.permute.xlu0 %7536
        %7538 = vrot.lane.b32.xlu0 %v7042, 12
        %v7539 = vpop.permute.xlu0 %7538
        %7540 = vrot.lane.b32.xlu0 %v7043, 12
        %v7541 = vpop.permute.xlu0 %7540
        %7542 = vrot.lane.b32.xlu0 %v7044, 12
        %v7543 = vpop.permute.xlu0 %7542
        %7544 = vrot.lane.b32.xlu0 %v7045, 12
        %v7545 = vpop.permute.xlu0 %7544
        %7546 = vrot.lane.b32.xlu0 %v7046, 12
        %v7547 = vpop.permute.xlu0 %7546
        %7548 = vrot.lane.b32.xlu0 %v7047, 12
        %v7549 = vpop.permute.xlu0 %7548
        %7550 = vrot.lane.b32.xlu0 %v7048, 12
        %v7551 = vpop.permute.xlu0 %7550
        %7552 = vrot.lane.b32.xlu0 %v7049, 12
        %v7553 = vpop.permute.xlu0 %7552
        %7554 = vrot.lane.b32.xlu0 %v7050, 12
        %v7555 = vpop.permute.xlu0 %7554
        %7556 = vrot.lane.b32.xlu0 %v7051, 12
        %v7557 = vpop.permute.xlu0 %7556
        %7558 = vrot.lane.b32.xlu0 %v7052, 12
        %v7559 = vpop.permute.xlu0 %7558
        %7560 = vrot.lane.b32.xlu0 %v7053, 12
        %v7561 = vpop.permute.xlu0 %7560
        %7562 = vrot.lane.b32.xlu0 %v7054, 12
        %v7563 = vpop.permute.xlu0 %7562
        %7564 = vrot.lane.b32.xlu0 %v7055, 12
        %v7565 = vpop.permute.xlu0 %7564
        %7566 = vrot.lane.b32.xlu0 %v7056, 12
        %v7567 = vpop.permute.xlu0 %7566
        %7568 = vrot.lane.b32.xlu0 %v7057, 12
        %v7569 = vpop.permute.xlu0 %7568
        %7570 = vrot.lane.b32.xlu0 %v7058, 12
        %v7571 = vpop.permute.xlu0 %7570
        %7636 = vrot.lane.b32.xlu0 %v7059, 16
        %v7637 = vpop.permute.xlu0 %7636
        %7638 = vrot.lane.b32.xlu0 %v7060, 16
        %v7639 = vpop.permute.xlu0 %7638
        %7640 = vrot.lane.b32.xlu0 %v7061, 16
        %v7641 = vpop.permute.xlu0 %7640
        %7642 = vrot.lane.b32.xlu0 %v7062, 16
        %v7643 = vpop.permute.xlu0 %7642
        %7644 = vrot.lane.b32.xlu0 %v7063, 16
        %v7645 = vpop.permute.xlu0 %7644
        %7646 = vrot.lane.b32.xlu0 %v7064, 16
        %v7647 = vpop.permute.xlu0 %7646
        %7648 = vrot.lane.b32.xlu0 %v7065, 16
        %v7649 = vpop.permute.xlu0 %7648
        %7650 = vrot.lane.b32.xlu0 %v7066, 16
        %v7651 = vpop.permute.xlu0 %7650
        %7652 = vrot.lane.b32.xlu0 %v7067, 16
        %v7653 = vpop.permute.xlu0 %7652
        %7654 = vrot.lane.b32.xlu0 %v7068, 16
        %v7655 = vpop.permute.xlu0 %7654
        %7656 = vrot.lane.b32.xlu0 %v7069, 16
        %v7657 = vpop.permute.xlu0 %7656
        %7658 = vrot.lane.b32.xlu0 %v7070, 16
        %v7659 = vpop.permute.xlu0 %7658
        %7660 = vrot.lane.b32.xlu0 %v7071, 16
        %v7661 = vpop.permute.xlu0 %7660
        %7662 = vrot.lane.b32.xlu0 %v7072, 16
        %v7663 = vpop.permute.xlu0 %7662
        %7664 = vrot.lane.b32.xlu0 %v7073, 16
        %v7665 = vpop.permute.xlu0 %7664
        %7666 = vrot.lane.b32.xlu0 %v7074, 16
        %v7667 = vpop.permute.xlu0 %7666
        %7668 = vrot.lane.b32.xlu0 %v7075, 16
        %v7669 = vpop.permute.xlu0 %7668
        %7670 = vrot.lane.b32.xlu0 %v7076, 16
        %v7671 = vpop.permute.xlu0 %7670
        %7672 = vrot.lane.b32.xlu0 %v7077, 16
        %v7673 = vpop.permute.xlu0 %7672
        %7674 = vrot.lane.b32.xlu0 %v7078, 16
        %v7675 = vpop.permute.xlu0 %7674
        %7676 = vrot.lane.b32.xlu0 %v7079, 16
        %v7677 = vpop.permute.xlu0 %7676
        %7678 = vrot.lane.b32.xlu0 %v7080, 16
        %v7679 = vpop.permute.xlu0 %7678
        %7680 = vrot.lane.b32.xlu0 %v7081, 16
        %v7681 = vpop.permute.xlu0 %7680
        %7682 = vrot.lane.b32.xlu0 %v7082, 16
        %v7683 = vpop.permute.xlu0 %7682
        %7684 = vrot.lane.b32.xlu0 %v7083, 16
        %v7685 = vpop.permute.xlu0 %7684
        %7686 = vrot.lane.b32.xlu0 %v7084, 16
        %v7687 = vpop.permute.xlu0 %7686
        %7688 = vrot.lane.b32.xlu0 %v7085, 16
        %v7689 = vpop.permute.xlu0 %7688
        %7690 = vrot.lane.b32.xlu0 %v7086, 16
        %v7691 = vpop.permute.xlu0 %7690
        %7692 = vrot.lane.b32.xlu0 %v7087, 16
        %v7693 = vpop.permute.xlu0 %7692
        %7694 = vrot.lane.b32.xlu0 %v7088, 16
        %v7695 = vpop.permute.xlu0 %7694
        %7696 = vrot.lane.b32.xlu0 %v7089, 16
        %v7697 = vpop.permute.xlu0 %7696
        %7698 = vrot.lane.b32.xlu0 %v7090, 16
        %v7699 = vpop.permute.xlu0 %7698
        %7764 = vrot.lane.b32.xlu0 %v7091, 20
        %v7765 = vpop.permute.xlu0 %7764
        %7766 = vrot.lane.b32.xlu0 %v7092, 20
        %v7767 = vpop.permute.xlu0 %7766
        %7768 = vrot.lane.b32.xlu0 %v7093, 20
        %v7769 = vpop.permute.xlu0 %7768
        %7770 = vrot.lane.b32.xlu0 %v7094, 20
        %v7771 = vpop.permute.xlu0 %7770
        %7772 = vrot.lane.b32.xlu0 %v7095, 20
        %v7773 = vpop.permute.xlu0 %7772
        %7774 = vrot.lane.b32.xlu0 %v7096, 20
        %v7775 = vpop.permute.xlu0 %7774
        %7776 = vrot.lane.b32.xlu0 %v7097, 20
        %v7777 = vpop.permute.xlu0 %7776
        %7778 = vrot.lane.b32.xlu0 %v7098, 20
        %v7779 = vpop.permute.xlu0 %7778
        %7780 = vrot.lane.b32.xlu0 %v7099, 20
        %v7781 = vpop.permute.xlu0 %7780
        %7782 = vrot.lane.b32.xlu0 %v7100, 20
        %v7783 = vpop.permute.xlu0 %7782
        %7784 = vrot.lane.b32.xlu0 %v7101, 20
        %v7785 = vpop.permute.xlu0 %7784
        %7786 = vrot.lane.b32.xlu0 %v7102, 20
        %v7787 = vpop.permute.xlu0 %7786
        %7788 = vrot.lane.b32.xlu0 %v7103, 20
        %v7789 = vpop.permute.xlu0 %7788
        %7790 = vrot.lane.b32.xlu0 %v7104, 20
        %v7791 = vpop.permute.xlu0 %7790
        %7792 = vrot.lane.b32.xlu0 %v7105, 20
        %v7793 = vpop.permute.xlu0 %7792
        %7794 = vrot.lane.b32.xlu0 %v7106, 20
        %v7795 = vpop.permute.xlu0 %7794
        %7796 = vrot.lane.b32.xlu0 %v7107, 20
        %v7797 = vpop.permute.xlu0 %7796
        %7798 = vrot.lane.b32.xlu0 %v7108, 20
        %v7799 = vpop.permute.xlu0 %7798
        %7800 = vrot.lane.b32.xlu0 %v7109, 20
        %v7801 = vpop.permute.xlu0 %7800
        %7802 = vrot.lane.b32.xlu0 %v7110, 20
        %v7803 = vpop.permute.xlu0 %7802
        %7804 = vrot.lane.b32.xlu0 %v7111, 20
        %v7805 = vpop.permute.xlu0 %7804
        %7806 = vrot.lane.b32.xlu0 %v7112, 20
        %v7807 = vpop.permute.xlu0 %7806
        %7808 = vrot.lane.b32.xlu0 %v7113, 20
        %v7809 = vpop.permute.xlu0 %7808
        %7810 = vrot.lane.b32.xlu0 %v7114, 20
        %v7811 = vpop.permute.xlu0 %7810
        %7812 = vrot.lane.b32.xlu0 %v7115, 20
        %v7813 = vpop.permute.xlu0 %7812
        %7814 = vrot.lane.b32.xlu0 %v7116, 20
        %v7815 = vpop.permute.xlu0 %7814
        %7816 = vrot.lane.b32.xlu0 %v7117, 20
        %v7817 = vpop.permute.xlu0 %7816
        %7818 = vrot.lane.b32.xlu0 %v7118, 20
        %v7819 = vpop.permute.xlu0 %7818
        %7820 = vrot.lane.b32.xlu0 %v7119, 20
        %v7821 = vpop.permute.xlu0 %7820
        %7822 = vrot.lane.b32.xlu0 %v7120, 20
        %v7823 = vpop.permute.xlu0 %7822
        %7824 = vrot.lane.b32.xlu0 %v7121, 20
        %v7825 = vpop.permute.xlu0 %7824
        %7826 = vrot.lane.b32.xlu0 %v7122, 20
        %v7827 = vpop.permute.xlu0 %7826
        %7892 = vrot.lane.b32.xlu0 %v7124, 24
        %v7893 = vpop.permute.xlu0 %7892
        %7894 = vrot.lane.b32.xlu0 %v7125, 24
        %v7895 = vpop.permute.xlu0 %7894
        %7896 = vrot.lane.b32.xlu0 %v7126, 24
        %v7897 = vpop.permute.xlu0 %7896
        %7898 = vrot.lane.b32.xlu0 %v7127, 24
        %v7899 = vpop.permute.xlu0 %7898
        %7900 = vrot.lane.b32.xlu0 %v7128, 24
        %v7901 = vpop.permute.xlu0 %7900
        %7902 = vrot.lane.b32.xlu0 %v7129, 24
        %v7903 = vpop.permute.xlu0 %7902
        %7904 = vrot.lane.b32.xlu0 %v7130, 24
        %v7905 = vpop.permute.xlu0 %7904
        %7906 = vrot.lane.b32.xlu0 %v7131, 24
        %v7907 = vpop.permute.xlu0 %7906
        %7908 = vrot.lane.b32.xlu0 %v7132, 24
        %v7909 = vpop.permute.xlu0 %7908
        %7910 = vrot.lane.b32.xlu0 %v7133, 24
        %v7911 = vpop.permute.xlu0 %7910
        %7912 = vrot.lane.b32.xlu0 %v7134, 24
        %v7913 = vpop.permute.xlu0 %7912
        %7914 = vrot.lane.b32.xlu0 %v7135, 24
        %v7915 = vpop.permute.xlu0 %7914
        %7916 = vrot.lane.b32.xlu0 %v7136, 24
        %v7917 = vpop.permute.xlu0 %7916
        %7918 = vrot.lane.b32.xlu0 %v7137, 24
        %v7919 = vpop.permute.xlu0 %7918
        %7920 = vrot.lane.b32.xlu0 %v7138, 24
        %v7921 = vpop.permute.xlu0 %7920
        %7922 = vrot.lane.b32.xlu0 %v7139, 24
        %v7923 = vpop.permute.xlu0 %7922
        %7924 = vrot.lane.b32.xlu0 %v7140, 24
        %v7925 = vpop.permute.xlu0 %7924
        %7926 = vrot.lane.b32.xlu0 %v7141, 24
        %v7927 = vpop.permute.xlu0 %7926
        %7928 = vrot.lane.b32.xlu0 %v7142, 24
        %v7929 = vpop.permute.xlu0 %7928
        %7930 = vrot.lane.b32.xlu0 %v7143, 24
        %v7931 = vpop.permute.xlu0 %7930
        %7932 = vrot.lane.b32.xlu0 %v7144, 24
        %v7933 = vpop.permute.xlu0 %7932
        %7934 = vrot.lane.b32.xlu0 %v7145, 24
        %v7935 = vpop.permute.xlu0 %7934
        %7936 = vrot.lane.b32.xlu0 %v7146, 24
        %v7937 = vpop.permute.xlu0 %7936
        %7938 = vrot.lane.b32.xlu0 %v7147, 24
        %v7939 = vpop.permute.xlu0 %7938
        %7940 = vrot.lane.b32.xlu0 %v7148, 24
        %v7941 = vpop.permute.xlu0 %7940
        %7942 = vrot.lane.b32.xlu0 %v7149, 24
        %v7943 = vpop.permute.xlu0 %7942
        %7944 = vrot.lane.b32.xlu0 %v7150, 24
        %v7945 = vpop.permute.xlu0 %7944
        %7946 = vrot.lane.b32.xlu0 %v7151, 24
        %v7947 = vpop.permute.xlu0 %7946
        %7948 = vrot.lane.b32.xlu0 %v7152, 24
        %v7949 = vpop.permute.xlu0 %7948
        %7950 = vrot.lane.b32.xlu0 %v7153, 24
        %v7951 = vpop.permute.xlu0 %7950
        %7952 = vrot.lane.b32.xlu0 %v7154, 24
        %v7953 = vpop.permute.xlu0 %7952
        %7954 = vrot.lane.b32.xlu0 %v7155, 24
        %v7955 = vpop.permute.xlu0 %7954
        %8020 = vrot.lane.b32.xlu0 %v7156, 28
        %v8021 = vpop.permute.xlu0 %8020
        %8022 = vrot.lane.b32.xlu0 %v7157, 28
        %v8023 = vpop.permute.xlu0 %8022
        %8024 = vrot.lane.b32.xlu0 %v7158, 28
        %v8025 = vpop.permute.xlu0 %8024
        %8026 = vrot.lane.b32.xlu0 %v7159, 28
        %v8027 = vpop.permute.xlu0 %8026
        %8028 = vrot.lane.b32.xlu0 %v7160, 28
        %v8029 = vpop.permute.xlu0 %8028
        %8030 = vrot.lane.b32.xlu0 %v7161, 28
        %v8031 = vpop.permute.xlu0 %8030
        %8032 = vrot.lane.b32.xlu0 %v7162, 28
        %v8033 = vpop.permute.xlu0 %8032
        %8034 = vrot.lane.b32.xlu0 %v7163, 28
        %v8035 = vpop.permute.xlu0 %8034
        %8036 = vrot.lane.b32.xlu0 %v7164, 28
        %v8037 = vpop.permute.xlu0 %8036
        %8038 = vrot.lane.b32.xlu0 %v7165, 28
        %v8039 = vpop.permute.xlu0 %8038
        %8040 = vrot.lane.b32.xlu0 %v7166, 28
        %v8041 = vpop.permute.xlu0 %8040
        %8042 = vrot.lane.b32.xlu0 %v7167, 28
        %v8043 = vpop.permute.xlu0 %8042
        %8044 = vrot.lane.b32.xlu0 %v7168, 28
        %v8045 = vpop.permute.xlu0 %8044
        %8046 = vrot.lane.b32.xlu0 %v7169, 28
        %v8047 = vpop.permute.xlu0 %8046
        %8048 = vrot.lane.b32.xlu0 %v7170, 28
        %v8049 = vpop.permute.xlu0 %8048
        %8050 = vrot.lane.b32.xlu0 %v7171, 28
        %v8051 = vpop.permute.xlu0 %8050
        %8052 = vrot.lane.b32.xlu0 %v7172, 28
        %v8053 = vpop.permute.xlu0 %8052
        %8054 = vrot.lane.b32.xlu0 %v7173, 28
        %v8055 = vpop.permute.xlu0 %8054
        %8056 = vrot.lane.b32.xlu0 %v7174, 28
        %v8057 = vpop.permute.xlu0 %8056
        %8058 = vrot.lane.b32.xlu0 %v7175, 28
        %v8059 = vpop.permute.xlu0 %8058
        %8060 = vrot.lane.b32.xlu0 %v7176, 28
        %v8061 = vpop.permute.xlu0 %8060
        %8062 = vrot.lane.b32.xlu0 %v7177, 28
        %v8063 = vpop.permute.xlu0 %8062
        %8064 = vrot.lane.b32.xlu0 %v7178, 28
        %v8065 = vpop.permute.xlu0 %8064
        %8066 = vrot.lane.b32.xlu0 %v7179, 28
        %v8067 = vpop.permute.xlu0 %8066
        %8068 = vrot.lane.b32.xlu0 %v7180, 28
        %v8069 = vpop.permute.xlu0 %8068
        %8070 = vrot.lane.b32.xlu0 %v7181, 28
        %v8071 = vpop.permute.xlu0 %8070
        %8072 = vrot.lane.b32.xlu0 %v7182, 28
        %v8073 = vpop.permute.xlu0 %8072
        %8074 = vrot.lane.b32.xlu0 %v7183, 28
        %v8075 = vpop.permute.xlu0 %8074
        %8076 = vrot.lane.b32.xlu0 %v7184, 28
        %v8077 = vpop.permute.xlu0 %8076
        %8078 = vrot.lane.b32.xlu0 %v7185, 28
        %v8079 = vpop.permute.xlu0 %8078
        %8080 = vrot.lane.b32.xlu0 %v7186, 28
        %v8081 = vpop.permute.xlu0 %8080
        %8082 = vrot.lane.b32.xlu0 %v7187, 28
        %v8083 = vpop.permute.xlu0 %8082
        %8148 = vrot.lane.b32.xlu0 %v7188, 32
        %v8149 = vpop.permute.xlu0 %8148
        %8150 = vrot.lane.b32.xlu0 %v7189, 32
        %v8151 = vpop.permute.xlu0 %8150
        %8152 = vrot.lane.b32.xlu0 %v7190, 32
        %v8153 = vpop.permute.xlu0 %8152
        %8154 = vrot.lane.b32.xlu0 %v7191, 32
        %v8155 = vpop.permute.xlu0 %8154
        %8156 = vrot.lane.b32.xlu0 %v7192, 32
        %v8157 = vpop.permute.xlu0 %8156
        %8158 = vrot.lane.b32.xlu0 %v7193, 32
        %v8159 = vpop.permute.xlu0 %8158
        %8160 = vrot.lane.b32.xlu0 %v7194, 32
        %v8161 = vpop.permute.xlu0 %8160
        %8162 = vrot.lane.b32.xlu0 %v7195, 32
        %v8163 = vpop.permute.xlu0 %8162
        %8164 = vrot.lane.b32.xlu0 %v7196, 32
        %v8165 = vpop.permute.xlu0 %8164
        %8166 = vrot.lane.b32.xlu0 %v7197, 32
        %v8167 = vpop.permute.xlu0 %8166
        %8168 = vrot.lane.b32.xlu0 %v7198, 32
        %v8169 = vpop.permute.xlu0 %8168
        %8170 = vrot.lane.b32.xlu0 %v7199, 32
        %v8171 = vpop.permute.xlu0 %8170
        %8172 = vrot.lane.b32.xlu0 %v7200, 32
        %v8173 = vpop.permute.xlu0 %8172
        %8174 = vrot.lane.b32.xlu0 %v7201, 32
        %v8175 = vpop.permute.xlu0 %8174
        %8176 = vrot.lane.b32.xlu0 %v7202, 32
        %v8177 = vpop.permute.xlu0 %8176
        %8178 = vrot.lane.b32.xlu0 %v7203, 32
        %v8179 = vpop.permute.xlu0 %8178
        %8180 = vrot.lane.b32.xlu0 %v7204, 32
        %v8181 = vpop.permute.xlu0 %8180
        %8182 = vrot.lane.b32.xlu0 %v7205, 32
        %v8183 = vpop.permute.xlu0 %8182
        %8184 = vrot.lane.b32.xlu0 %v7206, 32
        %v8185 = vpop.permute.xlu0 %8184
        %8186 = vrot.lane.b32.xlu0 %v7207, 32
        %v8187 = vpop.permute.xlu0 %8186
        %8188 = vrot.lane.b32.xlu0 %v7208, 32
        %v8189 = vpop.permute.xlu0 %8188
        %8190 = vrot.lane.b32.xlu0 %v7209, 32
        %v8191 = vpop.permute.xlu0 %8190
        %8192 = vrot.lane.b32.xlu0 %v7210, 32
        %v8193 = vpop.permute.xlu0 %8192
        %8194 = vrot.lane.b32.xlu0 %v7211, 32
        %v8195 = vpop.permute.xlu0 %8194
        %8196 = vrot.lane.b32.xlu0 %v7212, 32
        %v8197 = vpop.permute.xlu0 %8196
        %8198 = vrot.lane.b32.xlu0 %v7213, 32
        %v8199 = vpop.permute.xlu0 %8198
        %8200 = vrot.lane.b32.xlu0 %v7214, 32
        %v8201 = vpop.permute.xlu0 %8200
        %8202 = vrot.lane.b32.xlu0 %v7215, 32
        %v8203 = vpop.permute.xlu0 %8202
        %8204 = vrot.lane.b32.xlu0 %v7216, 32
        %v8205 = vpop.permute.xlu0 %8204
        %8206 = vrot.lane.b32.xlu0 %v7217, 32
        %v8207 = vpop.permute.xlu0 %8206
        %8208 = vrot.lane.b32.xlu0 %v7218, 32
        %v8209 = vpop.permute.xlu0 %8208
        %8210 = vrot.lane.b32.xlu0 %v7219, 32
        %v8211 = vpop.permute.xlu0 %8210
        %v8244 = vsel %vm505, %v6931, %v7253
        %v8245 = vsel %vm505, %v6932, %v7255
        %v8246 = vsel %vm505, %v6933, %v7257
        %v8247 = vsel %vm505, %v6934, %v7259
        %v8248 = vsel %vm505, %v6935, %v7261
        %v8249 = vsel %vm505, %v6936, %v7263
        %v8250 = vsel %vm505, %v6937, %v7265
        %v8251 = vsel %vm505, %v6938, %v7267
        %v8252 = vsel %vm505, %v6939, %v7269
        %v8253 = vsel %vm505, %v6940, %v7271
        %v8254 = vsel %vm505, %v6941, %v7273
        %v8255 = vsel %vm505, %v6942, %v7275
        %v8256 = vsel %vm505, %v6943, %v7277
        %v8257 = vsel %vm505, %v6944, %v7279
        %v8258 = vsel %vm505, %v6945, %v7281
        %v8259 = vsel %vm505, %v6946, %v7283
        %v8260 = vsel %vm505, %v6947, %v7285
        %v8261 = vsel %vm505, %v6948, %v7287
        %v8262 = vsel %vm505, %v6949, %v7289
        %v8263 = vsel %vm505, %v6950, %v7291
        %v8264 = vsel %vm505, %v6951, %v7293
        %v8265 = vsel %vm505, %v6952, %v7295
        %v8266 = vsel %vm505, %v6953, %v7297
        %v8267 = vsel %vm505, %v6954, %v7299
        %v8268 = vsel %vm505, %v6955, %v7301
        %v8269 = vsel %vm505, %v6956, %v7303
        %v8270 = vsel %vm505, %v6957, %v7305
        %v8271 = vsel %vm505, %v6958, %v7307
        %v8272 = vsel %vm505, %v6959, %v7309
        %v8273 = vsel %vm505, %v6960, %v7311
        %v8274 = vsel %vm505, %v6961, %v7313
        %v8275 = vsel %vm505, %v6962, %v7315
        %v8276 = vsel %vm459, %v8244, %v7381
        %v8277 = vsel %vm459, %v8245, %v7383
        %v8278 = vsel %vm459, %v8246, %v7385
        %v8279 = vsel %vm459, %v8247, %v7387
        %v8280 = vsel %vm459, %v8248, %v7389
        %v8281 = vsel %vm459, %v8249, %v7391
        %v8282 = vsel %vm459, %v8250, %v7393
        %v8283 = vsel %vm459, %v8251, %v7395
        %v8284 = vsel %vm459, %v8252, %v7397
        %v8285 = vsel %vm459, %v8253, %v7399
        %v8286 = vsel %vm459, %v8254, %v7401
        %v8287 = vsel %vm459, %v8255, %v7403
        %v8288 = vsel %vm459, %v8256, %v7405
        %v8289 = vsel %vm459, %v8257, %v7407
        %v8290 = vsel %vm459, %v8258, %v7409
        %v8291 = vsel %vm459, %v8259, %v7411
        %v8292 = vsel %vm459, %v8260, %v7413
        %v8293 = vsel %vm459, %v8261, %v7415
        %v8294 = vsel %vm459, %v8262, %v7417
        %v8295 = vsel %vm459, %v8263, %v7419
        %v8296 = vsel %vm459, %v8264, %v7421
        %v8297 = vsel %vm459, %v8265, %v7423
        %v8298 = vsel %vm459, %v8266, %v7425
        %v8299 = vsel %vm459, %v8267, %v7427
        %v8300 = vsel %vm459, %v8268, %v7429
        %v8301 = vsel %vm459, %v8269, %v7431
        %v8302 = vsel %vm459, %v8270, %v7433
        %v8303 = vsel %vm459, %v8271, %v7435
        %v8304 = vsel %vm459, %v8272, %v7437
        %v8305 = vsel %vm459, %v8273, %v7439
        %v8306 = vsel %vm459, %v8274, %v7441
        %v8307 = vsel %vm459, %v8275, %v7443
        %vm8308 = vcmask 97280
        %v8309 = vsel %vm8308, %v8276, %v7509
        %v8310 = vsel %vm8308, %v8277, %v7511
        %v8311 = vsel %vm8308, %v8278, %v7513
        %v8312 = vsel %vm8308, %v8279, %v7515
        %v8313 = vsel %vm8308, %v8280, %v7517
        %v8314 = vsel %vm8308, %v8281, %v7519
        %v8315 = vsel %vm8308, %v8282, %v7521
        %v8316 = vsel %vm8308, %v8283, %v7523
        %v8317 = vsel %vm8308, %v8284, %v7525
        %v8318 = vsel %vm8308, %v8285, %v7527
        %v8319 = vsel %vm8308, %v8286, %v7529
        %v8320 = vsel %vm8308, %v8287, %v7531
        %v8321 = vsel %vm8308, %v8288, %v7533
        %v8322 = vsel %vm8308, %v8289, %v7535
        %v8323 = vsel %vm8308, %v8290, %v7537
        %v8324 = vsel %vm8308, %v8291, %v7539
        %v8325 = vsel %vm8308, %v8292, %v7541
        %v8326 = vsel %vm8308, %v8293, %v7543
        %v8327 = vsel %vm8308, %v8294, %v7545
        %v8328 = vsel %vm8308, %v8295, %v7547
        %v8329 = vsel %vm8308, %v8296, %v7549
        %v8330 = vsel %vm8308, %v8297, %v7551
        %v8331 = vsel %vm8308, %v8298, %v7553
        %v8332 = vsel %vm8308, %v8299, %v7555
        %v8333 = vsel %vm8308, %v8300, %v7557
        %v8334 = vsel %vm8308, %v8301, %v7559
        %v8335 = vsel %vm8308, %v8302, %v7561
        %v8336 = vsel %vm8308, %v8303, %v7563
        %v8337 = vsel %vm8308, %v8304, %v7565
        %v8338 = vsel %vm8308, %v8305, %v7567
        %v8339 = vsel %vm8308, %v8306, %v7569
        %v8340 = vsel %vm8308, %v8307, %v7571
        %v8341 = vsel %vm6219, %v8309, %v7637
        %v8342 = vsel %vm6219, %v8310, %v7639
        %v8343 = vsel %vm6219, %v8311, %v7641
        %v8344 = vsel %vm6219, %v8312, %v7643
        %v8345 = vsel %vm6219, %v8313, %v7645
        %v8346 = vsel %vm6219, %v8314, %v7647
        %v8347 = vsel %vm6219, %v8315, %v7649
        %v8348 = vsel %vm6219, %v8316, %v7651
        %v8349 = vsel %vm6219, %v8317, %v7653
        %v8350 = vsel %vm6219, %v8318, %v7655
        %v8351 = vsel %vm6219, %v8319, %v7657
        %v8352 = vsel %vm6219, %v8320, %v7659
        %v8353 = vsel %vm6219, %v8321, %v7661
        %v8354 = vsel %vm6219, %v8322, %v7663
        %v8355 = vsel %vm6219, %v8323, %v7665
        %v8356 = vsel %vm6219, %v8324, %v7667
        %v8357 = vsel %vm6219, %v8325, %v7669
        %v8358 = vsel %vm6219, %v8326, %v7671
        %v8359 = vsel %vm6219, %v8327, %v7673
        %v8360 = vsel %vm6219, %v8328, %v7675
        %v8361 = vsel %vm6219, %v8329, %v7677
        %v8362 = vsel %vm6219, %v8330, %v7679
        %v8363 = vsel %vm6219, %v8331, %v7681
        %v8364 = vsel %vm6219, %v8332, %v7683
        %v8365 = vsel %vm6219, %v8333, %v7685
        %v8366 = vsel %vm6219, %v8334, %v7687
        %v8367 = vsel %vm6219, %v8335, %v7689
        %v8368 = vsel %vm6219, %v8336, %v7691
        %v8369 = vsel %vm6219, %v8337, %v7693
        %v8370 = vsel %vm6219, %v8338, %v7695
        %v8371 = vsel %vm6219, %v8339, %v7697
        %v8372 = vsel %vm6219, %v8340, %v7699
        %vm8373 = vcmask 162816
        %v8374 = vsel %vm8373, %v8341, %v7765
        %v8375 = vsel %vm8373, %v8342, %v7767
        %v8376 = vsel %vm8373, %v8343, %v7769
        %v8377 = vsel %vm8373, %v8344, %v7771
        %v8378 = vsel %vm8373, %v8345, %v7773
        %v8379 = vsel %vm8373, %v8346, %v7775
        %v8380 = vsel %vm8373, %v8347, %v7777
        %v8381 = vsel %vm8373, %v8348, %v7779
        %v8382 = vsel %vm8373, %v8349, %v7781
        %v8383 = vsel %vm8373, %v8350, %v7783
        %v8384 = vsel %vm8373, %v8351, %v7785
        %v8385 = vsel %vm8373, %v8352, %v7787
        %v8386 = vsel %vm8373, %v8353, %v7789
        %v8387 = vsel %vm8373, %v8354, %v7791
        %v8388 = vsel %vm8373, %v8355, %v7793
        %v8389 = vsel %vm8373, %v8356, %v7795
        %v8390 = vsel %vm8373, %v8357, %v7797
        %v8391 = vsel %vm8373, %v8358, %v7799
        %v8392 = vsel %vm8373, %v8359, %v7801
        %v8393 = vsel %vm8373, %v8360, %v7803
        %v8394 = vsel %vm8373, %v8361, %v7805
        %v8395 = vsel %vm8373, %v8362, %v7807
        %v8396 = vsel %vm8373, %v8363, %v7809
        %v8397 = vsel %vm8373, %v8364, %v7811
        %v8398 = vsel %vm8373, %v8365, %v7813
        %v8399 = vsel %vm8373, %v8366, %v7815
        %v8400 = vsel %vm8373, %v8367, %v7817
        %v8401 = vsel %vm8373, %v8368, %v7819
        %v8402 = vsel %vm8373, %v8369, %v7821
        %v8403 = vsel %vm8373, %v8370, %v7823
        %v8404 = vsel %vm8373, %v8371, %v7825
        %v8405 = vsel %vm8373, %v8372, %v7827
        %v8406 = vsel %vm6252, %v8374, %v7893
        %v8407 = vsel %vm6252, %v8375, %v7895
        %v8408 = vsel %vm6252, %v8376, %v7897
        %v8409 = vsel %vm6252, %v8377, %v7899
        %v8410 = vsel %vm6252, %v8378, %v7901
        %v8411 = vsel %vm6252, %v8379, %v7903
        %v8412 = vsel %vm6252, %v8380, %v7905
        %v8413 = vsel %vm6252, %v8381, %v7907
        %v8414 = vsel %vm6252, %v8382, %v7909
        %v8415 = vsel %vm6252, %v8383, %v7911
        %v8416 = vsel %vm6252, %v8384, %v7913
        %v8417 = vsel %vm6252, %v8385, %v7915
        %v8418 = vsel %vm6252, %v8386, %v7917
        %v8419 = vsel %vm6252, %v8387, %v7919
        %v8420 = vsel %vm6252, %v8388, %v7921
        %v8421 = vsel %vm6252, %v8389, %v7923
        %v8422 = vsel %vm6252, %v8390, %v7925
        %v8423 = vsel %vm6252, %v8391, %v7927
        %v8424 = vsel %vm6252, %v8392, %v7929
        %v8425 = vsel %vm6252, %v8393, %v7931
        %v8426 = vsel %vm6252, %v8394, %v7933
        %v8427 = vsel %vm6252, %v8395, %v7935
        %v8428 = vsel %vm6252, %v8396, %v7937
        %v8429 = vsel %vm6252, %v8397, %v7939
        %v8430 = vsel %vm6252, %v8398, %v7941
        %v8431 = vsel %vm6252, %v8399, %v7943
        %v8432 = vsel %vm6252, %v8400, %v7945
        %v8433 = vsel %vm6252, %v8401, %v7947
        %v8434 = vsel %vm6252, %v8402, %v7949
        %v8435 = vsel %vm6252, %v8403, %v7951
        %v8436 = vsel %vm6252, %v8404, %v7953
        %v8437 = vsel %vm6252, %v8405, %v7955
        %vm8438 = vcmask 228352
        %v8439 = vsel %vm8438, %v8406, %v8021
        %v8440 = vsel %vm8438, %v8407, %v8023
        %v8441 = vsel %vm8438, %v8408, %v8025
        %v8442 = vsel %vm8438, %v8409, %v8027
        %v8443 = vsel %vm8438, %v8410, %v8029
        %v8444 = vsel %vm8438, %v8411, %v8031
        %v8445 = vsel %vm8438, %v8412, %v8033
        %v8446 = vsel %vm8438, %v8413, %v8035
        %v8447 = vsel %vm8438, %v8414, %v8037
        %v8448 = vsel %vm8438, %v8415, %v8039
        %v8449 = vsel %vm8438, %v8416, %v8041
        %v8450 = vsel %vm8438, %v8417, %v8043
        %v8451 = vsel %vm8438, %v8418, %v8045
        %v8452 = vsel %vm8438, %v8419, %v8047
        %v8453 = vsel %vm8438, %v8420, %v8049
        %v8454 = vsel %vm8438, %v8421, %v8051
        %v8455 = vsel %vm8438, %v8422, %v8053
        %v8456 = vsel %vm8438, %v8423, %v8055
        %v8457 = vsel %vm8438, %v8424, %v8057
        %v8458 = vsel %vm8438, %v8425, %v8059
        %v8459 = vsel %vm8438, %v8426, %v8061
        %v8460 = vsel %vm8438, %v8427, %v8063
        %v8461 = vsel %vm8438, %v8428, %v8065
        %v8462 = vsel %vm8438, %v8429, %v8067
        %v8463 = vsel %vm8438, %v8430, %v8069
        %v8464 = vsel %vm8438, %v8431, %v8071
        %v8465 = vsel %vm8438, %v8432, %v8073
        %v8466 = vsel %vm8438, %v8433, %v8075
        %v8467 = vsel %vm8438, %v8434, %v8077
        %v8468 = vsel %vm8438, %v8435, %v8079
        %v8469 = vsel %vm8438, %v8436, %v8081
        %v8470 = vsel %vm8438, %v8437, %v8083
        %v8471 = vsel %vm6285, %v8439, %v8149
        %v8472 = vsel %vm6285, %v8440, %v8151
        %v8473 = vsel %vm6285, %v8441, %v8153
        %v8474 = vsel %vm6285, %v8442, %v8155
        %v8475 = vsel %vm6285, %v8443, %v8157
        %v8476 = vsel %vm6285, %v8444, %v8159
        %v8477 = vsel %vm6285, %v8445, %v8161
        %v8478 = vsel %vm6285, %v8446, %v8163
        %v8479 = vsel %vm6285, %v8447, %v8165
        %v8480 = vsel %vm6285, %v8448, %v8167
        %v8481 = vsel %vm6285, %v8449, %v8169
        %v8482 = vsel %vm6285, %v8450, %v8171
        %v8483 = vsel %vm6285, %v8451, %v8173
        %v8484 = vsel %vm6285, %v8452, %v8175
        %v8485 = vsel %vm6285, %v8453, %v8177
        %v8486 = vsel %vm6285, %v8454, %v8179
        %v8487 = vsel %vm6285, %v8455, %v8181
        %v8488 = vsel %vm6285, %v8456, %v8183
        %v8489 = vsel %vm6285, %v8457, %v8185
        %v8490 = vsel %vm6285, %v8458, %v8187
        %v8491 = vsel %vm6285, %v8459, %v8189
        %v8492 = vsel %vm6285, %v8460, %v8191
        %v8493 = vsel %vm6285, %v8461, %v8193
        %v8494 = vsel %vm6285, %v8462, %v8195
        %v8495 = vsel %vm6285, %v8463, %v8197
        %v8496 = vsel %vm6285, %v8464, %v8199
        %v8497 = vsel %vm6285, %v8465, %v8201
        %v8498 = vsel %vm6285, %v8466, %v8203
        %v8499 = vsel %vm6285, %v8467, %v8205
        %v8500 = vsel %vm6285, %v8468, %v8207
        %v8501 = vsel %vm6285, %v8469, %v8209
        %v8502 = vsel %vm6285, %v8470, %v8211
        %v8503 = vld [vmem:[%s9] sm:$0xff]
        %v8504 = vld [vmem:[%s9 + $0x8] sm:$0xff]
        %v8505 = vld [vmem:[%s9 + $0x10] sm:$0xff]
        %v8506 = vld [vmem:[%s9 + $0x18] sm:$0xff]
        %v8507 = vld [vmem:[%s9 + $0x20] sm:$0xf]
        %v8508 = vld [vmem:[%s10] sm:$0x1]
        %v8510 = vlaneseq
        %v8511 = vshrl.u32 %v8510, 7
        %v8512 = vsub.s32 0, %v8511
        %v8513 = vrot.slane %v8508, %v8512
        %vm8515 = vcmask 293888
        %v8517 = vsel %vm8515, %v8471, 0
        %v8520 = vsel %vm8515, %v8472, 0
        %v8523 = vsel %vm8515, %v8473, 0
        %v8526 = vsel %vm8515, %v8474, 0
        %v8529 = vsel %vm8515, %v8475, 0
        %v8532 = vsel %vm8515, %v8476, 0
        %v8535 = vsel %vm8515, %v8477, 0
        %v8538 = vsel %vm8515, %v8478, 0
        %v8541 = vsel %vm8515, %v8479, 0
        %v8544 = vsel %vm8515, %v8480, 0
        %v8547 = vsel %vm8515, %v8481, 0
        %v8550 = vsel %vm8515, %v8482, 0
        %v8553 = vsel %vm8515, %v8483, 0
        %v8556 = vsel %vm8515, %v8484, 0
        %v8559 = vsel %vm8515, %v8485, 0
        %v8562 = vsel %vm8515, %v8486, 0
        %v8565 = vsel %vm8515, %v8487, 0
        %v8568 = vsel %vm8515, %v8488, 0
        %v8571 = vsel %vm8515, %v8489, 0
        %v8574 = vsel %vm8515, %v8490, 0
        %v8577 = vsel %vm8515, %v8491, 0
        %v8580 = vsel %vm8515, %v8492, 0
        %v8583 = vsel %vm8515, %v8493, 0
        %v8586 = vsel %vm8515, %v8494, 0
        %v8589 = vsel %vm8515, %v8495, 0
        %v8592 = vsel %vm8515, %v8496, 0
        %v8595 = vsel %vm8515, %v8497, 0
        %v8598 = vsel %vm8515, %v8498, 0
        %v8601 = vsel %vm8515, %v8499, 0
        %v8604 = vsel %vm8515, %v8500, 0
        %v8607 = vsel %vm8515, %v8501, 0
        %v8610 = vsel %vm8515, %v8502, 0
        %vm8612 = vcmask 1043456
        %v8614 = vsel %vm8612, %v8507, 0
        %8616 = vmatprep.subr.mxu0 0.0
        %8617 = vmatpush1.msra.mxu0 0.0
        %8618 = vmatprep.subr.mxu0 0.0
        %8619 = vmatpush1.msra.mxu0 0.0
        %8620 = vmatprep.subr.mxu0 0.0
        %8621 = vmatpush1.msra.mxu0 0.0
        %8622 = vmatprep.subr.mxu0 0.0
        %8623 = vmatpush1.msra.mxu0 0.0
        %8624 = vmatprep.subr.mxu0 0.0
        %8625 = vmatpush1.msra.mxu0 0.0
        %8626 = vmatprep.subr.mxu0 0.0
        %8627 = vmatpush1.msra.mxu0 0.0
        %8628 = vmatprep.subr.mxu0 0.0
        %8629 = vmatpush1.msra.mxu0 0.0
        %8630 = vmatprep.subr.mxu0 0.0
        %8631 = vmatpush1.msra.mxu0 0.0
        %8632 = vmatprep.subr.mxu0 0.0
        %8633 = vmatpush1.msra.mxu0 0.0
        %8634 = vmatprep.subr.mxu0 0.0
        %8635 = vmatpush1.msra.mxu0 0.0
        %8636 = vmatprep.subr.mxu0 0.0
        %8637 = vmatpush1.msra.mxu0 0.0
        %8638 = vmatprep.subr.mxu0 0.0
        %8639 = vmatpush1.msra.mxu0 %v8614
        %8640 = vmatprep.subr.mxu0 0.0
        %8641 = vmatpush1.msra.mxu0 %v8506
        %8642 = vmatprep.subr.mxu0 0.0
        %8643 = vmatpush1.msra.mxu0 %v8505
        %8644 = vmatprep.subr.mxu0 0.0
        %8645 = vmatpush1.msra.mxu0 %v8504
        %8646 = vmatprep.subr.mxu0 0.0
        %8647 = vmatpush1.msra.mxu0 %v8503
        %8648 = vmatprep.subr.mxu0 0.0
        %8649 = vmatpush2.msra.mxu0 0.0
        %8650 = vmatprep.subr.mxu0 0.0
        %8651 = vmatpush2.msra.mxu0 0.0
        %8652 = vmatprep.subr.mxu0 0.0
        %8653 = vmatpush2.msra.mxu0 0.0
        %8654 = vmatprep.subr.mxu0 0.0
        %8655 = vmatpush2.msra.mxu0 0.0
        %8656 = vmatprep.subr.mxu0 0.0
        %8657 = vmatpush2.msra.mxu0 0.0
        %8658 = vmatprep.subr.mxu0 0.0
        %8659 = vmatpush2.msra.mxu0 0.0
        %8660 = vmatprep.subr.mxu0 0.0
        %8661 = vmatpush2.msra.mxu0 0.0
        %8662 = vmatprep.subr.mxu0 0.0
        %8663 = vmatpush2.msra.mxu0 0.0
        %8664 = vmatprep.subr.mxu0 0.0
        %8665 = vmatpush2.msra.mxu0 0.0
        %8666 = vmatprep.subr.mxu0 0.0
        %8667 = vmatpush2.msra.mxu0 0.0
        %8668 = vmatprep.subr.mxu0 0.0
        %8669 = vmatpush2.msra.mxu0 0.0
        %8670 = vmatprep.subr.mxu0 0.0
        %8671 = vmatpush2.msra.mxu0 0.0
        %8672 = vmatprep.subr.mxu0 0.0
        %8673 = vmatpush2.msra.mxu0 0.0
        %8674 = vmatprep.subr.mxu0 0.0
        %8675 = vmatpush2.msra.mxu0 0.0
        %8676 = vmatprep.subr.mxu0 0.0
        %8677 = vmatpush2.msra.mxu0 0.0
        %8678 = vmatprep.subr.mxu0 0.0
        %8679 = vmatpush2.msra.mxu0 0.0
        %8680 = vmatprep.mubr.f32.mxu0 0.0
        %8681 = vmatmul.mubr.f32.gmra.mxu0 %v8517
        %v8682 = vpop.f32.mrf.mxu0
        %v8683 = vadd.f32 %v8513, %v8682
        %v8684 = vpop.f32.mrf.mxu0
        %8685 = vmatprep.mubr.f32.mxu0 0.0
        %8686 = vmatmul.mubr.f32.gmra.mxu0 %v8520
        %v8687 = vpop.f32.mrf.mxu0
        %v8688 = vadd.f32 %v8513, %v8687
        %v8689 = vpop.f32.mrf.mxu0
        %8690 = vmatprep.mubr.f32.mxu0 0.0
        %8691 = vmatmul.mubr.f32.gmra.mxu0 %v8523
        %v8692 = vpop.f32.mrf.mxu0
        %v8693 = vadd.f32 %v8513, %v8692
        %v8694 = vpop.f32.mrf.mxu0
        %8695 = vmatprep.mubr.f32.mxu0 0.0
        %8696 = vmatmul.mubr.f32.gmra.mxu0 %v8526
        %v8697 = vpop.f32.mrf.mxu0
        %v8698 = vadd.f32 %v8513, %v8697
        %v8699 = vpop.f32.mrf.mxu0
        %8700 = vmatprep.mubr.f32.mxu0 0.0
        %8701 = vmatmul.mubr.f32.gmra.mxu0 %v8529
        %v8702 = vpop.f32.mrf.mxu0
        %v8703 = vadd.f32 %v8513, %v8702
        %v8704 = vpop.f32.mrf.mxu0
        %8705 = vmatprep.mubr.f32.mxu0 0.0
        %8706 = vmatmul.mubr.f32.gmra.mxu0 %v8532
        %v8707 = vpop.f32.mrf.mxu0
        %v8708 = vadd.f32 %v8513, %v8707
        %v8709 = vpop.f32.mrf.mxu0
        %8710 = vmatprep.mubr.f32.mxu0 0.0
        %8711 = vmatmul.mubr.f32.gmra.mxu0 %v8535
        %v8712 = vpop.f32.mrf.mxu0
        %v8713 = vadd.f32 %v8513, %v8712
        %v8714 = vpop.f32.mrf.mxu0
        %8715 = vmatprep.mubr.f32.mxu0 0.0
        %8716 = vmatmul.mubr.f32.gmra.mxu0 %v8538
        %v8717 = vpop.f32.mrf.mxu0
        %v8718 = vadd.f32 %v8513, %v8717
        %v8719 = vpop.f32.mrf.mxu0
        %8720 = vmatprep.mubr.f32.mxu0 0.0
        %8721 = vmatmul.mubr.f32.gmra.mxu0 %v8541
        %v8722 = vpop.f32.mrf.mxu0
        %v8723 = vadd.f32 %v8513, %v8722
        %v8724 = vpop.f32.mrf.mxu0
        %8725 = vmatprep.mubr.f32.mxu0 0.0
        %8726 = vmatmul.mubr.f32.gmra.mxu0 %v8544
        %v8727 = vpop.f32.mrf.mxu0
        %v8728 = vadd.f32 %v8513, %v8727
        %v8729 = vpop.f32.mrf.mxu0
        %8730 = vmatprep.mubr.f32.mxu0 0.0
        %8731 = vmatmul.mubr.f32.gmra.mxu0 %v8547
        %v8732 = vpop.f32.mrf.mxu0
        %v8733 = vadd.f32 %v8513, %v8732
        %v8734 = vpop.f32.mrf.mxu0
        %8735 = vmatprep.mubr.f32.mxu0 0.0
        %8736 = vmatmul.mubr.f32.gmra.mxu0 %v8550
        %v8737 = vpop.f32.mrf.mxu0
        %v8738 = vadd.f32 %v8513, %v8737
        %v8739 = vpop.f32.mrf.mxu0
        %8740 = vmatprep.mubr.f32.mxu0 0.0
        %8741 = vmatmul.mubr.f32.gmra.mxu0 %v8553
        %v8742 = vpop.f32.mrf.mxu0
        %v8743 = vadd.f32 %v8513, %v8742
        %v8744 = vpop.f32.mrf.mxu0
        %8745 = vmatprep.mubr.f32.mxu0 0.0
        %8746 = vmatmul.mubr.f32.gmra.mxu0 %v8556
        %v8747 = vpop.f32.mrf.mxu0
        %v8748 = vadd.f32 %v8513, %v8747
        %v8749 = vpop.f32.mrf.mxu0
        %8750 = vmatprep.mubr.f32.mxu0 0.0
        %8751 = vmatmul.mubr.f32.gmra.mxu0 %v8559
        %v8752 = vpop.f32.mrf.mxu0
        %v8753 = vadd.f32 %v8513, %v8752
        %v8754 = vpop.f32.mrf.mxu0
        %8755 = vmatprep.mubr.f32.mxu0 0.0
        %8756 = vmatmul.mubr.f32.gmra.mxu0 %v8562
        %v8757 = vpop.f32.mrf.mxu0
        %v8758 = vadd.f32 %v8513, %v8757
        %v8759 = vpop.f32.mrf.mxu0
        %8760 = vmatprep.mubr.f32.mxu0 0.0
        %8761 = vmatmul.mubr.f32.gmra.mxu0 %v8565
        %v8762 = vpop.f32.mrf.mxu0
        %v8763 = vadd.f32 %v8513, %v8762
        %v8764 = vpop.f32.mrf.mxu0
        %8765 = vmatprep.mubr.f32.mxu0 0.0
        %8766 = vmatmul.mubr.f32.gmra.mxu0 %v8568
        %v8767 = vpop.f32.mrf.mxu0
        %v8768 = vadd.f32 %v8513, %v8767
        %v8769 = vpop.f32.mrf.mxu0
        %8770 = vmatprep.mubr.f32.mxu0 0.0
        %8771 = vmatmul.mubr.f32.gmra.mxu0 %v8571
        %v8772 = vpop.f32.mrf.mxu0
        %v8773 = vadd.f32 %v8513, %v8772
        %v8774 = vpop.f32.mrf.mxu0
        %8775 = vmatprep.mubr.f32.mxu0 0.0
        %8776 = vmatmul.mubr.f32.gmra.mxu0 %v8574
        %v8777 = vpop.f32.mrf.mxu0
        %v8778 = vadd.f32 %v8513, %v8777
        %v8779 = vpop.f32.mrf.mxu0
        %8780 = vmatprep.mubr.f32.mxu0 0.0
        %8781 = vmatmul.mubr.f32.gmra.mxu0 %v8577
        %v8782 = vpop.f32.mrf.mxu0
        %v8783 = vadd.f32 %v8513, %v8782
        %v8784 = vpop.f32.mrf.mxu0
        %8785 = vmatprep.mubr.f32.mxu0 0.0
        %8786 = vmatmul.mubr.f32.gmra.mxu0 %v8580
        %v8787 = vpop.f32.mrf.mxu0
        %v8788 = vadd.f32 %v8513, %v8787
        %v8789 = vpop.f32.mrf.mxu0
        %8790 = vmatprep.mubr.f32.mxu0 0.0
        %8791 = vmatmul.mubr.f32.gmra.mxu0 %v8583
        %v8792 = vpop.f32.mrf.mxu0
        %v8793 = vadd.f32 %v8513, %v8792
        %v8794 = vpop.f32.mrf.mxu0
        %8795 = vmatprep.mubr.f32.mxu0 0.0
        %8796 = vmatmul.mubr.f32.gmra.mxu0 %v8586
        %v8797 = vpop.f32.mrf.mxu0
        %v8798 = vadd.f32 %v8513, %v8797
        %v8799 = vpop.f32.mrf.mxu0
        %8800 = vmatprep.mubr.f32.mxu0 0.0
        %8801 = vmatmul.mubr.f32.gmra.mxu0 %v8589
        %v8802 = vpop.f32.mrf.mxu0
        %v8803 = vadd.f32 %v8513, %v8802
        %v8804 = vpop.f32.mrf.mxu0
        %8805 = vmatprep.mubr.f32.mxu0 0.0
        %8806 = vmatmul.mubr.f32.gmra.mxu0 %v8592
        %v8807 = vpop.f32.mrf.mxu0
        %v8808 = vadd.f32 %v8513, %v8807
        %v8809 = vpop.f32.mrf.mxu0
        %8810 = vmatprep.mubr.f32.mxu0 0.0
        %8811 = vmatmul.mubr.f32.gmra.mxu0 %v8595
        %v8812 = vpop.f32.mrf.mxu0
        %v8813 = vadd.f32 %v8513, %v8812
        %v8814 = vpop.f32.mrf.mxu0
        %8815 = vmatprep.mubr.f32.mxu0 0.0
        %8816 = vmatmul.mubr.f32.gmra.mxu0 %v8598
        %v8817 = vpop.f32.mrf.mxu0
        %v8818 = vadd.f32 %v8513, %v8817
        %v8819 = vpop.f32.mrf.mxu0
        %8820 = vmatprep.mubr.f32.mxu0 0.0
        %8821 = vmatmul.mubr.f32.gmra.mxu0 %v8601
        %v8822 = vpop.f32.mrf.mxu0
        %v8823 = vadd.f32 %v8513, %v8822
        %v8824 = vpop.f32.mrf.mxu0
        %8825 = vmatprep.mubr.f32.mxu0 0.0
        %8826 = vmatmul.mubr.f32.gmra.mxu0 %v8604
        %v8827 = vpop.f32.mrf.mxu0
        %v8828 = vadd.f32 %v8513, %v8827
        %v8829 = vpop.f32.mrf.mxu0
        %8830 = vmatprep.mubr.f32.mxu0 0.0
        %8831 = vmatmul.mubr.f32.gmra.mxu0 %v8607
        %v8832 = vpop.f32.mrf.mxu0
        %v8833 = vadd.f32 %v8513, %v8832
        %v8834 = vpop.f32.mrf.mxu0
        %8835 = vmatprep.mubr.f32.mxu0 0.0
        %8836 = vmatmul.mubr.f32.gmra.mxu0 %v8610
        %v8837 = vpop.f32.mrf.mxu0
        %v8838 = vadd.f32 %v8513, %v8837
        %v8839 = vpop.f32.mrf.mxu0
        %8840 = vdwg.mxu0
        %v8841 = vmax.f32 %v8683, 0.0
        %v8842 = vmax.f32 %v8688, 0.0
        %v8843 = vmax.f32 %v8693, 0.0
        %v8844 = vmax.f32 %v8698, 0.0
        %v8845 = vmax.f32 %v8703, 0.0
        %v8846 = vmax.f32 %v8708, 0.0
        %v8847 = vmax.f32 %v8713, 0.0
        %v8848 = vmax.f32 %v8718, 0.0
        %v8849 = vmax.f32 %v8723, 0.0
        %v8850 = vmax.f32 %v8728, 0.0
        %v8851 = vmax.f32 %v8733, 0.0
        %v8852 = vmax.f32 %v8738, 0.0
        %v8853 = vmax.f32 %v8743, 0.0
        %v8854 = vmax.f32 %v8748, 0.0
        %v8855 = vmax.f32 %v8753, 0.0
        %v8856 = vmax.f32 %v8758, 0.0
        %v8857 = vmax.f32 %v8763, 0.0
        %v8858 = vmax.f32 %v8768, 0.0
        %v8859 = vmax.f32 %v8773, 0.0
        %v8860 = vmax.f32 %v8778, 0.0
        %v8861 = vmax.f32 %v8783, 0.0
        %v8862 = vmax.f32 %v8788, 0.0
        %v8863 = vmax.f32 %v8793, 0.0
        %v8864 = vmax.f32 %v8798, 0.0
        %v8865 = vmax.f32 %v8803, 0.0
        %v8866 = vmax.f32 %v8808, 0.0
        %v8867 = vmax.f32 %v8813, 0.0
        %v8868 = vmax.f32 %v8818, 0.0
        %v8869 = vmax.f32 %v8823, 0.0
        %v8870 = vmax.f32 %v8828, 0.0
        %v8871 = vmax.f32 %v8833, 0.0
        %v8872 = vmax.f32 %v8838, 0.0
        %v8873 = vld [vmem:[%s11] sm:$0x1]
        %v8875 = vlaneseq
        %v8876 = vshrl.u32 %v8875, 7
        %v8877 = vsub.s32 0, %v8876
        %v8878 = vrot.slane %v8873, %v8877
        %v8880 = vmul.f32 %v8841, %v8878
        %v8881 = vmul.f32 %v8842, %v8878
        %v8882 = vmul.f32 %v8843, %v8878
        %v8883 = vmul.f32 %v8844, %v8878
        %v8884 = vmul.f32 %v8845, %v8878
        %v8885 = vmul.f32 %v8846, %v8878
        %v8886 = vmul.f32 %v8847, %v8878
        %v8887 = vmul.f32 %v8848, %v8878
        %v8888 = vmul.f32 %v8849, %v8878
        %v8889 = vmul.f32 %v8850, %v8878
        %v8890 = vmul.f32 %v8851, %v8878
        %v8891 = vmul.f32 %v8852, %v8878
        %v8892 = vmul.f32 %v8853, %v8878
        %v8893 = vmul.f32 %v8854, %v8878
        %v8894 = vmul.f32 %v8855, %v8878
        %v8895 = vmul.f32 %v8856, %v8878
        %v8896 = vmul.f32 %v8857, %v8878
        %v8897 = vmul.f32 %v8858, %v8878
        %v8898 = vmul.f32 %v8859, %v8878
        %v8899 = vmul.f32 %v8860, %v8878
        %v8900 = vmul.f32 %v8861, %v8878
        %v8901 = vmul.f32 %v8862, %v8878
        %v8902 = vmul.f32 %v8863, %v8878
        %v8903 = vmul.f32 %v8864, %v8878
        %v8904 = vmul.f32 %v8865, %v8878
        %v8905 = vmul.f32 %v8866, %v8878
        %v8906 = vmul.f32 %v8867, %v8878
        %v8907 = vmul.f32 %v8868, %v8878
        %v8908 = vmul.f32 %v8869, %v8878
        %v8909 = vmul.f32 %v8870, %v8878
        %v8910 = vmul.f32 %v8871, %v8878
        %v8911 = vmul.f32 %v8872, %v8878
        %v8912 = vld [vmem:[%s12] sm:$0x1]
        %v8914 = vlaneseq
        %v8915 = vshrl.u32 %v8914, 7
        %v8916 = vsub.s32 0, %v8915
        %v8917 = vrot.slane %v8912, %v8916
        %v8919 = vadd.f32 %v8880, %v8917
        %v8920 = vadd.f32 %v8881, %v8917
        %v8921 = vadd.f32 %v8882, %v8917
        %v8922 = vadd.f32 %v8883, %v8917
        %v8923 = vadd.f32 %v8884, %v8917
        %v8924 = vadd.f32 %v8885, %v8917
        %v8925 = vadd.f32 %v8886, %v8917
        %v8926 = vadd.f32 %v8887, %v8917
        %v8927 = vadd.f32 %v8888, %v8917
        %v8928 = vadd.f32 %v8889, %v8917
        %v8929 = vadd.f32 %v8890, %v8917
        %v8930 = vadd.f32 %v8891, %v8917
        %v8931 = vadd.f32 %v8892, %v8917
        %v8932 = vadd.f32 %v8893, %v8917
        %v8933 = vadd.f32 %v8894, %v8917
        %v8934 = vadd.f32 %v8895, %v8917
        %v8935 = vadd.f32 %v8896, %v8917
        %v8936 = vadd.f32 %v8897, %v8917
        %v8937 = vadd.f32 %v8898, %v8917
        %v8938 = vadd.f32 %v8899, %v8917
        %v8939 = vadd.f32 %v8900, %v8917
        %v8940 = vadd.f32 %v8901, %v8917
        %v8941 = vadd.f32 %v8902, %v8917
        %v8942 = vadd.f32 %v8903, %v8917
        %v8943 = vadd.f32 %v8904, %v8917
        %v8944 = vadd.f32 %v8905, %v8917
        %v8945 = vadd.f32 %v8906, %v8917
        %v8946 = vadd.f32 %v8907, %v8917
        %v8947 = vadd.f32 %v8908, %v8917
        %v8948 = vadd.f32 %v8909, %v8917
        %v8949 = vadd.f32 %v8910, %v8917
        %v8950 = vadd.f32 %v8911, %v8917
        %8951 = vxpose.xlu0.b32.start [1/16] %v8919, 128
        %8952 = vxpose.xlu0.b32.cont [2/16] %v8920, 128
        %8953 = vxpose.xlu0.b32.cont [3/16] %v8921, 128
        %8954 = vxpose.xlu0.b32.cont [4/16] %v8922, 128
        %8955 = vxpose.xlu0.b32.cont [5/16] %v8923, 128
        %8956 = vxpose.xlu0.b32.cont [6/16] %v8924, 128
        %8957 = vxpose.xlu0.b32.cont [7/16] %v8925, 128
        %8958 = vxpose.xlu0.b32.cont [8/16] %v8926, 128
        %8959 = vxpose.xlu0.b32.cont [9/16] %v8927, 128
        %8960 = vxpose.xlu0.b32.cont [10/16] %v8928, 128
        %8961 = vxpose.xlu0.b32.cont [11/16] %v8929, 128
        %8962 = vxpose.xlu0.b32.cont [12/16] %v8930, 128
        %8963 = vxpose.xlu0.b32.cont [13/16] %v8931, 128
        %8964 = vxpose.xlu0.b32.cont [14/16] %v8932, 128
        %8965 = vxpose.xlu0.b32.cont [15/16] %v8933, 128
        %8966 = vxpose.xlu0.b32.end [16/16] %v8934, 128
        %v8967 = vpop.trf.xlu0
        %v8968 = vpop.trf.xlu0
        %v8969 = vpop.trf.xlu0
        %v8970 = vpop.trf.xlu0
        %v8971 = vpop.trf.xlu0
        %v8972 = vpop.trf.xlu0
        %v8973 = vpop.trf.xlu0
        %v8974 = vpop.trf.xlu0
        %v8975 = vpop.trf.xlu0
        %v8976 = vpop.trf.xlu0
        %v8977 = vpop.trf.xlu0
        %v8978 = vpop.trf.xlu0
        %v8979 = vpop.trf.xlu0
        %v8980 = vpop.trf.xlu0
        %v8981 = vpop.trf.xlu0
        %v8982 = vpop.trf.xlu0
        %8983 = vxpose.xlu0.b32.start [1/16] %v8935, 128
        %8984 = vxpose.xlu0.b32.cont [2/16] %v8936, 128
        %8985 = vxpose.xlu0.b32.cont [3/16] %v8937, 128
        %8986 = vxpose.xlu0.b32.cont [4/16] %v8938, 128
        %8987 = vxpose.xlu0.b32.cont [5/16] %v8939, 128
        %8988 = vxpose.xlu0.b32.cont [6/16] %v8940, 128
        %8989 = vxpose.xlu0.b32.cont [7/16] %v8941, 128
        %8990 = vxpose.xlu0.b32.cont [8/16] %v8942, 128
        %8991 = vxpose.xlu0.b32.cont [9/16] %v8943, 128
        %8992 = vxpose.xlu0.b32.cont [10/16] %v8944, 128
        %8993 = vxpose.xlu0.b32.cont [11/16] %v8945, 128
        %8994 = vxpose.xlu0.b32.cont [12/16] %v8946, 128
        %8995 = vxpose.xlu0.b32.cont [13/16] %v8947, 128
        %8996 = vxpose.xlu0.b32.cont [14/16] %v8948, 128
        %8997 = vxpose.xlu0.b32.cont [15/16] %v8949, 128
        %8998 = vxpose.xlu0.b32.end [16/16] %v8950, 128
        %v8999 = vpop.trf.xlu0
        %v9000 = vpop.trf.xlu0
        %v9001 = vpop.trf.xlu0
        %v9002 = vpop.trf.xlu0
        %v9003 = vpop.trf.xlu0
        %v9004 = vpop.trf.xlu0
        %v9005 = vpop.trf.xlu0
        %v9006 = vpop.trf.xlu0
        %v9007 = vpop.trf.xlu0
        %v9008 = vpop.trf.xlu0
        %v9009 = vpop.trf.xlu0
        %v9010 = vpop.trf.xlu0
        %v9011 = vpop.trf.xlu0
        %v9012 = vpop.trf.xlu0
        %v9013 = vpop.trf.xlu0
        %v9014 = vpop.trf.xlu0
        %v9017 = vcombine.low %v8967, %v8999
        %9019 = vst [vmem:[%s448] sm:$0xff] %v9017
        %s9020 = sand.u32 %s318, 1
        %s9021 = scalar_lea.sflag [#allocation5], %s9020
        %s9022 = sand.u32 %s318, 1
        %s9023 = smul.addr %s9022, 8
        %s9024 = scalar_lea.vmem [#allocation4], %s9023
        // Predicated region
        $region73: #{tpu_custom_call.1} parent=71 // pred_check
          %p9025 = pneg %p328
        $region74: #{tpu_custom_call.1} parent=71 // pred_check_branch
          %9027 = sbr.rel (%p9025) target = $region76
        $region75: #{tpu_custom_call.1} parent=71 // pred_region
          %s9029 = ssub.s32 128, 128
          %9030 = vsyncadd %s9021, %s9029
          %s9031 = smul.addr %s27, 2
          %s9032 = smul.addr %s9031, 64
          %s9033 = scalar_lea.hbm %s13, %s9032
          %s9035 = sshll.u32 %s9024, 4
          %s9036 = int_to_ptr.vmem [resolvable:$true] %s9035
          %9038 = dma.vmem_to_hbm [thread:$0]  %s9036, 128, %s9033, %s9021
        $region76: #{tpu_custom_call.1} parent=71 // pred_fallthru
          _
      $region72: #{tpu_custom_call.1} parent=5 // pred_fallthru
        _
      %p9039 = scmp.le.s32.totalorder 2, %s22
      // Predicated region
      $region77: #{tpu_custom_call.1} parent=5 // pred_check
        %p9040 = pneg %p9039
      $region78: #{tpu_custom_call.1} parent=5 // pred_check_branch
        %9042 = sbr.rel (%p9040) target = $region80
      $region79: #{tpu_custom_call.1} parent=5 // pred_region
        %s9043 = ssub.s32 %s22, 2
        // Predicated region
        $region81: #{tpu_custom_call.1} parent=79 // pred_check
          %p9044 = pneg %p334
        $region82: #{tpu_custom_call.1} parent=79 // pred_check_branch
          %9046 = sbr.rel (%p9044) target = $region84
        $region83: #{tpu_custom_call.1} parent=79 // pred_region
          %s9047 = sand.u32 %s319, 1
          %s9048 = scalar_lea.sflag [#allocation5], %s9047
          %s9049 = sand.u32 %s319, 1
          %s9050 = smul.addr %s9049, 8
          %s9051 = scalar_lea.vmem [#allocation4], %s9050
          %9052 = dma.done %s9048, 128
        $region84: #{tpu_custom_call.1} parent=79 // pred_fallthru
          _
      $region80: #{tpu_custom_call.1} parent=5 // pred_fallthru
        _
    $region6: #{tpu_custom_call.1} parent=1 // loop_footer
      %s26 = sadd.s32 1, %s22
    $region7: #{tpu_custom_call.1} parent=1 // loop_footer_branch
      %21 = sbr.rel target = $region3
    $region8: #{tpu_custom_call.1} parent=1 // loop_exit
      _
    %9053 = vsyncpa [#allocation5], 1
    %s9054 = scalar_lea.sflag [#allocation5], 1
    %9055 = vsyncpa %s9054, 1

</llo_original>
